<compile_context>
chip_gen: v7x
topology: tpu7x:2x2x1
jax: 0.10.0
libtpu: 0.0.40
codegen_flags: <defaults>
</compile_context>

<pallas_src>
import functools

import jax
import jax.numpy as jnp
from jax.experimental import pallas as pl
from jax.experimental.pallas import tpu as pltpu

EPS = 1e-5                      # nn.BatchNorm2d default eps
LANE = 128                      # pad channel dims to the 128-lane vreg width
_HALO_LPAD = 16                 # bf16 sublane-tile aligned left-halo width for the 3x3 scratch


# ----------------------------------------------------------------------------- helpers
def _round_up(x, m):
    return (x + m - 1) // m * m


def _pad_axis(a, axis, target):
    pad = target - a.shape[axis]
    if pad == 0:
        return a
    widths = [(0, 0)] * a.ndim
    widths[axis] = (0, pad)
    return jnp.pad(a, widths)


def _tpu_vmem_bytes():
    """Physical VMEM capacity (per core) with a conservative fallback."""
    try:
        info = pltpu.get_tpu_info()
        for attr in ("vmem_capacity_bytes", "vmem_size_bytes", "vmem_bytes"):
            v = getattr(info, attr, None)
            if v:
                return int(v)
    except Exception:
        pass
    return 64 << 20


def _pick_tile_m(m, per_row_bytes, fixed_bytes, budget_bytes, max_tile=2048):
    avail = max(budget_bytes - fixed_bytes, 8 * per_row_bytes)
    t = int(min(max_tile, avail // max(per_row_bytes, 1), m))
    t = max(t - t % 8, 8)
    while t >= 8 and m % t:
        t -= 8
    return max(t, 8)


def _cparams(vmem_limit):
    return pltpu.CompilerParams(dimension_semantics=("parallel",),
                                vmem_limit_bytes=int(vmem_limit))


def _write_partial_stats(s_ref, ss_ref, y):
    """Per-tile partial sum / sum-of-squares, broadcast over 8 sublanes (lane-dense)."""
    c = y.shape[-1]
    s_ref[0] = jnp.broadcast_to(jnp.sum(y, axis=0, keepdims=True), (8, c))
    ss_ref[0] = jnp.broadcast_to(jnp.sum(y * y, axis=0, keepdims=True), (8, c))


def _finalize_bn(s, ss, count):
    """Reduce per-tile partials -> (mean, 1/sqrt(var+eps)), biased variance."""
    total = jnp.sum(s[:, 0, :], axis=0)[None, :]
    total_sq = jnp.sum(ss[:, 0, :], axis=0)[None, :]
    mean = total / count
    var = jnp.maximum(total_sq / count - mean * mean, 0.0)
    return mean, jax.lax.rsqrt(var + EPS)


# ----------------------------------------------------------------------------- kernels
def _stage1_kernel(x_ref, w1_ref, y1_ref, s_ref, ss_ref):
    # conv1 (1x1 == channel matmul) + bn1 partial stats.
    y = jnp.dot(x_ref[...], w1_ref[...], preferred_element_type=jnp.float32)
    y1_ref[...] = y.astype(jnp.bfloat16)
    _write_partial_stats(s_ref, ss_ref, y)


def _make_stage2_kernel(H, W, C1p, C2p):
    # bn1-apply + relu + 3x3 conv (kx-folded matmuls over a zero-padded bf16 VMEM halo)
    # + bn2 partial stats, one image per grid step.
    HW = H * W
    LP = _HALO_LPAD
    WP = W + 2 * LP

    def kernel(y1_ref, m1_ref, i1_ref, w2_ref, y2_ref, s_ref, ss_ref,
               apad_ref, pack_ref, acc_ref):
        # bn1 apply + relu in f32, one bf16 interior store at a sublane-aligned offset.
        a1 = jnp.maximum(
            (y1_ref[0].astype(jnp.float32) - m1_ref[...]) * i1_ref[...], 0.0)
        apad_ref[1:H + 1, LP:LP + W, :] = a1.astype(jnp.bfloat16)

        # Zero only the halo strips every step (interior is fully overwritten each step,
        # and per-step strip zeroing stays correct if the grid axis is sharded over cores).
        zrow = jnp.zeros((WP, C1p), jnp.bfloat16)
        apad_ref[0] = zrow
        apad_ref[H + 1] = zrow
        zcol = jnp.zeros((H, LP, C1p), jnp.bfloat16)
        apad_ref[1:H + 1, 0:LP, :] = zcol
        apad_ref[1:H + 1, LP + W:WP, :] = zcol

        # 3x3 conv: fold the 3 kx taps into the matmul K dimension -> 3 matmuls, K = 3*C1p.
        for ky in range(3):
            for kx in range(3):
                c0 = LP - 1 + kx
                win = apad_ref[ky:ky + H, c0:c0 + W, :]          # shifted bf16 tap load
                pack_ref[:, kx * C1p:(kx + 1) * C1p] = win.reshape(HW, C1p)
            partial = jnp.dot(pack_ref[...], w2_ref[ky],
                              preferred_element_type=jnp.float32)
            if ky == 0:
                acc_ref[...] = partial
            else:
                acc_ref[...] += partial                           # in-place f32 accumulation

        acc = acc_ref[...]
        y2_ref[0] = acc.astype(jnp.bfloat16)
        _write_partial_stats(s_ref, ss_ref, acc)

    return kernel


def _stage3_kernel(y2_ref, m2_ref, i2_ref, w3_ref, s_ref, ss_ref):
    # bn2-apply + relu + conv3 (1x1) -> bn3 partial stats only (y3 is not materialized).
    a2 = jnp.maximum(
        (y2_ref[...].astype(jnp.float32) - m2_ref[...]) * i2_ref[...], 0.0)
    y3 = jnp.dot(a2.astype(jnp.bfloat16), w3_ref[...],
                 preferred_element_type=jnp.float32)
    _write_partial_stats(s_ref, ss_ref, y3)


def _stage4_kernel(y2_ref, m2_ref, i2_ref, w3_ref, m3_ref, i3_ref, res_ref, out_ref):
    # Recompute conv3, apply bn3, add (bf16-carried) identity residual, relu.
    a2 = jnp.maximum(
        (y2_ref[...].astype(jnp.float32) - m2_ref[...]) * i2_ref[...], 0.0)
    y3 = jnp.dot(a2.astype(jnp.bfloat16), w3_ref[...],
                 preferred_element_type=jnp.float32)
    res = res_ref[...].astype(jnp.float32)
    out_ref[...] = jnp.maximum((y3 - m3_ref[...]) * i3_ref[...] + res, 0.0)


# ----------------------------------------------------------------------------- wrapper
def resnet_block50_forward(x_nchw, conv1_w, conv2_w, conv3_w, *, tm=None):
    N, Cin, H, W = x_nchw.shape
    C1, C2, C3 = conv1_w.shape[0], conv2_w.shape[0], conv3_w.shape[0]
    assert C3 == Cin, "identity shortcut requires conv3 out-channels == input channels"
    assert conv2_w.shape[2:] == (3, 3)
    assert W % 8 == 0, "W must be a multiple of 8 (sublane width)"

    M = N * H * W
    Cin_p, C1p, C2p, C3p = (_round_up(c, LANE) for c in (Cin, C1, C2, C3))

    # Per-generation VMEM budget / tile size (v5e/v6e: 128 MiB, v7x: 64 MiB).
    vmem_cap = _tpu_vmem_bytes()
    vmem_limit = min(vmem_cap * 3 // 4, 100 << 20)
    if tm is None:
        per_row = max(4 * Cin_p + 4 * C1p,            # stage 1 (double-buffered bf16 in/out)
                      4 * C2p + 12 * C3p)             # stage 4 (dominant: y2 + res + f32 out)
        fixed = 4 * C2p * C3p + (1 << 20)             # resident conv3 weights + slack
        tm = _pick_tile_m(M, per_row, fixed, vmem_limit // 2)
    assert M % tm == 0 and tm % 8 == 0
    G = M // tm

    f32, bf16 = jnp.float32, jnp.bfloat16
    cparams = _cparams(vmem_limit)

    # ---- layout / parameter prep (cheap XLA glue) ----
    x2d = jnp.transpose(x_nchw, (0, 2, 3, 1)).reshape(M, Cin)
    x_bf = _pad_axis(x2d, 1, C3p).astype(bf16)       # conv1 operand AND bf16 residual (Cin_p == C3p)

    w1 = jnp.mean(conv1_w, axis=(2, 3)).T            # (Cin, C1)   spatial-mean 1x1 conv
    w1 = _pad_axis(_pad_axis(w1, 0, Cin_p), 1, C1p).astype(bf16)
    w2 = jnp.transpose(conv2_w, (2, 3, 1, 0)).reshape(9, C1, C2)
    w2 = _pad_axis(_pad_axis(w2, 1, C1p), 2, C2p)
    w2 = w2.reshape(3, 3 * C1p, C2p).astype(bf16)    # per-ky K-folded (kx major, ci minor)
    w3 = jnp.mean(conv3_w, axis=(2, 3)).T            # (C2, C3)    spatial-mean 1x1 conv
    w3 = _pad_axis(_pad_axis(w3, 0, C2p), 1, C3p).astype(bf16)

    # ---- stage 1: conv1 + bn1 partial stats (tiled over M, parallel) ----
    y1_bf, s1, ss1 = pl.pallas_call(
        _stage1_kernel,
        out_shape=(jax.ShapeDtypeStruct((M, C1p), bf16),
                   jax.ShapeDtypeStruct((G, 8, C1p), f32),
                   jax.ShapeDtypeStruct((G, 8, C1p), f32)),
        grid=(G,),
        in_specs=[pl.BlockSpec((tm, Cin_p), lambda i: (i, 0)),
                  pl.BlockSpec((Cin_p, C1p), lambda i: (0, 0))],
        out_specs=(pl.BlockSpec((tm, C1p), lambda i: (i, 0)),
                   pl.BlockSpec((1, 8, C1p), lambda i: (i, 0, 0)),
                   pl.BlockSpec((1, 8, C1p), lambda i: (i, 0, 0))),
        compiler_params=cparams,
    )(x_bf, w1)
    mean1, inv1 = _finalize_bn(s1, ss1, M)

    # ---- stage 2: bn1-apply + relu + 3x3 conv (kx-folded) + bn2 partial stats (per image) ----
    y2_bf, s2, ss2 = pl.pallas_call(
        _make_stage2_kernel(H, W, C1p, C2p),
        out_shape=(jax.ShapeDtypeStruct((N, H * W, C2p), bf16),
                   jax.ShapeDtypeStruct((N, 8, C2p), f32),
                   jax.ShapeDtypeStruct((N, 8, C2p), f32)),
        grid=(N,),
        in_specs=[pl.BlockSpec((1, H, W, C1p), lambda n: (n, 0, 0, 0)),
                  pl.BlockSpec((1, C1p), lambda n: (0, 0)),
                  pl.BlockSpec((1, C1p), lambda n: (0, 0)),
                  pl.BlockSpec((3, 3 * C1p, C2p), lambda n: (0, 0, 0))],
        out_specs=(pl.BlockSpec((1, H * W, C2p), lambda n: (n, 0, 0)),
                   pl.BlockSpec((1, 8, C2p), lambda n: (n, 0, 0)),
                   pl.BlockSpec((1, 8, C2p), lambda n: (n, 0, 0))),
        scratch_shapes=[pltpu.VMEM((H + 2, W + 2 * _HALO_LPAD, C1p), bf16),
                        pltpu.VMEM((H * W, 3 * C1p), bf16),
                        pltpu.VMEM((H * W, C2p), f32)],
        compiler_params=cparams,
    )(y1_bf.reshape(N, H, W, C1p), mean1, inv1, w2)
    mean2, inv2 = _finalize_bn(s2, ss2, M)

    # ---- stage 3: bn2-apply + relu + conv3 -> bn3 partial stats only ----
    y2_flat = y2_bf.reshape(M, C2p)
    s3, ss3 = pl.pallas_call(
        _stage3_kernel,
        out_shape=(jax.ShapeDtypeStruct((G, 8, C3p), f32),
                   jax.ShapeDtypeStruct((G, 8, C3p), f32)),
        grid=(G,),
        in_specs=[pl.BlockSpec((tm, C2p), lambda i: (i, 0)),
                  pl.BlockSpec((1, C2p), lambda i: (0, 0)),
                  pl.BlockSpec((1, C2p), lambda i: (0, 0)),
                  pl.BlockSpec((C2p, C3p), lambda i: (0, 0))],
        out_specs=(pl.BlockSpec((1, 8, C3p), lambda i: (i, 0, 0)),
                   pl.BlockSpec((1, 8, C3p), lambda i: (i, 0, 0))),
        compiler_params=cparams,
    )(y2_flat, mean2, inv2, w3)
    mean3, inv3 = _finalize_bn(s3, ss3, M)

    # ---- stage 4: recompute conv3, apply bn3, add bf16 identity residual, relu ----
    out2d = pl.pallas_call(
        _stage4_kernel,
        out_shape=jax.ShapeDtypeStruct((M, C3p), f32),
        grid=(G,),
        in_specs=[pl.BlockSpec((tm, C2p), lambda i: (i, 0)),
                  pl.BlockSpec((1, C2p), lambda i: (0, 0)),
                  pl.BlockSpec((1, C2p), lambda i: (0, 0)),
                  pl.BlockSpec((C2p, C3p), lambda i: (0, 0)),
                  pl.BlockSpec((1, C3p), lambda i: (0, 0)),
                  pl.BlockSpec((1, C3p), lambda i: (0, 0)),
                  pl.BlockSpec((tm, C3p), lambda i: (i, 0))],
        out_specs=pl.BlockSpec((tm, C3p), lambda i: (i, 0)),
        compiler_params=cparams,
    )(y2_flat, mean2, inv2, w3, mean3, inv3, x_bf)

    out = out2d[:, :C3].reshape(N, H, W, C3)
    return jnp.transpose(out, (0, 3, 1, 2))


# ----------------------------------------------------------------------------- reference
def _reference(x, w1, w2, w3):
    """Pure-JAX f32 replica of the PyTorch forward (training-mode BN, identity shortcut)."""
    def conv(x, w, pad):
        return jax.lax.conv_general_dilated(
            x, w, window_strides=(1, 1), padding=pad,
            dimension_numbers=('NCHW', 'OIHW', 'NCHW'))

    def bn(y):
        m = jnp.mean(y, axis=(0, 2, 3), keepdims=True)
        v = jnp.mean((y - m) ** 2, axis=(0, 2, 3), keepdims=True)
        return (y - m) / jnp.sqrt(v + EPS)

    w1m = jnp.mean(w1, axis=(2, 3), keepdims=True)
    out = jax.nn.relu(bn(conv(x, w1m, 'VALID')))
    out = jax.nn.relu(bn(conv(out, w2, [(1, 1), (1, 1)])))
    w3m = jnp.mean(w3, axis=(2, 3), keepdims=True)
    out = bn(conv(out, w3m, 'VALID'))
    return jax.nn.relu(out + x)


if __name__ == "__main__":
    key = jax.random.PRNGKey(0)
    k1, k2, k3, k4 = jax.random.split(key, 4)

    # bottleneck-style toy config with identity shortcut:
    # layer1=(8, 16), layer2=(8, 8), layer3=(16, 8), short_layer=None
    N, Cin, H, W = 2, 16, 16, 16
    C1, C2, C3 = 8, 8, 16

    x = jax.random.normal(k1, (N, Cin, H, W), jnp.float32)
    conv1_w = 0.1 * jax.random.normal(k2, (C1, Cin, 3, 3), jnp.float32)
    conv2_w = 0.1 * jax.random.normal(k3, (C2, C1, 3, 3), jnp.float32)
    conv3_w = 0.1 * jax.random.normal(k4, (C3, C2, 3, 3), jnp.float32)

    # tm=128 forces a 4-step M grid so the tiled/partial-stats path is exercised.
    fwd = jax.jit(functools.partial(resnet_block50_forward, tm=128))
    out = jax.block_until_ready(fwd(x, conv1_w, conv2_w, conv3_w))

    ref = _reference(x, conv1_w, conv2_w, conv3_w)
    assert out.shape == ref.shape == (N, C3, H, W)
    max_err = float(jnp.max(jnp.abs(out - ref)))
    # bf16 MXU operands / bf16 residual (f32 accumulation) -> a few e-3 drift vs f32 ref.
    assert jnp.allclose(out, ref, rtol=5e-2, atol=5e-2), f"max_err={max_err}"
    print("KERNEL_OK")
</pallas_src>

<mosaic_0001>
module attributes {stable_mosaic.version = 11 : i64} {
  func.func @_stage1_kernel(%arg0: i32, %arg1: memref<128x128xbf16, #tpu.memory_space<vmem>>, %arg2: memref<128x128xbf16, #tpu.memory_space<vmem>>, %arg3: memref<128x128xbf16, #tpu.memory_space<vmem>>, %arg4: memref<1x8x128xf32, #tpu.memory_space<vmem>>, %arg5: memref<1x8x128xf32, #tpu.memory_space<vmem>>) attributes {dimension_semantics = [#tpu.dimension_semantics<parallel>], iteration_bounds = array<i64: 4>, scalar_prefetch = 0 : i64, scratch_operands = 0 : i64, tpu.core_type = #tpu.core_type<tc>, window_params = [{transform_indices = @transform_0, window_bounds = array<i64: 128, 128>}, {pipeline_mode = #tpu.pipeline_mode<synchronous>, transform_indices = @transform_1, window_bounds = array<i64: 128, 128>}, {transform_indices = @transform_2, window_bounds = array<i64: 128, 128>}, {transform_indices = @transform_3, window_bounds = array<i64: 1, 8, 128>}, {transform_indices = @transform_4, window_bounds = array<i64: 1, 8, 128>}]} {
    %c0 = arith.constant 0 : index
    %c0_0 = arith.constant 0 : index
    %0 = vector.load %arg1[%c0, %c0_0] : memref<128x128xbf16, #tpu.memory_space<vmem>>, vector<128x128xbf16>
    %c0_1 = arith.constant 0 : index
    %c0_2 = arith.constant 0 : index
    %1 = vector.load %arg2[%c0_1, %c0_2] : memref<128x128xbf16, #tpu.memory_space<vmem>>, vector<128x128xbf16>
    %cst = arith.constant dense<0.000000e+00> : vector<128x128xf32>
    %2 = tpu.matmul %0, %1, %cst {dimension_numbers = #tpu.dot_dimension_numbers<[1], [0], [0], [1], [0, 0, 1, 1], [], []>} : vector<128x128xbf16>, vector<128x128xbf16>, vector<128x128xf32> -> vector<128x128xf32>
    %3 = arith.truncf %2 : vector<128x128xf32> to vector<128x128xbf16>
    %c0_3 = arith.constant 0 : index
    %c0_4 = arith.constant 0 : index
    %4 = vector.load %arg3[%c0_3, %c0_4] : memref<128x128xbf16, #tpu.memory_space<vmem>>, vector<128x128xbf16>
    tpu.vector_store %arg3[%c0_3, %c0_4], %3 {strides = array<i32>} : memref<128x128xbf16, #tpu.memory_space<vmem>>, vector<128x128xbf16>,
    %cst_5 = arith.constant dense<0.000000e+00> : vector<128xf32>
    %5 = vector.multi_reduction <add>, %2, %cst_5 [0] : vector<128x128xf32> to vector<128xf32>
    %6 = vector.shape_cast %5 : vector<128xf32> to vector<1x128xf32>
    %7 = vector.shape_cast %6 : vector<1x128xf32> to vector<1x128xf32>
    %8 = vector.broadcast %7 : vector<1x128xf32> to vector<8x128xf32>
    %c0_6 = arith.constant 0 : index
    %c0_7 = arith.constant 0 : index
    %c0_8 = arith.constant 0 : index
    %9 = vector.load %arg4[%c0_6, %c0_7, %c0_8] : memref<1x8x128xf32, #tpu.memory_space<vmem>>, vector<1x8x128xf32>
    %10 = vector.shape_cast %9 : vector<1x8x128xf32> to vector<8x128xf32>
    %11 = vector.shape_cast %8 : vector<8x128xf32> to vector<1x8x128xf32>
    tpu.vector_store %arg4[%c0_6, %c0_7, %c0_8], %11 {strides = array<i32>} : memref<1x8x128xf32, #tpu.memory_space<vmem>>, vector<1x8x128xf32>,
    %12 = arith.mulf %2, %2 : vector<128x128xf32>
    %cst_9 = arith.constant dense<0.000000e+00> : vector<128xf32>
    %13 = vector.multi_reduction <add>, %12, %cst_9 [0] : vector<128x128xf32> to vector<128xf32>
    %14 = vector.shape_cast %13 : vector<128xf32> to vector<1x128xf32>
    %15 = vector.shape_cast %14 : vector<1x128xf32> to vector<1x128xf32>
    %16 = vector.broadcast %15 : vector<1x128xf32> to vector<8x128xf32>
    %c0_10 = arith.constant 0 : index
    %c0_11 = arith.constant 0 : index
    %c0_12 = arith.constant 0 : index
    %17 = vector.load %arg5[%c0_10, %c0_11, %c0_12] : memref<1x8x128xf32, #tpu.memory_space<vmem>>, vector<1x8x128xf32>
    %18 = vector.shape_cast %17 : vector<1x8x128xf32> to vector<8x128xf32>
    %19 = vector.shape_cast %16 : vector<8x128xf32> to vector<1x8x128xf32>
    tpu.vector_store %arg5[%c0_10, %c0_11, %c0_12], %19 {strides = array<i32>} : memref<1x8x128xf32, #tpu.memory_space<vmem>>, vector<1x8x128xf32>,
    return
  }
  func.func @transform_0(%arg0: i32) -> (i32, i32) {
    %c0_i32 = arith.constant 0 : i32
    %c0_i32_0 = arith.constant 0 : i32
    return %arg0, %c0_i32 : i32, i32
  }
  func.func @transform_1(%arg0: i32) -> (i32, i32) {
    %c0_i32 = arith.constant 0 : i32
    %c0_i32_0 = arith.constant 0 : i32
    %c0_i32_1 = arith.constant 0 : i32
    return %c0_i32, %c0_i32_0 : i32, i32
  }
  func.func @transform_2(%arg0: i32) -> (i32, i32) {
    %c0_i32 = arith.constant 0 : i32
    %c0_i32_0 = arith.constant 0 : i32
    return %arg0, %c0_i32 : i32, i32
  }
  func.func @transform_3(%arg0: i32) -> (i32, i32, i32) {
    %c0_i32 = arith.constant 0 : i32
    %c0_i32_0 = arith.constant 0 : i32
    %c0_i32_1 = arith.constant 0 : i32
    return %arg0, %c0_i32, %c0_i32_0 : i32, i32, i32
  }
  func.func @transform_4(%arg0: i32) -> (i32, i32, i32) {
    %c0_i32 = arith.constant 0 : i32
    %c0_i32_0 = arith.constant 0 : i32
    %c0_i32_1 = arith.constant 0 : i32
    return %arg0, %c0_i32, %c0_i32_0 : i32, i32, i32
  }
}

module attributes {stable_mosaic.version = 11 : i64} {
  func.func @kernel(%arg0: i32, %arg1: memref<1x16x16x128xbf16, #tpu.memory_space<vmem>>, %arg2: memref<1x128xf32, #tpu.memory_space<vmem>>, %arg3: memref<1x128xf32, #tpu.memory_space<vmem>>, %arg4: memref<3x384x128xbf16, #tpu.memory_space<vmem>>, %arg5: memref<1x256x128xbf16, #tpu.memory_space<vmem>>, %arg6: memref<1x8x128xf32, #tpu.memory_space<vmem>>, %arg7: memref<1x8x128xf32, #tpu.memory_space<vmem>>, %arg8: memref<18x48x128xbf16, #tpu.memory_space<vmem>>, %arg9: memref<256x384xbf16, #tpu.memory_space<vmem>>, %arg10: memref<256x128xf32, #tpu.memory_space<vmem>>) attributes {dimension_semantics = [#tpu.dimension_semantics<parallel>], iteration_bounds = array<i64: 2>, scalar_prefetch = 0 : i64, scratch_operands = 3 : i64, tpu.core_type = #tpu.core_type<tc>, window_params = [{transform_indices = @transform_0, window_bounds = array<i64: 1, 16, 16, 128>}, {pipeline_mode = #tpu.pipeline_mode<synchronous>, transform_indices = @transform_1, window_bounds = array<i64: 1, 128>}, {pipeline_mode = #tpu.pipeline_mode<synchronous>, transform_indices = @transform_2, window_bounds = array<i64: 1, 128>}, {pipeline_mode = #tpu.pipeline_mode<synchronous>, transform_indices = @transform_3, window_bounds = array<i64: 3, 384, 128>}, {transform_indices = @transform_4, window_bounds = array<i64: 1, 256, 128>}, {transform_indices = @transform_5, window_bounds = array<i64: 1, 8, 128>}, {transform_indices = @transform_6, window_bounds = array<i64: 1, 8, 128>}]} {
    %c0 = arith.constant 0 : index
    %c0_0 = arith.constant 0 : index
    %c0_1 = arith.constant 0 : index
    %c0_2 = arith.constant 0 : index
    %0 = vector.load %arg1[%c0, %c0_0, %c0_1, %c0_2] : memref<1x16x16x128xbf16, #tpu.memory_space<vmem>>, vector<1x16x16x128xbf16>
    %1 = vector.shape_cast %0 : vector<1x16x16x128xbf16> to vector<16x16x128xbf16>
    %2 = arith.extf %1 : vector<16x16x128xbf16> to vector<16x16x128xf32>
    %c0_3 = arith.constant 0 : index
    %c0_4 = arith.constant 0 : index
    %3 = vector.load %arg2[%c0_3, %c0_4] : memref<1x128xf32, #tpu.memory_space<vmem>>, vector<1x128xf32>
    %4 = vector.shape_cast %3 : vector<1x128xf32> to vector<1x1x128xf32>
    %5 = vector.broadcast %4 : vector<1x1x128xf32> to vector<16x16x128xf32>
    %6 = arith.subf %2, %5 : vector<16x16x128xf32>
    %c0_5 = arith.constant 0 : index
    %c0_6 = arith.constant 0 : index
    %7 = vector.load %arg3[%c0_5, %c0_6] : memref<1x128xf32, #tpu.memory_space<vmem>>, vector<1x128xf32>
    %8 = vector.shape_cast %7 : vector<1x128xf32> to vector<1x1x128xf32>
    %9 = vector.broadcast %8 : vector<1x1x128xf32> to vector<16x16x128xf32>
    %10 = arith.mulf %6, %9 : vector<16x16x128xf32>
    %cst = arith.constant 0.000000e+00 : f32
    %11 = vector.broadcast %cst : f32 to vector<16x16x128xf32>
    %12 = arith.maximumf %10, %11 : vector<16x16x128xf32>
    %13 = arith.truncf %12 : vector<16x16x128xf32> to vector<16x16x128xbf16>
    %c1 = arith.constant 1 : index
    %c16 = arith.constant 16 : index
    %c0_7 = arith.constant 0 : index
    %14 = vector.load %arg8[%c1, %c16, %c0_7] : memref<18x48x128xbf16, #tpu.memory_space<vmem>>, vector<16x16x128xbf16>
    tpu.vector_store %arg8[%c1, %c16, %c0_7], %13 {strides = array<i32>} : memref<18x48x128xbf16, #tpu.memory_space<vmem>>, vector<16x16x128xbf16>,
    %cst_8 = arith.constant 0.000000e+00 : bf16
    %15 = vector.broadcast %cst_8 : bf16 to vector<48x128xbf16>
    %c0_9 = arith.constant 0 : index
    %c0_10 = arith.constant 0 : index
    %c0_11 = arith.constant 0 : index
    %16 = vector.load %arg8[%c0_9, %c0_10, %c0_11] : memref<18x48x128xbf16, #tpu.memory_space<vmem>>, vector<1x48x128xbf16>
    %17 = vector.shape_cast %16 : vector<1x48x128xbf16> to vector<48x128xbf16>
    %18 = vector.shape_cast %15 : vector<48x128xbf16> to vector<1x48x128xbf16>
    tpu.vector_store %arg8[%c0_9, %c0_10, %c0_11], %18 {strides = array<i32>} : memref<18x48x128xbf16, #tpu.memory_space<vmem>>, vector<1x48x128xbf16>,
    %c17 = arith.constant 17 : index
    %c0_12 = arith.constant 0 : index
    %c0_13 = arith.constant 0 : index
    %19 = vector.load %arg8[%c17, %c0_12, %c0_13] : memref<18x48x128xbf16, #tpu.memory_space<vmem>>, vector<1x48x128xbf16>
    %20 = vector.shape_cast %19 : vector<1x48x128xbf16> to vector<48x128xbf16>
    %21 = vector.shape_cast %15 : vector<48x128xbf16> to vector<1x48x128xbf16>
    tpu.vector_store %arg8[%c17, %c0_12, %c0_13], %21 {strides = array<i32>} : memref<18x48x128xbf16, #tpu.memory_space<vmem>>, vector<1x48x128xbf16>,
    %cst_14 = arith.constant 0.000000e+00 : bf16
    %22 = vector.broadcast %cst_14 : bf16 to vector<16x16x128xbf16>
    %c1_15 = arith.constant 1 : index
    %c0_16 = arith.constant 0 : index
    %c0_17 = arith.constant 0 : index
    %23 = vector.load %arg8[%c1_15, %c0_16, %c0_17] : memref<18x48x128xbf16, #tpu.memory_space<vmem>>, vector<16x16x128xbf16>
    tpu.vector_store %arg8[%c1_15, %c0_16, %c0_17], %22 {strides = array<i32>} : memref<18x48x128xbf16, #tpu.memory_space<vmem>>, vector<16x16x128xbf16>,
    %c1_18 = arith.constant 1 : index
    %c32 = arith.constant 32 : index
    %c0_19 = arith.constant 0 : index
    %24 = vector.load %arg8[%c1_18, %c32, %c0_19] : memref<18x48x128xbf16, #tpu.memory_space<vmem>>, vector<16x16x128xbf16>
    tpu.vector_store %arg8[%c1_18, %c32, %c0_19], %22 {strides = array<i32>} : memref<18x48x128xbf16, #tpu.memory_space<vmem>>, vector<16x16x128xbf16>,
    %c0_20 = arith.constant 0 : index
    %c15 = arith.constant 15 : index
    %c0_21 = arith.constant 0 : index
    %25 = vector.load %arg8[%c0_20, %c15, %c0_21] : memref<18x48x128xbf16, #tpu.memory_space<vmem>>, vector<16x16x128xbf16>
    %26 = vector.shape_cast %25 : vector<16x16x128xbf16> to vector<256x128xbf16>
    %c0_22 = arith.constant 0 : index
    %c0_23 = arith.constant 0 : index
    %27 = vector.load %arg9[%c0_22, %c0_23] : memref<256x384xbf16, #tpu.memory_space<vmem>>, vector<256x128xbf16>
    tpu.vector_store %arg9[%c0_22, %c0_23], %26 {strides = array<i32>} : memref<256x384xbf16, #tpu.memory_space<vmem>>, vector<256x128xbf16>,
    %c0_24 = arith.constant 0 : index
    %c16_25 = arith.constant 16 : index
    %c0_26 = arith.constant 0 : index
    %28 = vector.load %arg8[%c0_24, %c16_25, %c0_26] : memref<18x48x128xbf16, #tpu.memory_space<vmem>>, vector<16x16x128xbf16>
    %29 = vector.shape_cast %28 : vector<16x16x128xbf16> to vector<256x128xbf16>
    %c0_27 = arith.constant 0 : index
    %c128 = arith.constant 128 : index
    %30 = vector.load %arg9[%c0_27, %c128] : memref<256x384xbf16, #tpu.memory_space<vmem>>, vector<256x128xbf16>
    tpu.vector_store %arg9[%c0_27, %c128], %29 {strides = array<i32>} : memref<256x384xbf16, #tpu.memory_space<vmem>>, vector<256x128xbf16>,
    %c0_28 = arith.constant 0 : index
    %c17_29 = arith.constant 17 : index
    %c0_30 = arith.constant 0 : index
    %31 = vector.load %arg8[%c0_28, %c17_29, %c0_30] : memref<18x48x128xbf16, #tpu.memory_space<vmem>>, vector<16x16x128xbf16>
    %32 = vector.shape_cast %31 : vector<16x16x128xbf16> to vector<256x128xbf16>
    %c0_31 = arith.constant 0 : index
    %c256 = arith.constant 256 : index
    %33 = vector.load %arg9[%c0_31, %c256] : memref<256x384xbf16, #tpu.memory_space<vmem>>, vector<256x128xbf16>
    tpu.vector_store %arg9[%c0_31, %c256], %32 {strides = array<i32>} : memref<256x384xbf16, #tpu.memory_space<vmem>>, vector<256x128xbf16>,
    %c0_32 = arith.constant 0 : index
    %c0_33 = arith.constant 0 : index
    %34 = vector.load %arg9[%c0_32, %c0_33] : memref<256x384xbf16, #tpu.memory_space<vmem>>, vector<256x384xbf16>
    %c0_34 = arith.constant 0 : index
    %c0_35 = arith.constant 0 : index
    %c0_36 = arith.constant 0 : index
    %35 = vector.load %arg4[%c0_34, %c0_35, %c0_36] : memref<3x384x128xbf16, #tpu.memory_space<vmem>>, vector<1x384x128xbf16>
    %36 = vector.shape_cast %35 : vector<1x384x128xbf16> to vector<384x128xbf16>
    %cst_37 = arith.constant dense<0.000000e+00> : vector<256x128xf32>
    %37 = tpu.matmul %34, %36, %cst_37 {dimension_numbers = #tpu.dot_dimension_numbers<[1], [0], [0], [1], [0, 0, 1, 1], [], []>} : vector<256x384xbf16>, vector<384x128xbf16>, vector<256x128xf32> -> vector<256x128xf32>
    %c0_38 = arith.constant 0 : index
    %c0_39 = arith.constant 0 : index
    %38 = vector.load %arg10[%c0_38, %c0_39] : memref<256x128xf32, #tpu.memory_space<vmem>>, vector<256x128xf32>
    tpu.vector_store %arg10[%c0_38, %c0_39], %37 {strides = array<i32>} : memref<256x128xf32, #tpu.memory_space<vmem>>, vector<256x128xf32>,
    %c1_40 = arith.constant 1 : index
    %c15_41 = arith.constant 15 : index
    %c0_42 = arith.constant 0 : index
    %39 = vector.load %arg8[%c1_40, %c15_41, %c0_42] : memref<18x48x128xbf16, #tpu.memory_space<vmem>>, vector<16x16x128xbf16>
    %40 = vector.shape_cast %39 : vector<16x16x128xbf16> to vector<256x128xbf16>
    %c0_43 = arith.constant 0 : index
    %c0_44 = arith.constant 0 : index
    %41 = vector.load %arg9[%c0_43, %c0_44] : memref<256x384xbf16, #tpu.memory_space<vmem>>, vector<256x128xbf16>
    tpu.vector_store %arg9[%c0_43, %c0_44], %40 {strides = array<i32>} : memref<256x384xbf16, #tpu.memory_space<vmem>>, vector<256x128xbf16>,
    %c1_45 = arith.constant 1 : index
    %c16_46 = arith.constant 16 : index
    %c0_47 = arith.constant 0 : index
    %42 = vector.load %arg8[%c1_45, %c16_46, %c0_47] : memref<18x48x128xbf16, #tpu.memory_space<vmem>>, vector<16x16x128xbf16>
    %43 = vector.shape_cast %42 : vector<16x16x128xbf16> to vector<256x128xbf16>
    %c0_48 = arith.constant 0 : index
    %c128_49 = arith.constant 128 : index
    %44 = vector.load %arg9[%c0_48, %c128_49] : memref<256x384xbf16, #tpu.memory_space<vmem>>, vector<256x128xbf16>
    tpu.vector_store %arg9[%c0_48, %c128_49], %43 {strides = array<i32>} : memref<256x384xbf16, #tpu.memory_space<vmem>>, vector<256x128xbf16>,
    %c1_50 = arith.constant 1 : index
    %c17_51 = arith.constant 17 : index
    %c0_52 = arith.constant 0 : index
    %45 = vector.load %arg8[%c1_50, %c17_51, %c0_52] : memref<18x48x128xbf16, #tpu.memory_space<vmem>>, vector<16x16x128xbf16>
    %46 = vector.shape_cast %45 : vector<16x16x128xbf16> to vector<256x128xbf16>
    %c0_53 = arith.constant 0 : index
    %c256_54 = arith.constant 256 : index
    %47 = vector.load %arg9[%c0_53, %c256_54] : memref<256x384xbf16, #tpu.memory_space<vmem>>, vector<256x128xbf16>
    tpu.vector_store %arg9[%c0_53, %c256_54], %46 {strides = array<i32>} : memref<256x384xbf16, #tpu.memory_space<vmem>>, vector<256x128xbf16>,
    %c0_55 = arith.constant 0 : index
    %c0_56 = arith.constant 0 : index
    %48 = vector.load %arg9[%c0_55, %c0_56] : memref<256x384xbf16, #tpu.memory_space<vmem>>, vector<256x384xbf16>
    %c1_57 = arith.constant 1 : index
    %c0_58 = arith.constant 0 : index
    %c0_59 = arith.constant 0 : index
    %49 = vector.load %arg4[%c1_57, %c0_58, %c0_59] : memref<3x384x128xbf16, #tpu.memory_space<vmem>>, vector<1x384x128xbf16>
    %50 = vector.shape_cast %49 : vector<1x384x128xbf16> to vector<384x128xbf16>
    %cst_60 = arith.constant dense<0.000000e+00> : vector<256x128xf32>
    %51 = tpu.matmul %48, %50, %cst_60 {dimension_numbers = #tpu.dot_dimension_numbers<[1], [0], [0], [1], [0, 0, 1, 1], [], []>} : vector<256x384xbf16>, vector<384x128xbf16>, vector<256x128xf32> -> vector<256x128xf32>
    %c0_61 = arith.constant 0 : index
    %c0_62 = arith.constant 0 : index
    %52 = vector.load %arg10[%c0_61, %c0_62] : memref<256x128xf32, #tpu.memory_space<vmem>>, vector<256x128xf32>
    %53 = arith.addf %52, %51 : vector<256x128xf32>
    %c0_63 = arith.constant 0 : index
    %c0_64 = arith.constant 0 : index
    %54 = vector.load %arg10[%c0_63, %c0_64] : memref<256x128xf32, #tpu.memory_space<vmem>>, vector<256x128xf32>
    tpu.vector_store %arg10[%c0_63, %c0_64], %53 {strides = array<i32>} : memref<256x128xf32, #tpu.memory_space<vmem>>, vector<256x128xf32>,
    %c2 = arith.constant 2 : index
    %c15_65 = arith.constant 15 : index
    %c0_66 = arith.constant 0 : index
    %55 = vector.load %arg8[%c2, %c15_65, %c0_66] : memref<18x48x128xbf16, #tpu.memory_space<vmem>>, vector<16x16x128xbf16>
    %56 = vector.shape_cast %55 : vector<16x16x128xbf16> to vector<256x128xbf16>
    %c0_67 = arith.constant 0 : index
    %c0_68 = arith.constant 0 : index
    %57 = vector.load %arg9[%c0_67, %c0_68] : memref<256x384xbf16, #tpu.memory_space<vmem>>, vector<256x128xbf16>
    tpu.vector_store %arg9[%c0_67, %c0_68], %56 {strides = array<i32>} : memref<256x384xbf16, #tpu.memory_space<vmem>>, vector<256x128xbf16>,
    %c2_69 = arith.constant 2 : index
    %c16_70 = arith.constant 16 : index
    %c0_71 = arith.constant 0 : index
    %58 = vector.load %arg8[%c2_69, %c16_70, %c0_71] : memref<18x48x128xbf16, #tpu.memory_space<vmem>>, vector<16x16x128xbf16>
    %59 = vector.shape_cast %58 : vector<16x16x128xbf16> to vector<256x128xbf16>
    %c0_72 = arith.constant 0 : index
    %c128_73 = arith.constant 128 : index
    %60 = vector.load %arg9[%c0_72, %c128_73] : memref<256x384xbf16, #tpu.memory_space<vmem>>, vector<256x128xbf16>
    tpu.vector_store %arg9[%c0_72, %c128_73], %59 {strides = array<i32>} : memref<256x384xbf16, #tpu.memory_space<vmem>>, vector<256x128xbf16>,
    %c2_74 = arith.constant 2 : index
    %c17_75 = arith.constant 17 : index
    %c0_76 = arith.constant 0 : index
    %61 = vector.load %arg8[%c2_74, %c17_75, %c0_76] : memref<18x48x128xbf16, #tpu.memory_space<vmem>>, vector<16x16x128xbf16>
    %62 = vector.shape_cast %61 : vector<16x16x128xbf16> to vector<256x128xbf16>
    %c0_77 = arith.constant 0 : index
    %c256_78 = arith.constant 256 : index
    %63 = vector.load %arg9[%c0_77, %c256_78] : memref<256x384xbf16, #tpu.memory_space<vmem>>, vector<256x128xbf16>
    tpu.vector_store %arg9[%c0_77, %c256_78], %62 {strides = array<i32>} : memref<256x384xbf16, #tpu.memory_space<vmem>>, vector<256x128xbf16>,
    %c0_79 = arith.constant 0 : index
    %c0_80 = arith.constant 0 : index
    %64 = vector.load %arg9[%c0_79, %c0_80] : memref<256x384xbf16, #tpu.memory_space<vmem>>, vector<256x384xbf16>
    %c2_81 = arith.constant 2 : index
    %c0_82 = arith.constant 0 : index
    %c0_83 = arith.constant 0 : index
    %65 = vector.load %arg4[%c2_81, %c0_82, %c0_83] : memref<3x384x128xbf16, #tpu.memory_space<vmem>>, vector<1x384x128xbf16>
    %66 = vector.shape_cast %65 : vector<1x384x128xbf16> to vector<384x128xbf16>
    %cst_84 = arith.constant dense<0.000000e+00> : vector<256x128xf32>
    %67 = tpu.matmul %64, %66, %cst_84 {dimension_numbers = #tpu.dot_dimension_numbers<[1], [0], [0], [1], [0, 0, 1, 1], [], []>} : vector<256x384xbf16>, vector<384x128xbf16>, vector<256x128xf32> -> vector<256x128xf32>
    %c0_85 = arith.constant 0 : index
    %c0_86 = arith.constant 0 : index
    %68 = vector.load %arg10[%c0_85, %c0_86] : memref<256x128xf32, #tpu.memory_space<vmem>>, vector<256x128xf32>
    %69 = arith.addf %68, %67 : vector<256x128xf32>
    %c0_87 = arith.constant 0 : index
    %c0_88 = arith.constant 0 : index
    %70 = vector.load %arg10[%c0_87, %c0_88] : memref<256x128xf32, #tpu.memory_space<vmem>>, vector<256x128xf32>
    tpu.vector_store %arg10[%c0_87, %c0_88], %69 {strides = array<i32>} : memref<256x128xf32, #tpu.memory_space<vmem>>, vector<256x128xf32>,
    %c0_89 = arith.constant 0 : index
    %c0_90 = arith.constant 0 : index
    %71 = vector.load %arg10[%c0_89, %c0_90] : memref<256x128xf32, #tpu.memory_space<vmem>>, vector<256x128xf32>
    %72 = arith.truncf %71 : vector<256x128xf32> to vector<256x128xbf16>
    %c0_91 = arith.constant 0 : index
    %c0_92 = arith.constant 0 : index
    %c0_93 = arith.constant 0 : index
    %73 = vector.load %arg5[%c0_91, %c0_92, %c0_93] : memref<1x256x128xbf16, #tpu.memory_space<vmem>>, vector<1x256x128xbf16>
    %74 = vector.shape_cast %73 : vector<1x256x128xbf16> to vector<256x128xbf16>
    %75 = vector.shape_cast %72 : vector<256x128xbf16> to vector<1x256x128xbf16>
    tpu.vector_store %arg5[%c0_91, %c0_92, %c0_93], %75 {strides = array<i32>} : memref<1x256x128xbf16, #tpu.memory_space<vmem>>, vector<1x256x128xbf16>,
    %cst_94 = arith.constant dense<0.000000e+00> : vector<128xf32>
    %76 = vector.multi_reduction <add>, %71, %cst_94 [0] : vector<256x128xf32> to vector<128xf32>
    %77 = vector.shape_cast %76 : vector<128xf32> to vector<1x128xf32>
    %78 = vector.shape_cast %77 : vector<1x128xf32> to vector<1x128xf32>
    %79 = vector.broadcast %78 : vector<1x128xf32> to vector<8x128xf32>
    %c0_95 = arith.constant 0 : index
    %c0_96 = arith.constant 0 : index
    %c0_97 = arith.constant 0 : index
    %80 = vector.load %arg6[%c0_95, %c0_96, %c0_97] : memref<1x8x128xf32, #tpu.memory_space<vmem>>, vector<1x8x128xf32>
    %81 = vector.shape_cast %80 : vector<1x8x128xf32> to vector<8x128xf32>
    %82 = vector.shape_cast %79 : vector<8x128xf32> to vector<1x8x128xf32>
    tpu.vector_store %arg6[%c0_95, %c0_96, %c0_97], %82 {strides = array<i32>} : memref<1x8x128xf32, #tpu.memory_space<vmem>>, vector<1x8x128xf32>,
    %83 = arith.mulf %71, %71 : vector<256x128xf32>
    %cst_98 = arith.constant dense<0.000000e+00> : vector<128xf32>
    %84 = vector.multi_reduction <add>, %83, %cst_98 [0] : vector<256x128xf32> to vector<128xf32>
    %85 = vector.shape_cast %84 : vector<128xf32> to vector<1x128xf32>
    %86 = vector.shape_cast %85 : vector<1x128xf32> to vector<1x128xf32>
    %87 = vector.broadcast %86 : vector<1x128xf32> to vector<8x128xf32>
    %c0_99 = arith.constant 0 : index
    %c0_100 = arith.constant 0 : index
    %c0_101 = arith.constant 0 : index
    %88 = vector.load %arg7[%c0_99, %c0_100, %c0_101] : memref<1x8x128xf32, #tpu.memory_space<vmem>>, vector<1x8x128xf32>
    %89 = vector.shape_cast %88 : vector<1x8x128xf32> to vector<8x128xf32>
    %90 = vector.shape_cast %87 : vector<8x128xf32> to vector<1x8x128xf32>
    tpu.vector_store %arg7[%c0_99, %c0_100, %c0_101], %90 {strides = array<i32>} : memref<1x8x128xf32, #tpu.memory_space<vmem>>, vector<1x8x128xf32>,
    return
  }
  func.func @transform_0(%arg0: i32) -> (i32, i32, i32, i32) {
    %c0_i32 = arith.constant 0 : i32
    %c0_i32_0 = arith.constant 0 : i32
    %c0_i32_1 = arith.constant 0 : i32
    %c0_i32_2 = arith.constant 0 : i32
    return %arg0, %c0_i32, %c0_i32_0, %c0_i32_1 : i32, i32, i32, i32
  }
  func.func @transform_1(%arg0: i32) -> (i32, i32) {
    %c0_i32 = arith.constant 0 : i32
    %c0_i32_0 = arith.constant 0 : i32
    %c0_i32_1 = arith.constant 0 : i32
    return %c0_i32, %c0_i32_0 : i32, i32
  }
  func.func @transform_2(%arg0: i32) -> (i32, i32) {
    %c0_i32 = arith.constant 0 : i32
    %c0_i32_0 = arith.constant 0 : i32
    %c0_i32_1 = arith.constant 0 : i32
    return %c0_i32, %c0_i32_0 : i32, i32
  }
  func.func @transform_3(%arg0: i32) -> (i32, i32, i32) {
    %c0_i32 = arith.constant 0 : i32
    %c0_i32_0 = arith.constant 0 : i32
    %c0_i32_1 = arith.constant 0 : i32
    %c0_i32_2 = arith.constant 0 : i32
    return %c0_i32, %c0_i32_0, %c0_i32_1 : i32, i32, i32
  }
  func.func @transform_4(%arg0: i32) -> (i32, i32, i32) {
    %c0_i32 = arith.constant 0 : i32
    %c0_i32_0 = arith.constant 0 : i32
    %c0_i32_1 = arith.constant 0 : i32
    return %arg0, %c0_i32, %c0_i32_0 : i32, i32, i32
  }
  func.func @transform_5(%arg0: i32) -> (i32, i32, i32) {
    %c0_i32 = arith.constant 0 : i32
    %c0_i32_0 = arith.constant 0 : i32
    %c0_i32_1 = arith.constant 0 : i32
    return %arg0, %c0_i32, %c0_i32_0 : i32, i32, i32
  }
  func.func @transform_6(%arg0: i32) -> (i32, i32, i32) {
    %c0_i32 = arith.constant 0 : i32
    %c0_i32_0 = arith.constant 0 : i32
    %c0_i32_1 = arith.constant 0 : i32
    return %arg0, %c0_i32, %c0_i32_0 : i32, i32, i32
  }
}

module attributes {stable_mosaic.version = 11 : i64} {
  func.func @_stage3_kernel(%arg0: i32, %arg1: memref<128x128xbf16, #tpu.memory_space<vmem>>, %arg2: memref<1x128xf32, #tpu.memory_space<vmem>>, %arg3: memref<1x128xf32, #tpu.memory_space<vmem>>, %arg4: memref<128x128xbf16, #tpu.memory_space<vmem>>, %arg5: memref<1x8x128xf32, #tpu.memory_space<vmem>>, %arg6: memref<1x8x128xf32, #tpu.memory_space<vmem>>) attributes {dimension_semantics = [#tpu.dimension_semantics<parallel>], iteration_bounds = array<i64: 4>, scalar_prefetch = 0 : i64, scratch_operands = 0 : i64, tpu.core_type = #tpu.core_type<tc>, window_params = [{transform_indices = @transform_0, window_bounds = array<i64: 128, 128>}, {pipeline_mode = #tpu.pipeline_mode<synchronous>, transform_indices = @transform_1, window_bounds = array<i64: 1, 128>}, {pipeline_mode = #tpu.pipeline_mode<synchronous>, transform_indices = @transform_2, window_bounds = array<i64: 1, 128>}, {pipeline_mode = #tpu.pipeline_mode<synchronous>, transform_indices = @transform_3, window_bounds = array<i64: 128, 128>}, {transform_indices = @transform_4, window_bounds = array<i64: 1, 8, 128>}, {transform_indices = @transform_5, window_bounds = array<i64: 1, 8, 128>}]} {
    %c0 = arith.constant 0 : index
    %c0_0 = arith.constant 0 : index
    %0 = vector.load %arg1[%c0, %c0_0] : memref<128x128xbf16, #tpu.memory_space<vmem>>, vector<128x128xbf16>
    %1 = arith.extf %0 : vector<128x128xbf16> to vector<128x128xf32>
    %c0_1 = arith.constant 0 : index
    %c0_2 = arith.constant 0 : index
    %2 = vector.load %arg2[%c0_1, %c0_2] : memref<1x128xf32, #tpu.memory_space<vmem>>, vector<1x128xf32>
    %3 = vector.broadcast %2 : vector<1x128xf32> to vector<128x128xf32>
    %4 = arith.subf %1, %3 : vector<128x128xf32>
    %c0_3 = arith.constant 0 : index
    %c0_4 = arith.constant 0 : index
    %5 = vector.load %arg3[%c0_3, %c0_4] : memref<1x128xf32, #tpu.memory_space<vmem>>, vector<1x128xf32>
    %6 = vector.broadcast %5 : vector<1x128xf32> to vector<128x128xf32>
    %7 = arith.mulf %4, %6 : vector<128x128xf32>
    %cst = arith.constant 0.000000e+00 : f32
    %8 = vector.broadcast %cst : f32 to vector<128x128xf32>
    %9 = arith.maximumf %7, %8 : vector<128x128xf32>
    %10 = arith.truncf %9 : vector<128x128xf32> to vector<128x128xbf16>
    %c0_5 = arith.constant 0 : index
    %c0_6 = arith.constant 0 : index
    %11 = vector.load %arg4[%c0_5, %c0_6] : memref<128x128xbf16, #tpu.memory_space<vmem>>, vector<128x128xbf16>
    %cst_7 = arith.constant dense<0.000000e+00> : vector<128x128xf32>
    %12 = tpu.matmul %10, %11, %cst_7 {dimension_numbers = #tpu.dot_dimension_numbers<[1], [0], [0], [1], [0, 0, 1, 1], [], []>} : vector<128x128xbf16>, vector<128x128xbf16>, vector<128x128xf32> -> vector<128x128xf32>
    %cst_8 = arith.constant dense<0.000000e+00> : vector<128xf32>
    %13 = vector.multi_reduction <add>, %12, %cst_8 [0] : vector<128x128xf32> to vector<128xf32>
    %14 = vector.shape_cast %13 : vector<128xf32> to vector<1x128xf32>
    %15 = vector.shape_cast %14 : vector<1x128xf32> to vector<1x128xf32>
    %16 = vector.broadcast %15 : vector<1x128xf32> to vector<8x128xf32>
    %c0_9 = arith.constant 0 : index
    %c0_10 = arith.constant 0 : index
    %c0_11 = arith.constant 0 : index
    %17 = vector.load %arg5[%c0_9, %c0_10, %c0_11] : memref<1x8x128xf32, #tpu.memory_space<vmem>>, vector<1x8x128xf32>
    %18 = vector.shape_cast %17 : vector<1x8x128xf32> to vector<8x128xf32>
    %19 = vector.shape_cast %16 : vector<8x128xf32> to vector<1x8x128xf32>
    tpu.vector_store %arg5[%c0_9, %c0_10, %c0_11], %19 {strides = array<i32>} : memref<1x8x128xf32, #tpu.memory_space<vmem>>, vector<1x8x128xf32>,
    %20 = arith.mulf %12, %12 : vector<128x128xf32>
    %cst_12 = arith.constant dense<0.000000e+00> : vector<128xf32>
    %21 = vector.multi_reduction <add>, %20, %cst_12 [0] : vector<128x128xf32> to vector<128xf32>
    %22 = vector.shape_cast %21 : vector<128xf32> to vector<1x128xf32>
    %23 = vector.shape_cast %22 : vector<1x128xf32> to vector<1x128xf32>
    %24 = vector.broadcast %23 : vector<1x128xf32> to vector<8x128xf32>
    %c0_13 = arith.constant 0 : index
    %c0_14 = arith.constant 0 : index
    %c0_15 = arith.constant 0 : index
    %25 = vector.load %arg6[%c0_13, %c0_14, %c0_15] : memref<1x8x128xf32, #tpu.memory_space<vmem>>, vector<1x8x128xf32>
    %26 = vector.shape_cast %25 : vector<1x8x128xf32> to vector<8x128xf32>
    %27 = vector.shape_cast %24 : vector<8x128xf32> to vector<1x8x128xf32>
    tpu.vector_store %arg6[%c0_13, %c0_14, %c0_15], %27 {strides = array<i32>} : memref<1x8x128xf32, #tpu.memory_space<vmem>>, vector<1x8x128xf32>,
    return
  }
  func.func @transform_0(%arg0: i32) -> (i32, i32) {
    %c0_i32 = arith.constant 0 : i32
    %c0_i32_0 = arith.constant 0 : i32
    return %arg0, %c0_i32 : i32, i32
  }
  func.func @transform_1(%arg0: i32) -> (i32, i32) {
    %c0_i32 = arith.constant 0 : i32
    %c0_i32_0 = arith.constant 0 : i32
    %c0_i32_1 = arith.constant 0 : i32
    return %c0_i32, %c0_i32_0 : i32, i32
  }
  func.func @transform_2(%arg0: i32) -> (i32, i32) {
    %c0_i32 = arith.constant 0 : i32
    %c0_i32_0 = arith.constant 0 : i32
    %c0_i32_1 = arith.constant 0 : i32
    return %c0_i32, %c0_i32_0 : i32, i32
  }
  func.func @transform_3(%arg0: i32) -> (i32, i32) {
    %c0_i32 = arith.constant 0 : i32
    %c0_i32_0 = arith.constant 0 : i32
    %c0_i32_1 = arith.constant 0 : i32
    return %c0_i32, %c0_i32_0 : i32, i32
  }
  func.func @transform_4(%arg0: i32) -> (i32, i32, i32) {
    %c0_i32 = arith.constant 0 : i32
    %c0_i32_0 = arith.constant 0 : i32
    %c0_i32_1 = arith.constant 0 : i32
    return %arg0, %c0_i32, %c0_i32_0 : i32, i32, i32
  }
  func.func @transform_5(%arg0: i32) -> (i32, i32, i32) {
    %c0_i32 = arith.constant 0 : i32
    %c0_i32_0 = arith.constant 0 : i32
    %c0_i32_1 = arith.constant 0 : i32
    return %arg0, %c0_i32, %c0_i32_0 : i32, i32, i32
  }
}

module attributes {stable_mosaic.version = 11 : i64} {
  func.func @_stage4_kernel(%arg0: i32, %arg1: memref<128x128xbf16, #tpu.memory_space<vmem>>, %arg2: memref<1x128xf32, #tpu.memory_space<vmem>>, %arg3: memref<1x128xf32, #tpu.memory_space<vmem>>, %arg4: memref<128x128xbf16, #tpu.memory_space<vmem>>, %arg5: memref<1x128xf32, #tpu.memory_space<vmem>>, %arg6: memref<1x128xf32, #tpu.memory_space<vmem>>, %arg7: memref<128x128xbf16, #tpu.memory_space<vmem>>, %arg8: memref<128x128xf32, #tpu.memory_space<vmem>>) attributes {dimension_semantics = [#tpu.dimension_semantics<parallel>], iteration_bounds = array<i64: 4>, scalar_prefetch = 0 : i64, scratch_operands = 0 : i64, tpu.core_type = #tpu.core_type<tc>, window_params = [{transform_indices = @transform_0, window_bounds = array<i64: 128, 128>}, {pipeline_mode = #tpu.pipeline_mode<synchronous>, transform_indices = @transform_1, window_bounds = array<i64: 1, 128>}, {pipeline_mode = #tpu.pipeline_mode<synchronous>, transform_indices = @transform_2, window_bounds = array<i64: 1, 128>}, {pipeline_mode = #tpu.pipeline_mode<synchronous>, transform_indices = @transform_3, window_bounds = array<i64: 128, 128>}, {pipeline_mode = #tpu.pipeline_mode<synchronous>, transform_indices = @transform_4, window_bounds = array<i64: 1, 128>}, {pipeline_mode = #tpu.pipeline_mode<synchronous>, transform_indices = @transform_5, window_bounds = array<i64: 1, 128>}, {transform_indices = @transform_6, window_bounds = array<i64: 128, 128>}, {transform_indices = @transform_7, window_bounds = array<i64: 128, 128>}]} {
    %c0 = arith.constant 0 : index
    %c0_0 = arith.constant 0 : index
    %0 = vector.load %arg1[%c0, %c0_0] : memref<128x128xbf16, #tpu.memory_space<vmem>>, vector<128x128xbf16>
    %1 = arith.extf %0 : vector<128x128xbf16> to vector<128x128xf32>
    %c0_1 = arith.constant 0 : index
    %c0_2 = arith.constant 0 : index
    %2 = vector.load %arg2[%c0_1, %c0_2] : memref<1x128xf32, #tpu.memory_space<vmem>>, vector<1x128xf32>
    %3 = vector.broadcast %2 : vector<1x128xf32> to vector<128x128xf32>
    %4 = arith.subf %1, %3 : vector<128x128xf32>
    %c0_3 = arith.constant 0 : index
    %c0_4 = arith.constant 0 : index
    %5 = vector.load %arg3[%c0_3, %c0_4] : memref<1x128xf32, #tpu.memory_space<vmem>>, vector<1x128xf32>
    %6 = vector.broadcast %5 : vector<1x128xf32> to vector<128x128xf32>
    %7 = arith.mulf %4, %6 : vector<128x128xf32>
    %cst = arith.constant 0.000000e+00 : f32
    %8 = vector.broadcast %cst : f32 to vector<128x128xf32>
    %9 = arith.maximumf %7, %8 : vector<128x128xf32>
    %10 = arith.truncf %9 : vector<128x128xf32> to vector<128x128xbf16>
    %c0_5 = arith.constant 0 : index
    %c0_6 = arith.constant 0 : index
    %11 = vector.load %arg4[%c0_5, %c0_6] : memref<128x128xbf16, #tpu.memory_space<vmem>>, vector<128x128xbf16>
    %cst_7 = arith.constant dense<0.000000e+00> : vector<128x128xf32>
    %12 = tpu.matmul %10, %11, %cst_7 {dimension_numbers = #tpu.dot_dimension_numbers<[1], [0], [0], [1], [0, 0, 1, 1], [], []>} : vector<128x128xbf16>, vector<128x128xbf16>, vector<128x128xf32> -> vector<128x128xf32>
    %c0_8 = arith.constant 0 : index
    %c0_9 = arith.constant 0 : index
    %13 = vector.load %arg7[%c0_8, %c0_9] : memref<128x128xbf16, #tpu.memory_space<vmem>>, vector<128x128xbf16>
    %14 = arith.extf %13 : vector<128x128xbf16> to vector<128x128xf32>
    %c0_10 = arith.constant 0 : index
    %c0_11 = arith.constant 0 : index
    %15 = vector.load %arg5[%c0_10, %c0_11] : memref<1x128xf32, #tpu.memory_space<vmem>>, vector<1x128xf32>
    %16 = vector.broadcast %15 : vector<1x128xf32> to vector<128x128xf32>
    %17 = arith.subf %12, %16 : vector<128x128xf32>
    %c0_12 = arith.constant 0 : index
    %c0_13 = arith.constant 0 : index
    %18 = vector.load %arg6[%c0_12, %c0_13] : memref<1x128xf32, #tpu.memory_space<vmem>>, vector<1x128xf32>
    %19 = vector.broadcast %18 : vector<1x128xf32> to vector<128x128xf32>
    %20 = arith.mulf %17, %19 : vector<128x128xf32>
    %21 = arith.addf %20, %14 : vector<128x128xf32>
    %cst_14 = arith.constant 0.000000e+00 : f32
    %22 = vector.broadcast %cst_14 : f32 to vector<128x128xf32>
    %23 = arith.maximumf %21, %22 : vector<128x128xf32>
    %c0_15 = arith.constant 0 : index
    %c0_16 = arith.constant 0 : index
    %24 = vector.load %arg8[%c0_15, %c0_16] : memref<128x128xf32, #tpu.memory_space<vmem>>, vector<128x128xf32>
    tpu.vector_store %arg8[%c0_15, %c0_16], %23 {strides = array<i32>} : memref<128x128xf32, #tpu.memory_space<vmem>>, vector<128x128xf32>,
    return
  }
  func.func @transform_0(%arg0: i32) -> (i32, i32) {
    %c0_i32 = arith.constant 0 : i32
    %c0_i32_0 = arith.constant 0 : i32
    return %arg0, %c0_i32 : i32, i32
  }
  func.func @transform_1(%arg0: i32) -> (i32, i32) {
    %c0_i32 = arith.constant 0 : i32
    %c0_i32_0 = arith.constant 0 : i32
    %c0_i32_1 = arith.constant 0 : i32
    return %c0_i32, %c0_i32_0 : i32, i32
  }
  func.func @transform_2(%arg0: i32) -> (i32, i32) {
    %c0_i32 = arith.constant 0 : i32
    %c0_i32_0 = arith.constant 0 : i32
    %c0_i32_1 = arith.constant 0 : i32
    return %c0_i32, %c0_i32_0 : i32, i32
  }
  func.func @transform_3(%arg0: i32) -> (i32, i32) {
    %c0_i32 = arith.constant 0 : i32
    %c0_i32_0 = arith.constant 0 : i32
    %c0_i32_1 = arith.constant 0 : i32
    return %c0_i32, %c0_i32_0 : i32, i32
  }
  func.func @transform_4(%arg0: i32) -> (i32, i32) {
    %c0_i32 = arith.constant 0 : i32
    %c0_i32_0 = arith.constant 0 : i32
    %c0_i32_1 = arith.constant 0 : i32
    return %c0_i32, %c0_i32_0 : i32, i32
  }
  func.func @transform_5(%arg0: i32) -> (i32, i32) {
    %c0_i32 = arith.constant 0 : i32
    %c0_i32_0 = arith.constant 0 : i32
    %c0_i32_1 = arith.constant 0 : i32
    return %c0_i32, %c0_i32_0 : i32, i32
  }
  func.func @transform_6(%arg0: i32) -> (i32, i32) {
    %c0_i32 = arith.constant 0 : i32
    %c0_i32_0 = arith.constant 0 : i32
    return %arg0, %c0_i32 : i32, i32
  }
  func.func @transform_7(%arg0: i32) -> (i32, i32) {
    %c0_i32 = arith.constant 0 : i32
    %c0_i32_0 = arith.constant 0 : i32
    return %arg0, %c0_i32 : i32, i32
  }
}

</mosaic_0001>

<llo_original>
// kernel: resnet_block50_forward.6
$region0: #{resnet_block50_forward.6}
  #allocation0 [shape = 'u32[]', space=smem, size = 0x4, offset = 0x4, fixed_abs, tag = 'smem constant byte address 0x4 - core index']
  #allocation1 [shape = 'u32[144,128]{1,0:T(1,128)}', space=vmem, size = 0x12000, scoped, tag = 'internal scratch']
  %s0 = inlined_call_operand.vmem [shape: bf16[512,128], index: 0, kind: input, shape index: {}]
  %s1 = inlined_call_operand.vmem [shape: f32[1,128], index: 1, kind: input, shape index: {}]
  %s2 = inlined_call_operand.vmem [shape: f32[1,128], index: 2, kind: input, shape index: {}]
  %s3 = inlined_call_operand.vmem [shape: bf16[128,128], index: 3, kind: input, shape index: {}]
  %s4 = inlined_call_operand.vmem [shape: f32[4,8,128], index: 4, kind: output, shape index: {0}]
  %s5 = inlined_call_operand.vmem [shape: f32[4,8,128], index: 5, kind: output, shape index: {1}]
  %6 = xla_tuple %s4, %s5
  %s7 = sld [smem:[#allocation0]]
  $region57: #{resnet_block50_forward.6} parent=0
    _
  %s9 = ssub.s32 1, %s7
  %s10 = scalar_select 0, %s9, %s7
  loop: start=0, step=1, limit=6
  $region2: #{resnet_block50_forward.6} parent=0 // loop_pre_header
    _
  $region3: #{resnet_block50_forward.6} parent=0 // loop_header
    %s12 = sphi 0, %s16
    %p13 = scmp.ge.s32.totalorder %s12, 6
    %s22 = sphi 0, %s24
    %s25 = sphi 0, %s22
    %s26 = sphi 0, %s25
    %s42 = sphi 0, %s26
    %s46 = sphi 0, %s46
    %s48 = sphi 0, %s46
    %s49 = sphi 0, %s48
    %s63 = sphi 0, %s49
    %s67 = sphi 0, %s67
    %s69 = sphi 0, %s67
    %s70 = sphi 0, %s69
    %s84 = sphi 0, %s70
    %s88 = sphi 0, %s88
    %s90 = sphi 0, %s88
    %s91 = sphi 0, %s90
    %s105 = sphi 0, %s91
    %s111 = sphi 0, %s113
    %s114 = sphi 0, %s111
    %s115 = sphi 0, %s114
    %s131 = sphi 0, %s115
    %s137 = sphi 0, %s139
    %s140 = sphi 0, %s137
    %s141 = sphi 0, %s140
    %s157 = sphi 0, %s141
  $region4: #{resnet_block50_forward.6} parent=0 // loop_header_branch
    %15 = sbr.rel (%p13) target = $region8
  $region5: #{resnet_block50_forward.6} parent=0 // loop_body
    %s17 = ssub.s32 %s12, 1
    %s18 = ssub.s32 %s12, 2
    %s19 = sadd.s32 %s12, 1
    %s20 = ssub.s32 %s12, %s19
    %p21 = scmp.eq.s32.totalorder %s20, 0
    %s23 = sadd.s32 %s22, 1
    %s24 = scalar_select %p21, %s22, %s23
    %p27 = pneg %p21
    %p28 = scmp.eq.s32.totalorder %s12, 3
    %p29 = por %p27, %p28
    %p30 = scmp.ne.s32.totalorder %s22, %s25
    %p31 = scmp.eq.s32.totalorder %s12, 0
    %p32 = por %p30, %p31
    %p33 = scmp.ne.s32.totalorder %s22, %s25
    %p34 = scmp.eq.s32.totalorder %s17, 3
    %p35 = por %p33, %p34
    %p36 = scmp.ne.s32.totalorder %s25, %s26
    %p37 = scmp.eq.s32.totalorder %s17, 0
    %p38 = por %p36, %p37
    %p39 = scmp.ne.s32.totalorder %s25, %s26
    %p40 = scmp.eq.s32.totalorder %s18, 3
    %p41 = por %p39, %p40
    %p43 = scmp.ne.s32.totalorder %s26, %s42
    %p44 = scmp.eq.s32.totalorder %s18, 0
    %p45 = por %p43, %p44
    %s47 = sadd.s32 %s46, 1
    %p50 = scmp.eq.s32.totalorder %s12, 3
    %p51 = scmp.ne.s32.totalorder %s46, %s48
    %p52 = scmp.eq.s32.totalorder %s12, 0
    %p53 = por %p51, %p52
    %p54 = scmp.ne.s32.totalorder %s46, %s48
    %p55 = scmp.eq.s32.totalorder %s17, 3
    %p56 = por %p54, %p55
    %p57 = scmp.ne.s32.totalorder %s48, %s49
    %p58 = scmp.eq.s32.totalorder %s17, 0
    %p59 = por %p57, %p58
    %p60 = scmp.ne.s32.totalorder %s48, %s49
    %p61 = scmp.eq.s32.totalorder %s18, 3
    %p62 = por %p60, %p61
    %p64 = scmp.ne.s32.totalorder %s49, %s63
    %p65 = scmp.eq.s32.totalorder %s18, 0
    %p66 = por %p64, %p65
    %s68 = sadd.s32 %s67, 1
    %p71 = scmp.eq.s32.totalorder %s12, 3
    %p72 = scmp.ne.s32.totalorder %s67, %s69
    %p73 = scmp.eq.s32.totalorder %s12, 0
    %p74 = por %p72, %p73
    %p75 = scmp.ne.s32.totalorder %s67, %s69
    %p76 = scmp.eq.s32.totalorder %s17, 3
    %p77 = por %p75, %p76
    %p78 = scmp.ne.s32.totalorder %s69, %s70
    %p79 = scmp.eq.s32.totalorder %s17, 0
    %p80 = por %p78, %p79
    %p81 = scmp.ne.s32.totalorder %s69, %s70
    %p82 = scmp.eq.s32.totalorder %s18, 3
    %p83 = por %p81, %p82
    %p85 = scmp.ne.s32.totalorder %s70, %s84
    %p86 = scmp.eq.s32.totalorder %s18, 0
    %p87 = por %p85, %p86
    %s89 = sadd.s32 %s88, 1
    %p92 = scmp.eq.s32.totalorder %s12, 3
    %p93 = scmp.ne.s32.totalorder %s88, %s90
    %p94 = scmp.eq.s32.totalorder %s12, 0
    %p95 = por %p93, %p94
    %p96 = scmp.ne.s32.totalorder %s88, %s90
    %p97 = scmp.eq.s32.totalorder %s17, 3
    %p98 = por %p96, %p97
    %p99 = scmp.ne.s32.totalorder %s90, %s91
    %p100 = scmp.eq.s32.totalorder %s17, 0
    %p101 = por %p99, %p100
    %p102 = scmp.ne.s32.totalorder %s90, %s91
    %p103 = scmp.eq.s32.totalorder %s18, 3
    %p104 = por %p102, %p103
    %p106 = scmp.ne.s32.totalorder %s91, %s105
    %p107 = scmp.eq.s32.totalorder %s18, 0
    %p108 = por %p106, %p107
    %s109 = ssub.s32 %s12, %s19
    %p110 = scmp.eq.s32.totalorder %s109, 0
    %s112 = sadd.s32 %s111, 1
    %s113 = scalar_select %p110, %s111, %s112
    %p116 = pneg %p110
    %p117 = scmp.eq.s32.totalorder %s12, 3
    %p118 = por %p116, %p117
    %p119 = scmp.ne.s32.totalorder %s111, %s114
    %p120 = scmp.eq.s32.totalorder %s12, 0
    %p121 = por %p119, %p120
    %p122 = scmp.ne.s32.totalorder %s111, %s114
    %p123 = scmp.eq.s32.totalorder %s17, 3
    %p124 = por %p122, %p123
    %p125 = scmp.ne.s32.totalorder %s114, %s115
    %p126 = scmp.eq.s32.totalorder %s17, 0
    %p127 = por %p125, %p126
    %p128 = scmp.ne.s32.totalorder %s114, %s115
    %p129 = scmp.eq.s32.totalorder %s18, 3
    %p130 = por %p128, %p129
    %p132 = scmp.ne.s32.totalorder %s115, %s131
    %p133 = scmp.eq.s32.totalorder %s18, 0
    %p134 = por %p132, %p133
    %s135 = ssub.s32 %s12, %s19
    %p136 = scmp.eq.s32.totalorder %s135, 0
    %s138 = sadd.s32 %s137, 1
    %s139 = scalar_select %p136, %s137, %s138
    %p142 = pneg %p136
    %p143 = scmp.eq.s32.totalorder %s12, 3
    %p144 = por %p142, %p143
    %p145 = scmp.ne.s32.totalorder %s137, %s140
    %p146 = scmp.eq.s32.totalorder %s12, 0
    %p147 = por %p145, %p146
    %p148 = scmp.ne.s32.totalorder %s137, %s140
    %p149 = scmp.eq.s32.totalorder %s17, 3
    %p150 = por %p148, %p149
    %p151 = scmp.ne.s32.totalorder %s140, %s141
    %p152 = scmp.eq.s32.totalorder %s17, 0
    %p153 = por %p151, %p152
    %p154 = scmp.ne.s32.totalorder %s140, %s141
    %p155 = scmp.eq.s32.totalorder %s18, 3
    %p156 = por %p154, %p155
    %p158 = scmp.ne.s32.totalorder %s141, %s157
    %p159 = scmp.eq.s32.totalorder %s18, 0
    %p160 = por %p158, %p159
    %p161 = scmp.le.s32.totalorder 1, %s12
    %p162 = scmp.lt.s32.totalorder %s12, 5
    %p163 = pnand %p161, %p162
    %p164 = pneg %p163
    // Predicated region
    $region9: #{resnet_block50_forward.6} parent=5 // pred_check
      _
    $region10: #{resnet_block50_forward.6} parent=5 // pred_check_branch
      %166 = sbr.rel (%p163) target = $region12
    $region11: #{resnet_block50_forward.6} parent=5 // pred_region
      %s167 = ssub.s32 %s12, 1
      // Predicated region
      $region13: #{resnet_block50_forward.6} parent=11 // pred_check
        %p168 = pneg %p59
      $region14: #{resnet_block50_forward.6} parent=11 // pred_check_branch
        %170 = sbr.rel (%p168) target = $region16
      $region15: #{resnet_block50_forward.6} parent=11 // pred_region
        _
      $region16: #{resnet_block50_forward.6} parent=11 // pred_fallthru
        _
      // Predicated region
      $region17: #{resnet_block50_forward.6} parent=11 // pred_check
        %p171 = pneg %p80
      $region18: #{resnet_block50_forward.6} parent=11 // pred_check_branch
        %173 = sbr.rel (%p171) target = $region20
      $region19: #{resnet_block50_forward.6} parent=11 // pred_region
        _
      $region20: #{resnet_block50_forward.6} parent=11 // pred_fallthru
        _
      // Predicated region
      $region21: #{resnet_block50_forward.6} parent=11 // pred_check
        %p174 = pneg %p101
      $region22: #{resnet_block50_forward.6} parent=11 // pred_check_branch
        %176 = sbr.rel (%p174) target = $region24
      $region23: #{resnet_block50_forward.6} parent=11 // pred_region
        _
      $region24: #{resnet_block50_forward.6} parent=11 // pred_fallthru
        _
    $region12: #{resnet_block50_forward.6} parent=5 // pred_fallthru
      _
    %p177 = scmp.lt.s32.totalorder %s12, 4
    // Predicated region
    $region25: #{resnet_block50_forward.6} parent=5 // pred_check
      %p178 = pneg %p177
    $region26: #{resnet_block50_forward.6} parent=5 // pred_check_branch
      %180 = sbr.rel (%p178) target = $region28
    $region27: #{resnet_block50_forward.6} parent=5 // pred_region
      // Predicated region
      $region29: #{resnet_block50_forward.6} parent=27 // pred_check
        %p181 = pneg %p32
      $region30: #{resnet_block50_forward.6} parent=27 // pred_check_branch
        %183 = sbr.rel (%p181) target = $region32
      $region31: #{resnet_block50_forward.6} parent=27 // pred_region
        %s184 = smul.u32 16, %s12
        %p185 = scmp.lt.s32.totalorder %s184, 63
        %s186 = scalar_select %p185, %s184, 63
        %s187 = smul.addr %s186, 4
        %s188 = scalar_lea.vmem %s0, %s187
        %s189 = smul.u32 16, %s12
      $region32: #{resnet_block50_forward.6} parent=27 // pred_fallthru
        _
    $region28: #{resnet_block50_forward.6} parent=5 // pred_fallthru
      _
    %p190 = scmp.le.s32.totalorder 1, %s12
    %p191 = scmp.lt.s32.totalorder %s12, 5
    %p192 = pnand %p190, %p191
    %p193 = pneg %p192
    // Predicated region
    $region33: #{resnet_block50_forward.6} parent=5 // pred_check
      _
    $region34: #{resnet_block50_forward.6} parent=5 // pred_check_branch
      %195 = sbr.rel (%p192) target = $region36
    $region35: #{resnet_block50_forward.6} parent=5 // pred_region
      %s196 = ssub.s32 %s12, 1
      %s197 = smul.u32 16, %s17
      %p198 = scmp.lt.s32.totalorder %s197, 63
      %s199 = scalar_select %p198, %s197, 63
      %s200 = smul.addr %s199, 4
      %s201 = scalar_lea.vmem %s0, %s200
      %p202 = pneg %p38
      %p203 = pneg %p35
      %p204 = pneg %p59
      %p205 = pneg %p56
      %p206 = pneg %p80
      %p207 = pneg %p77
      %p208 = pneg %p101
      %p209 = pneg %p98
      %p210 = pneg %p127
      %p211 = pneg %p124
      %p212 = scmp.lt.s32.totalorder %s17, 3
      %s213 = scalar_select %p212, %s17, 3
      %s214 = smul.addr %s213, 8
      %s215 = scalar_lea.vmem %s4, %s214
      %p216 = pneg %p153
      %p217 = pneg %p150
      %p218 = scmp.lt.s32.totalorder %s17, 3
      %s219 = scalar_select %p218, %s17, 3
      %s220 = smul.addr %s219, 8
      %s221 = scalar_lea.vmem %s5, %s220
      %s222 = smul.u32 16, %s17
      %p223 = scmp.lt.s32.totalorder %s222, 63
      %s224 = scalar_select %p223, %s222, 63
      %s225 = smul.addr %s224, 4
      %s226 = scalar_lea.vmem %s0, %s225
      %s227 = smul.u32 16, %s17
      %p228 = scmp.lt.s32.totalorder %s17, 3
      %s229 = scalar_select %p228, %s17, 3
      %s230 = smul.addr %s229, 8
      %s231 = scalar_lea.vmem %s4, %s230
      %p232 = scmp.lt.s32.totalorder %s17, 3
      %s233 = scalar_select %p232, %s17, 3
      %s234 = smul.addr %s233, 8
      %s235 = scalar_lea.vmem %s5, %s234
      %v237 = vld [vmem:[%s226] sm:$0xf]
      %v238 = vld [vmem:[%s226 + $0x4] sm:$0xf]
      %v239 = vld [vmem:[%s226 + $0x8] sm:$0xf]
      %v240 = vld [vmem:[%s226 + $0xc] sm:$0xf]
      %v241 = vld [vmem:[%s226 + $0x10] sm:$0xf]
      %v242 = vld [vmem:[%s226 + $0x14] sm:$0xf]
      %v243 = vld [vmem:[%s226 + $0x18] sm:$0xf]
      %v244 = vld [vmem:[%s226 + $0x1c] sm:$0xf]
      %v245 = vld [vmem:[%s226 + $0x20] sm:$0xf]
      %v246 = vld [vmem:[%s226 + $0x24] sm:$0xf]
      %v247 = vld [vmem:[%s226 + $0x28] sm:$0xf]
      %v248 = vld [vmem:[%s226 + $0x2c] sm:$0xf]
      %v249 = vld [vmem:[%s226 + $0x30] sm:$0xf]
      %v250 = vld [vmem:[%s226 + $0x34] sm:$0xf]
      %v251 = vld [vmem:[%s226 + $0x38] sm:$0xf]
      %v252 = vld [vmem:[%s226 + $0x3c] sm:$0xf]
      %v253 = vunpack.c.l.bf16 %v237
      %v254 = vunpack.c.l.bf16 %v238
      %v255 = vunpack.c.l.bf16 %v239
      %v256 = vunpack.c.l.bf16 %v240
      %v257 = vunpack.c.l.bf16 %v241
      %v258 = vunpack.c.l.bf16 %v242
      %v259 = vunpack.c.l.bf16 %v243
      %v260 = vunpack.c.l.bf16 %v244
      %v261 = vunpack.c.l.bf16 %v245
      %v262 = vunpack.c.l.bf16 %v246
      %v263 = vunpack.c.l.bf16 %v247
      %v264 = vunpack.c.l.bf16 %v248
      %v265 = vunpack.c.l.bf16 %v249
      %v266 = vunpack.c.l.bf16 %v250
      %v267 = vunpack.c.l.bf16 %v251
      %v268 = vunpack.c.l.bf16 %v252
      %v269 = vld [vmem:[%s1] sm:$0x1]
      %v271 = vlaneseq
      %v272 = vshrl.u32 %v271, 7
      %v273 = vsub.s32 0, %v272
      %v274 = vrot.slane %v269, %v273
      %v276 = vsub.f32 %v253, %v274
      %v277 = vsub.f32 %v254, %v274
      %v278 = vsub.f32 %v255, %v274
      %v279 = vsub.f32 %v256, %v274
      %v280 = vsub.f32 %v257, %v274
      %v281 = vsub.f32 %v258, %v274
      %v282 = vsub.f32 %v259, %v274
      %v283 = vsub.f32 %v260, %v274
      %v284 = vsub.f32 %v261, %v274
      %v285 = vsub.f32 %v262, %v274
      %v286 = vsub.f32 %v263, %v274
      %v287 = vsub.f32 %v264, %v274
      %v288 = vsub.f32 %v265, %v274
      %v289 = vsub.f32 %v266, %v274
      %v290 = vsub.f32 %v267, %v274
      %v291 = vsub.f32 %v268, %v274
      %v292 = vld [vmem:[%s2] sm:$0x1]
      %v294 = vlaneseq
      %v295 = vshrl.u32 %v294, 7
      %v296 = vsub.s32 0, %v295
      %v297 = vrot.slane %v292, %v296
      %v299 = vmul.f32 %v276, %v297
      %v300 = vmul.f32 %v277, %v297
      %v301 = vmul.f32 %v278, %v297
      %v302 = vmul.f32 %v279, %v297
      %v303 = vmul.f32 %v280, %v297
      %v304 = vmul.f32 %v281, %v297
      %v305 = vmul.f32 %v282, %v297
      %v306 = vmul.f32 %v283, %v297
      %v307 = vmul.f32 %v284, %v297
      %v308 = vmul.f32 %v285, %v297
      %v309 = vmul.f32 %v286, %v297
      %v310 = vmul.f32 %v287, %v297
      %v311 = vmul.f32 %v288, %v297
      %v312 = vmul.f32 %v289, %v297
      %v313 = vmul.f32 %v290, %v297
      %v314 = vmul.f32 %v291, %v297
      %v315 = vmax.f32 %v299, 0.0
      %v316 = vmax.f32 %v300, 0.0
      %v317 = vmax.f32 %v301, 0.0
      %v318 = vmax.f32 %v302, 0.0
      %v319 = vmax.f32 %v303, 0.0
      %v320 = vmax.f32 %v304, 0.0
      %v321 = vmax.f32 %v305, 0.0
      %v322 = vmax.f32 %v306, 0.0
      %v323 = vmax.f32 %v307, 0.0
      %v324 = vmax.f32 %v308, 0.0
      %v325 = vmax.f32 %v309, 0.0
      %v326 = vmax.f32 %v310, 0.0
      %v327 = vmax.f32 %v311, 0.0
      %v328 = vmax.f32 %v312, 0.0
      %v329 = vmax.f32 %v313, 0.0
      %v330 = vmax.f32 %v314, 0.0
      %v331 = vpack.c.bf16 %v316, %v315
      %v332 = vpack.c.bf16 %v318, %v317
      %v333 = vpack.c.bf16 %v320, %v319
      %v334 = vpack.c.bf16 %v322, %v321
      %v335 = vpack.c.bf16 %v324, %v323
      %v336 = vpack.c.bf16 %v326, %v325
      %v337 = vpack.c.bf16 %v328, %v327
      %v338 = vpack.c.bf16 %v330, %v329
      %v339 = vld [vmem:[%s3] sm:$0xf]
      %v340 = vld [vmem:[%s3 + $0x4] sm:$0xf]
      %v341 = vld [vmem:[%s3 + $0x8] sm:$0xf]
      %v342 = vld [vmem:[%s3 + $0xc] sm:$0xf]
      %v343 = vld [vmem:[%s3 + $0x10] sm:$0xf]
      %v344 = vld [vmem:[%s3 + $0x14] sm:$0xf]
      %v345 = vld [vmem:[%s3 + $0x18] sm:$0xf]
      %v346 = vld [vmem:[%s3 + $0x1c] sm:$0xf]
      %v347 = vld [vmem:[%s3 + $0x20] sm:$0xf]
      %v348 = vld [vmem:[%s3 + $0x24] sm:$0xf]
      %v349 = vld [vmem:[%s3 + $0x28] sm:$0xf]
      %v350 = vld [vmem:[%s3 + $0x2c] sm:$0xf]
      %v351 = vld [vmem:[%s3 + $0x30] sm:$0xf]
      %v352 = vld [vmem:[%s3 + $0x34] sm:$0xf]
      %v353 = vld [vmem:[%s3 + $0x38] sm:$0xf]
      %v354 = vld [vmem:[%s3 + $0x3c] sm:$0xf]
      %v371 = vunpack.c.l.b16 %v339
      %v372 = vunpack.c.l.b16 %v340
      %v373 = vunpack.c.l.b16 %v341
      %v374 = vunpack.c.l.b16 %v342
      %v375 = vunpack.c.l.b16 %v343
      %v376 = vunpack.c.l.b16 %v344
      %v377 = vunpack.c.l.b16 %v345
      %v378 = vunpack.c.l.b16 %v346
      %v379 = vunpack.c.l.b16 %v347
      %v380 = vunpack.c.l.b16 %v348
      %v381 = vunpack.c.l.b16 %v349
      %v382 = vunpack.c.l.b16 %v350
      %v383 = vunpack.c.l.b16 %v351
      %v384 = vunpack.c.l.b16 %v352
      %v385 = vunpack.c.l.b16 %v353
      %v386 = vunpack.c.l.b16 %v354
      %v387 = vpack.c.b16 %v372, %v371
      %v388 = vpack.c.b16 %v374, %v373
      %v389 = vpack.c.b16 %v376, %v375
      %v390 = vpack.c.b16 %v378, %v377
      %v391 = vpack.c.b16 %v380, %v379
      %v392 = vpack.c.b16 %v382, %v381
      %v393 = vpack.c.b16 %v384, %v383
      %v394 = vpack.c.b16 %v386, %v385
      %403 = vmatprep.subr.bf16.mxu0 0
      %404 = vmatpush1.bf16.msra.mxu0 %v387
      %405 = vmatprep.subr.bf16.mxu0 0
      %406 = vmatpush1.bf16.msra.mxu0 %v388
      %407 = vmatprep.subr.bf16.mxu0 0
      %408 = vmatpush1.bf16.msra.mxu0 %v389
      %409 = vmatprep.subr.bf16.mxu0 0
      %410 = vmatpush1.bf16.msra.mxu0 %v390
      %411 = vmatprep.subr.bf16.mxu0 0
      %412 = vmatpush1.bf16.msra.mxu0 %v391
      %413 = vmatprep.subr.bf16.mxu0 0
      %414 = vmatpush1.bf16.msra.mxu0 %v392
      %415 = vmatprep.subr.bf16.mxu0 0
      %416 = vmatpush1.bf16.msra.mxu0 %v393
      %417 = vmatprep.subr.bf16.mxu0 0
      %418 = vmatpush1.bf16.msra.mxu0 %v394
      %419 = vmatprep.subr.bf16.mxu0 0
      %420 = vmatpush1.bf16.msra.mxu0 0
      %421 = vmatprep.subr.bf16.mxu0 0
      %422 = vmatpush1.bf16.msra.mxu0 0
      %423 = vmatprep.subr.bf16.mxu0 0
      %424 = vmatpush1.bf16.msra.mxu0 0
      %425 = vmatprep.subr.bf16.mxu0 0
      %426 = vmatpush1.bf16.msra.mxu0 0
      %427 = vmatprep.subr.bf16.mxu0 0
      %428 = vmatpush1.bf16.msra.mxu0 0
      %429 = vmatprep.subr.bf16.mxu0 0
      %430 = vmatpush1.bf16.msra.mxu0 0
      %431 = vmatprep.subr.bf16.mxu0 0
      %432 = vmatpush1.bf16.msra.mxu0 0
      %433 = vmatprep.subr.bf16.mxu0 0
      %434 = vmatpush1.bf16.msra.mxu0 0
      %435 = vmatprep.mubr.bf16.mxu0 0
      %436 = vmatmul.mubr.bf16.gmra.mrb[0].mxu0 %v331
      %v437 = vpop.f32.mrb[0].mxu0
      %v438 = vadd.f32 0.0, %v437
      %v439 = vpop.f32.mrb[0].mxu0
      %v440 = vpop.f32.mrb[0].mxu0
      %v441 = vadd.f32 0.0, %v440
      %v442 = vpop.f32.mrb[0].mxu0
      %443 = vmatprep.mubr.bf16.mxu0 0
      %444 = vmatmul.mubr.bf16.gmra.mrb[0].mxu0 %v332
      %v445 = vpop.f32.mrb[0].mxu0
      %v446 = vadd.f32 0.0, %v445
      %v447 = vpop.f32.mrb[0].mxu0
      %v448 = vpop.f32.mrb[0].mxu0
      %v449 = vadd.f32 0.0, %v448
      %v450 = vpop.f32.mrb[0].mxu0
      %451 = vmatprep.mubr.bf16.mxu0 0
      %452 = vmatmul.mubr.bf16.gmra.mrb[0].mxu0 %v333
      %v453 = vpop.f32.mrb[0].mxu0
      %v454 = vadd.f32 0.0, %v453
      %v455 = vpop.f32.mrb[0].mxu0
      %v456 = vpop.f32.mrb[0].mxu0
      %v457 = vadd.f32 0.0, %v456
      %v458 = vpop.f32.mrb[0].mxu0
      %459 = vmatprep.mubr.bf16.mxu0 0
      %460 = vmatmul.mubr.bf16.gmra.mrb[0].mxu0 %v334
      %v461 = vpop.f32.mrb[0].mxu0
      %v462 = vadd.f32 0.0, %v461
      %v463 = vpop.f32.mrb[0].mxu0
      %v464 = vpop.f32.mrb[0].mxu0
      %v465 = vadd.f32 0.0, %v464
      %v466 = vpop.f32.mrb[0].mxu0
      %467 = vmatprep.mubr.bf16.mxu0 0
      %468 = vmatmul.mubr.bf16.gmra.mrb[0].mxu0 %v335
      %v469 = vpop.f32.mrb[0].mxu0
      %v470 = vadd.f32 0.0, %v469
      %v471 = vpop.f32.mrb[0].mxu0
      %v472 = vpop.f32.mrb[0].mxu0
      %v473 = vadd.f32 0.0, %v472
      %v474 = vpop.f32.mrb[0].mxu0
      %475 = vmatprep.mubr.bf16.mxu0 0
      %476 = vmatmul.mubr.bf16.gmra.mrb[0].mxu0 %v336
      %v477 = vpop.f32.mrb[0].mxu0
      %v478 = vadd.f32 0.0, %v477
      %v479 = vpop.f32.mrb[0].mxu0
      %v480 = vpop.f32.mrb[0].mxu0
      %v481 = vadd.f32 0.0, %v480
      %v482 = vpop.f32.mrb[0].mxu0
      %483 = vmatprep.mubr.bf16.mxu0 0
      %484 = vmatmul.mubr.bf16.gmra.mrb[0].mxu0 %v337
      %v485 = vpop.f32.mrb[0].mxu0
      %v486 = vadd.f32 0.0, %v485
      %v487 = vpop.f32.mrb[0].mxu0
      %v488 = vpop.f32.mrb[0].mxu0
      %v489 = vadd.f32 0.0, %v488
      %v490 = vpop.f32.mrb[0].mxu0
      %491 = vmatprep.mubr.bf16.mxu0 0
      %492 = vmatmul.mubr.bf16.gmra.mrb[0].mxu0 %v338
      %v493 = vpop.f32.mrb[0].mxu0
      %v494 = vadd.f32 0.0, %v493
      %v495 = vpop.f32.mrb[0].mxu0
      %v496 = vpop.f32.mrb[0].mxu0
      %v497 = vadd.f32 0.0, %v496
      %v498 = vpop.f32.mrb[0].mxu0
      %499 = vdwg.mxu0
      %v500 = vadd.f32 %v438, %v441
      %v501 = vadd.f32 %v500, %v446
      %v502 = vadd.f32 %v501, %v449
      %v503 = vadd.f32 %v502, %v454
      %v504 = vadd.f32 %v503, %v457
      %v505 = vadd.f32 %v504, %v462
      %v506 = vadd.f32 %v505, %v465
      %v507 = vadd.f32 %v506, %v470
      %v508 = vadd.f32 %v507, %v473
      %v509 = vadd.f32 %v508, %v478
      %v510 = vadd.f32 %v509, %v481
      %v511 = vadd.f32 %v510, %v486
      %v512 = vadd.f32 %v511, %v489
      %v513 = vadd.f32 %v512, %v494
      %v514 = vadd.f32 %v513, %v497
      %v515 = vrot.slane %v514, 4
      %v516 = vadd.f32 %v514, %v515
      %v517 = vrot.slane %v516, 2
      %v518 = vadd.f32 %v516, %v517
      %v519 = vrot.slane %v518, 1
      %v520 = vadd.f32 %v518, %v519
      %521 = vst [vmem:[%s231] sm:$0xff] %v520
      %v522 = vmul.f32 %v438, %v438
      %v523 = vmul.f32 %v441, %v441
      %v524 = vmul.f32 %v446, %v446
      %v525 = vmul.f32 %v449, %v449
      %v526 = vmul.f32 %v454, %v454
      %v527 = vmul.f32 %v457, %v457
      %v528 = vmul.f32 %v462, %v462
      %v529 = vmul.f32 %v465, %v465
      %v530 = vmul.f32 %v470, %v470
      %v531 = vmul.f32 %v473, %v473
      %v532 = vmul.f32 %v478, %v478
      %v533 = vmul.f32 %v481, %v481
      %v534 = vmul.f32 %v486, %v486
      %v535 = vmul.f32 %v489, %v489
      %v536 = vmul.f32 %v494, %v494
      %v537 = vmul.f32 %v497, %v497
      %v538 = vadd.f32 %v522, %v523
      %v539 = vadd.f32 %v538, %v524
      %v540 = vadd.f32 %v539, %v525
      %v541 = vadd.f32 %v540, %v526
      %v542 = vadd.f32 %v541, %v527
      %v543 = vadd.f32 %v542, %v528
      %v544 = vadd.f32 %v543, %v529
      %v545 = vadd.f32 %v544, %v530
      %v546 = vadd.f32 %v545, %v531
      %v547 = vadd.f32 %v546, %v532
      %v548 = vadd.f32 %v547, %v533
      %v549 = vadd.f32 %v548, %v534
      %v550 = vadd.f32 %v549, %v535
      %v551 = vadd.f32 %v550, %v536
      %v552 = vadd.f32 %v551, %v537
      %v553 = vrot.slane %v552, 4
      %v554 = vadd.f32 %v552, %v553
      %v555 = vrot.slane %v554, 2
      %v556 = vadd.f32 %v554, %v555
      %v557 = vrot.slane %v556, 1
      %v558 = vadd.f32 %v556, %v557
      %559 = vst [vmem:[%s235] sm:$0xff] %v558
      %p560 = scmp.lt.s32.totalorder %s17, 3
      %s561 = scalar_select %p560, %s17, 3
      %s562 = smul.addr %s561, 8
      %s563 = scalar_lea.vmem %s4, %s562
      %p564 = scmp.lt.s32.totalorder %s17, 3
      %s565 = scalar_select %p564, %s17, 3
      %s566 = smul.addr %s565, 8
      %s567 = scalar_lea.vmem %s5, %s566
      // Predicated region
      $region37: #{resnet_block50_forward.6} parent=35 // pred_check
        %p568 = pneg %p124
      $region38: #{resnet_block50_forward.6} parent=35 // pred_check_branch
        %570 = sbr.rel (%p568) target = $region40
      $region39: #{resnet_block50_forward.6} parent=35 // pred_region
        _
      $region40: #{resnet_block50_forward.6} parent=35 // pred_fallthru
        _
      // Predicated region
      $region41: #{resnet_block50_forward.6} parent=35 // pred_check
        %p571 = pneg %p150
      $region42: #{resnet_block50_forward.6} parent=35 // pred_check_branch
        %573 = sbr.rel (%p571) target = $region44
      $region43: #{resnet_block50_forward.6} parent=35 // pred_region
        _
      $region44: #{resnet_block50_forward.6} parent=35 // pred_fallthru
        _
    $region36: #{resnet_block50_forward.6} parent=5 // pred_fallthru
      _
    %p574 = scmp.le.s32.totalorder 2, %s12
    // Predicated region
    $region45: #{resnet_block50_forward.6} parent=5 // pred_check
      %p575 = pneg %p574
    $region46: #{resnet_block50_forward.6} parent=5 // pred_check_branch
      %577 = sbr.rel (%p575) target = $region48
    $region47: #{resnet_block50_forward.6} parent=5 // pred_region
      %s578 = ssub.s32 %s12, 2
      // Predicated region
      $region49: #{resnet_block50_forward.6} parent=47 // pred_check
        %p579 = pneg %p130
      $region50: #{resnet_block50_forward.6} parent=47 // pred_check_branch
        %581 = sbr.rel (%p579) target = $region52
      $region51: #{resnet_block50_forward.6} parent=47 // pred_region
        %p582 = scmp.lt.s32.totalorder %s18, 3
        %s583 = scalar_select %p582, %s18, 3
        %s584 = smul.addr %s583, 8
        %s585 = scalar_lea.vmem %s4, %s584
      $region52: #{resnet_block50_forward.6} parent=47 // pred_fallthru
        _
      // Predicated region
      $region53: #{resnet_block50_forward.6} parent=47 // pred_check
        %p586 = pneg %p156
      $region54: #{resnet_block50_forward.6} parent=47 // pred_check_branch
        %588 = sbr.rel (%p586) target = $region56
      $region55: #{resnet_block50_forward.6} parent=47 // pred_region
        %p589 = scmp.lt.s32.totalorder %s18, 3
        %s590 = scalar_select %p589, %s18, 3
        %s591 = smul.addr %s590, 8
        %s592 = scalar_lea.vmem %s5, %s591
      $region56: #{resnet_block50_forward.6} parent=47 // pred_fallthru
        _
    $region48: #{resnet_block50_forward.6} parent=5 // pred_fallthru
      _
  $region6: #{resnet_block50_forward.6} parent=0 // loop_footer
    %s16 = sadd.s32 1, %s12
  $region7: #{resnet_block50_forward.6} parent=0 // loop_footer_branch
    %11 = sbr.rel target = $region3
  $region8: #{resnet_block50_forward.6} parent=0 // loop_exit
    _

// kernel: resnet_block50_forward.4
$region0: #{resnet_block50_forward.4}
  #allocation0 [shape = 'u32[]', space=smem, size = 0x4, offset = 0x4, fixed_abs, tag = 'smem constant byte address 0x4 - core index']
  #allocation1 [shape = 'u32[144,128]{1,0:T(1,128)}', space=vmem, size = 0x12000, scoped, tag = 'internal scratch']
  %s0 = inlined_call_operand.vmem [shape: bf16[512,128], index: 0, kind: input, shape index: {}]
  %s1 = inlined_call_operand.vmem [shape: bf16[128,128], index: 1, kind: input, shape index: {}]
  %s2 = inlined_call_operand.vmem [shape: bf16[512,128], index: 2, kind: output, shape index: {0}]
  %s3 = inlined_call_operand.vmem [shape: f32[4,8,128], index: 3, kind: output, shape index: {1}]
  %s4 = inlined_call_operand.vmem [shape: f32[4,8,128], index: 4, kind: output, shape index: {2}]
  %5 = xla_tuple %s2, %s3, %s4
  %s6 = sld [smem:[#allocation0]]
  $region57: #{resnet_block50_forward.4} parent=0
    _
  %s8 = ssub.s32 1, %s6
  %s9 = scalar_select 0, %s8, %s6
  loop: start=0, step=1, limit=6
  $region2: #{resnet_block50_forward.4} parent=0 // loop_pre_header
    _
  $region3: #{resnet_block50_forward.4} parent=0 // loop_header
    %s11 = sphi 0, %s15
    %p12 = scmp.ge.s32.totalorder %s11, 6
    %s21 = sphi 0, %s23
    %s24 = sphi 0, %s21
    %s25 = sphi 0, %s24
    %s41 = sphi 0, %s25
    %s45 = sphi 0, %s45
    %s47 = sphi 0, %s45
    %s48 = sphi 0, %s47
    %s62 = sphi 0, %s48
    %s68 = sphi 0, %s70
    %s71 = sphi 0, %s68
    %s72 = sphi 0, %s71
    %s88 = sphi 0, %s72
    %s94 = sphi 0, %s96
    %s97 = sphi 0, %s94
    %s98 = sphi 0, %s97
    %s114 = sphi 0, %s98
    %s120 = sphi 0, %s122
    %s123 = sphi 0, %s120
    %s124 = sphi 0, %s123
    %s140 = sphi 0, %s124
  $region4: #{resnet_block50_forward.4} parent=0 // loop_header_branch
    %14 = sbr.rel (%p12) target = $region8
  $region5: #{resnet_block50_forward.4} parent=0 // loop_body
    %s16 = ssub.s32 %s11, 1
    %s17 = ssub.s32 %s11, 2
    %s18 = sadd.s32 %s11, 1
    %s19 = ssub.s32 %s11, %s18
    %p20 = scmp.eq.s32.totalorder %s19, 0
    %s22 = sadd.s32 %s21, 1
    %s23 = scalar_select %p20, %s21, %s22
    %p26 = pneg %p20
    %p27 = scmp.eq.s32.totalorder %s11, 3
    %p28 = por %p26, %p27
    %p29 = scmp.ne.s32.totalorder %s21, %s24
    %p30 = scmp.eq.s32.totalorder %s11, 0
    %p31 = por %p29, %p30
    %p32 = scmp.ne.s32.totalorder %s21, %s24
    %p33 = scmp.eq.s32.totalorder %s16, 3
    %p34 = por %p32, %p33
    %p35 = scmp.ne.s32.totalorder %s24, %s25
    %p36 = scmp.eq.s32.totalorder %s16, 0
    %p37 = por %p35, %p36
    %p38 = scmp.ne.s32.totalorder %s24, %s25
    %p39 = scmp.eq.s32.totalorder %s17, 3
    %p40 = por %p38, %p39
    %p42 = scmp.ne.s32.totalorder %s25, %s41
    %p43 = scmp.eq.s32.totalorder %s17, 0
    %p44 = por %p42, %p43
    %s46 = sadd.s32 %s45, 1
    %p49 = scmp.eq.s32.totalorder %s11, 3
    %p50 = scmp.ne.s32.totalorder %s45, %s47
    %p51 = scmp.eq.s32.totalorder %s11, 0
    %p52 = por %p50, %p51
    %p53 = scmp.ne.s32.totalorder %s45, %s47
    %p54 = scmp.eq.s32.totalorder %s16, 3
    %p55 = por %p53, %p54
    %p56 = scmp.ne.s32.totalorder %s47, %s48
    %p57 = scmp.eq.s32.totalorder %s16, 0
    %p58 = por %p56, %p57
    %p59 = scmp.ne.s32.totalorder %s47, %s48
    %p60 = scmp.eq.s32.totalorder %s17, 3
    %p61 = por %p59, %p60
    %p63 = scmp.ne.s32.totalorder %s48, %s62
    %p64 = scmp.eq.s32.totalorder %s17, 0
    %p65 = por %p63, %p64
    %s66 = ssub.s32 %s11, %s18
    %p67 = scmp.eq.s32.totalorder %s66, 0
    %s69 = sadd.s32 %s68, 1
    %s70 = scalar_select %p67, %s68, %s69
    %p73 = pneg %p67
    %p74 = scmp.eq.s32.totalorder %s11, 3
    %p75 = por %p73, %p74
    %p76 = scmp.ne.s32.totalorder %s68, %s71
    %p77 = scmp.eq.s32.totalorder %s11, 0
    %p78 = por %p76, %p77
    %p79 = scmp.ne.s32.totalorder %s68, %s71
    %p80 = scmp.eq.s32.totalorder %s16, 3
    %p81 = por %p79, %p80
    %p82 = scmp.ne.s32.totalorder %s71, %s72
    %p83 = scmp.eq.s32.totalorder %s16, 0
    %p84 = por %p82, %p83
    %p85 = scmp.ne.s32.totalorder %s71, %s72
    %p86 = scmp.eq.s32.totalorder %s17, 3
    %p87 = por %p85, %p86
    %p89 = scmp.ne.s32.totalorder %s72, %s88
    %p90 = scmp.eq.s32.totalorder %s17, 0
    %p91 = por %p89, %p90
    %s92 = ssub.s32 %s11, %s18
    %p93 = scmp.eq.s32.totalorder %s92, 0
    %s95 = sadd.s32 %s94, 1
    %s96 = scalar_select %p93, %s94, %s95
    %p99 = pneg %p93
    %p100 = scmp.eq.s32.totalorder %s11, 3
    %p101 = por %p99, %p100
    %p102 = scmp.ne.s32.totalorder %s94, %s97
    %p103 = scmp.eq.s32.totalorder %s11, 0
    %p104 = por %p102, %p103
    %p105 = scmp.ne.s32.totalorder %s94, %s97
    %p106 = scmp.eq.s32.totalorder %s16, 3
    %p107 = por %p105, %p106
    %p108 = scmp.ne.s32.totalorder %s97, %s98
    %p109 = scmp.eq.s32.totalorder %s16, 0
    %p110 = por %p108, %p109
    %p111 = scmp.ne.s32.totalorder %s97, %s98
    %p112 = scmp.eq.s32.totalorder %s17, 3
    %p113 = por %p111, %p112
    %p115 = scmp.ne.s32.totalorder %s98, %s114
    %p116 = scmp.eq.s32.totalorder %s17, 0
    %p117 = por %p115, %p116
    %s118 = ssub.s32 %s11, %s18
    %p119 = scmp.eq.s32.totalorder %s118, 0
    %s121 = sadd.s32 %s120, 1
    %s122 = scalar_select %p119, %s120, %s121
    %p125 = pneg %p119
    %p126 = scmp.eq.s32.totalorder %s11, 3
    %p127 = por %p125, %p126
    %p128 = scmp.ne.s32.totalorder %s120, %s123
    %p129 = scmp.eq.s32.totalorder %s11, 0
    %p130 = por %p128, %p129
    %p131 = scmp.ne.s32.totalorder %s120, %s123
    %p132 = scmp.eq.s32.totalorder %s16, 3
    %p133 = por %p131, %p132
    %p134 = scmp.ne.s32.totalorder %s123, %s124
    %p135 = scmp.eq.s32.totalorder %s16, 0
    %p136 = por %p134, %p135
    %p137 = scmp.ne.s32.totalorder %s123, %s124
    %p138 = scmp.eq.s32.totalorder %s17, 3
    %p139 = por %p137, %p138
    %p141 = scmp.ne.s32.totalorder %s124, %s140
    %p142 = scmp.eq.s32.totalorder %s17, 0
    %p143 = por %p141, %p142
    %p144 = scmp.le.s32.totalorder 1, %s11
    %p145 = scmp.lt.s32.totalorder %s11, 5
    %p146 = pnand %p144, %p145
    %p147 = pneg %p146
    // Predicated region
    $region9: #{resnet_block50_forward.4} parent=5 // pred_check
      _
    $region10: #{resnet_block50_forward.4} parent=5 // pred_check_branch
      %149 = sbr.rel (%p146) target = $region12
    $region11: #{resnet_block50_forward.4} parent=5 // pred_region
      %s150 = ssub.s32 %s11, 1
      // Predicated region
      $region13: #{resnet_block50_forward.4} parent=11 // pred_check
        %p151 = pneg %p58
      $region14: #{resnet_block50_forward.4} parent=11 // pred_check_branch
        %153 = sbr.rel (%p151) target = $region16
      $region15: #{resnet_block50_forward.4} parent=11 // pred_region
        _
      $region16: #{resnet_block50_forward.4} parent=11 // pred_fallthru
        _
    $region12: #{resnet_block50_forward.4} parent=5 // pred_fallthru
      _
    %p154 = scmp.lt.s32.totalorder %s11, 4
    // Predicated region
    $region17: #{resnet_block50_forward.4} parent=5 // pred_check
      %p155 = pneg %p154
    $region18: #{resnet_block50_forward.4} parent=5 // pred_check_branch
      %157 = sbr.rel (%p155) target = $region20
    $region19: #{resnet_block50_forward.4} parent=5 // pred_region
      // Predicated region
      $region21: #{resnet_block50_forward.4} parent=19 // pred_check
        %p158 = pneg %p31
      $region22: #{resnet_block50_forward.4} parent=19 // pred_check_branch
        %160 = sbr.rel (%p158) target = $region24
      $region23: #{resnet_block50_forward.4} parent=19 // pred_region
        %s161 = smul.u32 16, %s11
        %p162 = scmp.lt.s32.totalorder %s161, 63
        %s163 = scalar_select %p162, %s161, 63
        %s164 = smul.addr %s163, 4
        %s165 = scalar_lea.vmem %s0, %s164
        %s166 = smul.u32 16, %s11
      $region24: #{resnet_block50_forward.4} parent=19 // pred_fallthru
        _
    $region20: #{resnet_block50_forward.4} parent=5 // pred_fallthru
      _
    %p167 = scmp.le.s32.totalorder 1, %s11
    %p168 = scmp.lt.s32.totalorder %s11, 5
    %p169 = pnand %p167, %p168
    %p170 = pneg %p169
    // Predicated region
    $region25: #{resnet_block50_forward.4} parent=5 // pred_check
      _
    $region26: #{resnet_block50_forward.4} parent=5 // pred_check_branch
      %172 = sbr.rel (%p169) target = $region28
    $region27: #{resnet_block50_forward.4} parent=5 // pred_region
      %s173 = ssub.s32 %s11, 1
      %s174 = smul.u32 16, %s16
      %p175 = scmp.lt.s32.totalorder %s174, 63
      %s176 = scalar_select %p175, %s174, 63
      %s177 = smul.addr %s176, 4
      %s178 = scalar_lea.vmem %s0, %s177
      %p179 = pneg %p37
      %p180 = pneg %p34
      %p181 = pneg %p58
      %p182 = pneg %p55
      %p183 = pneg %p84
      %p184 = pneg %p81
      %s185 = smul.u32 16, %s16
      %p186 = scmp.lt.s32.totalorder %s185, 63
      %s187 = scalar_select %p186, %s185, 63
      %s188 = smul.addr %s187, 4
      %s189 = scalar_lea.vmem %s2, %s188
      %p190 = pneg %p110
      %p191 = pneg %p107
      %p192 = scmp.lt.s32.totalorder %s16, 3
      %s193 = scalar_select %p192, %s16, 3
      %s194 = smul.addr %s193, 8
      %s195 = scalar_lea.vmem %s3, %s194
      %p196 = pneg %p136
      %p197 = pneg %p133
      %p198 = scmp.lt.s32.totalorder %s16, 3
      %s199 = scalar_select %p198, %s16, 3
      %s200 = smul.addr %s199, 8
      %s201 = scalar_lea.vmem %s4, %s200
      %s202 = smul.u32 16, %s16
      %p203 = scmp.lt.s32.totalorder %s202, 63
      %s204 = scalar_select %p203, %s202, 63
      %s205 = smul.addr %s204, 4
      %s206 = scalar_lea.vmem %s0, %s205
      %s207 = smul.u32 16, %s16
      %s208 = smul.u32 16, %s16
      %p209 = scmp.lt.s32.totalorder %s208, 63
      %s210 = scalar_select %p209, %s208, 63
      %s211 = smul.addr %s210, 4
      %s212 = scalar_lea.vmem %s2, %s211
      %s213 = smul.u32 16, %s16
      %p214 = scmp.lt.s32.totalorder %s16, 3
      %s215 = scalar_select %p214, %s16, 3
      %s216 = smul.addr %s215, 8
      %s217 = scalar_lea.vmem %s3, %s216
      %p218 = scmp.lt.s32.totalorder %s16, 3
      %s219 = scalar_select %p218, %s16, 3
      %s220 = smul.addr %s219, 8
      %s221 = scalar_lea.vmem %s4, %s220
      %v223 = vld [vmem:[%s206] sm:$0xf]
      %v224 = vld [vmem:[%s206 + $0x4] sm:$0xf]
      %v225 = vld [vmem:[%s206 + $0x8] sm:$0xf]
      %v226 = vld [vmem:[%s206 + $0xc] sm:$0xf]
      %v227 = vld [vmem:[%s206 + $0x10] sm:$0xf]
      %v228 = vld [vmem:[%s206 + $0x14] sm:$0xf]
      %v229 = vld [vmem:[%s206 + $0x18] sm:$0xf]
      %v230 = vld [vmem:[%s206 + $0x1c] sm:$0xf]
      %v231 = vld [vmem:[%s206 + $0x20] sm:$0xf]
      %v232 = vld [vmem:[%s206 + $0x24] sm:$0xf]
      %v233 = vld [vmem:[%s206 + $0x28] sm:$0xf]
      %v234 = vld [vmem:[%s206 + $0x2c] sm:$0xf]
      %v235 = vld [vmem:[%s206 + $0x30] sm:$0xf]
      %v236 = vld [vmem:[%s206 + $0x34] sm:$0xf]
      %v237 = vld [vmem:[%s206 + $0x38] sm:$0xf]
      %v238 = vld [vmem:[%s206 + $0x3c] sm:$0xf]
      %v239 = vld [vmem:[%s1] sm:$0xf]
      %v240 = vld [vmem:[%s1 + $0x4] sm:$0xf]
      %v241 = vld [vmem:[%s1 + $0x8] sm:$0xf]
      %v242 = vld [vmem:[%s1 + $0xc] sm:$0xf]
      %v243 = vld [vmem:[%s1 + $0x10] sm:$0xf]
      %v244 = vld [vmem:[%s1 + $0x14] sm:$0xf]
      %v245 = vld [vmem:[%s1 + $0x18] sm:$0xf]
      %v246 = vld [vmem:[%s1 + $0x1c] sm:$0xf]
      %v247 = vld [vmem:[%s1 + $0x20] sm:$0xf]
      %v248 = vld [vmem:[%s1 + $0x24] sm:$0xf]
      %v249 = vld [vmem:[%s1 + $0x28] sm:$0xf]
      %v250 = vld [vmem:[%s1 + $0x2c] sm:$0xf]
      %v251 = vld [vmem:[%s1 + $0x30] sm:$0xf]
      %v252 = vld [vmem:[%s1 + $0x34] sm:$0xf]
      %v253 = vld [vmem:[%s1 + $0x38] sm:$0xf]
      %v254 = vld [vmem:[%s1 + $0x3c] sm:$0xf]
      %v271 = vunpack.c.l.b16 %v223
      %v272 = vunpack.c.l.b16 %v224
      %v273 = vunpack.c.l.b16 %v225
      %v274 = vunpack.c.l.b16 %v226
      %v275 = vunpack.c.l.b16 %v227
      %v276 = vunpack.c.l.b16 %v228
      %v277 = vunpack.c.l.b16 %v229
      %v278 = vunpack.c.l.b16 %v230
      %v279 = vunpack.c.l.b16 %v231
      %v280 = vunpack.c.l.b16 %v232
      %v281 = vunpack.c.l.b16 %v233
      %v282 = vunpack.c.l.b16 %v234
      %v283 = vunpack.c.l.b16 %v235
      %v284 = vunpack.c.l.b16 %v236
      %v285 = vunpack.c.l.b16 %v237
      %v286 = vunpack.c.l.b16 %v238
      %v287 = vpack.c.b16 %v272, %v271
      %v288 = vpack.c.b16 %v274, %v273
      %v289 = vpack.c.b16 %v276, %v275
      %v290 = vpack.c.b16 %v278, %v277
      %v291 = vpack.c.b16 %v280, %v279
      %v292 = vpack.c.b16 %v282, %v281
      %v293 = vpack.c.b16 %v284, %v283
      %v294 = vpack.c.b16 %v286, %v285
      %v319 = vunpack.c.l.b16 %v239
      %v320 = vunpack.c.l.b16 %v240
      %v321 = vunpack.c.l.b16 %v241
      %v322 = vunpack.c.l.b16 %v242
      %v323 = vunpack.c.l.b16 %v243
      %v324 = vunpack.c.l.b16 %v244
      %v325 = vunpack.c.l.b16 %v245
      %v326 = vunpack.c.l.b16 %v246
      %v327 = vunpack.c.l.b16 %v247
      %v328 = vunpack.c.l.b16 %v248
      %v329 = vunpack.c.l.b16 %v249
      %v330 = vunpack.c.l.b16 %v250
      %v331 = vunpack.c.l.b16 %v251
      %v332 = vunpack.c.l.b16 %v252
      %v333 = vunpack.c.l.b16 %v253
      %v334 = vunpack.c.l.b16 %v254
      %v335 = vpack.c.b16 %v320, %v319
      %v336 = vpack.c.b16 %v322, %v321
      %v337 = vpack.c.b16 %v324, %v323
      %v338 = vpack.c.b16 %v326, %v325
      %v339 = vpack.c.b16 %v328, %v327
      %v340 = vpack.c.b16 %v330, %v329
      %v341 = vpack.c.b16 %v332, %v331
      %v342 = vpack.c.b16 %v334, %v333
      %351 = vmatprep.subr.bf16.mxu0 0
      %352 = vmatpush1.bf16.msra.mxu0 %v335
      %353 = vmatprep.subr.bf16.mxu0 0
      %354 = vmatpush1.bf16.msra.mxu0 %v336
      %355 = vmatprep.subr.bf16.mxu0 0
      %356 = vmatpush1.bf16.msra.mxu0 %v337
      %357 = vmatprep.subr.bf16.mxu0 0
      %358 = vmatpush1.bf16.msra.mxu0 %v338
      %359 = vmatprep.subr.bf16.mxu0 0
      %360 = vmatpush1.bf16.msra.mxu0 %v339
      %361 = vmatprep.subr.bf16.mxu0 0
      %362 = vmatpush1.bf16.msra.mxu0 %v340
      %363 = vmatprep.subr.bf16.mxu0 0
      %364 = vmatpush1.bf16.msra.mxu0 %v341
      %365 = vmatprep.subr.bf16.mxu0 0
      %366 = vmatpush1.bf16.msra.mxu0 %v342
      %367 = vmatprep.subr.bf16.mxu0 0
      %368 = vmatpush1.bf16.msra.mxu0 0
      %369 = vmatprep.subr.bf16.mxu0 0
      %370 = vmatpush1.bf16.msra.mxu0 0
      %371 = vmatprep.subr.bf16.mxu0 0
      %372 = vmatpush1.bf16.msra.mxu0 0
      %373 = vmatprep.subr.bf16.mxu0 0
      %374 = vmatpush1.bf16.msra.mxu0 0
      %375 = vmatprep.subr.bf16.mxu0 0
      %376 = vmatpush1.bf16.msra.mxu0 0
      %377 = vmatprep.subr.bf16.mxu0 0
      %378 = vmatpush1.bf16.msra.mxu0 0
      %379 = vmatprep.subr.bf16.mxu0 0
      %380 = vmatpush1.bf16.msra.mxu0 0
      %381 = vmatprep.subr.bf16.mxu0 0
      %382 = vmatpush1.bf16.msra.mxu0 0
      %383 = vmatprep.mubr.bf16.mxu0 0
      %384 = vmatmul.mubr.bf16.gmra.mrb[0].mxu0 %v287
      %v385 = vpop.f32.mrb[0].mxu0
      %v386 = vadd.f32 0.0, %v385
      %v387 = vpop.f32.mrb[0].mxu0
      %v388 = vpop.f32.mrb[0].mxu0
      %v389 = vadd.f32 0.0, %v388
      %v390 = vpop.f32.mrb[0].mxu0
      %391 = vmatprep.mubr.bf16.mxu0 0
      %392 = vmatmul.mubr.bf16.gmra.mrb[0].mxu0 %v288
      %v393 = vpop.f32.mrb[0].mxu0
      %v394 = vadd.f32 0.0, %v393
      %v395 = vpop.f32.mrb[0].mxu0
      %v396 = vpop.f32.mrb[0].mxu0
      %v397 = vadd.f32 0.0, %v396
      %v398 = vpop.f32.mrb[0].mxu0
      %399 = vmatprep.mubr.bf16.mxu0 0
      %400 = vmatmul.mubr.bf16.gmra.mrb[0].mxu0 %v289
      %v401 = vpop.f32.mrb[0].mxu0
      %v402 = vadd.f32 0.0, %v401
      %v403 = vpop.f32.mrb[0].mxu0
      %v404 = vpop.f32.mrb[0].mxu0
      %v405 = vadd.f32 0.0, %v404
      %v406 = vpop.f32.mrb[0].mxu0
      %407 = vmatprep.mubr.bf16.mxu0 0
      %408 = vmatmul.mubr.bf16.gmra.mrb[0].mxu0 %v290
      %v409 = vpop.f32.mrb[0].mxu0
      %v410 = vadd.f32 0.0, %v409
      %v411 = vpop.f32.mrb[0].mxu0
      %v412 = vpop.f32.mrb[0].mxu0
      %v413 = vadd.f32 0.0, %v412
      %v414 = vpop.f32.mrb[0].mxu0
      %415 = vmatprep.mubr.bf16.mxu0 0
      %416 = vmatmul.mubr.bf16.gmra.mrb[0].mxu0 %v291
      %v417 = vpop.f32.mrb[0].mxu0
      %v418 = vadd.f32 0.0, %v417
      %v419 = vpop.f32.mrb[0].mxu0
      %v420 = vpop.f32.mrb[0].mxu0
      %v421 = vadd.f32 0.0, %v420
      %v422 = vpop.f32.mrb[0].mxu0
      %423 = vmatprep.mubr.bf16.mxu0 0
      %424 = vmatmul.mubr.bf16.gmra.mrb[0].mxu0 %v292
      %v425 = vpop.f32.mrb[0].mxu0
      %v426 = vadd.f32 0.0, %v425
      %v427 = vpop.f32.mrb[0].mxu0
      %v428 = vpop.f32.mrb[0].mxu0
      %v429 = vadd.f32 0.0, %v428
      %v430 = vpop.f32.mrb[0].mxu0
      %431 = vmatprep.mubr.bf16.mxu0 0
      %432 = vmatmul.mubr.bf16.gmra.mrb[0].mxu0 %v293
      %v433 = vpop.f32.mrb[0].mxu0
      %v434 = vadd.f32 0.0, %v433
      %v435 = vpop.f32.mrb[0].mxu0
      %v436 = vpop.f32.mrb[0].mxu0
      %v437 = vadd.f32 0.0, %v436
      %v438 = vpop.f32.mrb[0].mxu0
      %439 = vmatprep.mubr.bf16.mxu0 0
      %440 = vmatmul.mubr.bf16.gmra.mrb[0].mxu0 %v294
      %v441 = vpop.f32.mrb[0].mxu0
      %v442 = vadd.f32 0.0, %v441
      %v443 = vpop.f32.mrb[0].mxu0
      %v444 = vpop.f32.mrb[0].mxu0
      %v445 = vadd.f32 0.0, %v444
      %v446 = vpop.f32.mrb[0].mxu0
      %447 = vdwg.mxu0
      %v448 = vpack.c.bf16 %v389, %v386
      %v449 = vpack.c.bf16 %v397, %v394
      %v450 = vpack.c.bf16 %v405, %v402
      %v451 = vpack.c.bf16 %v413, %v410
      %v452 = vpack.c.bf16 %v421, %v418
      %v453 = vpack.c.bf16 %v429, %v426
      %v454 = vpack.c.bf16 %v437, %v434
      %v455 = vpack.c.bf16 %v445, %v442
      %v464 = vunpack.c.l.b16 %v448
      %v465 = vunpack.c.h.b16 %v448
      %v466 = vunpack.c.l.b16 %v449
      %v467 = vunpack.c.h.b16 %v449
      %v468 = vunpack.c.l.b16 %v450
      %v469 = vunpack.c.h.b16 %v450
      %v470 = vunpack.c.l.b16 %v451
      %v471 = vunpack.c.h.b16 %v451
      %v472 = vunpack.c.l.b16 %v452
      %v473 = vunpack.c.h.b16 %v452
      %v474 = vunpack.c.l.b16 %v453
      %v475 = vunpack.c.h.b16 %v453
      %v476 = vunpack.c.l.b16 %v454
      %v477 = vunpack.c.h.b16 %v454
      %v478 = vunpack.c.l.b16 %v455
      %v479 = vunpack.c.h.b16 %v455
      %v480 = vpack.c.b16 %v464, %v464
      %v481 = vpack.c.b16 %v465, %v465
      %v482 = vpack.c.b16 %v466, %v466
      %v483 = vpack.c.b16 %v467, %v467
      %v484 = vpack.c.b16 %v468, %v468
      %v485 = vpack.c.b16 %v469, %v469
      %v486 = vpack.c.b16 %v470, %v470
      %v487 = vpack.c.b16 %v471, %v471
      %v488 = vpack.c.b16 %v472, %v472
      %v489 = vpack.c.b16 %v473, %v473
      %v490 = vpack.c.b16 %v474, %v474
      %v491 = vpack.c.b16 %v475, %v475
      %v492 = vpack.c.b16 %v476, %v476
      %v493 = vpack.c.b16 %v477, %v477
      %v494 = vpack.c.b16 %v478, %v478
      %v495 = vpack.c.b16 %v479, %v479
      %512 = vst [vmem:[%s212] sm:$0xf] %v480
      %513 = vst [vmem:[%s212 + $0x4] sm:$0xf] %v481
      %514 = vst [vmem:[%s212 + $0x8] sm:$0xf] %v482
      %515 = vst [vmem:[%s212 + $0xc] sm:$0xf] %v483
      %516 = vst [vmem:[%s212 + $0x10] sm:$0xf] %v484
      %517 = vst [vmem:[%s212 + $0x14] sm:$0xf] %v485
      %518 = vst [vmem:[%s212 + $0x18] sm:$0xf] %v486
      %519 = vst [vmem:[%s212 + $0x1c] sm:$0xf] %v487
      %520 = vst [vmem:[%s212 + $0x20] sm:$0xf] %v488
      %521 = vst [vmem:[%s212 + $0x24] sm:$0xf] %v489
      %522 = vst [vmem:[%s212 + $0x28] sm:$0xf] %v490
      %523 = vst [vmem:[%s212 + $0x2c] sm:$0xf] %v491
      %524 = vst [vmem:[%s212 + $0x30] sm:$0xf] %v492
      %525 = vst [vmem:[%s212 + $0x34] sm:$0xf] %v493
      %526 = vst [vmem:[%s212 + $0x38] sm:$0xf] %v494
      %527 = vst [vmem:[%s212 + $0x3c] sm:$0xf] %v495
      %v528 = vadd.f32 %v386, %v389
      %v529 = vadd.f32 %v528, %v394
      %v530 = vadd.f32 %v529, %v397
      %v531 = vadd.f32 %v530, %v402
      %v532 = vadd.f32 %v531, %v405
      %v533 = vadd.f32 %v532, %v410
      %v534 = vadd.f32 %v533, %v413
      %v535 = vadd.f32 %v534, %v418
      %v536 = vadd.f32 %v535, %v421
      %v537 = vadd.f32 %v536, %v426
      %v538 = vadd.f32 %v537, %v429
      %v539 = vadd.f32 %v538, %v434
      %v540 = vadd.f32 %v539, %v437
      %v541 = vadd.f32 %v540, %v442
      %v542 = vadd.f32 %v541, %v445
      %v543 = vrot.slane %v542, 4
      %v544 = vadd.f32 %v542, %v543
      %v545 = vrot.slane %v544, 2
      %v546 = vadd.f32 %v544, %v545
      %v547 = vrot.slane %v546, 1
      %v548 = vadd.f32 %v546, %v547
      %549 = vst [vmem:[%s217] sm:$0xff] %v548
      %v550 = vmul.f32 %v386, %v386
      %v551 = vmul.f32 %v389, %v389
      %v552 = vmul.f32 %v394, %v394
      %v553 = vmul.f32 %v397, %v397
      %v554 = vmul.f32 %v402, %v402
      %v555 = vmul.f32 %v405, %v405
      %v556 = vmul.f32 %v410, %v410
      %v557 = vmul.f32 %v413, %v413
      %v558 = vmul.f32 %v418, %v418
      %v559 = vmul.f32 %v421, %v421
      %v560 = vmul.f32 %v426, %v426
      %v561 = vmul.f32 %v429, %v429
      %v562 = vmul.f32 %v434, %v434
      %v563 = vmul.f32 %v437, %v437
      %v564 = vmul.f32 %v442, %v442
      %v565 = vmul.f32 %v445, %v445
      %v566 = vadd.f32 %v550, %v551
      %v567 = vadd.f32 %v566, %v552
      %v568 = vadd.f32 %v567, %v553
      %v569 = vadd.f32 %v568, %v554
      %v570 = vadd.f32 %v569, %v555
      %v571 = vadd.f32 %v570, %v556
      %v572 = vadd.f32 %v571, %v557
      %v573 = vadd.f32 %v572, %v558
      %v574 = vadd.f32 %v573, %v559
      %v575 = vadd.f32 %v574, %v560
      %v576 = vadd.f32 %v575, %v561
      %v577 = vadd.f32 %v576, %v562
      %v578 = vadd.f32 %v577, %v563
      %v579 = vadd.f32 %v578, %v564
      %v580 = vadd.f32 %v579, %v565
      %v581 = vrot.slane %v580, 4
      %v582 = vadd.f32 %v580, %v581
      %v583 = vrot.slane %v582, 2
      %v584 = vadd.f32 %v582, %v583
      %v585 = vrot.slane %v584, 1
      %v586 = vadd.f32 %v584, %v585
      %587 = vst [vmem:[%s221] sm:$0xff] %v586
      %s588 = smul.u32 16, %s16
      %p589 = scmp.lt.s32.totalorder %s588, 63
      %s590 = scalar_select %p589, %s588, 63
      %s591 = smul.addr %s590, 4
      %s592 = scalar_lea.vmem %s2, %s591
      %p593 = scmp.lt.s32.totalorder %s16, 3
      %s594 = scalar_select %p593, %s16, 3
      %s595 = smul.addr %s594, 8
      %s596 = scalar_lea.vmem %s3, %s595
      %p597 = scmp.lt.s32.totalorder %s16, 3
      %s598 = scalar_select %p597, %s16, 3
      %s599 = smul.addr %s598, 8
      %s600 = scalar_lea.vmem %s4, %s599
      // Predicated region
      $region29: #{resnet_block50_forward.4} parent=27 // pred_check
        %p601 = pneg %p81
      $region30: #{resnet_block50_forward.4} parent=27 // pred_check_branch
        %603 = sbr.rel (%p601) target = $region32
      $region31: #{resnet_block50_forward.4} parent=27 // pred_region
        %s604 = smul.u32 16, %s16
      $region32: #{resnet_block50_forward.4} parent=27 // pred_fallthru
        _
      // Predicated region
      $region33: #{resnet_block50_forward.4} parent=27 // pred_check
        %p605 = pneg %p107
      $region34: #{resnet_block50_forward.4} parent=27 // pred_check_branch
        %607 = sbr.rel (%p605) target = $region36
      $region35: #{resnet_block50_forward.4} parent=27 // pred_region
        _
      $region36: #{resnet_block50_forward.4} parent=27 // pred_fallthru
        _
      // Predicated region
      $region37: #{resnet_block50_forward.4} parent=27 // pred_check
        %p608 = pneg %p133
      $region38: #{resnet_block50_forward.4} parent=27 // pred_check_branch
        %610 = sbr.rel (%p608) target = $region40
      $region39: #{resnet_block50_forward.4} parent=27 // pred_region
        _
      $region40: #{resnet_block50_forward.4} parent=27 // pred_fallthru
        _
    $region28: #{resnet_block50_forward.4} parent=5 // pred_fallthru
      _
    %p611 = scmp.le.s32.totalorder 2, %s11
    // Predicated region
    $region41: #{resnet_block50_forward.4} parent=5 // pred_check
      %p612 = pneg %p611
    $region42: #{resnet_block50_forward.4} parent=5 // pred_check_branch
      %614 = sbr.rel (%p612) target = $region44
    $region43: #{resnet_block50_forward.4} parent=5 // pred_region
      %s615 = ssub.s32 %s11, 2
      // Predicated region
      $region45: #{resnet_block50_forward.4} parent=43 // pred_check
        %p616 = pneg %p87
      $region46: #{resnet_block50_forward.4} parent=43 // pred_check_branch
        %618 = sbr.rel (%p616) target = $region48
      $region47: #{resnet_block50_forward.4} parent=43 // pred_region
        %s619 = smul.u32 16, %s17
        %p620 = scmp.lt.s32.totalorder %s619, 63
        %s621 = scalar_select %p620, %s619, 63
        %s622 = smul.addr %s621, 4
        %s623 = scalar_lea.vmem %s2, %s622
      $region48: #{resnet_block50_forward.4} parent=43 // pred_fallthru
        _
      // Predicated region
      $region49: #{resnet_block50_forward.4} parent=43 // pred_check
        %p624 = pneg %p113
      $region50: #{resnet_block50_forward.4} parent=43 // pred_check_branch
        %626 = sbr.rel (%p624) target = $region52
      $region51: #{resnet_block50_forward.4} parent=43 // pred_region
        %p627 = scmp.lt.s32.totalorder %s17, 3
        %s628 = scalar_select %p627, %s17, 3
        %s629 = smul.addr %s628, 8
        %s630 = scalar_lea.vmem %s3, %s629
      $region52: #{resnet_block50_forward.4} parent=43 // pred_fallthru
        _
      // Predicated region
      $region53: #{resnet_block50_forward.4} parent=43 // pred_check
        %p631 = pneg %p139
      $region54: #{resnet_block50_forward.4} parent=43 // pred_check_branch
        %633 = sbr.rel (%p631) target = $region56
      $region55: #{resnet_block50_forward.4} parent=43 // pred_region
        %p634 = scmp.lt.s32.totalorder %s17, 3
        %s635 = scalar_select %p634, %s17, 3
        %s636 = smul.addr %s635, 8
        %s637 = scalar_lea.vmem %s4, %s636
      $region56: #{resnet_block50_forward.4} parent=43 // pred_fallthru
        _
    $region44: #{resnet_block50_forward.4} parent=5 // pred_fallthru
      _
  $region6: #{resnet_block50_forward.4} parent=0 // loop_footer
    %s15 = sadd.s32 1, %s11
  $region7: #{resnet_block50_forward.4} parent=0 // loop_footer_branch
    %10 = sbr.rel target = $region3
  $region8: #{resnet_block50_forward.4} parent=0 // loop_exit
    _

// kernel: resnet_block50_forward.7
$region0: #{resnet_block50_forward.7}
  #allocation0 [shape = 'u32[]', space=smem, size = 0x4, offset = 0x4, fixed_abs, tag = 'smem constant byte address 0x4 - core index']
  #allocation1 [shape = 'u32[144,128]{1,0:T(1,128)}', space=vmem, size = 0x12000, scoped, tag = 'internal scratch']
  %s0 = inlined_call_operand.vmem [shape: bf16[512,128], index: 0, kind: input, shape index: {}]
  %s1 = inlined_call_operand.vmem [shape: f32[1,128], index: 1, kind: input, shape index: {}]
  %s2 = inlined_call_operand.vmem [shape: f32[1,128], index: 2, kind: input, shape index: {}]
  %s3 = inlined_call_operand.vmem [shape: bf16[128,128], index: 3, kind: input, shape index: {}]
  %s4 = inlined_call_operand.vmem [shape: f32[1,128], index: 4, kind: input, shape index: {}]
  %s5 = inlined_call_operand.vmem [shape: f32[1,128], index: 5, kind: input, shape index: {}]
  %s6 = inlined_call_operand.vmem [shape: bf16[512,128], index: 6, kind: input, shape index: {}]
  %s7 = inlined_call_operand.vmem [shape: f32[512,128], index: 7, kind: output, shape index: {}]
  %s8 = sld [smem:[#allocation0]]
  $region61: #{resnet_block50_forward.7} parent=0
    _
  %s10 = ssub.s32 1, %s8
  %s11 = scalar_select 0, %s10, %s8
  loop: start=0, step=1, limit=6
  $region2: #{resnet_block50_forward.7} parent=0 // loop_pre_header
    _
  $region3: #{resnet_block50_forward.7} parent=0 // loop_header
    %s13 = sphi 0, %s17
    %p14 = scmp.ge.s32.totalorder %s13, 6
    %s23 = sphi 0, %s25
    %s26 = sphi 0, %s23
    %s27 = sphi 0, %s26
    %s43 = sphi 0, %s27
    %s47 = sphi 0, %s47
    %s49 = sphi 0, %s47
    %s50 = sphi 0, %s49
    %s64 = sphi 0, %s50
    %s68 = sphi 0, %s68
    %s70 = sphi 0, %s68
    %s71 = sphi 0, %s70
    %s85 = sphi 0, %s71
    %s89 = sphi 0, %s89
    %s91 = sphi 0, %s89
    %s92 = sphi 0, %s91
    %s106 = sphi 0, %s92
    %s110 = sphi 0, %s110
    %s112 = sphi 0, %s110
    %s113 = sphi 0, %s112
    %s127 = sphi 0, %s113
    %s131 = sphi 0, %s131
    %s133 = sphi 0, %s131
    %s134 = sphi 0, %s133
    %s148 = sphi 0, %s134
    %s154 = sphi 0, %s156
    %s157 = sphi 0, %s154
    %s158 = sphi 0, %s157
    %s174 = sphi 0, %s158
    %s180 = sphi 0, %s182
    %s183 = sphi 0, %s180
    %s184 = sphi 0, %s183
    %s200 = sphi 0, %s184
  $region4: #{resnet_block50_forward.7} parent=0 // loop_header_branch
    %16 = sbr.rel (%p14) target = $region8
  $region5: #{resnet_block50_forward.7} parent=0 // loop_body
    %s18 = ssub.s32 %s13, 1
    %s19 = ssub.s32 %s13, 2
    %s20 = sadd.s32 %s13, 1
    %s21 = ssub.s32 %s13, %s20
    %p22 = scmp.eq.s32.totalorder %s21, 0
    %s24 = sadd.s32 %s23, 1
    %s25 = scalar_select %p22, %s23, %s24
    %p28 = pneg %p22
    %p29 = scmp.eq.s32.totalorder %s13, 3
    %p30 = por %p28, %p29
    %p31 = scmp.ne.s32.totalorder %s23, %s26
    %p32 = scmp.eq.s32.totalorder %s13, 0
    %p33 = por %p31, %p32
    %p34 = scmp.ne.s32.totalorder %s23, %s26
    %p35 = scmp.eq.s32.totalorder %s18, 3
    %p36 = por %p34, %p35
    %p37 = scmp.ne.s32.totalorder %s26, %s27
    %p38 = scmp.eq.s32.totalorder %s18, 0
    %p39 = por %p37, %p38
    %p40 = scmp.ne.s32.totalorder %s26, %s27
    %p41 = scmp.eq.s32.totalorder %s19, 3
    %p42 = por %p40, %p41
    %p44 = scmp.ne.s32.totalorder %s27, %s43
    %p45 = scmp.eq.s32.totalorder %s19, 0
    %p46 = por %p44, %p45
    %s48 = sadd.s32 %s47, 1
    %p51 = scmp.eq.s32.totalorder %s13, 3
    %p52 = scmp.ne.s32.totalorder %s47, %s49
    %p53 = scmp.eq.s32.totalorder %s13, 0
    %p54 = por %p52, %p53
    %p55 = scmp.ne.s32.totalorder %s47, %s49
    %p56 = scmp.eq.s32.totalorder %s18, 3
    %p57 = por %p55, %p56
    %p58 = scmp.ne.s32.totalorder %s49, %s50
    %p59 = scmp.eq.s32.totalorder %s18, 0
    %p60 = por %p58, %p59
    %p61 = scmp.ne.s32.totalorder %s49, %s50
    %p62 = scmp.eq.s32.totalorder %s19, 3
    %p63 = por %p61, %p62
    %p65 = scmp.ne.s32.totalorder %s50, %s64
    %p66 = scmp.eq.s32.totalorder %s19, 0
    %p67 = por %p65, %p66
    %s69 = sadd.s32 %s68, 1
    %p72 = scmp.eq.s32.totalorder %s13, 3
    %p73 = scmp.ne.s32.totalorder %s68, %s70
    %p74 = scmp.eq.s32.totalorder %s13, 0
    %p75 = por %p73, %p74
    %p76 = scmp.ne.s32.totalorder %s68, %s70
    %p77 = scmp.eq.s32.totalorder %s18, 3
    %p78 = por %p76, %p77
    %p79 = scmp.ne.s32.totalorder %s70, %s71
    %p80 = scmp.eq.s32.totalorder %s18, 0
    %p81 = por %p79, %p80
    %p82 = scmp.ne.s32.totalorder %s70, %s71
    %p83 = scmp.eq.s32.totalorder %s19, 3
    %p84 = por %p82, %p83
    %p86 = scmp.ne.s32.totalorder %s71, %s85
    %p87 = scmp.eq.s32.totalorder %s19, 0
    %p88 = por %p86, %p87
    %s90 = sadd.s32 %s89, 1
    %p93 = scmp.eq.s32.totalorder %s13, 3
    %p94 = scmp.ne.s32.totalorder %s89, %s91
    %p95 = scmp.eq.s32.totalorder %s13, 0
    %p96 = por %p94, %p95
    %p97 = scmp.ne.s32.totalorder %s89, %s91
    %p98 = scmp.eq.s32.totalorder %s18, 3
    %p99 = por %p97, %p98
    %p100 = scmp.ne.s32.totalorder %s91, %s92
    %p101 = scmp.eq.s32.totalorder %s18, 0
    %p102 = por %p100, %p101
    %p103 = scmp.ne.s32.totalorder %s91, %s92
    %p104 = scmp.eq.s32.totalorder %s19, 3
    %p105 = por %p103, %p104
    %p107 = scmp.ne.s32.totalorder %s92, %s106
    %p108 = scmp.eq.s32.totalorder %s19, 0
    %p109 = por %p107, %p108
    %s111 = sadd.s32 %s110, 1
    %p114 = scmp.eq.s32.totalorder %s13, 3
    %p115 = scmp.ne.s32.totalorder %s110, %s112
    %p116 = scmp.eq.s32.totalorder %s13, 0
    %p117 = por %p115, %p116
    %p118 = scmp.ne.s32.totalorder %s110, %s112
    %p119 = scmp.eq.s32.totalorder %s18, 3
    %p120 = por %p118, %p119
    %p121 = scmp.ne.s32.totalorder %s112, %s113
    %p122 = scmp.eq.s32.totalorder %s18, 0
    %p123 = por %p121, %p122
    %p124 = scmp.ne.s32.totalorder %s112, %s113
    %p125 = scmp.eq.s32.totalorder %s19, 3
    %p126 = por %p124, %p125
    %p128 = scmp.ne.s32.totalorder %s113, %s127
    %p129 = scmp.eq.s32.totalorder %s19, 0
    %p130 = por %p128, %p129
    %s132 = sadd.s32 %s131, 1
    %p135 = scmp.eq.s32.totalorder %s13, 3
    %p136 = scmp.ne.s32.totalorder %s131, %s133
    %p137 = scmp.eq.s32.totalorder %s13, 0
    %p138 = por %p136, %p137
    %p139 = scmp.ne.s32.totalorder %s131, %s133
    %p140 = scmp.eq.s32.totalorder %s18, 3
    %p141 = por %p139, %p140
    %p142 = scmp.ne.s32.totalorder %s133, %s134
    %p143 = scmp.eq.s32.totalorder %s18, 0
    %p144 = por %p142, %p143
    %p145 = scmp.ne.s32.totalorder %s133, %s134
    %p146 = scmp.eq.s32.totalorder %s19, 3
    %p147 = por %p145, %p146
    %p149 = scmp.ne.s32.totalorder %s134, %s148
    %p150 = scmp.eq.s32.totalorder %s19, 0
    %p151 = por %p149, %p150
    %s152 = ssub.s32 %s13, %s20
    %p153 = scmp.eq.s32.totalorder %s152, 0
    %s155 = sadd.s32 %s154, 1
    %s156 = scalar_select %p153, %s154, %s155
    %p159 = pneg %p153
    %p160 = scmp.eq.s32.totalorder %s13, 3
    %p161 = por %p159, %p160
    %p162 = scmp.ne.s32.totalorder %s154, %s157
    %p163 = scmp.eq.s32.totalorder %s13, 0
    %p164 = por %p162, %p163
    %p165 = scmp.ne.s32.totalorder %s154, %s157
    %p166 = scmp.eq.s32.totalorder %s18, 3
    %p167 = por %p165, %p166
    %p168 = scmp.ne.s32.totalorder %s157, %s158
    %p169 = scmp.eq.s32.totalorder %s18, 0
    %p170 = por %p168, %p169
    %p171 = scmp.ne.s32.totalorder %s157, %s158
    %p172 = scmp.eq.s32.totalorder %s19, 3
    %p173 = por %p171, %p172
    %p175 = scmp.ne.s32.totalorder %s158, %s174
    %p176 = scmp.eq.s32.totalorder %s19, 0
    %p177 = por %p175, %p176
    %s178 = ssub.s32 %s13, %s20
    %p179 = scmp.eq.s32.totalorder %s178, 0
    %s181 = sadd.s32 %s180, 1
    %s182 = scalar_select %p179, %s180, %s181
    %p185 = pneg %p179
    %p186 = scmp.eq.s32.totalorder %s13, 3
    %p187 = por %p185, %p186
    %p188 = scmp.ne.s32.totalorder %s180, %s183
    %p189 = scmp.eq.s32.totalorder %s13, 0
    %p190 = por %p188, %p189
    %p191 = scmp.ne.s32.totalorder %s180, %s183
    %p192 = scmp.eq.s32.totalorder %s18, 3
    %p193 = por %p191, %p192
    %p194 = scmp.ne.s32.totalorder %s183, %s184
    %p195 = scmp.eq.s32.totalorder %s18, 0
    %p196 = por %p194, %p195
    %p197 = scmp.ne.s32.totalorder %s183, %s184
    %p198 = scmp.eq.s32.totalorder %s19, 3
    %p199 = por %p197, %p198
    %p201 = scmp.ne.s32.totalorder %s184, %s200
    %p202 = scmp.eq.s32.totalorder %s19, 0
    %p203 = por %p201, %p202
    %p204 = scmp.le.s32.totalorder 1, %s13
    %p205 = scmp.lt.s32.totalorder %s13, 5
    %p206 = pnand %p204, %p205
    %p207 = pneg %p206
    // Predicated region
    $region9: #{resnet_block50_forward.7} parent=5 // pred_check
      _
    $region10: #{resnet_block50_forward.7} parent=5 // pred_check_branch
      %209 = sbr.rel (%p206) target = $region12
    $region11: #{resnet_block50_forward.7} parent=5 // pred_region
      %s210 = ssub.s32 %s13, 1
      // Predicated region
      $region13: #{resnet_block50_forward.7} parent=11 // pred_check
        %p211 = pneg %p60
      $region14: #{resnet_block50_forward.7} parent=11 // pred_check_branch
        %213 = sbr.rel (%p211) target = $region16
      $region15: #{resnet_block50_forward.7} parent=11 // pred_region
        _
      $region16: #{resnet_block50_forward.7} parent=11 // pred_fallthru
        _
      // Predicated region
      $region17: #{resnet_block50_forward.7} parent=11 // pred_check
        %p214 = pneg %p81
      $region18: #{resnet_block50_forward.7} parent=11 // pred_check_branch
        %216 = sbr.rel (%p214) target = $region20
      $region19: #{resnet_block50_forward.7} parent=11 // pred_region
        _
      $region20: #{resnet_block50_forward.7} parent=11 // pred_fallthru
        _
      // Predicated region
      $region21: #{resnet_block50_forward.7} parent=11 // pred_check
        %p217 = pneg %p102
      $region22: #{resnet_block50_forward.7} parent=11 // pred_check_branch
        %219 = sbr.rel (%p217) target = $region24
      $region23: #{resnet_block50_forward.7} parent=11 // pred_region
        _
      $region24: #{resnet_block50_forward.7} parent=11 // pred_fallthru
        _
      // Predicated region
      $region25: #{resnet_block50_forward.7} parent=11 // pred_check
        %p220 = pneg %p123
      $region26: #{resnet_block50_forward.7} parent=11 // pred_check_branch
        %222 = sbr.rel (%p220) target = $region28
      $region27: #{resnet_block50_forward.7} parent=11 // pred_region
        _
      $region28: #{resnet_block50_forward.7} parent=11 // pred_fallthru
        _
      // Predicated region
      $region29: #{resnet_block50_forward.7} parent=11 // pred_check
        %p223 = pneg %p144
      $region30: #{resnet_block50_forward.7} parent=11 // pred_check_branch
        %225 = sbr.rel (%p223) target = $region32
      $region31: #{resnet_block50_forward.7} parent=11 // pred_region
        _
      $region32: #{resnet_block50_forward.7} parent=11 // pred_fallthru
        _
    $region12: #{resnet_block50_forward.7} parent=5 // pred_fallthru
      _
    %p226 = scmp.lt.s32.totalorder %s13, 4
    // Predicated region
    $region33: #{resnet_block50_forward.7} parent=5 // pred_check
      %p227 = pneg %p226
    $region34: #{resnet_block50_forward.7} parent=5 // pred_check_branch
      %229 = sbr.rel (%p227) target = $region36
    $region35: #{resnet_block50_forward.7} parent=5 // pred_region
      // Predicated region
      $region37: #{resnet_block50_forward.7} parent=35 // pred_check
        %p230 = pneg %p33
      $region38: #{resnet_block50_forward.7} parent=35 // pred_check_branch
        %232 = sbr.rel (%p230) target = $region40
      $region39: #{resnet_block50_forward.7} parent=35 // pred_region
        %s233 = smul.u32 16, %s13
        %p234 = scmp.lt.s32.totalorder %s233, 63
        %s235 = scalar_select %p234, %s233, 63
        %s236 = smul.addr %s235, 4
        %s237 = scalar_lea.vmem %s0, %s236
        %s238 = smul.u32 16, %s13
      $region40: #{resnet_block50_forward.7} parent=35 // pred_fallthru
        _
      // Predicated region
      $region41: #{resnet_block50_forward.7} parent=35 // pred_check
        %p239 = pneg %p164
      $region42: #{resnet_block50_forward.7} parent=35 // pred_check_branch
        %241 = sbr.rel (%p239) target = $region44
      $region43: #{resnet_block50_forward.7} parent=35 // pred_region
        %s242 = smul.u32 16, %s13
        %p243 = scmp.lt.s32.totalorder %s242, 63
        %s244 = scalar_select %p243, %s242, 63
        %s245 = smul.addr %s244, 4
        %s246 = scalar_lea.vmem %s6, %s245
        %s247 = smul.u32 16, %s13
      $region44: #{resnet_block50_forward.7} parent=35 // pred_fallthru
        _
    $region36: #{resnet_block50_forward.7} parent=5 // pred_fallthru
      _
    %p248 = scmp.le.s32.totalorder 1, %s13
    %p249 = scmp.lt.s32.totalorder %s13, 5
    %p250 = pnand %p248, %p249
    %p251 = pneg %p250
    // Predicated region
    $region45: #{resnet_block50_forward.7} parent=5 // pred_check
      _
    $region46: #{resnet_block50_forward.7} parent=5 // pred_check_branch
      %253 = sbr.rel (%p250) target = $region48
    $region47: #{resnet_block50_forward.7} parent=5 // pred_region
      %s254 = ssub.s32 %s13, 1
      %s255 = smul.u32 16, %s18
      %p256 = scmp.lt.s32.totalorder %s255, 63
      %s257 = scalar_select %p256, %s255, 63
      %s258 = smul.addr %s257, 4
      %s259 = scalar_lea.vmem %s0, %s258
      %p260 = pneg %p39
      %p261 = pneg %p36
      %p262 = pneg %p60
      %p263 = pneg %p57
      %p264 = pneg %p81
      %p265 = pneg %p78
      %p266 = pneg %p102
      %p267 = pneg %p99
      %p268 = pneg %p123
      %p269 = pneg %p120
      %p270 = pneg %p144
      %p271 = pneg %p141
      %s272 = smul.u32 16, %s18
      %p273 = scmp.lt.s32.totalorder %s272, 63
      %s274 = scalar_select %p273, %s272, 63
      %s275 = smul.addr %s274, 4
      %s276 = scalar_lea.vmem %s6, %s275
      %p277 = pneg %p170
      %p278 = pneg %p167
      %p279 = pneg %p196
      %p280 = pneg %p193
      %s281 = smul.u32 16, %s18
      %p282 = scmp.lt.s32.totalorder %s281, 63
      %s283 = scalar_select %p282, %s281, 63
      %s284 = smul.addr %s283, 8
      %s285 = scalar_lea.vmem %s7, %s284
      %s286 = smul.u32 16, %s18
      %p287 = scmp.lt.s32.totalorder %s286, 63
      %s288 = scalar_select %p287, %s286, 63
      %s289 = smul.addr %s288, 4
      %s290 = scalar_lea.vmem %s0, %s289
      %s291 = smul.u32 16, %s18
      %s292 = smul.u32 16, %s18
      %p293 = scmp.lt.s32.totalorder %s292, 63
      %s294 = scalar_select %p293, %s292, 63
      %s295 = smul.addr %s294, 4
      %s296 = scalar_lea.vmem %s6, %s295
      %s297 = smul.u32 16, %s18
      %s298 = smul.u32 16, %s18
      %p299 = scmp.lt.s32.totalorder %s298, 63
      %s300 = scalar_select %p299, %s298, 63
      %s301 = smul.addr %s300, 8
      %s302 = scalar_lea.vmem %s7, %s301
      %s303 = smul.u32 16, %s18
      %v305 = vld [vmem:[%s290] sm:$0xf]
      %v306 = vld [vmem:[%s290 + $0x4] sm:$0xf]
      %v307 = vld [vmem:[%s290 + $0x8] sm:$0xf]
      %v308 = vld [vmem:[%s290 + $0xc] sm:$0xf]
      %v309 = vld [vmem:[%s290 + $0x10] sm:$0xf]
      %v310 = vld [vmem:[%s290 + $0x14] sm:$0xf]
      %v311 = vld [vmem:[%s290 + $0x18] sm:$0xf]
      %v312 = vld [vmem:[%s290 + $0x1c] sm:$0xf]
      %v313 = vld [vmem:[%s290 + $0x20] sm:$0xf]
      %v314 = vld [vmem:[%s290 + $0x24] sm:$0xf]
      %v315 = vld [vmem:[%s290 + $0x28] sm:$0xf]
      %v316 = vld [vmem:[%s290 + $0x2c] sm:$0xf]
      %v317 = vld [vmem:[%s290 + $0x30] sm:$0xf]
      %v318 = vld [vmem:[%s290 + $0x34] sm:$0xf]
      %v319 = vld [vmem:[%s290 + $0x38] sm:$0xf]
      %v320 = vld [vmem:[%s290 + $0x3c] sm:$0xf]
      %v321 = vunpack.c.l.bf16 %v305
      %v322 = vunpack.c.l.bf16 %v306
      %v323 = vunpack.c.l.bf16 %v307
      %v324 = vunpack.c.l.bf16 %v308
      %v325 = vunpack.c.l.bf16 %v309
      %v326 = vunpack.c.l.bf16 %v310
      %v327 = vunpack.c.l.bf16 %v311
      %v328 = vunpack.c.l.bf16 %v312
      %v329 = vunpack.c.l.bf16 %v313
      %v330 = vunpack.c.l.bf16 %v314
      %v331 = vunpack.c.l.bf16 %v315
      %v332 = vunpack.c.l.bf16 %v316
      %v333 = vunpack.c.l.bf16 %v317
      %v334 = vunpack.c.l.bf16 %v318
      %v335 = vunpack.c.l.bf16 %v319
      %v336 = vunpack.c.l.bf16 %v320
      %v337 = vld [vmem:[%s1] sm:$0x1]
      %v339 = vlaneseq
      %v340 = vshrl.u32 %v339, 7
      %v341 = vsub.s32 0, %v340
      %v342 = vrot.slane %v337, %v341
      %v344 = vsub.f32 %v321, %v342
      %v345 = vsub.f32 %v322, %v342
      %v346 = vsub.f32 %v323, %v342
      %v347 = vsub.f32 %v324, %v342
      %v348 = vsub.f32 %v325, %v342
      %v349 = vsub.f32 %v326, %v342
      %v350 = vsub.f32 %v327, %v342
      %v351 = vsub.f32 %v328, %v342
      %v352 = vsub.f32 %v329, %v342
      %v353 = vsub.f32 %v330, %v342
      %v354 = vsub.f32 %v331, %v342
      %v355 = vsub.f32 %v332, %v342
      %v356 = vsub.f32 %v333, %v342
      %v357 = vsub.f32 %v334, %v342
      %v358 = vsub.f32 %v335, %v342
      %v359 = vsub.f32 %v336, %v342
      %v360 = vld [vmem:[%s2] sm:$0x1]
      %v362 = vlaneseq
      %v363 = vshrl.u32 %v362, 7
      %v364 = vsub.s32 0, %v363
      %v365 = vrot.slane %v360, %v364
      %v367 = vmul.f32 %v344, %v365
      %v368 = vmul.f32 %v345, %v365
      %v369 = vmul.f32 %v346, %v365
      %v370 = vmul.f32 %v347, %v365
      %v371 = vmul.f32 %v348, %v365
      %v372 = vmul.f32 %v349, %v365
      %v373 = vmul.f32 %v350, %v365
      %v374 = vmul.f32 %v351, %v365
      %v375 = vmul.f32 %v352, %v365
      %v376 = vmul.f32 %v353, %v365
      %v377 = vmul.f32 %v354, %v365
      %v378 = vmul.f32 %v355, %v365
      %v379 = vmul.f32 %v356, %v365
      %v380 = vmul.f32 %v357, %v365
      %v381 = vmul.f32 %v358, %v365
      %v382 = vmul.f32 %v359, %v365
      %v383 = vmax.f32 %v367, 0.0
      %v384 = vmax.f32 %v368, 0.0
      %v385 = vmax.f32 %v369, 0.0
      %v386 = vmax.f32 %v370, 0.0
      %v387 = vmax.f32 %v371, 0.0
      %v388 = vmax.f32 %v372, 0.0
      %v389 = vmax.f32 %v373, 0.0
      %v390 = vmax.f32 %v374, 0.0
      %v391 = vmax.f32 %v375, 0.0
      %v392 = vmax.f32 %v376, 0.0
      %v393 = vmax.f32 %v377, 0.0
      %v394 = vmax.f32 %v378, 0.0
      %v395 = vmax.f32 %v379, 0.0
      %v396 = vmax.f32 %v380, 0.0
      %v397 = vmax.f32 %v381, 0.0
      %v398 = vmax.f32 %v382, 0.0
      %v399 = vpack.c.bf16 %v384, %v383
      %v400 = vpack.c.bf16 %v386, %v385
      %v401 = vpack.c.bf16 %v388, %v387
      %v402 = vpack.c.bf16 %v390, %v389
      %v403 = vpack.c.bf16 %v392, %v391
      %v404 = vpack.c.bf16 %v394, %v393
      %v405 = vpack.c.bf16 %v396, %v395
      %v406 = vpack.c.bf16 %v398, %v397
      %v407 = vld [vmem:[%s3] sm:$0xf]
      %v408 = vld [vmem:[%s3 + $0x4] sm:$0xf]
      %v409 = vld [vmem:[%s3 + $0x8] sm:$0xf]
      %v410 = vld [vmem:[%s3 + $0xc] sm:$0xf]
      %v411 = vld [vmem:[%s3 + $0x10] sm:$0xf]
      %v412 = vld [vmem:[%s3 + $0x14] sm:$0xf]
      %v413 = vld [vmem:[%s3 + $0x18] sm:$0xf]
      %v414 = vld [vmem:[%s3 + $0x1c] sm:$0xf]
      %v415 = vld [vmem:[%s3 + $0x20] sm:$0xf]
      %v416 = vld [vmem:[%s3 + $0x24] sm:$0xf]
      %v417 = vld [vmem:[%s3 + $0x28] sm:$0xf]
      %v418 = vld [vmem:[%s3 + $0x2c] sm:$0xf]
      %v419 = vld [vmem:[%s3 + $0x30] sm:$0xf]
      %v420 = vld [vmem:[%s3 + $0x34] sm:$0xf]
      %v421 = vld [vmem:[%s3 + $0x38] sm:$0xf]
      %v422 = vld [vmem:[%s3 + $0x3c] sm:$0xf]
      %v439 = vunpack.c.l.b16 %v407
      %v440 = vunpack.c.l.b16 %v408
      %v441 = vunpack.c.l.b16 %v409
      %v442 = vunpack.c.l.b16 %v410
      %v443 = vunpack.c.l.b16 %v411
      %v444 = vunpack.c.l.b16 %v412
      %v445 = vunpack.c.l.b16 %v413
      %v446 = vunpack.c.l.b16 %v414
      %v447 = vunpack.c.l.b16 %v415
      %v448 = vunpack.c.l.b16 %v416
      %v449 = vunpack.c.l.b16 %v417
      %v450 = vunpack.c.l.b16 %v418
      %v451 = vunpack.c.l.b16 %v419
      %v452 = vunpack.c.l.b16 %v420
      %v453 = vunpack.c.l.b16 %v421
      %v454 = vunpack.c.l.b16 %v422
      %v455 = vpack.c.b16 %v440, %v439
      %v456 = vpack.c.b16 %v442, %v441
      %v457 = vpack.c.b16 %v444, %v443
      %v458 = vpack.c.b16 %v446, %v445
      %v459 = vpack.c.b16 %v448, %v447
      %v460 = vpack.c.b16 %v450, %v449
      %v461 = vpack.c.b16 %v452, %v451
      %v462 = vpack.c.b16 %v454, %v453
      %471 = vmatprep.subr.bf16.mxu0 0
      %472 = vmatpush1.bf16.msra.mxu0 %v455
      %473 = vmatprep.subr.bf16.mxu0 0
      %474 = vmatpush1.bf16.msra.mxu0 %v456
      %475 = vmatprep.subr.bf16.mxu0 0
      %476 = vmatpush1.bf16.msra.mxu0 %v457
      %477 = vmatprep.subr.bf16.mxu0 0
      %478 = vmatpush1.bf16.msra.mxu0 %v458
      %479 = vmatprep.subr.bf16.mxu0 0
      %480 = vmatpush1.bf16.msra.mxu0 %v459
      %481 = vmatprep.subr.bf16.mxu0 0
      %482 = vmatpush1.bf16.msra.mxu0 %v460
      %483 = vmatprep.subr.bf16.mxu0 0
      %484 = vmatpush1.bf16.msra.mxu0 %v461
      %485 = vmatprep.subr.bf16.mxu0 0
      %486 = vmatpush1.bf16.msra.mxu0 %v462
      %487 = vmatprep.subr.bf16.mxu0 0
      %488 = vmatpush1.bf16.msra.mxu0 0
      %489 = vmatprep.subr.bf16.mxu0 0
      %490 = vmatpush1.bf16.msra.mxu0 0
      %491 = vmatprep.subr.bf16.mxu0 0
      %492 = vmatpush1.bf16.msra.mxu0 0
      %493 = vmatprep.subr.bf16.mxu0 0
      %494 = vmatpush1.bf16.msra.mxu0 0
      %495 = vmatprep.subr.bf16.mxu0 0
      %496 = vmatpush1.bf16.msra.mxu0 0
      %497 = vmatprep.subr.bf16.mxu0 0
      %498 = vmatpush1.bf16.msra.mxu0 0
      %499 = vmatprep.subr.bf16.mxu0 0
      %500 = vmatpush1.bf16.msra.mxu0 0
      %501 = vmatprep.subr.bf16.mxu0 0
      %502 = vmatpush1.bf16.msra.mxu0 0
      %503 = vmatprep.mubr.bf16.mxu0 0
      %504 = vmatmul.mubr.bf16.gmra.mrb[0].mxu0 %v399
      %v505 = vpop.f32.mrb[0].mxu0
      %v506 = vadd.f32 0.0, %v505
      %v507 = vpop.f32.mrb[0].mxu0
      %v508 = vpop.f32.mrb[0].mxu0
      %v509 = vadd.f32 0.0, %v508
      %v510 = vpop.f32.mrb[0].mxu0
      %511 = vmatprep.mubr.bf16.mxu0 0
      %512 = vmatmul.mubr.bf16.gmra.mrb[0].mxu0 %v400
      %v513 = vpop.f32.mrb[0].mxu0
      %v514 = vadd.f32 0.0, %v513
      %v515 = vpop.f32.mrb[0].mxu0
      %v516 = vpop.f32.mrb[0].mxu0
      %v517 = vadd.f32 0.0, %v516
      %v518 = vpop.f32.mrb[0].mxu0
      %519 = vmatprep.mubr.bf16.mxu0 0
      %520 = vmatmul.mubr.bf16.gmra.mrb[0].mxu0 %v401
      %v521 = vpop.f32.mrb[0].mxu0
      %v522 = vadd.f32 0.0, %v521
      %v523 = vpop.f32.mrb[0].mxu0
      %v524 = vpop.f32.mrb[0].mxu0
      %v525 = vadd.f32 0.0, %v524
      %v526 = vpop.f32.mrb[0].mxu0
      %527 = vmatprep.mubr.bf16.mxu0 0
      %528 = vmatmul.mubr.bf16.gmra.mrb[0].mxu0 %v402
      %v529 = vpop.f32.mrb[0].mxu0
      %v530 = vadd.f32 0.0, %v529
      %v531 = vpop.f32.mrb[0].mxu0
      %v532 = vpop.f32.mrb[0].mxu0
      %v533 = vadd.f32 0.0, %v532
      %v534 = vpop.f32.mrb[0].mxu0
      %535 = vmatprep.mubr.bf16.mxu0 0
      %536 = vmatmul.mubr.bf16.gmra.mrb[0].mxu0 %v403
      %v537 = vpop.f32.mrb[0].mxu0
      %v538 = vadd.f32 0.0, %v537
      %v539 = vpop.f32.mrb[0].mxu0
      %v540 = vpop.f32.mrb[0].mxu0
      %v541 = vadd.f32 0.0, %v540
      %v542 = vpop.f32.mrb[0].mxu0
      %543 = vmatprep.mubr.bf16.mxu0 0
      %544 = vmatmul.mubr.bf16.gmra.mrb[0].mxu0 %v404
      %v545 = vpop.f32.mrb[0].mxu0
      %v546 = vadd.f32 0.0, %v545
      %v547 = vpop.f32.mrb[0].mxu0
      %v548 = vpop.f32.mrb[0].mxu0
      %v549 = vadd.f32 0.0, %v548
      %v550 = vpop.f32.mrb[0].mxu0
      %551 = vmatprep.mubr.bf16.mxu0 0
      %552 = vmatmul.mubr.bf16.gmra.mrb[0].mxu0 %v405
      %v553 = vpop.f32.mrb[0].mxu0
      %v554 = vadd.f32 0.0, %v553
      %v555 = vpop.f32.mrb[0].mxu0
      %v556 = vpop.f32.mrb[0].mxu0
      %v557 = vadd.f32 0.0, %v556
      %v558 = vpop.f32.mrb[0].mxu0
      %559 = vmatprep.mubr.bf16.mxu0 0
      %560 = vmatmul.mubr.bf16.gmra.mrb[0].mxu0 %v406
      %v561 = vpop.f32.mrb[0].mxu0
      %v562 = vadd.f32 0.0, %v561
      %v563 = vpop.f32.mrb[0].mxu0
      %v564 = vpop.f32.mrb[0].mxu0
      %v565 = vadd.f32 0.0, %v564
      %v566 = vpop.f32.mrb[0].mxu0
      %567 = vdwg.mxu0
      %v568 = vld [vmem:[%s296] sm:$0xf]
      %v569 = vld [vmem:[%s296 + $0x4] sm:$0xf]
      %v570 = vld [vmem:[%s296 + $0x8] sm:$0xf]
      %v571 = vld [vmem:[%s296 + $0xc] sm:$0xf]
      %v572 = vld [vmem:[%s296 + $0x10] sm:$0xf]
      %v573 = vld [vmem:[%s296 + $0x14] sm:$0xf]
      %v574 = vld [vmem:[%s296 + $0x18] sm:$0xf]
      %v575 = vld [vmem:[%s296 + $0x1c] sm:$0xf]
      %v576 = vld [vmem:[%s296 + $0x20] sm:$0xf]
      %v577 = vld [vmem:[%s296 + $0x24] sm:$0xf]
      %v578 = vld [vmem:[%s296 + $0x28] sm:$0xf]
      %v579 = vld [vmem:[%s296 + $0x2c] sm:$0xf]
      %v580 = vld [vmem:[%s296 + $0x30] sm:$0xf]
      %v581 = vld [vmem:[%s296 + $0x34] sm:$0xf]
      %v582 = vld [vmem:[%s296 + $0x38] sm:$0xf]
      %v583 = vld [vmem:[%s296 + $0x3c] sm:$0xf]
      %v584 = vunpack.c.l.bf16 %v568
      %v585 = vunpack.c.l.bf16 %v569
      %v586 = vunpack.c.l.bf16 %v570
      %v587 = vunpack.c.l.bf16 %v571
      %v588 = vunpack.c.l.bf16 %v572
      %v589 = vunpack.c.l.bf16 %v573
      %v590 = vunpack.c.l.bf16 %v574
      %v591 = vunpack.c.l.bf16 %v575
      %v592 = vunpack.c.l.bf16 %v576
      %v593 = vunpack.c.l.bf16 %v577
      %v594 = vunpack.c.l.bf16 %v578
      %v595 = vunpack.c.l.bf16 %v579
      %v596 = vunpack.c.l.bf16 %v580
      %v597 = vunpack.c.l.bf16 %v581
      %v598 = vunpack.c.l.bf16 %v582
      %v599 = vunpack.c.l.bf16 %v583
      %v600 = vld [vmem:[%s4] sm:$0x1]
      %v602 = vlaneseq
      %v603 = vshrl.u32 %v602, 7
      %v604 = vsub.s32 0, %v603
      %v605 = vrot.slane %v600, %v604
      %v607 = vsub.f32 %v506, %v605
      %v608 = vsub.f32 %v509, %v605
      %v609 = vsub.f32 %v514, %v605
      %v610 = vsub.f32 %v517, %v605
      %v611 = vsub.f32 %v522, %v605
      %v612 = vsub.f32 %v525, %v605
      %v613 = vsub.f32 %v530, %v605
      %v614 = vsub.f32 %v533, %v605
      %v615 = vsub.f32 %v538, %v605
      %v616 = vsub.f32 %v541, %v605
      %v617 = vsub.f32 %v546, %v605
      %v618 = vsub.f32 %v549, %v605
      %v619 = vsub.f32 %v554, %v605
      %v620 = vsub.f32 %v557, %v605
      %v621 = vsub.f32 %v562, %v605
      %v622 = vsub.f32 %v565, %v605
      %v623 = vld [vmem:[%s5] sm:$0x1]
      %v625 = vlaneseq
      %v626 = vshrl.u32 %v625, 7
      %v627 = vsub.s32 0, %v626
      %v628 = vrot.slane %v623, %v627
      %v630 = vmul.f32 %v607, %v628
      %v631 = vmul.f32 %v608, %v628
      %v632 = vmul.f32 %v609, %v628
      %v633 = vmul.f32 %v610, %v628
      %v634 = vmul.f32 %v611, %v628
      %v635 = vmul.f32 %v612, %v628
      %v636 = vmul.f32 %v613, %v628
      %v637 = vmul.f32 %v614, %v628
      %v638 = vmul.f32 %v615, %v628
      %v639 = vmul.f32 %v616, %v628
      %v640 = vmul.f32 %v617, %v628
      %v641 = vmul.f32 %v618, %v628
      %v642 = vmul.f32 %v619, %v628
      %v643 = vmul.f32 %v620, %v628
      %v644 = vmul.f32 %v621, %v628
      %v645 = vmul.f32 %v622, %v628
      %v646 = vadd.f32 %v630, %v584
      %v647 = vadd.f32 %v631, %v585
      %v648 = vadd.f32 %v632, %v586
      %v649 = vadd.f32 %v633, %v587
      %v650 = vadd.f32 %v634, %v588
      %v651 = vadd.f32 %v635, %v589
      %v652 = vadd.f32 %v636, %v590
      %v653 = vadd.f32 %v637, %v591
      %v654 = vadd.f32 %v638, %v592
      %v655 = vadd.f32 %v639, %v593
      %v656 = vadd.f32 %v640, %v594
      %v657 = vadd.f32 %v641, %v595
      %v658 = vadd.f32 %v642, %v596
      %v659 = vadd.f32 %v643, %v597
      %v660 = vadd.f32 %v644, %v598
      %v661 = vadd.f32 %v645, %v599
      %v662 = vmax.f32 %v646, 0.0
      %v663 = vmax.f32 %v647, 0.0
      %v664 = vmax.f32 %v648, 0.0
      %v665 = vmax.f32 %v649, 0.0
      %v666 = vmax.f32 %v650, 0.0
      %v667 = vmax.f32 %v651, 0.0
      %v668 = vmax.f32 %v652, 0.0
      %v669 = vmax.f32 %v653, 0.0
      %v670 = vmax.f32 %v654, 0.0
      %v671 = vmax.f32 %v655, 0.0
      %v672 = vmax.f32 %v656, 0.0
      %v673 = vmax.f32 %v657, 0.0
      %v674 = vmax.f32 %v658, 0.0
      %v675 = vmax.f32 %v659, 0.0
      %v676 = vmax.f32 %v660, 0.0
      %v677 = vmax.f32 %v661, 0.0
      %678 = vst [vmem:[%s302] sm:$0xff] %v662
      %679 = vst [vmem:[%s302 + $0x8] sm:$0xff] %v663
      %680 = vst [vmem:[%s302 + $0x10] sm:$0xff] %v664
      %681 = vst [vmem:[%s302 + $0x18] sm:$0xff] %v665
      %682 = vst [vmem:[%s302 + $0x20] sm:$0xff] %v666
      %683 = vst [vmem:[%s302 + $0x28] sm:$0xff] %v667
      %684 = vst [vmem:[%s302 + $0x30] sm:$0xff] %v668
      %685 = vst [vmem:[%s302 + $0x38] sm:$0xff] %v669
      %686 = vst [vmem:[%s302 + $0x40] sm:$0xff] %v670
      %687 = vst [vmem:[%s302 + $0x48] sm:$0xff] %v671
      %688 = vst [vmem:[%s302 + $0x50] sm:$0xff] %v672
      %689 = vst [vmem:[%s302 + $0x58] sm:$0xff] %v673
      %690 = vst [vmem:[%s302 + $0x60] sm:$0xff] %v674
      %691 = vst [vmem:[%s302 + $0x68] sm:$0xff] %v675
      %692 = vst [vmem:[%s302 + $0x70] sm:$0xff] %v676
      %693 = vst [vmem:[%s302 + $0x78] sm:$0xff] %v677
      %s694 = smul.u32 16, %s18
      %p695 = scmp.lt.s32.totalorder %s694, 63
      %s696 = scalar_select %p695, %s694, 63
      %s697 = smul.addr %s696, 8
      %s698 = scalar_lea.vmem %s7, %s697
      // Predicated region
      $region49: #{resnet_block50_forward.7} parent=47 // pred_check
        %p699 = pneg %p193
      $region50: #{resnet_block50_forward.7} parent=47 // pred_check_branch
        %701 = sbr.rel (%p699) target = $region52
      $region51: #{resnet_block50_forward.7} parent=47 // pred_region
        %s702 = smul.u32 16, %s18
      $region52: #{resnet_block50_forward.7} parent=47 // pred_fallthru
        _
    $region48: #{resnet_block50_forward.7} parent=5 // pred_fallthru
      _
    %p703 = scmp.le.s32.totalorder 2, %s13
    // Predicated region
    $region53: #{resnet_block50_forward.7} parent=5 // pred_check
      %p704 = pneg %p703
    $region54: #{resnet_block50_forward.7} parent=5 // pred_check_branch
      %706 = sbr.rel (%p704) target = $region56
    $region55: #{resnet_block50_forward.7} parent=5 // pred_region
      %s707 = ssub.s32 %s13, 2
      // Predicated region
      $region57: #{resnet_block50_forward.7} parent=55 // pred_check
        %p708 = pneg %p199
      $region58: #{resnet_block50_forward.7} parent=55 // pred_check_branch
        %710 = sbr.rel (%p708) target = $region60
      $region59: #{resnet_block50_forward.7} parent=55 // pred_region
        %s711 = smul.u32 16, %s19
        %p712 = scmp.lt.s32.totalorder %s711, 63
        %s713 = scalar_select %p712, %s711, 63
        %s714 = smul.addr %s713, 8
        %s715 = scalar_lea.vmem %s7, %s714
      $region60: #{resnet_block50_forward.7} parent=55 // pred_fallthru
        _
    $region56: #{resnet_block50_forward.7} parent=5 // pred_fallthru
      _
  $region6: #{resnet_block50_forward.7} parent=0 // loop_footer
    %s17 = sadd.s32 1, %s13
  $region7: #{resnet_block50_forward.7} parent=0 // loop_footer_branch
    %12 = sbr.rel target = $region3
  $region8: #{resnet_block50_forward.7} parent=0 // loop_exit
    _

// kernel: resnet_block50_forward.5
$region0: #{resnet_block50_forward.5}
  #allocation0 [shape = 'u32[]', space=smem, size = 0x4, offset = 0x4, fixed_abs, tag = 'smem constant byte address 0x4 - core index']
  #allocation1 [shape = 'u32[144,128]{1,0:T(1,128)}', space=vmem, size = 0x12000, scoped, tag = 'internal scratch']
  #allocation2 [shape = 'bf16[18,48,128]{2,1,0:T(16,128)(2,1)}', space=vmem, size = 0x36000, scoped, tag = 'scratch operand']
  #allocation3 [shape = 'bf16[256,384]{1,0:T(16,128)(2,1)}', space=vmem, size = 0x30000, scoped, tag = 'scratch operand']
  #allocation4 [shape = 'f32[256,128]{1,0:T(8,128)}', space=vmem, size = 0x20000, scoped, tag = 'scratch operand']
  %s0 = inlined_call_operand.vmem [shape: bf16[2,16,16,128], index: 0, kind: input, shape index: {}]
  %s1 = inlined_call_operand.vmem [shape: f32[1,128], index: 1, kind: input, shape index: {}]
  %s2 = inlined_call_operand.vmem [shape: f32[1,128], index: 2, kind: input, shape index: {}]
  %s3 = inlined_call_operand.vmem [shape: bf16[3,384,128], index: 3, kind: input, shape index: {}]
  %s4 = inlined_call_operand.vmem [shape: bf16[2,256,128], index: 4, kind: output, shape index: {0}]
  %s5 = inlined_call_operand.vmem [shape: f32[2,8,128], index: 5, kind: output, shape index: {1}]
  %s6 = inlined_call_operand.vmem [shape: f32[2,8,128], index: 6, kind: output, shape index: {2}]
  %7 = xla_tuple %s4, %s5, %s6
  %s8 = sld [smem:[#allocation0]]
  $region65: #{resnet_block50_forward.5} parent=0
    _
  %s10 = ssub.s32 1, %s8
  %s11 = scalar_select 0, %s10, %s8
  loop: start=0, step=1, limit=4
  $region2: #{resnet_block50_forward.5} parent=0 // loop_pre_header
    _
  $region3: #{resnet_block50_forward.5} parent=0 // loop_header
    %s13 = sphi 0, %s17
    %p14 = scmp.ge.s32.totalorder %s13, 4
    %s23 = sphi 0, %s25
    %s26 = sphi 0, %s23
    %s27 = sphi 0, %s26
    %s43 = sphi 0, %s27
    %s47 = sphi 0, %s47
    %s49 = sphi 0, %s47
    %s50 = sphi 0, %s49
    %s64 = sphi 0, %s50
    %s68 = sphi 0, %s68
    %s70 = sphi 0, %s68
    %s71 = sphi 0, %s70
    %s85 = sphi 0, %s71
    %s89 = sphi 0, %s89
    %s91 = sphi 0, %s89
    %s92 = sphi 0, %s91
    %s106 = sphi 0, %s92
    %s112 = sphi 0, %s114
    %s115 = sphi 0, %s112
    %s116 = sphi 0, %s115
    %s132 = sphi 0, %s116
    %s138 = sphi 0, %s140
    %s141 = sphi 0, %s138
    %s142 = sphi 0, %s141
    %s158 = sphi 0, %s142
    %s164 = sphi 0, %s166
    %s167 = sphi 0, %s164
    %s168 = sphi 0, %s167
    %s184 = sphi 0, %s168
  $region4: #{resnet_block50_forward.5} parent=0 // loop_header_branch
    %16 = sbr.rel (%p14) target = $region8
  $region5: #{resnet_block50_forward.5} parent=0 // loop_body
    %s18 = ssub.s32 %s13, 1
    %s19 = ssub.s32 %s13, 2
    %s20 = sadd.s32 %s13, 1
    %s21 = ssub.s32 %s13, %s20
    %p22 = scmp.eq.s32.totalorder %s21, 0
    %s24 = sadd.s32 %s23, 1
    %s25 = scalar_select %p22, %s23, %s24
    %p28 = pneg %p22
    %p29 = scmp.eq.s32.totalorder %s13, 1
    %p30 = por %p28, %p29
    %p31 = scmp.ne.s32.totalorder %s23, %s26
    %p32 = scmp.eq.s32.totalorder %s13, 0
    %p33 = por %p31, %p32
    %p34 = scmp.ne.s32.totalorder %s23, %s26
    %p35 = scmp.eq.s32.totalorder %s18, 1
    %p36 = por %p34, %p35
    %p37 = scmp.ne.s32.totalorder %s26, %s27
    %p38 = scmp.eq.s32.totalorder %s18, 0
    %p39 = por %p37, %p38
    %p40 = scmp.ne.s32.totalorder %s26, %s27
    %p41 = scmp.eq.s32.totalorder %s19, 1
    %p42 = por %p40, %p41
    %p44 = scmp.ne.s32.totalorder %s27, %s43
    %p45 = scmp.eq.s32.totalorder %s19, 0
    %p46 = por %p44, %p45
    %s48 = sadd.s32 %s47, 1
    %p51 = scmp.eq.s32.totalorder %s13, 1
    %p52 = scmp.ne.s32.totalorder %s47, %s49
    %p53 = scmp.eq.s32.totalorder %s13, 0
    %p54 = por %p52, %p53
    %p55 = scmp.ne.s32.totalorder %s47, %s49
    %p56 = scmp.eq.s32.totalorder %s18, 1
    %p57 = por %p55, %p56
    %p58 = scmp.ne.s32.totalorder %s49, %s50
    %p59 = scmp.eq.s32.totalorder %s18, 0
    %p60 = por %p58, %p59
    %p61 = scmp.ne.s32.totalorder %s49, %s50
    %p62 = scmp.eq.s32.totalorder %s19, 1
    %p63 = por %p61, %p62
    %p65 = scmp.ne.s32.totalorder %s50, %s64
    %p66 = scmp.eq.s32.totalorder %s19, 0
    %p67 = por %p65, %p66
    %s69 = sadd.s32 %s68, 1
    %p72 = scmp.eq.s32.totalorder %s13, 1
    %p73 = scmp.ne.s32.totalorder %s68, %s70
    %p74 = scmp.eq.s32.totalorder %s13, 0
    %p75 = por %p73, %p74
    %p76 = scmp.ne.s32.totalorder %s68, %s70
    %p77 = scmp.eq.s32.totalorder %s18, 1
    %p78 = por %p76, %p77
    %p79 = scmp.ne.s32.totalorder %s70, %s71
    %p80 = scmp.eq.s32.totalorder %s18, 0
    %p81 = por %p79, %p80
    %p82 = scmp.ne.s32.totalorder %s70, %s71
    %p83 = scmp.eq.s32.totalorder %s19, 1
    %p84 = por %p82, %p83
    %p86 = scmp.ne.s32.totalorder %s71, %s85
    %p87 = scmp.eq.s32.totalorder %s19, 0
    %p88 = por %p86, %p87
    %s90 = sadd.s32 %s89, 1
    %p93 = scmp.eq.s32.totalorder %s13, 1
    %p94 = scmp.ne.s32.totalorder %s89, %s91
    %p95 = scmp.eq.s32.totalorder %s13, 0
    %p96 = por %p94, %p95
    %p97 = scmp.ne.s32.totalorder %s89, %s91
    %p98 = scmp.eq.s32.totalorder %s18, 1
    %p99 = por %p97, %p98
    %p100 = scmp.ne.s32.totalorder %s91, %s92
    %p101 = scmp.eq.s32.totalorder %s18, 0
    %p102 = por %p100, %p101
    %p103 = scmp.ne.s32.totalorder %s91, %s92
    %p104 = scmp.eq.s32.totalorder %s19, 1
    %p105 = por %p103, %p104
    %p107 = scmp.ne.s32.totalorder %s92, %s106
    %p108 = scmp.eq.s32.totalorder %s19, 0
    %p109 = por %p107, %p108
    %s110 = ssub.s32 %s13, %s20
    %p111 = scmp.eq.s32.totalorder %s110, 0
    %s113 = sadd.s32 %s112, 1
    %s114 = scalar_select %p111, %s112, %s113
    %p117 = pneg %p111
    %p118 = scmp.eq.s32.totalorder %s13, 1
    %p119 = por %p117, %p118
    %p120 = scmp.ne.s32.totalorder %s112, %s115
    %p121 = scmp.eq.s32.totalorder %s13, 0
    %p122 = por %p120, %p121
    %p123 = scmp.ne.s32.totalorder %s112, %s115
    %p124 = scmp.eq.s32.totalorder %s18, 1
    %p125 = por %p123, %p124
    %p126 = scmp.ne.s32.totalorder %s115, %s116
    %p127 = scmp.eq.s32.totalorder %s18, 0
    %p128 = por %p126, %p127
    %p129 = scmp.ne.s32.totalorder %s115, %s116
    %p130 = scmp.eq.s32.totalorder %s19, 1
    %p131 = por %p129, %p130
    %p133 = scmp.ne.s32.totalorder %s116, %s132
    %p134 = scmp.eq.s32.totalorder %s19, 0
    %p135 = por %p133, %p134
    %s136 = ssub.s32 %s13, %s20
    %p137 = scmp.eq.s32.totalorder %s136, 0
    %s139 = sadd.s32 %s138, 1
    %s140 = scalar_select %p137, %s138, %s139
    %p143 = pneg %p137
    %p144 = scmp.eq.s32.totalorder %s13, 1
    %p145 = por %p143, %p144
    %p146 = scmp.ne.s32.totalorder %s138, %s141
    %p147 = scmp.eq.s32.totalorder %s13, 0
    %p148 = por %p146, %p147
    %p149 = scmp.ne.s32.totalorder %s138, %s141
    %p150 = scmp.eq.s32.totalorder %s18, 1
    %p151 = por %p149, %p150
    %p152 = scmp.ne.s32.totalorder %s141, %s142
    %p153 = scmp.eq.s32.totalorder %s18, 0
    %p154 = por %p152, %p153
    %p155 = scmp.ne.s32.totalorder %s141, %s142
    %p156 = scmp.eq.s32.totalorder %s19, 1
    %p157 = por %p155, %p156
    %p159 = scmp.ne.s32.totalorder %s142, %s158
    %p160 = scmp.eq.s32.totalorder %s19, 0
    %p161 = por %p159, %p160
    %s162 = ssub.s32 %s13, %s20
    %p163 = scmp.eq.s32.totalorder %s162, 0
    %s165 = sadd.s32 %s164, 1
    %s166 = scalar_select %p163, %s164, %s165
    %p169 = pneg %p163
    %p170 = scmp.eq.s32.totalorder %s13, 1
    %p171 = por %p169, %p170
    %p172 = scmp.ne.s32.totalorder %s164, %s167
    %p173 = scmp.eq.s32.totalorder %s13, 0
    %p174 = por %p172, %p173
    %p175 = scmp.ne.s32.totalorder %s164, %s167
    %p176 = scmp.eq.s32.totalorder %s18, 1
    %p177 = por %p175, %p176
    %p178 = scmp.ne.s32.totalorder %s167, %s168
    %p179 = scmp.eq.s32.totalorder %s18, 0
    %p180 = por %p178, %p179
    %p181 = scmp.ne.s32.totalorder %s167, %s168
    %p182 = scmp.eq.s32.totalorder %s19, 1
    %p183 = por %p181, %p182
    %p185 = scmp.ne.s32.totalorder %s168, %s184
    %p186 = scmp.eq.s32.totalorder %s19, 0
    %p187 = por %p185, %p186
    %p188 = scmp.le.s32.totalorder 1, %s13
    %p189 = scmp.lt.s32.totalorder %s13, 3
    %p190 = pnand %p188, %p189
    %p191 = pneg %p190
    // Predicated region
    $region9: #{resnet_block50_forward.5} parent=5 // pred_check
      _
    $region10: #{resnet_block50_forward.5} parent=5 // pred_check_branch
      %193 = sbr.rel (%p190) target = $region12
    $region11: #{resnet_block50_forward.5} parent=5 // pred_region
      %s194 = ssub.s32 %s13, 1
      // Predicated region
      $region13: #{resnet_block50_forward.5} parent=11 // pred_check
        %p195 = pneg %p60
      $region14: #{resnet_block50_forward.5} parent=11 // pred_check_branch
        %197 = sbr.rel (%p195) target = $region16
      $region15: #{resnet_block50_forward.5} parent=11 // pred_region
        _
      $region16: #{resnet_block50_forward.5} parent=11 // pred_fallthru
        _
      // Predicated region
      $region17: #{resnet_block50_forward.5} parent=11 // pred_check
        %p198 = pneg %p81
      $region18: #{resnet_block50_forward.5} parent=11 // pred_check_branch
        %200 = sbr.rel (%p198) target = $region20
      $region19: #{resnet_block50_forward.5} parent=11 // pred_region
        _
      $region20: #{resnet_block50_forward.5} parent=11 // pred_fallthru
        _
      // Predicated region
      $region21: #{resnet_block50_forward.5} parent=11 // pred_check
        %p201 = pneg %p102
      $region22: #{resnet_block50_forward.5} parent=11 // pred_check_branch
        %203 = sbr.rel (%p201) target = $region24
      $region23: #{resnet_block50_forward.5} parent=11 // pred_region
        _
      $region24: #{resnet_block50_forward.5} parent=11 // pred_fallthru
        _
    $region12: #{resnet_block50_forward.5} parent=5 // pred_fallthru
      _
    %p204 = scmp.lt.s32.totalorder %s13, 2
    // Predicated region
    $region25: #{resnet_block50_forward.5} parent=5 // pred_check
      %p205 = pneg %p204
    $region26: #{resnet_block50_forward.5} parent=5 // pred_check_branch
      %207 = sbr.rel (%p205) target = $region28
    $region27: #{resnet_block50_forward.5} parent=5 // pred_region
      // Predicated region
      $region29: #{resnet_block50_forward.5} parent=27 // pred_check
        %p208 = pneg %p33
      $region30: #{resnet_block50_forward.5} parent=27 // pred_check_branch
        %210 = sbr.rel (%p208) target = $region32
      $region31: #{resnet_block50_forward.5} parent=27 // pred_region
        %p211 = scmp.lt.s32.totalorder %s13, 1
        %s212 = scalar_select %p211, %s13, 1
        %s213 = smul.addr %s212, 32
        %s214 = smul.addr %s213, 4
        %s215 = scalar_lea.vmem %s0, %s214
      $region32: #{resnet_block50_forward.5} parent=27 // pred_fallthru
        _
    $region28: #{resnet_block50_forward.5} parent=5 // pred_fallthru
      _
    %p216 = scmp.le.s32.totalorder 1, %s13
    %p217 = scmp.lt.s32.totalorder %s13, 3
    %p218 = pnand %p216, %p217
    %p219 = pneg %p218
    // Predicated region
    $region33: #{resnet_block50_forward.5} parent=5 // pred_check
      _
    $region34: #{resnet_block50_forward.5} parent=5 // pred_check_branch
      %221 = sbr.rel (%p218) target = $region36
    $region35: #{resnet_block50_forward.5} parent=5 // pred_region
      %s222 = ssub.s32 %s13, 1
      %p223 = scmp.lt.s32.totalorder %s18, 1
      %s224 = scalar_select %p223, %s18, 1
      %s225 = smul.addr %s224, 32
      %s226 = smul.addr %s225, 4
      %s227 = scalar_lea.vmem %s0, %s226
      %p228 = pneg %p39
      %p229 = pneg %p36
      %p230 = pneg %p60
      %p231 = pneg %p57
      %p232 = pneg %p81
      %p233 = pneg %p78
      %p234 = pneg %p102
      %p235 = pneg %p99
      %p236 = pneg %p128
      %p237 = pneg %p125
      %p238 = scmp.lt.s32.totalorder %s18, 1
      %s239 = scalar_select %p238, %s18, 1
      %s240 = smul.addr %s239, 32
      %s241 = smul.addr %s240, 4
      %s242 = scalar_lea.vmem %s4, %s241
      %p243 = pneg %p154
      %p244 = pneg %p151
      %p245 = scmp.lt.s32.totalorder %s18, 1
      %s246 = scalar_select %p245, %s18, 1
      %s247 = smul.addr %s246, 8
      %s248 = scalar_lea.vmem %s5, %s247
      %p249 = pneg %p180
      %p250 = pneg %p177
      %p251 = scmp.lt.s32.totalorder %s18, 1
      %s252 = scalar_select %p251, %s18, 1
      %s253 = smul.addr %s252, 8
      %s254 = scalar_lea.vmem %s6, %s253
      %p255 = scmp.lt.s32.totalorder %s18, 1
      %s256 = scalar_select %p255, %s18, 1
      %s257 = smul.addr %s256, 32
      %s258 = smul.addr %s257, 4
      %s259 = scalar_lea.vmem %s0, %s258
      %p260 = scmp.lt.s32.totalorder %s18, 1
      %s261 = scalar_select %p260, %s18, 1
      %s262 = smul.addr %s261, 32
      %s263 = smul.addr %s262, 4
      %s264 = scalar_lea.vmem %s4, %s263
      %p265 = scmp.lt.s32.totalorder %s18, 1
      %s266 = scalar_select %p265, %s18, 1
      %s267 = smul.addr %s266, 8
      %s268 = scalar_lea.vmem %s5, %s267
      %p269 = scmp.lt.s32.totalorder %s18, 1
      %s270 = scalar_select %p269, %s18, 1
      %s271 = smul.addr %s270, 8
      %s272 = scalar_lea.vmem %s6, %s271
      %v274 = vld [vmem:[%s259] sm:$0xf]
      %v275 = vld [vmem:[%s259 + $0x4] sm:$0xf]
      %v276 = vld [vmem:[%s259 + $0x8] sm:$0xf]
      %v277 = vld [vmem:[%s259 + $0xc] sm:$0xf]
      %v278 = vld [vmem:[%s259 + $0x10] sm:$0xf]
      %v279 = vld [vmem:[%s259 + $0x14] sm:$0xf]
      %v280 = vld [vmem:[%s259 + $0x18] sm:$0xf]
      %v281 = vld [vmem:[%s259 + $0x1c] sm:$0xf]
      %v282 = vld [vmem:[%s259 + $0x20] sm:$0xf]
      %v283 = vld [vmem:[%s259 + $0x24] sm:$0xf]
      %v284 = vld [vmem:[%s259 + $0x28] sm:$0xf]
      %v285 = vld [vmem:[%s259 + $0x2c] sm:$0xf]
      %v286 = vld [vmem:[%s259 + $0x30] sm:$0xf]
      %v287 = vld [vmem:[%s259 + $0x34] sm:$0xf]
      %v288 = vld [vmem:[%s259 + $0x38] sm:$0xf]
      %v289 = vld [vmem:[%s259 + $0x3c] sm:$0xf]
      %v290 = vld [vmem:[%s259 + $0x40] sm:$0xf]
      %v291 = vld [vmem:[%s259 + $0x44] sm:$0xf]
      %v292 = vld [vmem:[%s259 + $0x48] sm:$0xf]
      %v293 = vld [vmem:[%s259 + $0x4c] sm:$0xf]
      %v294 = vld [vmem:[%s259 + $0x50] sm:$0xf]
      %v295 = vld [vmem:[%s259 + $0x54] sm:$0xf]
      %v296 = vld [vmem:[%s259 + $0x58] sm:$0xf]
      %v297 = vld [vmem:[%s259 + $0x5c] sm:$0xf]
      %v298 = vld [vmem:[%s259 + $0x60] sm:$0xf]
      %v299 = vld [vmem:[%s259 + $0x64] sm:$0xf]
      %v300 = vld [vmem:[%s259 + $0x68] sm:$0xf]
      %v301 = vld [vmem:[%s259 + $0x6c] sm:$0xf]
      %v302 = vld [vmem:[%s259 + $0x70] sm:$0xf]
      %v303 = vld [vmem:[%s259 + $0x74] sm:$0xf]
      %v304 = vld [vmem:[%s259 + $0x78] sm:$0xf]
      %v305 = vld [vmem:[%s259 + $0x7c] sm:$0xf]
      %v306 = vunpack.c.l.bf16 %v274
      %v307 = vunpack.c.l.bf16 %v275
      %v308 = vunpack.c.l.bf16 %v276
      %v309 = vunpack.c.l.bf16 %v277
      %v310 = vunpack.c.l.bf16 %v278
      %v311 = vunpack.c.l.bf16 %v279
      %v312 = vunpack.c.l.bf16 %v280
      %v313 = vunpack.c.l.bf16 %v281
      %v314 = vunpack.c.l.bf16 %v282
      %v315 = vunpack.c.l.bf16 %v283
      %v316 = vunpack.c.l.bf16 %v284
      %v317 = vunpack.c.l.bf16 %v285
      %v318 = vunpack.c.l.bf16 %v286
      %v319 = vunpack.c.l.bf16 %v287
      %v320 = vunpack.c.l.bf16 %v288
      %v321 = vunpack.c.l.bf16 %v289
      %v322 = vunpack.c.l.bf16 %v290
      %v323 = vunpack.c.l.bf16 %v291
      %v324 = vunpack.c.l.bf16 %v292
      %v325 = vunpack.c.l.bf16 %v293
      %v326 = vunpack.c.l.bf16 %v294
      %v327 = vunpack.c.l.bf16 %v295
      %v328 = vunpack.c.l.bf16 %v296
      %v329 = vunpack.c.l.bf16 %v297
      %v330 = vunpack.c.l.bf16 %v298
      %v331 = vunpack.c.l.bf16 %v299
      %v332 = vunpack.c.l.bf16 %v300
      %v333 = vunpack.c.l.bf16 %v301
      %v334 = vunpack.c.l.bf16 %v302
      %v335 = vunpack.c.l.bf16 %v303
      %v336 = vunpack.c.l.bf16 %v304
      %v337 = vunpack.c.l.bf16 %v305
      %v338 = vld [vmem:[%s1] sm:$0x1]
      %v340 = vlaneseq
      %v341 = vshrl.u32 %v340, 7
      %v342 = vsub.s32 0, %v341
      %v343 = vrot.slane %v338, %v342
      %v345 = vsub.f32 %v306, %v343
      %v346 = vsub.f32 %v307, %v343
      %v347 = vsub.f32 %v308, %v343
      %v348 = vsub.f32 %v309, %v343
      %v349 = vsub.f32 %v310, %v343
      %v350 = vsub.f32 %v311, %v343
      %v351 = vsub.f32 %v312, %v343
      %v352 = vsub.f32 %v313, %v343
      %v353 = vsub.f32 %v314, %v343
      %v354 = vsub.f32 %v315, %v343
      %v355 = vsub.f32 %v316, %v343
      %v356 = vsub.f32 %v317, %v343
      %v357 = vsub.f32 %v318, %v343
      %v358 = vsub.f32 %v319, %v343
      %v359 = vsub.f32 %v320, %v343
      %v360 = vsub.f32 %v321, %v343
      %v361 = vsub.f32 %v322, %v343
      %v362 = vsub.f32 %v323, %v343
      %v363 = vsub.f32 %v324, %v343
      %v364 = vsub.f32 %v325, %v343
      %v365 = vsub.f32 %v326, %v343
      %v366 = vsub.f32 %v327, %v343
      %v367 = vsub.f32 %v328, %v343
      %v368 = vsub.f32 %v329, %v343
      %v369 = vsub.f32 %v330, %v343
      %v370 = vsub.f32 %v331, %v343
      %v371 = vsub.f32 %v332, %v343
      %v372 = vsub.f32 %v333, %v343
      %v373 = vsub.f32 %v334, %v343
      %v374 = vsub.f32 %v335, %v343
      %v375 = vsub.f32 %v336, %v343
      %v376 = vsub.f32 %v337, %v343
      %v377 = vld [vmem:[%s2] sm:$0x1]
      %v379 = vlaneseq
      %v380 = vshrl.u32 %v379, 7
      %v381 = vsub.s32 0, %v380
      %v382 = vrot.slane %v377, %v381
      %v384 = vmul.f32 %v345, %v382
      %v385 = vmul.f32 %v346, %v382
      %v386 = vmul.f32 %v347, %v382
      %v387 = vmul.f32 %v348, %v382
      %v388 = vmul.f32 %v349, %v382
      %v389 = vmul.f32 %v350, %v382
      %v390 = vmul.f32 %v351, %v382
      %v391 = vmul.f32 %v352, %v382
      %v392 = vmul.f32 %v353, %v382
      %v393 = vmul.f32 %v354, %v382
      %v394 = vmul.f32 %v355, %v382
      %v395 = vmul.f32 %v356, %v382
      %v396 = vmul.f32 %v357, %v382
      %v397 = vmul.f32 %v358, %v382
      %v398 = vmul.f32 %v359, %v382
      %v399 = vmul.f32 %v360, %v382
      %v400 = vmul.f32 %v361, %v382
      %v401 = vmul.f32 %v362, %v382
      %v402 = vmul.f32 %v363, %v382
      %v403 = vmul.f32 %v364, %v382
      %v404 = vmul.f32 %v365, %v382
      %v405 = vmul.f32 %v366, %v382
      %v406 = vmul.f32 %v367, %v382
      %v407 = vmul.f32 %v368, %v382
      %v408 = vmul.f32 %v369, %v382
      %v409 = vmul.f32 %v370, %v382
      %v410 = vmul.f32 %v371, %v382
      %v411 = vmul.f32 %v372, %v382
      %v412 = vmul.f32 %v373, %v382
      %v413 = vmul.f32 %v374, %v382
      %v414 = vmul.f32 %v375, %v382
      %v415 = vmul.f32 %v376, %v382
      %v416 = vmax.f32 %v384, 0.0
      %v417 = vmax.f32 %v385, 0.0
      %v418 = vmax.f32 %v386, 0.0
      %v419 = vmax.f32 %v387, 0.0
      %v420 = vmax.f32 %v388, 0.0
      %v421 = vmax.f32 %v389, 0.0
      %v422 = vmax.f32 %v390, 0.0
      %v423 = vmax.f32 %v391, 0.0
      %v424 = vmax.f32 %v392, 0.0
      %v425 = vmax.f32 %v393, 0.0
      %v426 = vmax.f32 %v394, 0.0
      %v427 = vmax.f32 %v395, 0.0
      %v428 = vmax.f32 %v396, 0.0
      %v429 = vmax.f32 %v397, 0.0
      %v430 = vmax.f32 %v398, 0.0
      %v431 = vmax.f32 %v399, 0.0
      %v432 = vmax.f32 %v400, 0.0
      %v433 = vmax.f32 %v401, 0.0
      %v434 = vmax.f32 %v402, 0.0
      %v435 = vmax.f32 %v403, 0.0
      %v436 = vmax.f32 %v404, 0.0
      %v437 = vmax.f32 %v405, 0.0
      %v438 = vmax.f32 %v406, 0.0
      %v439 = vmax.f32 %v407, 0.0
      %v440 = vmax.f32 %v408, 0.0
      %v441 = vmax.f32 %v409, 0.0
      %v442 = vmax.f32 %v410, 0.0
      %v443 = vmax.f32 %v411, 0.0
      %v444 = vmax.f32 %v412, 0.0
      %v445 = vmax.f32 %v413, 0.0
      %v446 = vmax.f32 %v414, 0.0
      %v447 = vmax.f32 %v415, 0.0
      %v448 = vpack.c.bf16 %v417, %v416
      %v449 = vpack.c.bf16 %v419, %v418
      %v450 = vpack.c.bf16 %v421, %v420
      %v451 = vpack.c.bf16 %v423, %v422
      %v452 = vpack.c.bf16 %v425, %v424
      %v453 = vpack.c.bf16 %v427, %v426
      %v454 = vpack.c.bf16 %v429, %v428
      %v455 = vpack.c.bf16 %v431, %v430
      %v456 = vpack.c.bf16 %v433, %v432
      %v457 = vpack.c.bf16 %v435, %v434
      %v458 = vpack.c.bf16 %v437, %v436
      %v459 = vpack.c.bf16 %v439, %v438
      %v460 = vpack.c.bf16 %v441, %v440
      %v461 = vpack.c.bf16 %v443, %v442
      %v462 = vpack.c.bf16 %v445, %v444
      %v463 = vpack.c.bf16 %v447, %v446
      %s464 = scalar_lea.vmem [#allocation2], 24
      %465 = vst [vmem:[%s464 + $0x8] sm:$0xff] %v448
      %466 = vst [vmem:[%s464 + $0x20] sm:$0xff] %v449
      %467 = vst [vmem:[%s464 + $0x38] sm:$0xff] %v450
      %468 = vst [vmem:[%s464 + $0x50] sm:$0xff] %v451
      %469 = vst [vmem:[%s464 + $0x68] sm:$0xff] %v452
      %470 = vst [vmem:[%s464 + $0x80] sm:$0xff] %v453
      %471 = vst [vmem:[%s464 + $0x98] sm:$0xff] %v454
      %472 = vst [vmem:[%s464 + $0xb0] sm:$0xff] %v455
      %473 = vst [vmem:[%s464 + $0xc8] sm:$0xff] %v456
      %474 = vst [vmem:[%s464 + $0xe0] sm:$0xff] %v457
      %475 = vst [vmem:[%s464 + $0xf8] sm:$0xff] %v458
      %476 = vst [vmem:[%s464 + $0x110] sm:$0xff] %v459
      %477 = vst [vmem:[%s464 + $0x128] sm:$0xff] %v460
      %478 = vst [vmem:[%s464 + $0x140] sm:$0xff] %v461
      %479 = vst [vmem:[%s464 + $0x158] sm:$0xff] %v462
      %480 = vst [vmem:[%s464 + $0x170] sm:$0xff] %v463
      %481 = vst [vmem:[#allocation2] sm:$0xff] 0
      %482 = vst [vmem:[#allocation2 + $0x8] sm:$0xff] 0
      %483 = vst [vmem:[#allocation2 + $0x10] sm:$0xff] 0
      %s484 = scalar_lea.vmem [#allocation2], 408
      %485 = vst [vmem:[%s484] sm:$0xff] 0
      %486 = vst [vmem:[%s484 + $0x8] sm:$0xff] 0
      %487 = vst [vmem:[%s484 + $0x10] sm:$0xff] 0
      %488 = vst [vmem:[%s464] sm:$0xff] 0
      %489 = vst [vmem:[%s464 + $0x18] sm:$0xff] 0
      %490 = vst [vmem:[%s464 + $0x30] sm:$0xff] 0
      %491 = vst [vmem:[%s464 + $0x48] sm:$0xff] 0
      %492 = vst [vmem:[%s464 + $0x60] sm:$0xff] 0
      %493 = vst [vmem:[%s464 + $0x78] sm:$0xff] 0
      %494 = vst [vmem:[%s464 + $0x90] sm:$0xff] 0
      %495 = vst [vmem:[%s464 + $0xa8] sm:$0xff] 0
      %496 = vst [vmem:[%s464 + $0xc0] sm:$0xff] 0
      %497 = vst [vmem:[%s464 + $0xd8] sm:$0xff] 0
      %498 = vst [vmem:[%s464 + $0xf0] sm:$0xff] 0
      %499 = vst [vmem:[%s464 + $0x108] sm:$0xff] 0
      %500 = vst [vmem:[%s464 + $0x120] sm:$0xff] 0
      %501 = vst [vmem:[%s464 + $0x138] sm:$0xff] 0
      %502 = vst [vmem:[%s464 + $0x150] sm:$0xff] 0
      %503 = vst [vmem:[%s464 + $0x168] sm:$0xff] 0
      %504 = vst [vmem:[%s464 + $0x10] sm:$0xff] 0
      %505 = vst [vmem:[%s464 + $0x28] sm:$0xff] 0
      %506 = vst [vmem:[%s464 + $0x40] sm:$0xff] 0
      %507 = vst [vmem:[%s464 + $0x58] sm:$0xff] 0
      %508 = vst [vmem:[%s464 + $0x70] sm:$0xff] 0
      %509 = vst [vmem:[%s464 + $0x88] sm:$0xff] 0
      %510 = vst [vmem:[%s464 + $0xa0] sm:$0xff] 0
      %511 = vst [vmem:[%s464 + $0xb8] sm:$0xff] 0
      %512 = vst [vmem:[%s464 + $0xd0] sm:$0xff] 0
      %513 = vst [vmem:[%s464 + $0xe8] sm:$0xff] 0
      %514 = vst [vmem:[%s464 + $0x100] sm:$0xff] 0
      %515 = vst [vmem:[%s464 + $0x118] sm:$0xff] 0
      %516 = vst [vmem:[%s464 + $0x130] sm:$0xff] 0
      %517 = vst [vmem:[%s464 + $0x148] sm:$0xff] 0
      %518 = vst [vmem:[%s464 + $0x160] sm:$0xff] 0
      %519 = vst [vmem:[%s464 + $0x178] sm:$0xff] 0
      %v520 = vld [vmem:[#allocation2] sm:$0x80]
      %v521 = vld [vmem:[#allocation2 + $0x8] sm:$0xff]
      %v522 = vld [vmem:[#allocation2 + $0x18] sm:$0x80]
      %v523 = vld [vmem:[#allocation2 + $0x20] sm:$0xff]
      %v524 = vld [vmem:[#allocation2 + $0x30] sm:$0x80]
      %v525 = vld [vmem:[#allocation2 + $0x38] sm:$0xff]
      %v526 = vld [vmem:[#allocation2 + $0x48] sm:$0x80]
      %v527 = vld [vmem:[#allocation2 + $0x50] sm:$0xff]
      %v528 = vld [vmem:[#allocation2 + $0x60] sm:$0x80]
      %v529 = vld [vmem:[#allocation2 + $0x68] sm:$0xff]
      %v530 = vld [vmem:[#allocation2 + $0x78] sm:$0x80]
      %v531 = vld [vmem:[#allocation2 + $0x80] sm:$0xff]
      %v532 = vld [vmem:[#allocation2 + $0x90] sm:$0x80]
      %v533 = vld [vmem:[#allocation2 + $0x98] sm:$0xff]
      %v534 = vld [vmem:[#allocation2 + $0xa8] sm:$0x80]
      %v535 = vld [vmem:[#allocation2 + $0xb0] sm:$0xff]
      %v536 = vld [vmem:[#allocation2 + $0xc0] sm:$0x80]
      %v537 = vld [vmem:[#allocation2 + $0xc8] sm:$0xff]
      %v538 = vld [vmem:[#allocation2 + $0xd8] sm:$0x80]
      %v539 = vld [vmem:[#allocation2 + $0xe0] sm:$0xff]
      %v540 = vld [vmem:[#allocation2 + $0xf0] sm:$0x80]
      %v541 = vld [vmem:[#allocation2 + $0xf8] sm:$0xff]
      %v542 = vld [vmem:[#allocation2 + $0x108] sm:$0x80]
      %v543 = vld [vmem:[#allocation2 + $0x110] sm:$0xff]
      %v544 = vld [vmem:[#allocation2 + $0x120] sm:$0x80]
      %v545 = vld [vmem:[#allocation2 + $0x128] sm:$0xff]
      %v546 = vld [vmem:[#allocation2 + $0x138] sm:$0x80]
      %v547 = vld [vmem:[#allocation2 + $0x140] sm:$0xff]
      %v548 = vld [vmem:[#allocation2 + $0x150] sm:$0x80]
      %v549 = vld [vmem:[#allocation2 + $0x158] sm:$0xff]
      %v550 = vld [vmem:[#allocation2 + $0x168] sm:$0x80]
      %v551 = vld [vmem:[#allocation2 + $0x170] sm:$0xff]
      %vm552 = vsmask.f32 256
      %v554 = vshrl.u32 %v520, 16
      %v556 = vrot.slane %v554, 7
      %v558 = vshrl.u32 %v521, 16
      %v560 = vrot.slane %v558, 7
      %v561 = vshll.u32 %v521, 16
      %v563 = vor.u32 %v560, %v561
      %v564 = vsel %vm552, %v556, %v563
      %v566 = vshrl.u32 %v522, 16
      %v568 = vrot.slane %v566, 7
      %v570 = vshrl.u32 %v523, 16
      %v572 = vrot.slane %v570, 7
      %v573 = vshll.u32 %v523, 16
      %v575 = vor.u32 %v572, %v573
      %v576 = vsel %vm552, %v568, %v575
      %v578 = vshrl.u32 %v524, 16
      %v580 = vrot.slane %v578, 7
      %v582 = vshrl.u32 %v525, 16
      %v584 = vrot.slane %v582, 7
      %v585 = vshll.u32 %v525, 16
      %v587 = vor.u32 %v584, %v585
      %v588 = vsel %vm552, %v580, %v587
      %v590 = vshrl.u32 %v526, 16
      %v592 = vrot.slane %v590, 7
      %v594 = vshrl.u32 %v527, 16
      %v596 = vrot.slane %v594, 7
      %v597 = vshll.u32 %v527, 16
      %v599 = vor.u32 %v596, %v597
      %v600 = vsel %vm552, %v592, %v599
      %v602 = vshrl.u32 %v528, 16
      %v604 = vrot.slane %v602, 7
      %v606 = vshrl.u32 %v529, 16
      %v608 = vrot.slane %v606, 7
      %v609 = vshll.u32 %v529, 16
      %v611 = vor.u32 %v608, %v609
      %v612 = vsel %vm552, %v604, %v611
      %v614 = vshrl.u32 %v530, 16
      %v616 = vrot.slane %v614, 7
      %v618 = vshrl.u32 %v531, 16
      %v620 = vrot.slane %v618, 7
      %v621 = vshll.u32 %v531, 16
      %v623 = vor.u32 %v620, %v621
      %v624 = vsel %vm552, %v616, %v623
      %v626 = vshrl.u32 %v532, 16
      %v628 = vrot.slane %v626, 7
      %v630 = vshrl.u32 %v533, 16
      %v632 = vrot.slane %v630, 7
      %v633 = vshll.u32 %v533, 16
      %v635 = vor.u32 %v632, %v633
      %v636 = vsel %vm552, %v628, %v635
      %v638 = vshrl.u32 %v534, 16
      %v640 = vrot.slane %v638, 7
      %v642 = vshrl.u32 %v535, 16
      %v644 = vrot.slane %v642, 7
      %v645 = vshll.u32 %v535, 16
      %v647 = vor.u32 %v644, %v645
      %v648 = vsel %vm552, %v640, %v647
      %v650 = vshrl.u32 %v536, 16
      %v652 = vrot.slane %v650, 7
      %v654 = vshrl.u32 %v537, 16
      %v656 = vrot.slane %v654, 7
      %v657 = vshll.u32 %v537, 16
      %v659 = vor.u32 %v656, %v657
      %v660 = vsel %vm552, %v652, %v659
      %v662 = vshrl.u32 %v538, 16
      %v664 = vrot.slane %v662, 7
      %v666 = vshrl.u32 %v539, 16
      %v668 = vrot.slane %v666, 7
      %v669 = vshll.u32 %v539, 16
      %v671 = vor.u32 %v668, %v669
      %v672 = vsel %vm552, %v664, %v671
      %v674 = vshrl.u32 %v540, 16
      %v676 = vrot.slane %v674, 7
      %v678 = vshrl.u32 %v541, 16
      %v680 = vrot.slane %v678, 7
      %v681 = vshll.u32 %v541, 16
      %v683 = vor.u32 %v680, %v681
      %v684 = vsel %vm552, %v676, %v683
      %v686 = vshrl.u32 %v542, 16
      %v688 = vrot.slane %v686, 7
      %v690 = vshrl.u32 %v543, 16
      %v692 = vrot.slane %v690, 7
      %v693 = vshll.u32 %v543, 16
      %v695 = vor.u32 %v692, %v693
      %v696 = vsel %vm552, %v688, %v695
      %v698 = vshrl.u32 %v544, 16
      %v700 = vrot.slane %v698, 7
      %v702 = vshrl.u32 %v545, 16
      %v704 = vrot.slane %v702, 7
      %v705 = vshll.u32 %v545, 16
      %v707 = vor.u32 %v704, %v705
      %v708 = vsel %vm552, %v700, %v707
      %v710 = vshrl.u32 %v546, 16
      %v712 = vrot.slane %v710, 7
      %v714 = vshrl.u32 %v547, 16
      %v716 = vrot.slane %v714, 7
      %v717 = vshll.u32 %v547, 16
      %v719 = vor.u32 %v716, %v717
      %v720 = vsel %vm552, %v712, %v719
      %v722 = vshrl.u32 %v548, 16
      %v724 = vrot.slane %v722, 7
      %v726 = vshrl.u32 %v549, 16
      %v728 = vrot.slane %v726, 7
      %v729 = vshll.u32 %v549, 16
      %v731 = vor.u32 %v728, %v729
      %v732 = vsel %vm552, %v724, %v731
      %v734 = vshrl.u32 %v550, 16
      %v736 = vrot.slane %v734, 7
      %v738 = vshrl.u32 %v551, 16
      %v740 = vrot.slane %v738, 7
      %v741 = vshll.u32 %v551, 16
      %v743 = vor.u32 %v740, %v741
      %v744 = vsel %vm552, %v736, %v743
      %761 = vst [vmem:[#allocation3] sm:$0xff] %v564
      %762 = vst [vmem:[#allocation3 + $0x18] sm:$0xff] %v576
      %763 = vst [vmem:[#allocation3 + $0x30] sm:$0xff] %v588
      %764 = vst [vmem:[#allocation3 + $0x48] sm:$0xff] %v600
      %765 = vst [vmem:[#allocation3 + $0x60] sm:$0xff] %v612
      %766 = vst [vmem:[#allocation3 + $0x78] sm:$0xff] %v624
      %767 = vst [vmem:[#allocation3 + $0x90] sm:$0xff] %v636
      %768 = vst [vmem:[#allocation3 + $0xa8] sm:$0xff] %v648
      %769 = vst [vmem:[#allocation3 + $0xc0] sm:$0xff] %v660
      %770 = vst [vmem:[#allocation3 + $0xd8] sm:$0xff] %v672
      %771 = vst [vmem:[#allocation3 + $0xf0] sm:$0xff] %v684
      %772 = vst [vmem:[#allocation3 + $0x108] sm:$0xff] %v696
      %773 = vst [vmem:[#allocation3 + $0x120] sm:$0xff] %v708
      %774 = vst [vmem:[#allocation3 + $0x138] sm:$0xff] %v720
      %775 = vst [vmem:[#allocation3 + $0x150] sm:$0xff] %v732
      %776 = vst [vmem:[#allocation3 + $0x168] sm:$0xff] %v744
      %v777 = vld [vmem:[#allocation2 + $0x8] sm:$0xff]
      %v778 = vld [vmem:[#allocation2 + $0x20] sm:$0xff]
      %v779 = vld [vmem:[#allocation2 + $0x38] sm:$0xff]
      %v780 = vld [vmem:[#allocation2 + $0x50] sm:$0xff]
      %v781 = vld [vmem:[#allocation2 + $0x68] sm:$0xff]
      %v782 = vld [vmem:[#allocation2 + $0x80] sm:$0xff]
      %v783 = vld [vmem:[#allocation2 + $0x98] sm:$0xff]
      %v784 = vld [vmem:[#allocation2 + $0xb0] sm:$0xff]
      %v785 = vld [vmem:[#allocation2 + $0xc8] sm:$0xff]
      %v786 = vld [vmem:[#allocation2 + $0xe0] sm:$0xff]
      %v787 = vld [vmem:[#allocation2 + $0xf8] sm:$0xff]
      %v788 = vld [vmem:[#allocation2 + $0x110] sm:$0xff]
      %v789 = vld [vmem:[#allocation2 + $0x128] sm:$0xff]
      %v790 = vld [vmem:[#allocation2 + $0x140] sm:$0xff]
      %v791 = vld [vmem:[#allocation2 + $0x158] sm:$0xff]
      %v792 = vld [vmem:[#allocation2 + $0x170] sm:$0xff]
      %793 = vst [vmem:[#allocation3 + $0x8] sm:$0xff] %v777
      %794 = vst [vmem:[#allocation3 + $0x20] sm:$0xff] %v778
      %795 = vst [vmem:[#allocation3 + $0x38] sm:$0xff] %v779
      %796 = vst [vmem:[#allocation3 + $0x50] sm:$0xff] %v780
      %797 = vst [vmem:[#allocation3 + $0x68] sm:$0xff] %v781
      %798 = vst [vmem:[#allocation3 + $0x80] sm:$0xff] %v782
      %799 = vst [vmem:[#allocation3 + $0x98] sm:$0xff] %v783
      %800 = vst [vmem:[#allocation3 + $0xb0] sm:$0xff] %v784
      %801 = vst [vmem:[#allocation3 + $0xc8] sm:$0xff] %v785
      %802 = vst [vmem:[#allocation3 + $0xe0] sm:$0xff] %v786
      %803 = vst [vmem:[#allocation3 + $0xf8] sm:$0xff] %v787
      %804 = vst [vmem:[#allocation3 + $0x110] sm:$0xff] %v788
      %805 = vst [vmem:[#allocation3 + $0x128] sm:$0xff] %v789
      %806 = vst [vmem:[#allocation3 + $0x140] sm:$0xff] %v790
      %807 = vst [vmem:[#allocation3 + $0x158] sm:$0xff] %v791
      %808 = vst [vmem:[#allocation3 + $0x170] sm:$0xff] %v792
      %v809 = vld [vmem:[#allocation2 + $0x8] sm:$0xff]
      %v810 = vld [vmem:[#allocation2 + $0x10] sm:$0x1]
      %v811 = vld [vmem:[#allocation2 + $0x20] sm:$0xff]
      %v812 = vld [vmem:[#allocation2 + $0x28] sm:$0x1]
      %v813 = vld [vmem:[#allocation2 + $0x38] sm:$0xff]
      %v814 = vld [vmem:[#allocation2 + $0x40] sm:$0x1]
      %v815 = vld [vmem:[#allocation2 + $0x50] sm:$0xff]
      %v816 = vld [vmem:[#allocation2 + $0x58] sm:$0x1]
      %v817 = vld [vmem:[#allocation2 + $0x68] sm:$0xff]
      %v818 = vld [vmem:[#allocation2 + $0x70] sm:$0x1]
      %v819 = vld [vmem:[#allocation2 + $0x80] sm:$0xff]
      %v820 = vld [vmem:[#allocation2 + $0x88] sm:$0x1]
      %v821 = vld [vmem:[#allocation2 + $0x98] sm:$0xff]
      %v822 = vld [vmem:[#allocation2 + $0xa0] sm:$0x1]
      %v823 = vld [vmem:[#allocation2 + $0xb0] sm:$0xff]
      %v824 = vld [vmem:[#allocation2 + $0xb8] sm:$0x1]
      %v825 = vld [vmem:[#allocation2 + $0xc8] sm:$0xff]
      %v826 = vld [vmem:[#allocation2 + $0xd0] sm:$0x1]
      %v827 = vld [vmem:[#allocation2 + $0xe0] sm:$0xff]
      %v828 = vld [vmem:[#allocation2 + $0xe8] sm:$0x1]
      %v829 = vld [vmem:[#allocation2 + $0xf8] sm:$0xff]
      %v830 = vld [vmem:[#allocation2 + $0x100] sm:$0x1]
      %v831 = vld [vmem:[#allocation2 + $0x110] sm:$0xff]
      %v832 = vld [vmem:[#allocation2 + $0x118] sm:$0x1]
      %v833 = vld [vmem:[#allocation2 + $0x128] sm:$0xff]
      %v834 = vld [vmem:[#allocation2 + $0x130] sm:$0x1]
      %v835 = vld [vmem:[#allocation2 + $0x140] sm:$0xff]
      %v836 = vld [vmem:[#allocation2 + $0x148] sm:$0x1]
      %v837 = vld [vmem:[#allocation2 + $0x158] sm:$0xff]
      %v838 = vld [vmem:[#allocation2 + $0x160] sm:$0x1]
      %v839 = vld [vmem:[#allocation2 + $0x170] sm:$0xff]
      %v840 = vld [vmem:[#allocation2 + $0x178] sm:$0x1]
      %vm841 = vsmask.f32 7424
      %v843 = vshrl.u32 %v809, 16
      %v845 = vshll.u32 %v809, 16
      %v847 = vrot.slane %v845, 1
      %v848 = vor.u32 %v843, %v847
      %v850 = vshll.u32 %v810, 16
      %v852 = vrot.slane %v850, 1
      %v853 = vsel %vm841, %v848, %v852
      %v855 = vshrl.u32 %v811, 16
      %v857 = vshll.u32 %v811, 16
      %v859 = vrot.slane %v857, 1
      %v860 = vor.u32 %v855, %v859
      %v862 = vshll.u32 %v812, 16
      %v864 = vrot.slane %v862, 1
      %v865 = vsel %vm841, %v860, %v864
      %v867 = vshrl.u32 %v813, 16
      %v869 = vshll.u32 %v813, 16
      %v871 = vrot.slane %v869, 1
      %v872 = vor.u32 %v867, %v871
      %v874 = vshll.u32 %v814, 16
      %v876 = vrot.slane %v874, 1
      %v877 = vsel %vm841, %v872, %v876
      %v879 = vshrl.u32 %v815, 16
      %v881 = vshll.u32 %v815, 16
      %v883 = vrot.slane %v881, 1
      %v884 = vor.u32 %v879, %v883
      %v886 = vshll.u32 %v816, 16
      %v888 = vrot.slane %v886, 1
      %v889 = vsel %vm841, %v884, %v888
      %v891 = vshrl.u32 %v817, 16
      %v893 = vshll.u32 %v817, 16
      %v895 = vrot.slane %v893, 1
      %v896 = vor.u32 %v891, %v895
      %v898 = vshll.u32 %v818, 16
      %v900 = vrot.slane %v898, 1
      %v901 = vsel %vm841, %v896, %v900
      %v903 = vshrl.u32 %v819, 16
      %v905 = vshll.u32 %v819, 16
      %v907 = vrot.slane %v905, 1
      %v908 = vor.u32 %v903, %v907
      %v910 = vshll.u32 %v820, 16
      %v912 = vrot.slane %v910, 1
      %v913 = vsel %vm841, %v908, %v912
      %v915 = vshrl.u32 %v821, 16
      %v917 = vshll.u32 %v821, 16
      %v919 = vrot.slane %v917, 1
      %v920 = vor.u32 %v915, %v919
      %v922 = vshll.u32 %v822, 16
      %v924 = vrot.slane %v922, 1
      %v925 = vsel %vm841, %v920, %v924
      %v927 = vshrl.u32 %v823, 16
      %v929 = vshll.u32 %v823, 16
      %v931 = vrot.slane %v929, 1
      %v932 = vor.u32 %v927, %v931
      %v934 = vshll.u32 %v824, 16
      %v936 = vrot.slane %v934, 1
      %v937 = vsel %vm841, %v932, %v936
      %v939 = vshrl.u32 %v825, 16
      %v941 = vshll.u32 %v825, 16
      %v943 = vrot.slane %v941, 1
      %v944 = vor.u32 %v939, %v943
      %v946 = vshll.u32 %v826, 16
      %v948 = vrot.slane %v946, 1
      %v949 = vsel %vm841, %v944, %v948
      %v951 = vshrl.u32 %v827, 16
      %v953 = vshll.u32 %v827, 16
      %v955 = vrot.slane %v953, 1
      %v956 = vor.u32 %v951, %v955
      %v958 = vshll.u32 %v828, 16
      %v960 = vrot.slane %v958, 1
      %v961 = vsel %vm841, %v956, %v960
      %v963 = vshrl.u32 %v829, 16
      %v965 = vshll.u32 %v829, 16
      %v967 = vrot.slane %v965, 1
      %v968 = vor.u32 %v963, %v967
      %v970 = vshll.u32 %v830, 16
      %v972 = vrot.slane %v970, 1
      %v973 = vsel %vm841, %v968, %v972
      %v975 = vshrl.u32 %v831, 16
      %v977 = vshll.u32 %v831, 16
      %v979 = vrot.slane %v977, 1
      %v980 = vor.u32 %v975, %v979
      %v982 = vshll.u32 %v832, 16
      %v984 = vrot.slane %v982, 1
      %v985 = vsel %vm841, %v980, %v984
      %v987 = vshrl.u32 %v833, 16
      %v989 = vshll.u32 %v833, 16
      %v991 = vrot.slane %v989, 1
      %v992 = vor.u32 %v987, %v991
      %v994 = vshll.u32 %v834, 16
      %v996 = vrot.slane %v994, 1
      %v997 = vsel %vm841, %v992, %v996
      %v999 = vshrl.u32 %v835, 16
      %v1001 = vshll.u32 %v835, 16
      %v1003 = vrot.slane %v1001, 1
      %v1004 = vor.u32 %v999, %v1003
      %v1006 = vshll.u32 %v836, 16
      %v1008 = vrot.slane %v1006, 1
      %v1009 = vsel %vm841, %v1004, %v1008
      %v1011 = vshrl.u32 %v837, 16
      %v1013 = vshll.u32 %v837, 16
      %v1015 = vrot.slane %v1013, 1
      %v1016 = vor.u32 %v1011, %v1015
      %v1018 = vshll.u32 %v838, 16
      %v1020 = vrot.slane %v1018, 1
      %v1021 = vsel %vm841, %v1016, %v1020
      %v1023 = vshrl.u32 %v839, 16
      %v1025 = vshll.u32 %v839, 16
      %v1027 = vrot.slane %v1025, 1
      %v1028 = vor.u32 %v1023, %v1027
      %v1030 = vshll.u32 %v840, 16
      %v1032 = vrot.slane %v1030, 1
      %v1033 = vsel %vm841, %v1028, %v1032
      %1050 = vst [vmem:[#allocation3 + $0x10] sm:$0xff] %v853
      %1051 = vst [vmem:[#allocation3 + $0x28] sm:$0xff] %v865
      %1052 = vst [vmem:[#allocation3 + $0x40] sm:$0xff] %v877
      %1053 = vst [vmem:[#allocation3 + $0x58] sm:$0xff] %v889
      %1054 = vst [vmem:[#allocation3 + $0x70] sm:$0xff] %v901
      %1055 = vst [vmem:[#allocation3 + $0x88] sm:$0xff] %v913
      %1056 = vst [vmem:[#allocation3 + $0xa0] sm:$0xff] %v925
      %1057 = vst [vmem:[#allocation3 + $0xb8] sm:$0xff] %v937
      %1058 = vst [vmem:[#allocation3 + $0xd0] sm:$0xff] %v949
      %1059 = vst [vmem:[#allocation3 + $0xe8] sm:$0xff] %v961
      %1060 = vst [vmem:[#allocation3 + $0x100] sm:$0xff] %v973
      %1061 = vst [vmem:[#allocation3 + $0x118] sm:$0xff] %v985
      %1062 = vst [vmem:[#allocation3 + $0x130] sm:$0xff] %v997
      %1063 = vst [vmem:[#allocation3 + $0x148] sm:$0xff] %v1009
      %1064 = vst [vmem:[#allocation3 + $0x160] sm:$0xff] %v1021
      %1065 = vst [vmem:[#allocation3 + $0x178] sm:$0xff] %v1033
      %v1066 = vld [vmem:[#allocation3] sm:$0xff]
      %v1067 = vld [vmem:[#allocation3 + $0x8] sm:$0xff]
      %v1068 = vld [vmem:[#allocation3 + $0x10] sm:$0xff]
      %v1069 = vld [vmem:[#allocation3 + $0x18] sm:$0xff]
      %v1070 = vld [vmem:[#allocation3 + $0x20] sm:$0xff]
      %v1071 = vld [vmem:[#allocation3 + $0x28] sm:$0xff]
      %v1072 = vld [vmem:[#allocation3 + $0x30] sm:$0xff]
      %v1073 = vld [vmem:[#allocation3 + $0x38] sm:$0xff]
      %v1074 = vld [vmem:[#allocation3 + $0x40] sm:$0xff]
      %v1075 = vld [vmem:[#allocation3 + $0x48] sm:$0xff]
      %v1076 = vld [vmem:[#allocation3 + $0x50] sm:$0xff]
      %v1077 = vld [vmem:[#allocation3 + $0x58] sm:$0xff]
      %v1078 = vld [vmem:[#allocation3 + $0x60] sm:$0xff]
      %v1079 = vld [vmem:[#allocation3 + $0x68] sm:$0xff]
      %v1080 = vld [vmem:[#allocation3 + $0x70] sm:$0xff]
      %v1081 = vld [vmem:[#allocation3 + $0x78] sm:$0xff]
      %v1082 = vld [vmem:[#allocation3 + $0x80] sm:$0xff]
      %v1083 = vld [vmem:[#allocation3 + $0x88] sm:$0xff]
      %v1084 = vld [vmem:[#allocation3 + $0x90] sm:$0xff]
      %v1085 = vld [vmem:[#allocation3 + $0x98] sm:$0xff]
      %v1086 = vld [vmem:[#allocation3 + $0xa0] sm:$0xff]
      %v1087 = vld [vmem:[#allocation3 + $0xa8] sm:$0xff]
      %v1088 = vld [vmem:[#allocation3 + $0xb0] sm:$0xff]
      %v1089 = vld [vmem:[#allocation3 + $0xb8] sm:$0xff]
      %v1090 = vld [vmem:[#allocation3 + $0xc0] sm:$0xff]
      %v1091 = vld [vmem:[#allocation3 + $0xc8] sm:$0xff]
      %v1092 = vld [vmem:[#allocation3 + $0xd0] sm:$0xff]
      %v1093 = vld [vmem:[#allocation3 + $0xd8] sm:$0xff]
      %v1094 = vld [vmem:[#allocation3 + $0xe0] sm:$0xff]
      %v1095 = vld [vmem:[#allocation3 + $0xe8] sm:$0xff]
      %v1096 = vld [vmem:[#allocation3 + $0xf0] sm:$0xff]
      %v1097 = vld [vmem:[#allocation3 + $0xf8] sm:$0xff]
      %v1098 = vld [vmem:[#allocation3 + $0x100] sm:$0xff]
      %v1099 = vld [vmem:[#allocation3 + $0x108] sm:$0xff]
      %v1100 = vld [vmem:[#allocation3 + $0x110] sm:$0xff]
      %v1101 = vld [vmem:[#allocation3 + $0x118] sm:$0xff]
      %v1102 = vld [vmem:[#allocation3 + $0x120] sm:$0xff]
      %v1103 = vld [vmem:[#allocation3 + $0x128] sm:$0xff]
      %v1104 = vld [vmem:[#allocation3 + $0x130] sm:$0xff]
      %v1105 = vld [vmem:[#allocation3 + $0x138] sm:$0xff]
      %v1106 = vld [vmem:[#allocation3 + $0x140] sm:$0xff]
      %v1107 = vld [vmem:[#allocation3 + $0x148] sm:$0xff]
      %v1108 = vld [vmem:[#allocation3 + $0x150] sm:$0xff]
      %v1109 = vld [vmem:[#allocation3 + $0x158] sm:$0xff]
      %v1110 = vld [vmem:[#allocation3 + $0x160] sm:$0xff]
      %v1111 = vld [vmem:[#allocation3 + $0x168] sm:$0xff]
      %v1112 = vld [vmem:[#allocation3 + $0x170] sm:$0xff]
      %v1113 = vld [vmem:[#allocation3 + $0x178] sm:$0xff]
      %v1114 = vld [vmem:[%s3] sm:$0xf]
      %v1115 = vld [vmem:[%s3 + $0x4] sm:$0xf]
      %v1116 = vld [vmem:[%s3 + $0x8] sm:$0xf]
      %v1117 = vld [vmem:[%s3 + $0xc] sm:$0xf]
      %v1118 = vld [vmem:[%s3 + $0x10] sm:$0xf]
      %v1119 = vld [vmem:[%s3 + $0x14] sm:$0xf]
      %v1120 = vld [vmem:[%s3 + $0x18] sm:$0xf]
      %v1121 = vld [vmem:[%s3 + $0x1c] sm:$0xf]
      %v1122 = vld [vmem:[%s3 + $0x20] sm:$0xf]
      %v1123 = vld [vmem:[%s3 + $0x24] sm:$0xf]
      %v1124 = vld [vmem:[%s3 + $0x28] sm:$0xf]
      %v1125 = vld [vmem:[%s3 + $0x2c] sm:$0xf]
      %v1126 = vld [vmem:[%s3 + $0x30] sm:$0xf]
      %v1127 = vld [vmem:[%s3 + $0x34] sm:$0xf]
      %v1128 = vld [vmem:[%s3 + $0x38] sm:$0xf]
      %v1129 = vld [vmem:[%s3 + $0x3c] sm:$0xf]
      %v1130 = vld [vmem:[%s3 + $0x40] sm:$0xf]
      %v1131 = vld [vmem:[%s3 + $0x44] sm:$0xf]
      %v1132 = vld [vmem:[%s3 + $0x48] sm:$0xf]
      %v1133 = vld [vmem:[%s3 + $0x4c] sm:$0xf]
      %v1134 = vld [vmem:[%s3 + $0x50] sm:$0xf]
      %v1135 = vld [vmem:[%s3 + $0x54] sm:$0xf]
      %v1136 = vld [vmem:[%s3 + $0x58] sm:$0xf]
      %v1137 = vld [vmem:[%s3 + $0x5c] sm:$0xf]
      %v1138 = vld [vmem:[%s3 + $0x60] sm:$0xf]
      %v1139 = vld [vmem:[%s3 + $0x64] sm:$0xf]
      %v1140 = vld [vmem:[%s3 + $0x68] sm:$0xf]
      %v1141 = vld [vmem:[%s3 + $0x6c] sm:$0xf]
      %v1142 = vld [vmem:[%s3 + $0x70] sm:$0xf]
      %v1143 = vld [vmem:[%s3 + $0x74] sm:$0xf]
      %v1144 = vld [vmem:[%s3 + $0x78] sm:$0xf]
      %v1145 = vld [vmem:[%s3 + $0x7c] sm:$0xf]
      %v1146 = vld [vmem:[%s3 + $0x80] sm:$0xf]
      %v1147 = vld [vmem:[%s3 + $0x84] sm:$0xf]
      %v1148 = vld [vmem:[%s3 + $0x88] sm:$0xf]
      %v1149 = vld [vmem:[%s3 + $0x8c] sm:$0xf]
      %v1150 = vld [vmem:[%s3 + $0x90] sm:$0xf]
      %v1151 = vld [vmem:[%s3 + $0x94] sm:$0xf]
      %v1152 = vld [vmem:[%s3 + $0x98] sm:$0xf]
      %v1153 = vld [vmem:[%s3 + $0x9c] sm:$0xf]
      %v1154 = vld [vmem:[%s3 + $0xa0] sm:$0xf]
      %v1155 = vld [vmem:[%s3 + $0xa4] sm:$0xf]
      %v1156 = vld [vmem:[%s3 + $0xa8] sm:$0xf]
      %v1157 = vld [vmem:[%s3 + $0xac] sm:$0xf]
      %v1158 = vld [vmem:[%s3 + $0xb0] sm:$0xf]
      %v1159 = vld [vmem:[%s3 + $0xb4] sm:$0xf]
      %v1160 = vld [vmem:[%s3 + $0xb8] sm:$0xf]
      %v1161 = vld [vmem:[%s3 + $0xbc] sm:$0xf]
      %v1210 = vunpack.c.l.b16 %v1114
      %v1211 = vunpack.c.l.b16 %v1115
      %v1212 = vunpack.c.l.b16 %v1116
      %v1213 = vunpack.c.l.b16 %v1117
      %v1214 = vunpack.c.l.b16 %v1118
      %v1215 = vunpack.c.l.b16 %v1119
      %v1216 = vunpack.c.l.b16 %v1120
      %v1217 = vunpack.c.l.b16 %v1121
      %v1218 = vunpack.c.l.b16 %v1122
      %v1219 = vunpack.c.l.b16 %v1123
      %v1220 = vunpack.c.l.b16 %v1124
      %v1221 = vunpack.c.l.b16 %v1125
      %v1222 = vunpack.c.l.b16 %v1126
      %v1223 = vunpack.c.l.b16 %v1127
      %v1224 = vunpack.c.l.b16 %v1128
      %v1225 = vunpack.c.l.b16 %v1129
      %v1226 = vunpack.c.l.b16 %v1130
      %v1227 = vunpack.c.l.b16 %v1131
      %v1228 = vunpack.c.l.b16 %v1132
      %v1229 = vunpack.c.l.b16 %v1133
      %v1230 = vunpack.c.l.b16 %v1134
      %v1231 = vunpack.c.l.b16 %v1135
      %v1232 = vunpack.c.l.b16 %v1136
      %v1233 = vunpack.c.l.b16 %v1137
      %v1234 = vunpack.c.l.b16 %v1138
      %v1235 = vunpack.c.l.b16 %v1139
      %v1236 = vunpack.c.l.b16 %v1140
      %v1237 = vunpack.c.l.b16 %v1141
      %v1238 = vunpack.c.l.b16 %v1142
      %v1239 = vunpack.c.l.b16 %v1143
      %v1240 = vunpack.c.l.b16 %v1144
      %v1241 = vunpack.c.l.b16 %v1145
      %v1242 = vunpack.c.l.b16 %v1146
      %v1243 = vunpack.c.l.b16 %v1147
      %v1244 = vunpack.c.l.b16 %v1148
      %v1245 = vunpack.c.l.b16 %v1149
      %v1246 = vunpack.c.l.b16 %v1150
      %v1247 = vunpack.c.l.b16 %v1151
      %v1248 = vunpack.c.l.b16 %v1152
      %v1249 = vunpack.c.l.b16 %v1153
      %v1250 = vunpack.c.l.b16 %v1154
      %v1251 = vunpack.c.l.b16 %v1155
      %v1252 = vunpack.c.l.b16 %v1156
      %v1253 = vunpack.c.l.b16 %v1157
      %v1254 = vunpack.c.l.b16 %v1158
      %v1255 = vunpack.c.l.b16 %v1159
      %v1256 = vunpack.c.l.b16 %v1160
      %v1257 = vunpack.c.l.b16 %v1161
      %v1258 = vpack.c.b16 %v1211, %v1210
      %v1259 = vpack.c.b16 %v1213, %v1212
      %v1260 = vpack.c.b16 %v1215, %v1214
      %v1261 = vpack.c.b16 %v1217, %v1216
      %v1262 = vpack.c.b16 %v1219, %v1218
      %v1263 = vpack.c.b16 %v1221, %v1220
      %v1264 = vpack.c.b16 %v1223, %v1222
      %v1265 = vpack.c.b16 %v1225, %v1224
      %v1266 = vpack.c.b16 %v1227, %v1226
      %v1267 = vpack.c.b16 %v1229, %v1228
      %v1268 = vpack.c.b16 %v1231, %v1230
      %v1269 = vpack.c.b16 %v1233, %v1232
      %v1270 = vpack.c.b16 %v1235, %v1234
      %v1271 = vpack.c.b16 %v1237, %v1236
      %v1272 = vpack.c.b16 %v1239, %v1238
      %v1273 = vpack.c.b16 %v1241, %v1240
      %v1274 = vpack.c.b16 %v1243, %v1242
      %v1275 = vpack.c.b16 %v1245, %v1244
      %v1276 = vpack.c.b16 %v1247, %v1246
      %v1277 = vpack.c.b16 %v1249, %v1248
      %v1278 = vpack.c.b16 %v1251, %v1250
      %v1279 = vpack.c.b16 %v1253, %v1252
      %v1280 = vpack.c.b16 %v1255, %v1254
      %v1281 = vpack.c.b16 %v1257, %v1256
      %1306 = vmatprep.subr.bf16.mxu0 0
      %1307 = vmatpush1.bf16.msra.mxu0 %v1258
      %1308 = vmatprep.subr.bf16.mxu0 0
      %1309 = vmatpush1.bf16.msra.mxu0 %v1259
      %1310 = vmatprep.subr.bf16.mxu0 0
      %1311 = vmatpush1.bf16.msra.mxu0 %v1260
      %1312 = vmatprep.subr.bf16.mxu0 0
      %1313 = vmatpush1.bf16.msra.mxu0 %v1261
      %1314 = vmatprep.subr.bf16.mxu0 0
      %1315 = vmatpush1.bf16.msra.mxu0 %v1262
      %1316 = vmatprep.subr.bf16.mxu0 0
      %1317 = vmatpush1.bf16.msra.mxu0 %v1263
      %1318 = vmatprep.subr.bf16.mxu0 0
      %1319 = vmatpush1.bf16.msra.mxu0 %v1264
      %1320 = vmatprep.subr.bf16.mxu0 0
      %1321 = vmatpush1.bf16.msra.mxu0 %v1265
      %1322 = vmatprep.subr.bf16.mxu0 0
      %1323 = vmatpush1.bf16.msra.mxu0 %v1266
      %1324 = vmatprep.subr.bf16.mxu0 0
      %1325 = vmatpush1.bf16.msra.mxu0 %v1267
      %1326 = vmatprep.subr.bf16.mxu0 0
      %1327 = vmatpush1.bf16.msra.mxu0 %v1268
      %1328 = vmatprep.subr.bf16.mxu0 0
      %1329 = vmatpush1.bf16.msra.mxu0 %v1269
      %1330 = vmatprep.subr.bf16.mxu0 0
      %1331 = vmatpush1.bf16.msra.mxu0 %v1270
      %1332 = vmatprep.subr.bf16.mxu0 0
      %1333 = vmatpush1.bf16.msra.mxu0 %v1271
      %1334 = vmatprep.subr.bf16.mxu0 0
      %1335 = vmatpush1.bf16.msra.mxu0 %v1272
      %1336 = vmatprep.subr.bf16.mxu0 0
      %1337 = vmatpush1.bf16.msra.mxu0 %v1273
      %1338 = vmatprep.mubr.bf16.mxu0 %v1067
      %1339 = vmatmul.mubr.bf16.gmra.mrb[0].mxu0 %v1066
      %v1340 = vpop.f32.mrb[0].mxu0
      %v1341 = vadd.f32 0.0, %v1340
      %v1342 = vpop.f32.mrb[0].mxu0
      %v1343 = vpop.f32.mrb[0].mxu0
      %v1344 = vadd.f32 0.0, %v1343
      %v1345 = vpop.f32.mrb[0].mxu0
      %1346 = vmatprep.mubr.bf16.mxu0 %v1070
      %1347 = vmatmul.mubr.bf16.gmra.mrb[0].mxu0 %v1069
      %v1348 = vpop.f32.mrb[0].mxu0
      %v1349 = vadd.f32 0.0, %v1348
      %v1350 = vpop.f32.mrb[0].mxu0
      %v1351 = vpop.f32.mrb[0].mxu0
      %v1352 = vadd.f32 0.0, %v1351
      %v1353 = vpop.f32.mrb[0].mxu0
      %1354 = vmatprep.mubr.bf16.mxu0 %v1073
      %1355 = vmatmul.mubr.bf16.gmra.mrb[0].mxu0 %v1072
      %v1356 = vpop.f32.mrb[0].mxu0
      %v1357 = vadd.f32 0.0, %v1356
      %v1358 = vpop.f32.mrb[0].mxu0
      %v1359 = vpop.f32.mrb[0].mxu0
      %v1360 = vadd.f32 0.0, %v1359
      %v1361 = vpop.f32.mrb[0].mxu0
      %1362 = vmatprep.mubr.bf16.mxu0 %v1076
      %1363 = vmatmul.mubr.bf16.gmra.mrb[0].mxu0 %v1075
      %v1364 = vpop.f32.mrb[0].mxu0
      %v1365 = vadd.f32 0.0, %v1364
      %v1366 = vpop.f32.mrb[0].mxu0
      %v1367 = vpop.f32.mrb[0].mxu0
      %v1368 = vadd.f32 0.0, %v1367
      %v1369 = vpop.f32.mrb[0].mxu0
      %1370 = vmatprep.mubr.bf16.mxu0 %v1079
      %1371 = vmatmul.mubr.bf16.gmra.mrb[0].mxu0 %v1078
      %v1372 = vpop.f32.mrb[0].mxu0
      %v1373 = vadd.f32 0.0, %v1372
      %v1374 = vpop.f32.mrb[0].mxu0
      %v1375 = vpop.f32.mrb[0].mxu0
      %v1376 = vadd.f32 0.0, %v1375
      %v1377 = vpop.f32.mrb[0].mxu0
      %1378 = vmatprep.mubr.bf16.mxu0 %v1082
      %1379 = vmatmul.mubr.bf16.gmra.mrb[0].mxu0 %v1081
      %v1380 = vpop.f32.mrb[0].mxu0
      %v1381 = vadd.f32 0.0, %v1380
      %v1382 = vpop.f32.mrb[0].mxu0
      %v1383 = vpop.f32.mrb[0].mxu0
      %v1384 = vadd.f32 0.0, %v1383
      %v1385 = vpop.f32.mrb[0].mxu0
      %1386 = vmatprep.mubr.bf16.mxu0 %v1085
      %1387 = vmatmul.mubr.bf16.gmra.mrb[0].mxu0 %v1084
      %v1388 = vpop.f32.mrb[0].mxu0
      %v1389 = vadd.f32 0.0, %v1388
      %v1390 = vpop.f32.mrb[0].mxu0
      %v1391 = vpop.f32.mrb[0].mxu0
      %v1392 = vadd.f32 0.0, %v1391
      %v1393 = vpop.f32.mrb[0].mxu0
      %1394 = vmatprep.mubr.bf16.mxu0 %v1088
      %1395 = vmatmul.mubr.bf16.gmra.mrb[0].mxu0 %v1087
      %v1396 = vpop.f32.mrb[0].mxu0
      %v1397 = vadd.f32 0.0, %v1396
      %v1398 = vpop.f32.mrb[0].mxu0
      %v1399 = vpop.f32.mrb[0].mxu0
      %v1400 = vadd.f32 0.0, %v1399
      %v1401 = vpop.f32.mrb[0].mxu0
      %1402 = vmatprep.mubr.bf16.mxu0 %v1091
      %1403 = vmatmul.mubr.bf16.gmra.mrb[0].mxu0 %v1090
      %v1404 = vpop.f32.mrb[0].mxu0
      %v1405 = vadd.f32 0.0, %v1404
      %v1406 = vpop.f32.mrb[0].mxu0
      %v1407 = vpop.f32.mrb[0].mxu0
      %v1408 = vadd.f32 0.0, %v1407
      %v1409 = vpop.f32.mrb[0].mxu0
      %1410 = vmatprep.mubr.bf16.mxu0 %v1094
      %1411 = vmatmul.mubr.bf16.gmra.mrb[0].mxu0 %v1093
      %v1412 = vpop.f32.mrb[0].mxu0
      %v1413 = vadd.f32 0.0, %v1412
      %v1414 = vpop.f32.mrb[0].mxu0
      %v1415 = vpop.f32.mrb[0].mxu0
      %v1416 = vadd.f32 0.0, %v1415
      %v1417 = vpop.f32.mrb[0].mxu0
      %1418 = vmatprep.mubr.bf16.mxu0 %v1097
      %1419 = vmatmul.mubr.bf16.gmra.mrb[0].mxu0 %v1096
      %v1420 = vpop.f32.mrb[0].mxu0
      %v1421 = vadd.f32 0.0, %v1420
      %v1422 = vpop.f32.mrb[0].mxu0
      %v1423 = vpop.f32.mrb[0].mxu0
      %v1424 = vadd.f32 0.0, %v1423
      %v1425 = vpop.f32.mrb[0].mxu0
      %1426 = vmatprep.mubr.bf16.mxu0 %v1100
      %1427 = vmatmul.mubr.bf16.gmra.mrb[0].mxu0 %v1099
      %v1428 = vpop.f32.mrb[0].mxu0
      %v1429 = vadd.f32 0.0, %v1428
      %v1430 = vpop.f32.mrb[0].mxu0
      %v1431 = vpop.f32.mrb[0].mxu0
      %v1432 = vadd.f32 0.0, %v1431
      %v1433 = vpop.f32.mrb[0].mxu0
      %1434 = vmatprep.mubr.bf16.mxu0 %v1103
      %1435 = vmatmul.mubr.bf16.gmra.mrb[0].mxu0 %v1102
      %v1436 = vpop.f32.mrb[0].mxu0
      %v1437 = vadd.f32 0.0, %v1436
      %v1438 = vpop.f32.mrb[0].mxu0
      %v1439 = vpop.f32.mrb[0].mxu0
      %v1440 = vadd.f32 0.0, %v1439
      %v1441 = vpop.f32.mrb[0].mxu0
      %1442 = vmatprep.mubr.bf16.mxu0 %v1106
      %1443 = vmatmul.mubr.bf16.gmra.mrb[0].mxu0 %v1105
      %v1444 = vpop.f32.mrb[0].mxu0
      %v1445 = vadd.f32 0.0, %v1444
      %v1446 = vpop.f32.mrb[0].mxu0
      %v1447 = vpop.f32.mrb[0].mxu0
      %v1448 = vadd.f32 0.0, %v1447
      %v1449 = vpop.f32.mrb[0].mxu0
      %1450 = vmatprep.mubr.bf16.mxu0 %v1109
      %1451 = vmatmul.mubr.bf16.gmra.mrb[0].mxu0 %v1108
      %v1452 = vpop.f32.mrb[0].mxu0
      %v1453 = vadd.f32 0.0, %v1452
      %v1454 = vpop.f32.mrb[0].mxu0
      %v1455 = vpop.f32.mrb[0].mxu0
      %v1456 = vadd.f32 0.0, %v1455
      %v1457 = vpop.f32.mrb[0].mxu0
      %1458 = vmatprep.mubr.bf16.mxu0 %v1112
      %1459 = vmatmul.mubr.bf16.gmra.mrb[0].mxu0 %v1111
      %v1460 = vpop.f32.mrb[0].mxu0
      %v1461 = vadd.f32 0.0, %v1460
      %v1462 = vpop.f32.mrb[0].mxu0
      %v1463 = vpop.f32.mrb[0].mxu0
      %v1464 = vadd.f32 0.0, %v1463
      %v1465 = vpop.f32.mrb[0].mxu0
      %1466 = vdwg.mxu0
      %1467 = vmatprep.subr.bf16.mxu0 0
      %1468 = vmatpush1.bf16.msra.mxu0 %v1274
      %1469 = vmatprep.subr.bf16.mxu0 0
      %1470 = vmatpush1.bf16.msra.mxu0 %v1275
      %1471 = vmatprep.subr.bf16.mxu0 0
      %1472 = vmatpush1.bf16.msra.mxu0 %v1276
      %1473 = vmatprep.subr.bf16.mxu0 0
      %1474 = vmatpush1.bf16.msra.mxu0 %v1277
      %1475 = vmatprep.subr.bf16.mxu0 0
      %1476 = vmatpush1.bf16.msra.mxu0 %v1278
      %1477 = vmatprep.subr.bf16.mxu0 0
      %1478 = vmatpush1.bf16.msra.mxu0 %v1279
      %1479 = vmatprep.subr.bf16.mxu0 0
      %1480 = vmatpush1.bf16.msra.mxu0 %v1280
      %1481 = vmatprep.subr.bf16.mxu0 0
      %1482 = vmatpush1.bf16.msra.mxu0 %v1281
      %1483 = vmatprep.subr.bf16.mxu0 0
      %1484 = vmatpush1.bf16.msra.mxu0 0
      %1485 = vmatprep.subr.bf16.mxu0 0
      %1486 = vmatpush1.bf16.msra.mxu0 0
      %1487 = vmatprep.subr.bf16.mxu0 0
      %1488 = vmatpush1.bf16.msra.mxu0 0
      %1489 = vmatprep.subr.bf16.mxu0 0
      %1490 = vmatpush1.bf16.msra.mxu0 0
      %1491 = vmatprep.subr.bf16.mxu0 0
      %1492 = vmatpush1.bf16.msra.mxu0 0
      %1493 = vmatprep.subr.bf16.mxu0 0
      %1494 = vmatpush1.bf16.msra.mxu0 0
      %1495 = vmatprep.subr.bf16.mxu0 0
      %1496 = vmatpush1.bf16.msra.mxu0 0
      %1497 = vmatprep.subr.bf16.mxu0 0
      %1498 = vmatpush1.bf16.msra.mxu0 0
      %1499 = vmatprep.mubr.bf16.mxu0 0
      %1500 = vmatmul.mubr.bf16.gmra.mrb[0].mxu0 %v1068
      %v1501 = vpop.f32.mrb[0].mxu0
      %v1502 = vadd.f32 %v1341, %v1501
      %v1503 = vpop.f32.mrb[0].mxu0
      %v1504 = vpop.f32.mrb[0].mxu0
      %v1505 = vadd.f32 %v1344, %v1504
      %v1506 = vpop.f32.mrb[0].mxu0
      %1507 = vmatprep.mubr.bf16.mxu0 0
      %1508 = vmatmul.mubr.bf16.gmra.mrb[0].mxu0 %v1071
      %v1509 = vpop.f32.mrb[0].mxu0
      %v1510 = vadd.f32 %v1349, %v1509
      %v1511 = vpop.f32.mrb[0].mxu0
      %v1512 = vpop.f32.mrb[0].mxu0
      %v1513 = vadd.f32 %v1352, %v1512
      %v1514 = vpop.f32.mrb[0].mxu0
      %1515 = vmatprep.mubr.bf16.mxu0 0
      %1516 = vmatmul.mubr.bf16.gmra.mrb[0].mxu0 %v1074
      %v1517 = vpop.f32.mrb[0].mxu0
      %v1518 = vadd.f32 %v1357, %v1517
      %v1519 = vpop.f32.mrb[0].mxu0
      %v1520 = vpop.f32.mrb[0].mxu0
      %v1521 = vadd.f32 %v1360, %v1520
      %v1522 = vpop.f32.mrb[0].mxu0
      %1523 = vmatprep.mubr.bf16.mxu0 0
      %1524 = vmatmul.mubr.bf16.gmra.mrb[0].mxu0 %v1077
      %v1525 = vpop.f32.mrb[0].mxu0
      %v1526 = vadd.f32 %v1365, %v1525
      %v1527 = vpop.f32.mrb[0].mxu0
      %v1528 = vpop.f32.mrb[0].mxu0
      %v1529 = vadd.f32 %v1368, %v1528
      %v1530 = vpop.f32.mrb[0].mxu0
      %1531 = vmatprep.mubr.bf16.mxu0 0
      %1532 = vmatmul.mubr.bf16.gmra.mrb[0].mxu0 %v1080
      %v1533 = vpop.f32.mrb[0].mxu0
      %v1534 = vadd.f32 %v1373, %v1533
      %v1535 = vpop.f32.mrb[0].mxu0
      %v1536 = vpop.f32.mrb[0].mxu0
      %v1537 = vadd.f32 %v1376, %v1536
      %v1538 = vpop.f32.mrb[0].mxu0
      %1539 = vmatprep.mubr.bf16.mxu0 0
      %1540 = vmatmul.mubr.bf16.gmra.mrb[0].mxu0 %v1083
      %v1541 = vpop.f32.mrb[0].mxu0
      %v1542 = vadd.f32 %v1381, %v1541
      %v1543 = vpop.f32.mrb[0].mxu0
      %v1544 = vpop.f32.mrb[0].mxu0
      %v1545 = vadd.f32 %v1384, %v1544
      %v1546 = vpop.f32.mrb[0].mxu0
      %1547 = vmatprep.mubr.bf16.mxu0 0
      %1548 = vmatmul.mubr.bf16.gmra.mrb[0].mxu0 %v1086
      %v1549 = vpop.f32.mrb[0].mxu0
      %v1550 = vadd.f32 %v1389, %v1549
      %v1551 = vpop.f32.mrb[0].mxu0
      %v1552 = vpop.f32.mrb[0].mxu0
      %v1553 = vadd.f32 %v1392, %v1552
      %v1554 = vpop.f32.mrb[0].mxu0
      %1555 = vmatprep.mubr.bf16.mxu0 0
      %1556 = vmatmul.mubr.bf16.gmra.mrb[0].mxu0 %v1089
      %v1557 = vpop.f32.mrb[0].mxu0
      %v1558 = vadd.f32 %v1397, %v1557
      %v1559 = vpop.f32.mrb[0].mxu0
      %v1560 = vpop.f32.mrb[0].mxu0
      %v1561 = vadd.f32 %v1400, %v1560
      %v1562 = vpop.f32.mrb[0].mxu0
      %1563 = vmatprep.mubr.bf16.mxu0 0
      %1564 = vmatmul.mubr.bf16.gmra.mrb[0].mxu0 %v1092
      %v1565 = vpop.f32.mrb[0].mxu0
      %v1566 = vadd.f32 %v1405, %v1565
      %v1567 = vpop.f32.mrb[0].mxu0
      %v1568 = vpop.f32.mrb[0].mxu0
      %v1569 = vadd.f32 %v1408, %v1568
      %v1570 = vpop.f32.mrb[0].mxu0
      %1571 = vmatprep.mubr.bf16.mxu0 0
      %1572 = vmatmul.mubr.bf16.gmra.mrb[0].mxu0 %v1095
      %v1573 = vpop.f32.mrb[0].mxu0
      %v1574 = vadd.f32 %v1413, %v1573
      %v1575 = vpop.f32.mrb[0].mxu0
      %v1576 = vpop.f32.mrb[0].mxu0
      %v1577 = vadd.f32 %v1416, %v1576
      %v1578 = vpop.f32.mrb[0].mxu0
      %1579 = vmatprep.mubr.bf16.mxu0 0
      %1580 = vmatmul.mubr.bf16.gmra.mrb[0].mxu0 %v1098
      %v1581 = vpop.f32.mrb[0].mxu0
      %v1582 = vadd.f32 %v1421, %v1581
      %v1583 = vpop.f32.mrb[0].mxu0
      %v1584 = vpop.f32.mrb[0].mxu0
      %v1585 = vadd.f32 %v1424, %v1584
      %v1586 = vpop.f32.mrb[0].mxu0
      %1587 = vmatprep.mubr.bf16.mxu0 0
      %1588 = vmatmul.mubr.bf16.gmra.mrb[0].mxu0 %v1101
      %v1589 = vpop.f32.mrb[0].mxu0
      %v1590 = vadd.f32 %v1429, %v1589
      %v1591 = vpop.f32.mrb[0].mxu0
      %v1592 = vpop.f32.mrb[0].mxu0
      %v1593 = vadd.f32 %v1432, %v1592
      %v1594 = vpop.f32.mrb[0].mxu0
      %1595 = vmatprep.mubr.bf16.mxu0 0
      %1596 = vmatmul.mubr.bf16.gmra.mrb[0].mxu0 %v1104
      %v1597 = vpop.f32.mrb[0].mxu0
      %v1598 = vadd.f32 %v1437, %v1597
      %v1599 = vpop.f32.mrb[0].mxu0
      %v1600 = vpop.f32.mrb[0].mxu0
      %v1601 = vadd.f32 %v1440, %v1600
      %v1602 = vpop.f32.mrb[0].mxu0
      %1603 = vmatprep.mubr.bf16.mxu0 0
      %1604 = vmatmul.mubr.bf16.gmra.mrb[0].mxu0 %v1107
      %v1605 = vpop.f32.mrb[0].mxu0
      %v1606 = vadd.f32 %v1445, %v1605
      %v1607 = vpop.f32.mrb[0].mxu0
      %v1608 = vpop.f32.mrb[0].mxu0
      %v1609 = vadd.f32 %v1448, %v1608
      %v1610 = vpop.f32.mrb[0].mxu0
      %1611 = vmatprep.mubr.bf16.mxu0 0
      %1612 = vmatmul.mubr.bf16.gmra.mrb[0].mxu0 %v1110
      %v1613 = vpop.f32.mrb[0].mxu0
      %v1614 = vadd.f32 %v1453, %v1613
      %v1615 = vpop.f32.mrb[0].mxu0
      %v1616 = vpop.f32.mrb[0].mxu0
      %v1617 = vadd.f32 %v1456, %v1616
      %v1618 = vpop.f32.mrb[0].mxu0
      %1619 = vmatprep.mubr.bf16.mxu0 0
      %1620 = vmatmul.mubr.bf16.gmra.mrb[0].mxu0 %v1113
      %v1621 = vpop.f32.mrb[0].mxu0
      %v1622 = vadd.f32 %v1461, %v1621
      %v1623 = vpop.f32.mrb[0].mxu0
      %v1624 = vpop.f32.mrb[0].mxu0
      %v1625 = vadd.f32 %v1464, %v1624
      %v1626 = vpop.f32.mrb[0].mxu0
      %1627 = vdwg.mxu0
      %1628 = vst [vmem:[#allocation4] sm:$0xff] %v1502
      %1629 = vst [vmem:[#allocation4 + $0x8] sm:$0xff] %v1505
      %1630 = vst [vmem:[#allocation4 + $0x10] sm:$0xff] %v1510
      %1631 = vst [vmem:[#allocation4 + $0x18] sm:$0xff] %v1513
      %1632 = vst [vmem:[#allocation4 + $0x20] sm:$0xff] %v1518
      %1633 = vst [vmem:[#allocation4 + $0x28] sm:$0xff] %v1521
      %1634 = vst [vmem:[#allocation4 + $0x30] sm:$0xff] %v1526
      %1635 = vst [vmem:[#allocation4 + $0x38] sm:$0xff] %v1529
      %1636 = vst [vmem:[#allocation4 + $0x40] sm:$0xff] %v1534
      %1637 = vst [vmem:[#allocation4 + $0x48] sm:$0xff] %v1537
      %1638 = vst [vmem:[#allocation4 + $0x50] sm:$0xff] %v1542
      %1639 = vst [vmem:[#allocation4 + $0x58] sm:$0xff] %v1545
      %1640 = vst [vmem:[#allocation4 + $0x60] sm:$0xff] %v1550
      %1641 = vst [vmem:[#allocation4 + $0x68] sm:$0xff] %v1553
      %1642 = vst [vmem:[#allocation4 + $0x70] sm:$0xff] %v1558
      %1643 = vst [vmem:[#allocation4 + $0x78] sm:$0xff] %v1561
      %1644 = vst [vmem:[#allocation4 + $0x80] sm:$0xff] %v1566
      %1645 = vst [vmem:[#allocation4 + $0x88] sm:$0xff] %v1569
      %1646 = vst [vmem:[#allocation4 + $0x90] sm:$0xff] %v1574
      %1647 = vst [vmem:[#allocation4 + $0x98] sm:$0xff] %v1577
      %1648 = vst [vmem:[#allocation4 + $0xa0] sm:$0xff] %v1582
      %1649 = vst [vmem:[#allocation4 + $0xa8] sm:$0xff] %v1585
      %1650 = vst [vmem:[#allocation4 + $0xb0] sm:$0xff] %v1590
      %1651 = vst [vmem:[#allocation4 + $0xb8] sm:$0xff] %v1593
      %1652 = vst [vmem:[#allocation4 + $0xc0] sm:$0xff] %v1598
      %1653 = vst [vmem:[#allocation4 + $0xc8] sm:$0xff] %v1601
      %1654 = vst [vmem:[#allocation4 + $0xd0] sm:$0xff] %v1606
      %1655 = vst [vmem:[#allocation4 + $0xd8] sm:$0xff] %v1609
      %1656 = vst [vmem:[#allocation4 + $0xe0] sm:$0xff] %v1614
      %1657 = vst [vmem:[#allocation4 + $0xe8] sm:$0xff] %v1617
      %1658 = vst [vmem:[#allocation4 + $0xf0] sm:$0xff] %v1622
      %1659 = vst [vmem:[#allocation4 + $0xf8] sm:$0xff] %v1625
      %v1660 = vld [vmem:[%s464] sm:$0x80]
      %v1661 = vld [vmem:[%s464 + $0x8] sm:$0xff]
      %v1662 = vld [vmem:[%s464 + $0x18] sm:$0x80]
      %v1663 = vld [vmem:[%s464 + $0x20] sm:$0xff]
      %v1664 = vld [vmem:[%s464 + $0x30] sm:$0x80]
      %v1665 = vld [vmem:[%s464 + $0x38] sm:$0xff]
      %v1666 = vld [vmem:[%s464 + $0x48] sm:$0x80]
      %v1667 = vld [vmem:[%s464 + $0x50] sm:$0xff]
      %v1668 = vld [vmem:[%s464 + $0x60] sm:$0x80]
      %v1669 = vld [vmem:[%s464 + $0x68] sm:$0xff]
      %v1670 = vld [vmem:[%s464 + $0x78] sm:$0x80]
      %v1671 = vld [vmem:[%s464 + $0x80] sm:$0xff]
      %v1672 = vld [vmem:[%s464 + $0x90] sm:$0x80]
      %v1673 = vld [vmem:[%s464 + $0x98] sm:$0xff]
      %v1674 = vld [vmem:[%s464 + $0xa8] sm:$0x80]
      %v1675 = vld [vmem:[%s464 + $0xb0] sm:$0xff]
      %v1676 = vld [vmem:[%s464 + $0xc0] sm:$0x80]
      %v1677 = vld [vmem:[%s464 + $0xc8] sm:$0xff]
      %v1678 = vld [vmem:[%s464 + $0xd8] sm:$0x80]
      %v1679 = vld [vmem:[%s464 + $0xe0] sm:$0xff]
      %v1680 = vld [vmem:[%s464 + $0xf0] sm:$0x80]
      %v1681 = vld [vmem:[%s464 + $0xf8] sm:$0xff]
      %v1682 = vld [vmem:[%s464 + $0x108] sm:$0x80]
      %v1683 = vld [vmem:[%s464 + $0x110] sm:$0xff]
      %v1684 = vld [vmem:[%s464 + $0x120] sm:$0x80]
      %v1685 = vld [vmem:[%s464 + $0x128] sm:$0xff]
      %v1686 = vld [vmem:[%s464 + $0x138] sm:$0x80]
      %v1687 = vld [vmem:[%s464 + $0x140] sm:$0xff]
      %v1688 = vld [vmem:[%s464 + $0x150] sm:$0x80]
      %v1689 = vld [vmem:[%s464 + $0x158] sm:$0xff]
      %v1690 = vld [vmem:[%s464 + $0x168] sm:$0x80]
      %v1691 = vld [vmem:[%s464 + $0x170] sm:$0xff]
      %v1693 = vshrl.u32 %v1660, 16
      %v1695 = vrot.slane %v1693, 7
      %v1697 = vshrl.u32 %v1661, 16
      %v1699 = vrot.slane %v1697, 7
      %v1700 = vshll.u32 %v1661, 16
      %v1702 = vor.u32 %v1699, %v1700
      %v1703 = vsel %vm552, %v1695, %v1702
      %v1705 = vshrl.u32 %v1662, 16
      %v1707 = vrot.slane %v1705, 7
      %v1709 = vshrl.u32 %v1663, 16
      %v1711 = vrot.slane %v1709, 7
      %v1712 = vshll.u32 %v1663, 16
      %v1714 = vor.u32 %v1711, %v1712
      %v1715 = vsel %vm552, %v1707, %v1714
      %v1717 = vshrl.u32 %v1664, 16
      %v1719 = vrot.slane %v1717, 7
      %v1721 = vshrl.u32 %v1665, 16
      %v1723 = vrot.slane %v1721, 7
      %v1724 = vshll.u32 %v1665, 16
      %v1726 = vor.u32 %v1723, %v1724
      %v1727 = vsel %vm552, %v1719, %v1726
      %v1729 = vshrl.u32 %v1666, 16
      %v1731 = vrot.slane %v1729, 7
      %v1733 = vshrl.u32 %v1667, 16
      %v1735 = vrot.slane %v1733, 7
      %v1736 = vshll.u32 %v1667, 16
      %v1738 = vor.u32 %v1735, %v1736
      %v1739 = vsel %vm552, %v1731, %v1738
      %v1741 = vshrl.u32 %v1668, 16
      %v1743 = vrot.slane %v1741, 7
      %v1745 = vshrl.u32 %v1669, 16
      %v1747 = vrot.slane %v1745, 7
      %v1748 = vshll.u32 %v1669, 16
      %v1750 = vor.u32 %v1747, %v1748
      %v1751 = vsel %vm552, %v1743, %v1750
      %v1753 = vshrl.u32 %v1670, 16
      %v1755 = vrot.slane %v1753, 7
      %v1757 = vshrl.u32 %v1671, 16
      %v1759 = vrot.slane %v1757, 7
      %v1760 = vshll.u32 %v1671, 16
      %v1762 = vor.u32 %v1759, %v1760
      %v1763 = vsel %vm552, %v1755, %v1762
      %v1765 = vshrl.u32 %v1672, 16
      %v1767 = vrot.slane %v1765, 7
      %v1769 = vshrl.u32 %v1673, 16
      %v1771 = vrot.slane %v1769, 7
      %v1772 = vshll.u32 %v1673, 16
      %v1774 = vor.u32 %v1771, %v1772
      %v1775 = vsel %vm552, %v1767, %v1774
      %v1777 = vshrl.u32 %v1674, 16
      %v1779 = vrot.slane %v1777, 7
      %v1781 = vshrl.u32 %v1675, 16
      %v1783 = vrot.slane %v1781, 7
      %v1784 = vshll.u32 %v1675, 16
      %v1786 = vor.u32 %v1783, %v1784
      %v1787 = vsel %vm552, %v1779, %v1786
      %v1789 = vshrl.u32 %v1676, 16
      %v1791 = vrot.slane %v1789, 7
      %v1793 = vshrl.u32 %v1677, 16
      %v1795 = vrot.slane %v1793, 7
      %v1796 = vshll.u32 %v1677, 16
      %v1798 = vor.u32 %v1795, %v1796
      %v1799 = vsel %vm552, %v1791, %v1798
      %v1801 = vshrl.u32 %v1678, 16
      %v1803 = vrot.slane %v1801, 7
      %v1805 = vshrl.u32 %v1679, 16
      %v1807 = vrot.slane %v1805, 7
      %v1808 = vshll.u32 %v1679, 16
      %v1810 = vor.u32 %v1807, %v1808
      %v1811 = vsel %vm552, %v1803, %v1810
      %v1813 = vshrl.u32 %v1680, 16
      %v1815 = vrot.slane %v1813, 7
      %v1817 = vshrl.u32 %v1681, 16
      %v1819 = vrot.slane %v1817, 7
      %v1820 = vshll.u32 %v1681, 16
      %v1822 = vor.u32 %v1819, %v1820
      %v1823 = vsel %vm552, %v1815, %v1822
      %v1825 = vshrl.u32 %v1682, 16
      %v1827 = vrot.slane %v1825, 7
      %v1829 = vshrl.u32 %v1683, 16
      %v1831 = vrot.slane %v1829, 7
      %v1832 = vshll.u32 %v1683, 16
      %v1834 = vor.u32 %v1831, %v1832
      %v1835 = vsel %vm552, %v1827, %v1834
      %v1837 = vshrl.u32 %v1684, 16
      %v1839 = vrot.slane %v1837, 7
      %v1841 = vshrl.u32 %v1685, 16
      %v1843 = vrot.slane %v1841, 7
      %v1844 = vshll.u32 %v1685, 16
      %v1846 = vor.u32 %v1843, %v1844
      %v1847 = vsel %vm552, %v1839, %v1846
      %v1849 = vshrl.u32 %v1686, 16
      %v1851 = vrot.slane %v1849, 7
      %v1853 = vshrl.u32 %v1687, 16
      %v1855 = vrot.slane %v1853, 7
      %v1856 = vshll.u32 %v1687, 16
      %v1858 = vor.u32 %v1855, %v1856
      %v1859 = vsel %vm552, %v1851, %v1858
      %v1861 = vshrl.u32 %v1688, 16
      %v1863 = vrot.slane %v1861, 7
      %v1865 = vshrl.u32 %v1689, 16
      %v1867 = vrot.slane %v1865, 7
      %v1868 = vshll.u32 %v1689, 16
      %v1870 = vor.u32 %v1867, %v1868
      %v1871 = vsel %vm552, %v1863, %v1870
      %v1873 = vshrl.u32 %v1690, 16
      %v1875 = vrot.slane %v1873, 7
      %v1877 = vshrl.u32 %v1691, 16
      %v1879 = vrot.slane %v1877, 7
      %v1880 = vshll.u32 %v1691, 16
      %v1882 = vor.u32 %v1879, %v1880
      %v1883 = vsel %vm552, %v1875, %v1882
      %1900 = vst [vmem:[#allocation3] sm:$0xff] %v1703
      %1901 = vst [vmem:[#allocation3 + $0x18] sm:$0xff] %v1715
      %1902 = vst [vmem:[#allocation3 + $0x30] sm:$0xff] %v1727
      %1903 = vst [vmem:[#allocation3 + $0x48] sm:$0xff] %v1739
      %1904 = vst [vmem:[#allocation3 + $0x60] sm:$0xff] %v1751
      %1905 = vst [vmem:[#allocation3 + $0x78] sm:$0xff] %v1763
      %1906 = vst [vmem:[#allocation3 + $0x90] sm:$0xff] %v1775
      %1907 = vst [vmem:[#allocation3 + $0xa8] sm:$0xff] %v1787
      %1908 = vst [vmem:[#allocation3 + $0xc0] sm:$0xff] %v1799
      %1909 = vst [vmem:[#allocation3 + $0xd8] sm:$0xff] %v1811
      %1910 = vst [vmem:[#allocation3 + $0xf0] sm:$0xff] %v1823
      %1911 = vst [vmem:[#allocation3 + $0x108] sm:$0xff] %v1835
      %1912 = vst [vmem:[#allocation3 + $0x120] sm:$0xff] %v1847
      %1913 = vst [vmem:[#allocation3 + $0x138] sm:$0xff] %v1859
      %1914 = vst [vmem:[#allocation3 + $0x150] sm:$0xff] %v1871
      %1915 = vst [vmem:[#allocation3 + $0x168] sm:$0xff] %v1883
      %v1916 = vld [vmem:[%s464 + $0x8] sm:$0xff]
      %v1917 = vld [vmem:[%s464 + $0x20] sm:$0xff]
      %v1918 = vld [vmem:[%s464 + $0x38] sm:$0xff]
      %v1919 = vld [vmem:[%s464 + $0x50] sm:$0xff]
      %v1920 = vld [vmem:[%s464 + $0x68] sm:$0xff]
      %v1921 = vld [vmem:[%s464 + $0x80] sm:$0xff]
      %v1922 = vld [vmem:[%s464 + $0x98] sm:$0xff]
      %v1923 = vld [vmem:[%s464 + $0xb0] sm:$0xff]
      %v1924 = vld [vmem:[%s464 + $0xc8] sm:$0xff]
      %v1925 = vld [vmem:[%s464 + $0xe0] sm:$0xff]
      %v1926 = vld [vmem:[%s464 + $0xf8] sm:$0xff]
      %v1927 = vld [vmem:[%s464 + $0x110] sm:$0xff]
      %v1928 = vld [vmem:[%s464 + $0x128] sm:$0xff]
      %v1929 = vld [vmem:[%s464 + $0x140] sm:$0xff]
      %v1930 = vld [vmem:[%s464 + $0x158] sm:$0xff]
      %v1931 = vld [vmem:[%s464 + $0x170] sm:$0xff]
      %1932 = vst [vmem:[#allocation3 + $0x8] sm:$0xff] %v1916
      %1933 = vst [vmem:[#allocation3 + $0x20] sm:$0xff] %v1917
      %1934 = vst [vmem:[#allocation3 + $0x38] sm:$0xff] %v1918
      %1935 = vst [vmem:[#allocation3 + $0x50] sm:$0xff] %v1919
      %1936 = vst [vmem:[#allocation3 + $0x68] sm:$0xff] %v1920
      %1937 = vst [vmem:[#allocation3 + $0x80] sm:$0xff] %v1921
      %1938 = vst [vmem:[#allocation3 + $0x98] sm:$0xff] %v1922
      %1939 = vst [vmem:[#allocation3 + $0xb0] sm:$0xff] %v1923
      %1940 = vst [vmem:[#allocation3 + $0xc8] sm:$0xff] %v1924
      %1941 = vst [vmem:[#allocation3 + $0xe0] sm:$0xff] %v1925
      %1942 = vst [vmem:[#allocation3 + $0xf8] sm:$0xff] %v1926
      %1943 = vst [vmem:[#allocation3 + $0x110] sm:$0xff] %v1927
      %1944 = vst [vmem:[#allocation3 + $0x128] sm:$0xff] %v1928
      %1945 = vst [vmem:[#allocation3 + $0x140] sm:$0xff] %v1929
      %1946 = vst [vmem:[#allocation3 + $0x158] sm:$0xff] %v1930
      %1947 = vst [vmem:[#allocation3 + $0x170] sm:$0xff] %v1931
      %v1948 = vld [vmem:[%s464 + $0x8] sm:$0xff]
      %v1949 = vld [vmem:[%s464 + $0x10] sm:$0x1]
      %v1950 = vld [vmem:[%s464 + $0x20] sm:$0xff]
      %v1951 = vld [vmem:[%s464 + $0x28] sm:$0x1]
      %v1952 = vld [vmem:[%s464 + $0x38] sm:$0xff]
      %v1953 = vld [vmem:[%s464 + $0x40] sm:$0x1]
      %v1954 = vld [vmem:[%s464 + $0x50] sm:$0xff]
      %v1955 = vld [vmem:[%s464 + $0x58] sm:$0x1]
      %v1956 = vld [vmem:[%s464 + $0x68] sm:$0xff]
      %v1957 = vld [vmem:[%s464 + $0x70] sm:$0x1]
      %v1958 = vld [vmem:[%s464 + $0x80] sm:$0xff]
      %v1959 = vld [vmem:[%s464 + $0x88] sm:$0x1]
      %v1960 = vld [vmem:[%s464 + $0x98] sm:$0xff]
      %v1961 = vld [vmem:[%s464 + $0xa0] sm:$0x1]
      %v1962 = vld [vmem:[%s464 + $0xb0] sm:$0xff]
      %v1963 = vld [vmem:[%s464 + $0xb8] sm:$0x1]
      %v1964 = vld [vmem:[%s464 + $0xc8] sm:$0xff]
      %v1965 = vld [vmem:[%s464 + $0xd0] sm:$0x1]
      %v1966 = vld [vmem:[%s464 + $0xe0] sm:$0xff]
      %v1967 = vld [vmem:[%s464 + $0xe8] sm:$0x1]
      %v1968 = vld [vmem:[%s464 + $0xf8] sm:$0xff]
      %v1969 = vld [vmem:[%s464 + $0x100] sm:$0x1]
      %v1970 = vld [vmem:[%s464 + $0x110] sm:$0xff]
      %v1971 = vld [vmem:[%s464 + $0x118] sm:$0x1]
      %v1972 = vld [vmem:[%s464 + $0x128] sm:$0xff]
      %v1973 = vld [vmem:[%s464 + $0x130] sm:$0x1]
      %v1974 = vld [vmem:[%s464 + $0x140] sm:$0xff]
      %v1975 = vld [vmem:[%s464 + $0x148] sm:$0x1]
      %v1976 = vld [vmem:[%s464 + $0x158] sm:$0xff]
      %v1977 = vld [vmem:[%s464 + $0x160] sm:$0x1]
      %v1978 = vld [vmem:[%s464 + $0x170] sm:$0xff]
      %v1979 = vld [vmem:[%s464 + $0x178] sm:$0x1]
      %v1981 = vshrl.u32 %v1948, 16
      %v1983 = vshll.u32 %v1948, 16
      %v1985 = vrot.slane %v1983, 1
      %v1986 = vor.u32 %v1981, %v1985
      %v1988 = vshll.u32 %v1949, 16
      %v1990 = vrot.slane %v1988, 1
      %v1991 = vsel %vm841, %v1986, %v1990
      %v1993 = vshrl.u32 %v1950, 16
      %v1995 = vshll.u32 %v1950, 16
      %v1997 = vrot.slane %v1995, 1
      %v1998 = vor.u32 %v1993, %v1997
      %v2000 = vshll.u32 %v1951, 16
      %v2002 = vrot.slane %v2000, 1
      %v2003 = vsel %vm841, %v1998, %v2002
      %v2005 = vshrl.u32 %v1952, 16
      %v2007 = vshll.u32 %v1952, 16
      %v2009 = vrot.slane %v2007, 1
      %v2010 = vor.u32 %v2005, %v2009
      %v2012 = vshll.u32 %v1953, 16
      %v2014 = vrot.slane %v2012, 1
      %v2015 = vsel %vm841, %v2010, %v2014
      %v2017 = vshrl.u32 %v1954, 16
      %v2019 = vshll.u32 %v1954, 16
      %v2021 = vrot.slane %v2019, 1
      %v2022 = vor.u32 %v2017, %v2021
      %v2024 = vshll.u32 %v1955, 16
      %v2026 = vrot.slane %v2024, 1
      %v2027 = vsel %vm841, %v2022, %v2026
      %v2029 = vshrl.u32 %v1956, 16
      %v2031 = vshll.u32 %v1956, 16
      %v2033 = vrot.slane %v2031, 1
      %v2034 = vor.u32 %v2029, %v2033
      %v2036 = vshll.u32 %v1957, 16
      %v2038 = vrot.slane %v2036, 1
      %v2039 = vsel %vm841, %v2034, %v2038
      %v2041 = vshrl.u32 %v1958, 16
      %v2043 = vshll.u32 %v1958, 16
      %v2045 = vrot.slane %v2043, 1
      %v2046 = vor.u32 %v2041, %v2045
      %v2048 = vshll.u32 %v1959, 16
      %v2050 = vrot.slane %v2048, 1
      %v2051 = vsel %vm841, %v2046, %v2050
      %v2053 = vshrl.u32 %v1960, 16
      %v2055 = vshll.u32 %v1960, 16
      %v2057 = vrot.slane %v2055, 1
      %v2058 = vor.u32 %v2053, %v2057
      %v2060 = vshll.u32 %v1961, 16
      %v2062 = vrot.slane %v2060, 1
      %v2063 = vsel %vm841, %v2058, %v2062
      %v2065 = vshrl.u32 %v1962, 16
      %v2067 = vshll.u32 %v1962, 16
      %v2069 = vrot.slane %v2067, 1
      %v2070 = vor.u32 %v2065, %v2069
      %v2072 = vshll.u32 %v1963, 16
      %v2074 = vrot.slane %v2072, 1
      %v2075 = vsel %vm841, %v2070, %v2074
      %v2077 = vshrl.u32 %v1964, 16
      %v2079 = vshll.u32 %v1964, 16
      %v2081 = vrot.slane %v2079, 1
      %v2082 = vor.u32 %v2077, %v2081
      %v2084 = vshll.u32 %v1965, 16
      %v2086 = vrot.slane %v2084, 1
      %v2087 = vsel %vm841, %v2082, %v2086
      %v2089 = vshrl.u32 %v1966, 16
      %v2091 = vshll.u32 %v1966, 16
      %v2093 = vrot.slane %v2091, 1
      %v2094 = vor.u32 %v2089, %v2093
      %v2096 = vshll.u32 %v1967, 16
      %v2098 = vrot.slane %v2096, 1
      %v2099 = vsel %vm841, %v2094, %v2098
      %v2101 = vshrl.u32 %v1968, 16
      %v2103 = vshll.u32 %v1968, 16
      %v2105 = vrot.slane %v2103, 1
      %v2106 = vor.u32 %v2101, %v2105
      %v2108 = vshll.u32 %v1969, 16
      %v2110 = vrot.slane %v2108, 1
      %v2111 = vsel %vm841, %v2106, %v2110
      %v2113 = vshrl.u32 %v1970, 16
      %v2115 = vshll.u32 %v1970, 16
      %v2117 = vrot.slane %v2115, 1
      %v2118 = vor.u32 %v2113, %v2117
      %v2120 = vshll.u32 %v1971, 16
      %v2122 = vrot.slane %v2120, 1
      %v2123 = vsel %vm841, %v2118, %v2122
      %v2125 = vshrl.u32 %v1972, 16
      %v2127 = vshll.u32 %v1972, 16
      %v2129 = vrot.slane %v2127, 1
      %v2130 = vor.u32 %v2125, %v2129
      %v2132 = vshll.u32 %v1973, 16
      %v2134 = vrot.slane %v2132, 1
      %v2135 = vsel %vm841, %v2130, %v2134
      %v2137 = vshrl.u32 %v1974, 16
      %v2139 = vshll.u32 %v1974, 16
      %v2141 = vrot.slane %v2139, 1
      %v2142 = vor.u32 %v2137, %v2141
      %v2144 = vshll.u32 %v1975, 16
      %v2146 = vrot.slane %v2144, 1
      %v2147 = vsel %vm841, %v2142, %v2146
      %v2149 = vshrl.u32 %v1976, 16
      %v2151 = vshll.u32 %v1976, 16
      %v2153 = vrot.slane %v2151, 1
      %v2154 = vor.u32 %v2149, %v2153
      %v2156 = vshll.u32 %v1977, 16
      %v2158 = vrot.slane %v2156, 1
      %v2159 = vsel %vm841, %v2154, %v2158
      %v2161 = vshrl.u32 %v1978, 16
      %v2163 = vshll.u32 %v1978, 16
      %v2165 = vrot.slane %v2163, 1
      %v2166 = vor.u32 %v2161, %v2165
      %v2168 = vshll.u32 %v1979, 16
      %v2170 = vrot.slane %v2168, 1
      %v2171 = vsel %vm841, %v2166, %v2170
      %2188 = vst [vmem:[#allocation3 + $0x10] sm:$0xff] %v1991
      %2189 = vst [vmem:[#allocation3 + $0x28] sm:$0xff] %v2003
      %2190 = vst [vmem:[#allocation3 + $0x40] sm:$0xff] %v2015
      %2191 = vst [vmem:[#allocation3 + $0x58] sm:$0xff] %v2027
      %2192 = vst [vmem:[#allocation3 + $0x70] sm:$0xff] %v2039
      %2193 = vst [vmem:[#allocation3 + $0x88] sm:$0xff] %v2051
      %2194 = vst [vmem:[#allocation3 + $0xa0] sm:$0xff] %v2063
      %2195 = vst [vmem:[#allocation3 + $0xb8] sm:$0xff] %v2075
      %2196 = vst [vmem:[#allocation3 + $0xd0] sm:$0xff] %v2087
      %2197 = vst [vmem:[#allocation3 + $0xe8] sm:$0xff] %v2099
      %2198 = vst [vmem:[#allocation3 + $0x100] sm:$0xff] %v2111
      %2199 = vst [vmem:[#allocation3 + $0x118] sm:$0xff] %v2123
      %2200 = vst [vmem:[#allocation3 + $0x130] sm:$0xff] %v2135
      %2201 = vst [vmem:[#allocation3 + $0x148] sm:$0xff] %v2147
      %2202 = vst [vmem:[#allocation3 + $0x160] sm:$0xff] %v2159
      %2203 = vst [vmem:[#allocation3 + $0x178] sm:$0xff] %v2171
      %v2204 = vld [vmem:[#allocation3] sm:$0xff]
      %v2205 = vld [vmem:[#allocation3 + $0x8] sm:$0xff]
      %v2206 = vld [vmem:[#allocation3 + $0x10] sm:$0xff]
      %v2207 = vld [vmem:[#allocation3 + $0x18] sm:$0xff]
      %v2208 = vld [vmem:[#allocation3 + $0x20] sm:$0xff]
      %v2209 = vld [vmem:[#allocation3 + $0x28] sm:$0xff]
      %v2210 = vld [vmem:[#allocation3 + $0x30] sm:$0xff]
      %v2211 = vld [vmem:[#allocation3 + $0x38] sm:$0xff]
      %v2212 = vld [vmem:[#allocation3 + $0x40] sm:$0xff]
      %v2213 = vld [vmem:[#allocation3 + $0x48] sm:$0xff]
      %v2214 = vld [vmem:[#allocation3 + $0x50] sm:$0xff]
      %v2215 = vld [vmem:[#allocation3 + $0x58] sm:$0xff]
      %v2216 = vld [vmem:[#allocation3 + $0x60] sm:$0xff]
      %v2217 = vld [vmem:[#allocation3 + $0x68] sm:$0xff]
      %v2218 = vld [vmem:[#allocation3 + $0x70] sm:$0xff]
      %v2219 = vld [vmem:[#allocation3 + $0x78] sm:$0xff]
      %v2220 = vld [vmem:[#allocation3 + $0x80] sm:$0xff]
      %v2221 = vld [vmem:[#allocation3 + $0x88] sm:$0xff]
      %v2222 = vld [vmem:[#allocation3 + $0x90] sm:$0xff]
      %v2223 = vld [vmem:[#allocation3 + $0x98] sm:$0xff]
      %v2224 = vld [vmem:[#allocation3 + $0xa0] sm:$0xff]
      %v2225 = vld [vmem:[#allocation3 + $0xa8] sm:$0xff]
      %v2226 = vld [vmem:[#allocation3 + $0xb0] sm:$0xff]
      %v2227 = vld [vmem:[#allocation3 + $0xb8] sm:$0xff]
      %v2228 = vld [vmem:[#allocation3 + $0xc0] sm:$0xff]
      %v2229 = vld [vmem:[#allocation3 + $0xc8] sm:$0xff]
      %v2230 = vld [vmem:[#allocation3 + $0xd0] sm:$0xff]
      %v2231 = vld [vmem:[#allocation3 + $0xd8] sm:$0xff]
      %v2232 = vld [vmem:[#allocation3 + $0xe0] sm:$0xff]
      %v2233 = vld [vmem:[#allocation3 + $0xe8] sm:$0xff]
      %v2234 = vld [vmem:[#allocation3 + $0xf0] sm:$0xff]
      %v2235 = vld [vmem:[#allocation3 + $0xf8] sm:$0xff]
      %v2236 = vld [vmem:[#allocation3 + $0x100] sm:$0xff]
      %v2237 = vld [vmem:[#allocation3 + $0x108] sm:$0xff]
      %v2238 = vld [vmem:[#allocation3 + $0x110] sm:$0xff]
      %v2239 = vld [vmem:[#allocation3 + $0x118] sm:$0xff]
      %v2240 = vld [vmem:[#allocation3 + $0x120] sm:$0xff]
      %v2241 = vld [vmem:[#allocation3 + $0x128] sm:$0xff]
      %v2242 = vld [vmem:[#allocation3 + $0x130] sm:$0xff]
      %v2243 = vld [vmem:[#allocation3 + $0x138] sm:$0xff]
      %v2244 = vld [vmem:[#allocation3 + $0x140] sm:$0xff]
      %v2245 = vld [vmem:[#allocation3 + $0x148] sm:$0xff]
      %v2246 = vld [vmem:[#allocation3 + $0x150] sm:$0xff]
      %v2247 = vld [vmem:[#allocation3 + $0x158] sm:$0xff]
      %v2248 = vld [vmem:[#allocation3 + $0x160] sm:$0xff]
      %v2249 = vld [vmem:[#allocation3 + $0x168] sm:$0xff]
      %v2250 = vld [vmem:[#allocation3 + $0x170] sm:$0xff]
      %v2251 = vld [vmem:[#allocation3 + $0x178] sm:$0xff]
      %s2252 = scalar_lea.vmem %s3, 192
      %v2253 = vld [vmem:[%s2252] sm:$0xf]
      %v2254 = vld [vmem:[%s2252 + $0x4] sm:$0xf]
      %v2255 = vld [vmem:[%s2252 + $0x8] sm:$0xf]
      %v2256 = vld [vmem:[%s2252 + $0xc] sm:$0xf]
      %v2257 = vld [vmem:[%s2252 + $0x10] sm:$0xf]
      %v2258 = vld [vmem:[%s2252 + $0x14] sm:$0xf]
      %v2259 = vld [vmem:[%s2252 + $0x18] sm:$0xf]
      %v2260 = vld [vmem:[%s2252 + $0x1c] sm:$0xf]
      %v2261 = vld [vmem:[%s2252 + $0x20] sm:$0xf]
      %v2262 = vld [vmem:[%s2252 + $0x24] sm:$0xf]
      %v2263 = vld [vmem:[%s2252 + $0x28] sm:$0xf]
      %v2264 = vld [vmem:[%s2252 + $0x2c] sm:$0xf]
      %v2265 = vld [vmem:[%s2252 + $0x30] sm:$0xf]
      %v2266 = vld [vmem:[%s2252 + $0x34] sm:$0xf]
      %v2267 = vld [vmem:[%s2252 + $0x38] sm:$0xf]
      %v2268 = vld [vmem:[%s2252 + $0x3c] sm:$0xf]
      %v2269 = vld [vmem:[%s2252 + $0x40] sm:$0xf]
      %v2270 = vld [vmem:[%s2252 + $0x44] sm:$0xf]
      %v2271 = vld [vmem:[%s2252 + $0x48] sm:$0xf]
      %v2272 = vld [vmem:[%s2252 + $0x4c] sm:$0xf]
      %v2273 = vld [vmem:[%s2252 + $0x50] sm:$0xf]
      %v2274 = vld [vmem:[%s2252 + $0x54] sm:$0xf]
      %v2275 = vld [vmem:[%s2252 + $0x58] sm:$0xf]
      %v2276 = vld [vmem:[%s2252 + $0x5c] sm:$0xf]
      %v2277 = vld [vmem:[%s2252 + $0x60] sm:$0xf]
      %v2278 = vld [vmem:[%s2252 + $0x64] sm:$0xf]
      %v2279 = vld [vmem:[%s2252 + $0x68] sm:$0xf]
      %v2280 = vld [vmem:[%s2252 + $0x6c] sm:$0xf]
      %v2281 = vld [vmem:[%s2252 + $0x70] sm:$0xf]
      %v2282 = vld [vmem:[%s2252 + $0x74] sm:$0xf]
      %v2283 = vld [vmem:[%s2252 + $0x78] sm:$0xf]
      %v2284 = vld [vmem:[%s2252 + $0x7c] sm:$0xf]
      %v2285 = vld [vmem:[%s2252 + $0x80] sm:$0xf]
      %v2286 = vld [vmem:[%s2252 + $0x84] sm:$0xf]
      %v2287 = vld [vmem:[%s2252 + $0x88] sm:$0xf]
      %v2288 = vld [vmem:[%s2252 + $0x8c] sm:$0xf]
      %v2289 = vld [vmem:[%s2252 + $0x90] sm:$0xf]
      %v2290 = vld [vmem:[%s2252 + $0x94] sm:$0xf]
      %v2291 = vld [vmem:[%s2252 + $0x98] sm:$0xf]
      %v2292 = vld [vmem:[%s2252 + $0x9c] sm:$0xf]
      %v2293 = vld [vmem:[%s2252 + $0xa0] sm:$0xf]
      %v2294 = vld [vmem:[%s2252 + $0xa4] sm:$0xf]
      %v2295 = vld [vmem:[%s2252 + $0xa8] sm:$0xf]
      %v2296 = vld [vmem:[%s2252 + $0xac] sm:$0xf]
      %v2297 = vld [vmem:[%s2252 + $0xb0] sm:$0xf]
      %v2298 = vld [vmem:[%s2252 + $0xb4] sm:$0xf]
      %v2299 = vld [vmem:[%s2252 + $0xb8] sm:$0xf]
      %v2300 = vld [vmem:[%s2252 + $0xbc] sm:$0xf]
      %v2349 = vunpack.c.l.b16 %v2253
      %v2350 = vunpack.c.l.b16 %v2254
      %v2351 = vunpack.c.l.b16 %v2255
      %v2352 = vunpack.c.l.b16 %v2256
      %v2353 = vunpack.c.l.b16 %v2257
      %v2354 = vunpack.c.l.b16 %v2258
      %v2355 = vunpack.c.l.b16 %v2259
      %v2356 = vunpack.c.l.b16 %v2260
      %v2357 = vunpack.c.l.b16 %v2261
      %v2358 = vunpack.c.l.b16 %v2262
      %v2359 = vunpack.c.l.b16 %v2263
      %v2360 = vunpack.c.l.b16 %v2264
      %v2361 = vunpack.c.l.b16 %v2265
      %v2362 = vunpack.c.l.b16 %v2266
      %v2363 = vunpack.c.l.b16 %v2267
      %v2364 = vunpack.c.l.b16 %v2268
      %v2365 = vunpack.c.l.b16 %v2269
      %v2366 = vunpack.c.l.b16 %v2270
      %v2367 = vunpack.c.l.b16 %v2271
      %v2368 = vunpack.c.l.b16 %v2272
      %v2369 = vunpack.c.l.b16 %v2273
      %v2370 = vunpack.c.l.b16 %v2274
      %v2371 = vunpack.c.l.b16 %v2275
      %v2372 = vunpack.c.l.b16 %v2276
      %v2373 = vunpack.c.l.b16 %v2277
      %v2374 = vunpack.c.l.b16 %v2278
      %v2375 = vunpack.c.l.b16 %v2279
      %v2376 = vunpack.c.l.b16 %v2280
      %v2377 = vunpack.c.l.b16 %v2281
      %v2378 = vunpack.c.l.b16 %v2282
      %v2379 = vunpack.c.l.b16 %v2283
      %v2380 = vunpack.c.l.b16 %v2284
      %v2381 = vunpack.c.l.b16 %v2285
      %v2382 = vunpack.c.l.b16 %v2286
      %v2383 = vunpack.c.l.b16 %v2287
      %v2384 = vunpack.c.l.b16 %v2288
      %v2385 = vunpack.c.l.b16 %v2289
      %v2386 = vunpack.c.l.b16 %v2290
      %v2387 = vunpack.c.l.b16 %v2291
      %v2388 = vunpack.c.l.b16 %v2292
      %v2389 = vunpack.c.l.b16 %v2293
      %v2390 = vunpack.c.l.b16 %v2294
      %v2391 = vunpack.c.l.b16 %v2295
      %v2392 = vunpack.c.l.b16 %v2296
      %v2393 = vunpack.c.l.b16 %v2297
      %v2394 = vunpack.c.l.b16 %v2298
      %v2395 = vunpack.c.l.b16 %v2299
      %v2396 = vunpack.c.l.b16 %v2300
      %v2397 = vpack.c.b16 %v2350, %v2349
      %v2398 = vpack.c.b16 %v2352, %v2351
      %v2399 = vpack.c.b16 %v2354, %v2353
      %v2400 = vpack.c.b16 %v2356, %v2355
      %v2401 = vpack.c.b16 %v2358, %v2357
      %v2402 = vpack.c.b16 %v2360, %v2359
      %v2403 = vpack.c.b16 %v2362, %v2361
      %v2404 = vpack.c.b16 %v2364, %v2363
      %v2405 = vpack.c.b16 %v2366, %v2365
      %v2406 = vpack.c.b16 %v2368, %v2367
      %v2407 = vpack.c.b16 %v2370, %v2369
      %v2408 = vpack.c.b16 %v2372, %v2371
      %v2409 = vpack.c.b16 %v2374, %v2373
      %v2410 = vpack.c.b16 %v2376, %v2375
      %v2411 = vpack.c.b16 %v2378, %v2377
      %v2412 = vpack.c.b16 %v2380, %v2379
      %v2413 = vpack.c.b16 %v2382, %v2381
      %v2414 = vpack.c.b16 %v2384, %v2383
      %v2415 = vpack.c.b16 %v2386, %v2385
      %v2416 = vpack.c.b16 %v2388, %v2387
      %v2417 = vpack.c.b16 %v2390, %v2389
      %v2418 = vpack.c.b16 %v2392, %v2391
      %v2419 = vpack.c.b16 %v2394, %v2393
      %v2420 = vpack.c.b16 %v2396, %v2395
      %2445 = vmatprep.subr.bf16.mxu0 0
      %2446 = vmatpush1.bf16.msra.mxu0 %v2397
      %2447 = vmatprep.subr.bf16.mxu0 0
      %2448 = vmatpush1.bf16.msra.mxu0 %v2398
      %2449 = vmatprep.subr.bf16.mxu0 0
      %2450 = vmatpush1.bf16.msra.mxu0 %v2399
      %2451 = vmatprep.subr.bf16.mxu0 0
      %2452 = vmatpush1.bf16.msra.mxu0 %v2400
      %2453 = vmatprep.subr.bf16.mxu0 0
      %2454 = vmatpush1.bf16.msra.mxu0 %v2401
      %2455 = vmatprep.subr.bf16.mxu0 0
      %2456 = vmatpush1.bf16.msra.mxu0 %v2402
      %2457 = vmatprep.subr.bf16.mxu0 0
      %2458 = vmatpush1.bf16.msra.mxu0 %v2403
      %2459 = vmatprep.subr.bf16.mxu0 0
      %2460 = vmatpush1.bf16.msra.mxu0 %v2404
      %2461 = vmatprep.subr.bf16.mxu0 0
      %2462 = vmatpush1.bf16.msra.mxu0 %v2405
      %2463 = vmatprep.subr.bf16.mxu0 0
      %2464 = vmatpush1.bf16.msra.mxu0 %v2406
      %2465 = vmatprep.subr.bf16.mxu0 0
      %2466 = vmatpush1.bf16.msra.mxu0 %v2407
      %2467 = vmatprep.subr.bf16.mxu0 0
      %2468 = vmatpush1.bf16.msra.mxu0 %v2408
      %2469 = vmatprep.subr.bf16.mxu0 0
      %2470 = vmatpush1.bf16.msra.mxu0 %v2409
      %2471 = vmatprep.subr.bf16.mxu0 0
      %2472 = vmatpush1.bf16.msra.mxu0 %v2410
      %2473 = vmatprep.subr.bf16.mxu0 0
      %2474 = vmatpush1.bf16.msra.mxu0 %v2411
      %2475 = vmatprep.subr.bf16.mxu0 0
      %2476 = vmatpush1.bf16.msra.mxu0 %v2412
      %2477 = vmatprep.mubr.bf16.mxu0 %v2205
      %2478 = vmatmul.mubr.bf16.gmra.mrb[0].mxu0 %v2204
      %v2479 = vpop.f32.mrb[0].mxu0
      %v2480 = vadd.f32 0.0, %v2479
      %v2481 = vpop.f32.mrb[0].mxu0
      %v2482 = vpop.f32.mrb[0].mxu0
      %v2483 = vadd.f32 0.0, %v2482
      %v2484 = vpop.f32.mrb[0].mxu0
      %2485 = vmatprep.mubr.bf16.mxu0 %v2208
      %2486 = vmatmul.mubr.bf16.gmra.mrb[0].mxu0 %v2207
      %v2487 = vpop.f32.mrb[0].mxu0
      %v2488 = vadd.f32 0.0, %v2487
      %v2489 = vpop.f32.mrb[0].mxu0
      %v2490 = vpop.f32.mrb[0].mxu0
      %v2491 = vadd.f32 0.0, %v2490
      %v2492 = vpop.f32.mrb[0].mxu0
      %2493 = vmatprep.mubr.bf16.mxu0 %v2211
      %2494 = vmatmul.mubr.bf16.gmra.mrb[0].mxu0 %v2210
      %v2495 = vpop.f32.mrb[0].mxu0
      %v2496 = vadd.f32 0.0, %v2495
      %v2497 = vpop.f32.mrb[0].mxu0
      %v2498 = vpop.f32.mrb[0].mxu0
      %v2499 = vadd.f32 0.0, %v2498
      %v2500 = vpop.f32.mrb[0].mxu0
      %2501 = vmatprep.mubr.bf16.mxu0 %v2214
      %2502 = vmatmul.mubr.bf16.gmra.mrb[0].mxu0 %v2213
      %v2503 = vpop.f32.mrb[0].mxu0
      %v2504 = vadd.f32 0.0, %v2503
      %v2505 = vpop.f32.mrb[0].mxu0
      %v2506 = vpop.f32.mrb[0].mxu0
      %v2507 = vadd.f32 0.0, %v2506
      %v2508 = vpop.f32.mrb[0].mxu0
      %2509 = vmatprep.mubr.bf16.mxu0 %v2217
      %2510 = vmatmul.mubr.bf16.gmra.mrb[0].mxu0 %v2216
      %v2511 = vpop.f32.mrb[0].mxu0
      %v2512 = vadd.f32 0.0, %v2511
      %v2513 = vpop.f32.mrb[0].mxu0
      %v2514 = vpop.f32.mrb[0].mxu0
      %v2515 = vadd.f32 0.0, %v2514
      %v2516 = vpop.f32.mrb[0].mxu0
      %2517 = vmatprep.mubr.bf16.mxu0 %v2220
      %2518 = vmatmul.mubr.bf16.gmra.mrb[0].mxu0 %v2219
      %v2519 = vpop.f32.mrb[0].mxu0
      %v2520 = vadd.f32 0.0, %v2519
      %v2521 = vpop.f32.mrb[0].mxu0
      %v2522 = vpop.f32.mrb[0].mxu0
      %v2523 = vadd.f32 0.0, %v2522
      %v2524 = vpop.f32.mrb[0].mxu0
      %2525 = vmatprep.mubr.bf16.mxu0 %v2223
      %2526 = vmatmul.mubr.bf16.gmra.mrb[0].mxu0 %v2222
      %v2527 = vpop.f32.mrb[0].mxu0
      %v2528 = vadd.f32 0.0, %v2527
      %v2529 = vpop.f32.mrb[0].mxu0
      %v2530 = vpop.f32.mrb[0].mxu0
      %v2531 = vadd.f32 0.0, %v2530
      %v2532 = vpop.f32.mrb[0].mxu0
      %2533 = vmatprep.mubr.bf16.mxu0 %v2226
      %2534 = vmatmul.mubr.bf16.gmra.mrb[0].mxu0 %v2225
      %v2535 = vpop.f32.mrb[0].mxu0
      %v2536 = vadd.f32 0.0, %v2535
      %v2537 = vpop.f32.mrb[0].mxu0
      %v2538 = vpop.f32.mrb[0].mxu0
      %v2539 = vadd.f32 0.0, %v2538
      %v2540 = vpop.f32.mrb[0].mxu0
      %2541 = vmatprep.mubr.bf16.mxu0 %v2229
      %2542 = vmatmul.mubr.bf16.gmra.mrb[0].mxu0 %v2228
      %v2543 = vpop.f32.mrb[0].mxu0
      %v2544 = vadd.f32 0.0, %v2543
      %v2545 = vpop.f32.mrb[0].mxu0
      %v2546 = vpop.f32.mrb[0].mxu0
      %v2547 = vadd.f32 0.0, %v2546
      %v2548 = vpop.f32.mrb[0].mxu0
      %2549 = vmatprep.mubr.bf16.mxu0 %v2232
      %2550 = vmatmul.mubr.bf16.gmra.mrb[0].mxu0 %v2231
      %v2551 = vpop.f32.mrb[0].mxu0
      %v2552 = vadd.f32 0.0, %v2551
      %v2553 = vpop.f32.mrb[0].mxu0
      %v2554 = vpop.f32.mrb[0].mxu0
      %v2555 = vadd.f32 0.0, %v2554
      %v2556 = vpop.f32.mrb[0].mxu0
      %2557 = vmatprep.mubr.bf16.mxu0 %v2235
      %2558 = vmatmul.mubr.bf16.gmra.mrb[0].mxu0 %v2234
      %v2559 = vpop.f32.mrb[0].mxu0
      %v2560 = vadd.f32 0.0, %v2559
      %v2561 = vpop.f32.mrb[0].mxu0
      %v2562 = vpop.f32.mrb[0].mxu0
      %v2563 = vadd.f32 0.0, %v2562
      %v2564 = vpop.f32.mrb[0].mxu0
      %2565 = vmatprep.mubr.bf16.mxu0 %v2238
      %2566 = vmatmul.mubr.bf16.gmra.mrb[0].mxu0 %v2237
      %v2567 = vpop.f32.mrb[0].mxu0
      %v2568 = vadd.f32 0.0, %v2567
      %v2569 = vpop.f32.mrb[0].mxu0
      %v2570 = vpop.f32.mrb[0].mxu0
      %v2571 = vadd.f32 0.0, %v2570
      %v2572 = vpop.f32.mrb[0].mxu0
      %2573 = vmatprep.mubr.bf16.mxu0 %v2241
      %2574 = vmatmul.mubr.bf16.gmra.mrb[0].mxu0 %v2240
      %v2575 = vpop.f32.mrb[0].mxu0
      %v2576 = vadd.f32 0.0, %v2575
      %v2577 = vpop.f32.mrb[0].mxu0
      %v2578 = vpop.f32.mrb[0].mxu0
      %v2579 = vadd.f32 0.0, %v2578
      %v2580 = vpop.f32.mrb[0].mxu0
      %2581 = vmatprep.mubr.bf16.mxu0 %v2244
      %2582 = vmatmul.mubr.bf16.gmra.mrb[0].mxu0 %v2243
      %v2583 = vpop.f32.mrb[0].mxu0
      %v2584 = vadd.f32 0.0, %v2583
      %v2585 = vpop.f32.mrb[0].mxu0
      %v2586 = vpop.f32.mrb[0].mxu0
      %v2587 = vadd.f32 0.0, %v2586
      %v2588 = vpop.f32.mrb[0].mxu0
      %2589 = vmatprep.mubr.bf16.mxu0 %v2247
      %2590 = vmatmul.mubr.bf16.gmra.mrb[0].mxu0 %v2246
      %v2591 = vpop.f32.mrb[0].mxu0
      %v2592 = vadd.f32 0.0, %v2591
      %v2593 = vpop.f32.mrb[0].mxu0
      %v2594 = vpop.f32.mrb[0].mxu0
      %v2595 = vadd.f32 0.0, %v2594
      %v2596 = vpop.f32.mrb[0].mxu0
      %2597 = vmatprep.mubr.bf16.mxu0 %v2250
      %2598 = vmatmul.mubr.bf16.gmra.mrb[0].mxu0 %v2249
      %v2599 = vpop.f32.mrb[0].mxu0
      %v2600 = vadd.f32 0.0, %v2599
      %v2601 = vpop.f32.mrb[0].mxu0
      %v2602 = vpop.f32.mrb[0].mxu0
      %v2603 = vadd.f32 0.0, %v2602
      %v2604 = vpop.f32.mrb[0].mxu0
      %2605 = vdwg.mxu0
      %2606 = vmatprep.subr.bf16.mxu0 0
      %2607 = vmatpush1.bf16.msra.mxu0 %v2413
      %2608 = vmatprep.subr.bf16.mxu0 0
      %2609 = vmatpush1.bf16.msra.mxu0 %v2414
      %2610 = vmatprep.subr.bf16.mxu0 0
      %2611 = vmatpush1.bf16.msra.mxu0 %v2415
      %2612 = vmatprep.subr.bf16.mxu0 0
      %2613 = vmatpush1.bf16.msra.mxu0 %v2416
      %2614 = vmatprep.subr.bf16.mxu0 0
      %2615 = vmatpush1.bf16.msra.mxu0 %v2417
      %2616 = vmatprep.subr.bf16.mxu0 0
      %2617 = vmatpush1.bf16.msra.mxu0 %v2418
      %2618 = vmatprep.subr.bf16.mxu0 0
      %2619 = vmatpush1.bf16.msra.mxu0 %v2419
      %2620 = vmatprep.subr.bf16.mxu0 0
      %2621 = vmatpush1.bf16.msra.mxu0 %v2420
      %2622 = vmatprep.subr.bf16.mxu0 0
      %2623 = vmatpush1.bf16.msra.mxu0 0
      %2624 = vmatprep.subr.bf16.mxu0 0
      %2625 = vmatpush1.bf16.msra.mxu0 0
      %2626 = vmatprep.subr.bf16.mxu0 0
      %2627 = vmatpush1.bf16.msra.mxu0 0
      %2628 = vmatprep.subr.bf16.mxu0 0
      %2629 = vmatpush1.bf16.msra.mxu0 0
      %2630 = vmatprep.subr.bf16.mxu0 0
      %2631 = vmatpush1.bf16.msra.mxu0 0
      %2632 = vmatprep.subr.bf16.mxu0 0
      %2633 = vmatpush1.bf16.msra.mxu0 0
      %2634 = vmatprep.subr.bf16.mxu0 0
      %2635 = vmatpush1.bf16.msra.mxu0 0
      %2636 = vmatprep.subr.bf16.mxu0 0
      %2637 = vmatpush1.bf16.msra.mxu0 0
      %2638 = vmatprep.mubr.bf16.mxu0 0
      %2639 = vmatmul.mubr.bf16.gmra.mrb[0].mxu0 %v2206
      %v2640 = vpop.f32.mrb[0].mxu0
      %v2641 = vadd.f32 %v2480, %v2640
      %v2642 = vpop.f32.mrb[0].mxu0
      %v2643 = vpop.f32.mrb[0].mxu0
      %v2644 = vadd.f32 %v2483, %v2643
      %v2645 = vpop.f32.mrb[0].mxu0
      %2646 = vmatprep.mubr.bf16.mxu0 0
      %2647 = vmatmul.mubr.bf16.gmra.mrb[0].mxu0 %v2209
      %v2648 = vpop.f32.mrb[0].mxu0
      %v2649 = vadd.f32 %v2488, %v2648
      %v2650 = vpop.f32.mrb[0].mxu0
      %v2651 = vpop.f32.mrb[0].mxu0
      %v2652 = vadd.f32 %v2491, %v2651
      %v2653 = vpop.f32.mrb[0].mxu0
      %2654 = vmatprep.mubr.bf16.mxu0 0
      %2655 = vmatmul.mubr.bf16.gmra.mrb[0].mxu0 %v2212
      %v2656 = vpop.f32.mrb[0].mxu0
      %v2657 = vadd.f32 %v2496, %v2656
      %v2658 = vpop.f32.mrb[0].mxu0
      %v2659 = vpop.f32.mrb[0].mxu0
      %v2660 = vadd.f32 %v2499, %v2659
      %v2661 = vpop.f32.mrb[0].mxu0
      %2662 = vmatprep.mubr.bf16.mxu0 0
      %2663 = vmatmul.mubr.bf16.gmra.mrb[0].mxu0 %v2215
      %v2664 = vpop.f32.mrb[0].mxu0
      %v2665 = vadd.f32 %v2504, %v2664
      %v2666 = vpop.f32.mrb[0].mxu0
      %v2667 = vpop.f32.mrb[0].mxu0
      %v2668 = vadd.f32 %v2507, %v2667
      %v2669 = vpop.f32.mrb[0].mxu0
      %2670 = vmatprep.mubr.bf16.mxu0 0
      %2671 = vmatmul.mubr.bf16.gmra.mrb[0].mxu0 %v2218
      %v2672 = vpop.f32.mrb[0].mxu0
      %v2673 = vadd.f32 %v2512, %v2672
      %v2674 = vpop.f32.mrb[0].mxu0
      %v2675 = vpop.f32.mrb[0].mxu0
      %v2676 = vadd.f32 %v2515, %v2675
      %v2677 = vpop.f32.mrb[0].mxu0
      %2678 = vmatprep.mubr.bf16.mxu0 0
      %2679 = vmatmul.mubr.bf16.gmra.mrb[0].mxu0 %v2221
      %v2680 = vpop.f32.mrb[0].mxu0
      %v2681 = vadd.f32 %v2520, %v2680
      %v2682 = vpop.f32.mrb[0].mxu0
      %v2683 = vpop.f32.mrb[0].mxu0
      %v2684 = vadd.f32 %v2523, %v2683
      %v2685 = vpop.f32.mrb[0].mxu0
      %2686 = vmatprep.mubr.bf16.mxu0 0
      %2687 = vmatmul.mubr.bf16.gmra.mrb[0].mxu0 %v2224
      %v2688 = vpop.f32.mrb[0].mxu0
      %v2689 = vadd.f32 %v2528, %v2688
      %v2690 = vpop.f32.mrb[0].mxu0
      %v2691 = vpop.f32.mrb[0].mxu0
      %v2692 = vadd.f32 %v2531, %v2691
      %v2693 = vpop.f32.mrb[0].mxu0
      %2694 = vmatprep.mubr.bf16.mxu0 0
      %2695 = vmatmul.mubr.bf16.gmra.mrb[0].mxu0 %v2227
      %v2696 = vpop.f32.mrb[0].mxu0
      %v2697 = vadd.f32 %v2536, %v2696
      %v2698 = vpop.f32.mrb[0].mxu0
      %v2699 = vpop.f32.mrb[0].mxu0
      %v2700 = vadd.f32 %v2539, %v2699
      %v2701 = vpop.f32.mrb[0].mxu0
      %2702 = vmatprep.mubr.bf16.mxu0 0
      %2703 = vmatmul.mubr.bf16.gmra.mrb[0].mxu0 %v2230
      %v2704 = vpop.f32.mrb[0].mxu0
      %v2705 = vadd.f32 %v2544, %v2704
      %v2706 = vpop.f32.mrb[0].mxu0
      %v2707 = vpop.f32.mrb[0].mxu0
      %v2708 = vadd.f32 %v2547, %v2707
      %v2709 = vpop.f32.mrb[0].mxu0
      %2710 = vmatprep.mubr.bf16.mxu0 0
      %2711 = vmatmul.mubr.bf16.gmra.mrb[0].mxu0 %v2233
      %v2712 = vpop.f32.mrb[0].mxu0
      %v2713 = vadd.f32 %v2552, %v2712
      %v2714 = vpop.f32.mrb[0].mxu0
      %v2715 = vpop.f32.mrb[0].mxu0
      %v2716 = vadd.f32 %v2555, %v2715
      %v2717 = vpop.f32.mrb[0].mxu0
      %2718 = vmatprep.mubr.bf16.mxu0 0
      %2719 = vmatmul.mubr.bf16.gmra.mrb[0].mxu0 %v2236
      %v2720 = vpop.f32.mrb[0].mxu0
      %v2721 = vadd.f32 %v2560, %v2720
      %v2722 = vpop.f32.mrb[0].mxu0
      %v2723 = vpop.f32.mrb[0].mxu0
      %v2724 = vadd.f32 %v2563, %v2723
      %v2725 = vpop.f32.mrb[0].mxu0
      %2726 = vmatprep.mubr.bf16.mxu0 0
      %2727 = vmatmul.mubr.bf16.gmra.mrb[0].mxu0 %v2239
      %v2728 = vpop.f32.mrb[0].mxu0
      %v2729 = vadd.f32 %v2568, %v2728
      %v2730 = vpop.f32.mrb[0].mxu0
      %v2731 = vpop.f32.mrb[0].mxu0
      %v2732 = vadd.f32 %v2571, %v2731
      %v2733 = vpop.f32.mrb[0].mxu0
      %2734 = vmatprep.mubr.bf16.mxu0 0
      %2735 = vmatmul.mubr.bf16.gmra.mrb[0].mxu0 %v2242
      %v2736 = vpop.f32.mrb[0].mxu0
      %v2737 = vadd.f32 %v2576, %v2736
      %v2738 = vpop.f32.mrb[0].mxu0
      %v2739 = vpop.f32.mrb[0].mxu0
      %v2740 = vadd.f32 %v2579, %v2739
      %v2741 = vpop.f32.mrb[0].mxu0
      %2742 = vmatprep.mubr.bf16.mxu0 0
      %2743 = vmatmul.mubr.bf16.gmra.mrb[0].mxu0 %v2245
      %v2744 = vpop.f32.mrb[0].mxu0
      %v2745 = vadd.f32 %v2584, %v2744
      %v2746 = vpop.f32.mrb[0].mxu0
      %v2747 = vpop.f32.mrb[0].mxu0
      %v2748 = vadd.f32 %v2587, %v2747
      %v2749 = vpop.f32.mrb[0].mxu0
      %2750 = vmatprep.mubr.bf16.mxu0 0
      %2751 = vmatmul.mubr.bf16.gmra.mrb[0].mxu0 %v2248
      %v2752 = vpop.f32.mrb[0].mxu0
      %v2753 = vadd.f32 %v2592, %v2752
      %v2754 = vpop.f32.mrb[0].mxu0
      %v2755 = vpop.f32.mrb[0].mxu0
      %v2756 = vadd.f32 %v2595, %v2755
      %v2757 = vpop.f32.mrb[0].mxu0
      %2758 = vmatprep.mubr.bf16.mxu0 0
      %2759 = vmatmul.mubr.bf16.gmra.mrb[0].mxu0 %v2251
      %v2760 = vpop.f32.mrb[0].mxu0
      %v2761 = vadd.f32 %v2600, %v2760
      %v2762 = vpop.f32.mrb[0].mxu0
      %v2763 = vpop.f32.mrb[0].mxu0
      %v2764 = vadd.f32 %v2603, %v2763
      %v2765 = vpop.f32.mrb[0].mxu0
      %2766 = vdwg.mxu0
      %v2767 = vld [vmem:[#allocation4] sm:$0xff]
      %v2768 = vld [vmem:[#allocation4 + $0x8] sm:$0xff]
      %v2769 = vld [vmem:[#allocation4 + $0x10] sm:$0xff]
      %v2770 = vld [vmem:[#allocation4 + $0x18] sm:$0xff]
      %v2771 = vld [vmem:[#allocation4 + $0x20] sm:$0xff]
      %v2772 = vld [vmem:[#allocation4 + $0x28] sm:$0xff]
      %v2773 = vld [vmem:[#allocation4 + $0x30] sm:$0xff]
      %v2774 = vld [vmem:[#allocation4 + $0x38] sm:$0xff]
      %v2775 = vld [vmem:[#allocation4 + $0x40] sm:$0xff]
      %v2776 = vld [vmem:[#allocation4 + $0x48] sm:$0xff]
      %v2777 = vld [vmem:[#allocation4 + $0x50] sm:$0xff]
      %v2778 = vld [vmem:[#allocation4 + $0x58] sm:$0xff]
      %v2779 = vld [vmem:[#allocation4 + $0x60] sm:$0xff]
      %v2780 = vld [vmem:[#allocation4 + $0x68] sm:$0xff]
      %v2781 = vld [vmem:[#allocation4 + $0x70] sm:$0xff]
      %v2782 = vld [vmem:[#allocation4 + $0x78] sm:$0xff]
      %v2783 = vld [vmem:[#allocation4 + $0x80] sm:$0xff]
      %v2784 = vld [vmem:[#allocation4 + $0x88] sm:$0xff]
      %v2785 = vld [vmem:[#allocation4 + $0x90] sm:$0xff]
      %v2786 = vld [vmem:[#allocation4 + $0x98] sm:$0xff]
      %v2787 = vld [vmem:[#allocation4 + $0xa0] sm:$0xff]
      %v2788 = vld [vmem:[#allocation4 + $0xa8] sm:$0xff]
      %v2789 = vld [vmem:[#allocation4 + $0xb0] sm:$0xff]
      %v2790 = vld [vmem:[#allocation4 + $0xb8] sm:$0xff]
      %v2791 = vld [vmem:[#allocation4 + $0xc0] sm:$0xff]
      %v2792 = vld [vmem:[#allocation4 + $0xc8] sm:$0xff]
      %v2793 = vld [vmem:[#allocation4 + $0xd0] sm:$0xff]
      %v2794 = vld [vmem:[#allocation4 + $0xd8] sm:$0xff]
      %v2795 = vld [vmem:[#allocation4 + $0xe0] sm:$0xff]
      %v2796 = vld [vmem:[#allocation4 + $0xe8] sm:$0xff]
      %v2797 = vld [vmem:[#allocation4 + $0xf0] sm:$0xff]
      %v2798 = vld [vmem:[#allocation4 + $0xf8] sm:$0xff]
      %v2799 = vadd.f32 %v2767, %v2641
      %v2800 = vadd.f32 %v2768, %v2644
      %v2801 = vadd.f32 %v2769, %v2649
      %v2802 = vadd.f32 %v2770, %v2652
      %v2803 = vadd.f32 %v2771, %v2657
      %v2804 = vadd.f32 %v2772, %v2660
      %v2805 = vadd.f32 %v2773, %v2665
      %v2806 = vadd.f32 %v2774, %v2668
      %v2807 = vadd.f32 %v2775, %v2673
      %v2808 = vadd.f32 %v2776, %v2676
      %v2809 = vadd.f32 %v2777, %v2681
      %v2810 = vadd.f32 %v2778, %v2684
      %v2811 = vadd.f32 %v2779, %v2689
      %v2812 = vadd.f32 %v2780, %v2692
      %v2813 = vadd.f32 %v2781, %v2697
      %v2814 = vadd.f32 %v2782, %v2700
      %v2815 = vadd.f32 %v2783, %v2705
      %v2816 = vadd.f32 %v2784, %v2708
      %v2817 = vadd.f32 %v2785, %v2713
      %v2818 = vadd.f32 %v2786, %v2716
      %v2819 = vadd.f32 %v2787, %v2721
      %v2820 = vadd.f32 %v2788, %v2724
      %v2821 = vadd.f32 %v2789, %v2729
      %v2822 = vadd.f32 %v2790, %v2732
      %v2823 = vadd.f32 %v2791, %v2737
      %v2824 = vadd.f32 %v2792, %v2740
      %v2825 = vadd.f32 %v2793, %v2745
      %v2826 = vadd.f32 %v2794, %v2748
      %v2827 = vadd.f32 %v2795, %v2753
      %v2828 = vadd.f32 %v2796, %v2756
      %v2829 = vadd.f32 %v2797, %v2761
      %v2830 = vadd.f32 %v2798, %v2764
      %2831 = vst [vmem:[#allocation4] sm:$0xff] %v2799
      %2832 = vst [vmem:[#allocation4 + $0x8] sm:$0xff] %v2800
      %2833 = vst [vmem:[#allocation4 + $0x10] sm:$0xff] %v2801
      %2834 = vst [vmem:[#allocation4 + $0x18] sm:$0xff] %v2802
      %2835 = vst [vmem:[#allocation4 + $0x20] sm:$0xff] %v2803
      %2836 = vst [vmem:[#allocation4 + $0x28] sm:$0xff] %v2804
      %2837 = vst [vmem:[#allocation4 + $0x30] sm:$0xff] %v2805
      %2838 = vst [vmem:[#allocation4 + $0x38] sm:$0xff] %v2806
      %2839 = vst [vmem:[#allocation4 + $0x40] sm:$0xff] %v2807
      %2840 = vst [vmem:[#allocation4 + $0x48] sm:$0xff] %v2808
      %2841 = vst [vmem:[#allocation4 + $0x50] sm:$0xff] %v2809
      %2842 = vst [vmem:[#allocation4 + $0x58] sm:$0xff] %v2810
      %2843 = vst [vmem:[#allocation4 + $0x60] sm:$0xff] %v2811
      %2844 = vst [vmem:[#allocation4 + $0x68] sm:$0xff] %v2812
      %2845 = vst [vmem:[#allocation4 + $0x70] sm:$0xff] %v2813
      %2846 = vst [vmem:[#allocation4 + $0x78] sm:$0xff] %v2814
      %2847 = vst [vmem:[#allocation4 + $0x80] sm:$0xff] %v2815
      %2848 = vst [vmem:[#allocation4 + $0x88] sm:$0xff] %v2816
      %2849 = vst [vmem:[#allocation4 + $0x90] sm:$0xff] %v2817
      %2850 = vst [vmem:[#allocation4 + $0x98] sm:$0xff] %v2818
      %2851 = vst [vmem:[#allocation4 + $0xa0] sm:$0xff] %v2819
      %2852 = vst [vmem:[#allocation4 + $0xa8] sm:$0xff] %v2820
      %2853 = vst [vmem:[#allocation4 + $0xb0] sm:$0xff] %v2821
      %2854 = vst [vmem:[#allocation4 + $0xb8] sm:$0xff] %v2822
      %2855 = vst [vmem:[#allocation4 + $0xc0] sm:$0xff] %v2823
      %2856 = vst [vmem:[#allocation4 + $0xc8] sm:$0xff] %v2824
      %2857 = vst [vmem:[#allocation4 + $0xd0] sm:$0xff] %v2825
      %2858 = vst [vmem:[#allocation4 + $0xd8] sm:$0xff] %v2826
      %2859 = vst [vmem:[#allocation4 + $0xe0] sm:$0xff] %v2827
      %2860 = vst [vmem:[#allocation4 + $0xe8] sm:$0xff] %v2828
      %2861 = vst [vmem:[#allocation4 + $0xf0] sm:$0xff] %v2829
      %2862 = vst [vmem:[#allocation4 + $0xf8] sm:$0xff] %v2830
      %s2863 = scalar_lea.vmem [#allocation2], 48
      %v2864 = vld [vmem:[%s2863] sm:$0x80]
      %v2865 = vld [vmem:[%s2863 + $0x8] sm:$0xff]
      %v2866 = vld [vmem:[%s2863 + $0x18] sm:$0x80]
      %v2867 = vld [vmem:[%s2863 + $0x20] sm:$0xff]
      %v2868 = vld [vmem:[%s2863 + $0x30] sm:$0x80]
      %v2869 = vld [vmem:[%s2863 + $0x38] sm:$0xff]
      %v2870 = vld [vmem:[%s2863 + $0x48] sm:$0x80]
      %v2871 = vld [vmem:[%s2863 + $0x50] sm:$0xff]
      %v2872 = vld [vmem:[%s2863 + $0x60] sm:$0x80]
      %v2873 = vld [vmem:[%s2863 + $0x68] sm:$0xff]
      %v2874 = vld [vmem:[%s2863 + $0x78] sm:$0x80]
      %v2875 = vld [vmem:[%s2863 + $0x80] sm:$0xff]
      %v2876 = vld [vmem:[%s2863 + $0x90] sm:$0x80]
      %v2877 = vld [vmem:[%s2863 + $0x98] sm:$0xff]
      %v2878 = vld [vmem:[%s2863 + $0xa8] sm:$0x80]
      %v2879 = vld [vmem:[%s2863 + $0xb0] sm:$0xff]
      %v2880 = vld [vmem:[%s2863 + $0xc0] sm:$0x80]
      %v2881 = vld [vmem:[%s2863 + $0xc8] sm:$0xff]
      %v2882 = vld [vmem:[%s2863 + $0xd8] sm:$0x80]
      %v2883 = vld [vmem:[%s2863 + $0xe0] sm:$0xff]
      %v2884 = vld [vmem:[%s2863 + $0xf0] sm:$0x80]
      %v2885 = vld [vmem:[%s2863 + $0xf8] sm:$0xff]
      %v2886 = vld [vmem:[%s2863 + $0x108] sm:$0x80]
      %v2887 = vld [vmem:[%s2863 + $0x110] sm:$0xff]
      %v2888 = vld [vmem:[%s2863 + $0x120] sm:$0x80]
      %v2889 = vld [vmem:[%s2863 + $0x128] sm:$0xff]
      %v2890 = vld [vmem:[%s2863 + $0x138] sm:$0x80]
      %v2891 = vld [vmem:[%s2863 + $0x140] sm:$0xff]
      %v2892 = vld [vmem:[%s2863 + $0x150] sm:$0x80]
      %v2893 = vld [vmem:[%s2863 + $0x158] sm:$0xff]
      %v2894 = vld [vmem:[%s2863 + $0x168] sm:$0x80]
      %v2895 = vld [vmem:[%s2863 + $0x170] sm:$0xff]
      %v2897 = vshrl.u32 %v2864, 16
      %v2899 = vrot.slane %v2897, 7
      %v2901 = vshrl.u32 %v2865, 16
      %v2903 = vrot.slane %v2901, 7
      %v2904 = vshll.u32 %v2865, 16
      %v2906 = vor.u32 %v2903, %v2904
      %v2907 = vsel %vm552, %v2899, %v2906
      %v2909 = vshrl.u32 %v2866, 16
      %v2911 = vrot.slane %v2909, 7
      %v2913 = vshrl.u32 %v2867, 16
      %v2915 = vrot.slane %v2913, 7
      %v2916 = vshll.u32 %v2867, 16
      %v2918 = vor.u32 %v2915, %v2916
      %v2919 = vsel %vm552, %v2911, %v2918
      %v2921 = vshrl.u32 %v2868, 16
      %v2923 = vrot.slane %v2921, 7
      %v2925 = vshrl.u32 %v2869, 16
      %v2927 = vrot.slane %v2925, 7
      %v2928 = vshll.u32 %v2869, 16
      %v2930 = vor.u32 %v2927, %v2928
      %v2931 = vsel %vm552, %v2923, %v2930
      %v2933 = vshrl.u32 %v2870, 16
      %v2935 = vrot.slane %v2933, 7
      %v2937 = vshrl.u32 %v2871, 16
      %v2939 = vrot.slane %v2937, 7
      %v2940 = vshll.u32 %v2871, 16
      %v2942 = vor.u32 %v2939, %v2940
      %v2943 = vsel %vm552, %v2935, %v2942
      %v2945 = vshrl.u32 %v2872, 16
      %v2947 = vrot.slane %v2945, 7
      %v2949 = vshrl.u32 %v2873, 16
      %v2951 = vrot.slane %v2949, 7
      %v2952 = vshll.u32 %v2873, 16
      %v2954 = vor.u32 %v2951, %v2952
      %v2955 = vsel %vm552, %v2947, %v2954
      %v2957 = vshrl.u32 %v2874, 16
      %v2959 = vrot.slane %v2957, 7
      %v2961 = vshrl.u32 %v2875, 16
      %v2963 = vrot.slane %v2961, 7
      %v2964 = vshll.u32 %v2875, 16
      %v2966 = vor.u32 %v2963, %v2964
      %v2967 = vsel %vm552, %v2959, %v2966
      %v2969 = vshrl.u32 %v2876, 16
      %v2971 = vrot.slane %v2969, 7
      %v2973 = vshrl.u32 %v2877, 16
      %v2975 = vrot.slane %v2973, 7
      %v2976 = vshll.u32 %v2877, 16
      %v2978 = vor.u32 %v2975, %v2976
      %v2979 = vsel %vm552, %v2971, %v2978
      %v2981 = vshrl.u32 %v2878, 16
      %v2983 = vrot.slane %v2981, 7
      %v2985 = vshrl.u32 %v2879, 16
      %v2987 = vrot.slane %v2985, 7
      %v2988 = vshll.u32 %v2879, 16
      %v2990 = vor.u32 %v2987, %v2988
      %v2991 = vsel %vm552, %v2983, %v2990
      %v2993 = vshrl.u32 %v2880, 16
      %v2995 = vrot.slane %v2993, 7
      %v2997 = vshrl.u32 %v2881, 16
      %v2999 = vrot.slane %v2997, 7
      %v3000 = vshll.u32 %v2881, 16
      %v3002 = vor.u32 %v2999, %v3000
      %v3003 = vsel %vm552, %v2995, %v3002
      %v3005 = vshrl.u32 %v2882, 16
      %v3007 = vrot.slane %v3005, 7
      %v3009 = vshrl.u32 %v2883, 16
      %v3011 = vrot.slane %v3009, 7
      %v3012 = vshll.u32 %v2883, 16
      %v3014 = vor.u32 %v3011, %v3012
      %v3015 = vsel %vm552, %v3007, %v3014
      %v3017 = vshrl.u32 %v2884, 16
      %v3019 = vrot.slane %v3017, 7
      %v3021 = vshrl.u32 %v2885, 16
      %v3023 = vrot.slane %v3021, 7
      %v3024 = vshll.u32 %v2885, 16
      %v3026 = vor.u32 %v3023, %v3024
      %v3027 = vsel %vm552, %v3019, %v3026
      %v3029 = vshrl.u32 %v2886, 16
      %v3031 = vrot.slane %v3029, 7
      %v3033 = vshrl.u32 %v2887, 16
      %v3035 = vrot.slane %v3033, 7
      %v3036 = vshll.u32 %v2887, 16
      %v3038 = vor.u32 %v3035, %v3036
      %v3039 = vsel %vm552, %v3031, %v3038
      %v3041 = vshrl.u32 %v2888, 16
      %v3043 = vrot.slane %v3041, 7
      %v3045 = vshrl.u32 %v2889, 16
      %v3047 = vrot.slane %v3045, 7
      %v3048 = vshll.u32 %v2889, 16
      %v3050 = vor.u32 %v3047, %v3048
      %v3051 = vsel %vm552, %v3043, %v3050
      %v3053 = vshrl.u32 %v2890, 16
      %v3055 = vrot.slane %v3053, 7
      %v3057 = vshrl.u32 %v2891, 16
      %v3059 = vrot.slane %v3057, 7
      %v3060 = vshll.u32 %v2891, 16
      %v3062 = vor.u32 %v3059, %v3060
      %v3063 = vsel %vm552, %v3055, %v3062
      %v3065 = vshrl.u32 %v2892, 16
      %v3067 = vrot.slane %v3065, 7
      %v3069 = vshrl.u32 %v2893, 16
      %v3071 = vrot.slane %v3069, 7
      %v3072 = vshll.u32 %v2893, 16
      %v3074 = vor.u32 %v3071, %v3072
      %v3075 = vsel %vm552, %v3067, %v3074
      %v3077 = vshrl.u32 %v2894, 16
      %v3079 = vrot.slane %v3077, 7
      %v3081 = vshrl.u32 %v2895, 16
      %v3083 = vrot.slane %v3081, 7
      %v3084 = vshll.u32 %v2895, 16
      %v3086 = vor.u32 %v3083, %v3084
      %v3087 = vsel %vm552, %v3079, %v3086
      %3104 = vst [vmem:[#allocation3] sm:$0xff] %v2907
      %3105 = vst [vmem:[#allocation3 + $0x18] sm:$0xff] %v2919
      %3106 = vst [vmem:[#allocation3 + $0x30] sm:$0xff] %v2931
      %3107 = vst [vmem:[#allocation3 + $0x48] sm:$0xff] %v2943
      %3108 = vst [vmem:[#allocation3 + $0x60] sm:$0xff] %v2955
      %3109 = vst [vmem:[#allocation3 + $0x78] sm:$0xff] %v2967
      %3110 = vst [vmem:[#allocation3 + $0x90] sm:$0xff] %v2979
      %3111 = vst [vmem:[#allocation3 + $0xa8] sm:$0xff] %v2991
      %3112 = vst [vmem:[#allocation3 + $0xc0] sm:$0xff] %v3003
      %3113 = vst [vmem:[#allocation3 + $0xd8] sm:$0xff] %v3015
      %3114 = vst [vmem:[#allocation3 + $0xf0] sm:$0xff] %v3027
      %3115 = vst [vmem:[#allocation3 + $0x108] sm:$0xff] %v3039
      %3116 = vst [vmem:[#allocation3 + $0x120] sm:$0xff] %v3051
      %3117 = vst [vmem:[#allocation3 + $0x138] sm:$0xff] %v3063
      %3118 = vst [vmem:[#allocation3 + $0x150] sm:$0xff] %v3075
      %3119 = vst [vmem:[#allocation3 + $0x168] sm:$0xff] %v3087
      %v3120 = vld [vmem:[%s2863 + $0x8] sm:$0xff]
      %v3121 = vld [vmem:[%s2863 + $0x20] sm:$0xff]
      %v3122 = vld [vmem:[%s2863 + $0x38] sm:$0xff]
      %v3123 = vld [vmem:[%s2863 + $0x50] sm:$0xff]
      %v3124 = vld [vmem:[%s2863 + $0x68] sm:$0xff]
      %v3125 = vld [vmem:[%s2863 + $0x80] sm:$0xff]
      %v3126 = vld [vmem:[%s2863 + $0x98] sm:$0xff]
      %v3127 = vld [vmem:[%s2863 + $0xb0] sm:$0xff]
      %v3128 = vld [vmem:[%s2863 + $0xc8] sm:$0xff]
      %v3129 = vld [vmem:[%s2863 + $0xe0] sm:$0xff]
      %v3130 = vld [vmem:[%s2863 + $0xf8] sm:$0xff]
      %v3131 = vld [vmem:[%s2863 + $0x110] sm:$0xff]
      %v3132 = vld [vmem:[%s2863 + $0x128] sm:$0xff]
      %v3133 = vld [vmem:[%s2863 + $0x140] sm:$0xff]
      %v3134 = vld [vmem:[%s2863 + $0x158] sm:$0xff]
      %v3135 = vld [vmem:[%s2863 + $0x170] sm:$0xff]
      %3136 = vst [vmem:[#allocation3 + $0x8] sm:$0xff] %v3120
      %3137 = vst [vmem:[#allocation3 + $0x20] sm:$0xff] %v3121
      %3138 = vst [vmem:[#allocation3 + $0x38] sm:$0xff] %v3122
      %3139 = vst [vmem:[#allocation3 + $0x50] sm:$0xff] %v3123
      %3140 = vst [vmem:[#allocation3 + $0x68] sm:$0xff] %v3124
      %3141 = vst [vmem:[#allocation3 + $0x80] sm:$0xff] %v3125
      %3142 = vst [vmem:[#allocation3 + $0x98] sm:$0xff] %v3126
      %3143 = vst [vmem:[#allocation3 + $0xb0] sm:$0xff] %v3127
      %3144 = vst [vmem:[#allocation3 + $0xc8] sm:$0xff] %v3128
      %3145 = vst [vmem:[#allocation3 + $0xe0] sm:$0xff] %v3129
      %3146 = vst [vmem:[#allocation3 + $0xf8] sm:$0xff] %v3130
      %3147 = vst [vmem:[#allocation3 + $0x110] sm:$0xff] %v3131
      %3148 = vst [vmem:[#allocation3 + $0x128] sm:$0xff] %v3132
      %3149 = vst [vmem:[#allocation3 + $0x140] sm:$0xff] %v3133
      %3150 = vst [vmem:[#allocation3 + $0x158] sm:$0xff] %v3134
      %3151 = vst [vmem:[#allocation3 + $0x170] sm:$0xff] %v3135
      %v3152 = vld [vmem:[%s2863 + $0x8] sm:$0xff]
      %v3153 = vld [vmem:[%s2863 + $0x10] sm:$0x1]
      %v3154 = vld [vmem:[%s2863 + $0x20] sm:$0xff]
      %v3155 = vld [vmem:[%s2863 + $0x28] sm:$0x1]
      %v3156 = vld [vmem:[%s2863 + $0x38] sm:$0xff]
      %v3157 = vld [vmem:[%s2863 + $0x40] sm:$0x1]
      %v3158 = vld [vmem:[%s2863 + $0x50] sm:$0xff]
      %v3159 = vld [vmem:[%s2863 + $0x58] sm:$0x1]
      %v3160 = vld [vmem:[%s2863 + $0x68] sm:$0xff]
      %v3161 = vld [vmem:[%s2863 + $0x70] sm:$0x1]
      %v3162 = vld [vmem:[%s2863 + $0x80] sm:$0xff]
      %v3163 = vld [vmem:[%s2863 + $0x88] sm:$0x1]
      %v3164 = vld [vmem:[%s2863 + $0x98] sm:$0xff]
      %v3165 = vld [vmem:[%s2863 + $0xa0] sm:$0x1]
      %v3166 = vld [vmem:[%s2863 + $0xb0] sm:$0xff]
      %v3167 = vld [vmem:[%s2863 + $0xb8] sm:$0x1]
      %v3168 = vld [vmem:[%s2863 + $0xc8] sm:$0xff]
      %v3169 = vld [vmem:[%s2863 + $0xd0] sm:$0x1]
      %v3170 = vld [vmem:[%s2863 + $0xe0] sm:$0xff]
      %v3171 = vld [vmem:[%s2863 + $0xe8] sm:$0x1]
      %v3172 = vld [vmem:[%s2863 + $0xf8] sm:$0xff]
      %v3173 = vld [vmem:[%s2863 + $0x100] sm:$0x1]
      %v3174 = vld [vmem:[%s2863 + $0x110] sm:$0xff]
      %v3175 = vld [vmem:[%s2863 + $0x118] sm:$0x1]
      %v3176 = vld [vmem:[%s2863 + $0x128] sm:$0xff]
      %v3177 = vld [vmem:[%s2863 + $0x130] sm:$0x1]
      %v3178 = vld [vmem:[%s2863 + $0x140] sm:$0xff]
      %v3179 = vld [vmem:[%s2863 + $0x148] sm:$0x1]
      %v3180 = vld [vmem:[%s2863 + $0x158] sm:$0xff]
      %v3181 = vld [vmem:[%s2863 + $0x160] sm:$0x1]
      %v3182 = vld [vmem:[%s2863 + $0x170] sm:$0xff]
      %v3183 = vld [vmem:[%s2863 + $0x178] sm:$0x1]
      %v3185 = vshrl.u32 %v3152, 16
      %v3187 = vshll.u32 %v3152, 16
      %v3189 = vrot.slane %v3187, 1
      %v3190 = vor.u32 %v3185, %v3189
      %v3192 = vshll.u32 %v3153, 16
      %v3194 = vrot.slane %v3192, 1
      %v3195 = vsel %vm841, %v3190, %v3194
      %v3197 = vshrl.u32 %v3154, 16
      %v3199 = vshll.u32 %v3154, 16
      %v3201 = vrot.slane %v3199, 1
      %v3202 = vor.u32 %v3197, %v3201
      %v3204 = vshll.u32 %v3155, 16
      %v3206 = vrot.slane %v3204, 1
      %v3207 = vsel %vm841, %v3202, %v3206
      %v3209 = vshrl.u32 %v3156, 16
      %v3211 = vshll.u32 %v3156, 16
      %v3213 = vrot.slane %v3211, 1
      %v3214 = vor.u32 %v3209, %v3213
      %v3216 = vshll.u32 %v3157, 16
      %v3218 = vrot.slane %v3216, 1
      %v3219 = vsel %vm841, %v3214, %v3218
      %v3221 = vshrl.u32 %v3158, 16
      %v3223 = vshll.u32 %v3158, 16
      %v3225 = vrot.slane %v3223, 1
      %v3226 = vor.u32 %v3221, %v3225
      %v3228 = vshll.u32 %v3159, 16
      %v3230 = vrot.slane %v3228, 1
      %v3231 = vsel %vm841, %v3226, %v3230
      %v3233 = vshrl.u32 %v3160, 16
      %v3235 = vshll.u32 %v3160, 16
      %v3237 = vrot.slane %v3235, 1
      %v3238 = vor.u32 %v3233, %v3237
      %v3240 = vshll.u32 %v3161, 16
      %v3242 = vrot.slane %v3240, 1
      %v3243 = vsel %vm841, %v3238, %v3242
      %v3245 = vshrl.u32 %v3162, 16
      %v3247 = vshll.u32 %v3162, 16
      %v3249 = vrot.slane %v3247, 1
      %v3250 = vor.u32 %v3245, %v3249
      %v3252 = vshll.u32 %v3163, 16
      %v3254 = vrot.slane %v3252, 1
      %v3255 = vsel %vm841, %v3250, %v3254
      %v3257 = vshrl.u32 %v3164, 16
      %v3259 = vshll.u32 %v3164, 16
      %v3261 = vrot.slane %v3259, 1
      %v3262 = vor.u32 %v3257, %v3261
      %v3264 = vshll.u32 %v3165, 16
      %v3266 = vrot.slane %v3264, 1
      %v3267 = vsel %vm841, %v3262, %v3266
      %v3269 = vshrl.u32 %v3166, 16
      %v3271 = vshll.u32 %v3166, 16
      %v3273 = vrot.slane %v3271, 1
      %v3274 = vor.u32 %v3269, %v3273
      %v3276 = vshll.u32 %v3167, 16
      %v3278 = vrot.slane %v3276, 1
      %v3279 = vsel %vm841, %v3274, %v3278
      %v3281 = vshrl.u32 %v3168, 16
      %v3283 = vshll.u32 %v3168, 16
      %v3285 = vrot.slane %v3283, 1
      %v3286 = vor.u32 %v3281, %v3285
      %v3288 = vshll.u32 %v3169, 16
      %v3290 = vrot.slane %v3288, 1
      %v3291 = vsel %vm841, %v3286, %v3290
      %v3293 = vshrl.u32 %v3170, 16
      %v3295 = vshll.u32 %v3170, 16
      %v3297 = vrot.slane %v3295, 1
      %v3298 = vor.u32 %v3293, %v3297
      %v3300 = vshll.u32 %v3171, 16
      %v3302 = vrot.slane %v3300, 1
      %v3303 = vsel %vm841, %v3298, %v3302
      %v3305 = vshrl.u32 %v3172, 16
      %v3307 = vshll.u32 %v3172, 16
      %v3309 = vrot.slane %v3307, 1
      %v3310 = vor.u32 %v3305, %v3309
      %v3312 = vshll.u32 %v3173, 16
      %v3314 = vrot.slane %v3312, 1
      %v3315 = vsel %vm841, %v3310, %v3314
      %v3317 = vshrl.u32 %v3174, 16
      %v3319 = vshll.u32 %v3174, 16
      %v3321 = vrot.slane %v3319, 1
      %v3322 = vor.u32 %v3317, %v3321
      %v3324 = vshll.u32 %v3175, 16
      %v3326 = vrot.slane %v3324, 1
      %v3327 = vsel %vm841, %v3322, %v3326
      %v3329 = vshrl.u32 %v3176, 16
      %v3331 = vshll.u32 %v3176, 16
      %v3333 = vrot.slane %v3331, 1
      %v3334 = vor.u32 %v3329, %v3333
      %v3336 = vshll.u32 %v3177, 16
      %v3338 = vrot.slane %v3336, 1
      %v3339 = vsel %vm841, %v3334, %v3338
      %v3341 = vshrl.u32 %v3178, 16
      %v3343 = vshll.u32 %v3178, 16
      %v3345 = vrot.slane %v3343, 1
      %v3346 = vor.u32 %v3341, %v3345
      %v3348 = vshll.u32 %v3179, 16
      %v3350 = vrot.slane %v3348, 1
      %v3351 = vsel %vm841, %v3346, %v3350
      %v3353 = vshrl.u32 %v3180, 16
      %v3355 = vshll.u32 %v3180, 16
      %v3357 = vrot.slane %v3355, 1
      %v3358 = vor.u32 %v3353, %v3357
      %v3360 = vshll.u32 %v3181, 16
      %v3362 = vrot.slane %v3360, 1
      %v3363 = vsel %vm841, %v3358, %v3362
      %v3365 = vshrl.u32 %v3182, 16
      %v3367 = vshll.u32 %v3182, 16
      %v3369 = vrot.slane %v3367, 1
      %v3370 = vor.u32 %v3365, %v3369
      %v3372 = vshll.u32 %v3183, 16
      %v3374 = vrot.slane %v3372, 1
      %v3375 = vsel %vm841, %v3370, %v3374
      %3392 = vst [vmem:[#allocation3 + $0x10] sm:$0xff] %v3195
      %3393 = vst [vmem:[#allocation3 + $0x28] sm:$0xff] %v3207
      %3394 = vst [vmem:[#allocation3 + $0x40] sm:$0xff] %v3219
      %3395 = vst [vmem:[#allocation3 + $0x58] sm:$0xff] %v3231
      %3396 = vst [vmem:[#allocation3 + $0x70] sm:$0xff] %v3243
      %3397 = vst [vmem:[#allocation3 + $0x88] sm:$0xff] %v3255
      %3398 = vst [vmem:[#allocation3 + $0xa0] sm:$0xff] %v3267
      %3399 = vst [vmem:[#allocation3 + $0xb8] sm:$0xff] %v3279
      %3400 = vst [vmem:[#allocation3 + $0xd0] sm:$0xff] %v3291
      %3401 = vst [vmem:[#allocation3 + $0xe8] sm:$0xff] %v3303
      %3402 = vst [vmem:[#allocation3 + $0x100] sm:$0xff] %v3315
      %3403 = vst [vmem:[#allocation3 + $0x118] sm:$0xff] %v3327
      %3404 = vst [vmem:[#allocation3 + $0x130] sm:$0xff] %v3339
      %3405 = vst [vmem:[#allocation3 + $0x148] sm:$0xff] %v3351
      %3406 = vst [vmem:[#allocation3 + $0x160] sm:$0xff] %v3363
      %3407 = vst [vmem:[#allocation3 + $0x178] sm:$0xff] %v3375
      %v3408 = vld [vmem:[#allocation3] sm:$0xff]
      %v3409 = vld [vmem:[#allocation3 + $0x8] sm:$0xff]
      %v3410 = vld [vmem:[#allocation3 + $0x10] sm:$0xff]
      %v3411 = vld [vmem:[#allocation3 + $0x18] sm:$0xff]
      %v3412 = vld [vmem:[#allocation3 + $0x20] sm:$0xff]
      %v3413 = vld [vmem:[#allocation3 + $0x28] sm:$0xff]
      %v3414 = vld [vmem:[#allocation3 + $0x30] sm:$0xff]
      %v3415 = vld [vmem:[#allocation3 + $0x38] sm:$0xff]
      %v3416 = vld [vmem:[#allocation3 + $0x40] sm:$0xff]
      %v3417 = vld [vmem:[#allocation3 + $0x48] sm:$0xff]
      %v3418 = vld [vmem:[#allocation3 + $0x50] sm:$0xff]
      %v3419 = vld [vmem:[#allocation3 + $0x58] sm:$0xff]
      %v3420 = vld [vmem:[#allocation3 + $0x60] sm:$0xff]
      %v3421 = vld [vmem:[#allocation3 + $0x68] sm:$0xff]
      %v3422 = vld [vmem:[#allocation3 + $0x70] sm:$0xff]
      %v3423 = vld [vmem:[#allocation3 + $0x78] sm:$0xff]
      %v3424 = vld [vmem:[#allocation3 + $0x80] sm:$0xff]
      %v3425 = vld [vmem:[#allocation3 + $0x88] sm:$0xff]
      %v3426 = vld [vmem:[#allocation3 + $0x90] sm:$0xff]
      %v3427 = vld [vmem:[#allocation3 + $0x98] sm:$0xff]
      %v3428 = vld [vmem:[#allocation3 + $0xa0] sm:$0xff]
      %v3429 = vld [vmem:[#allocation3 + $0xa8] sm:$0xff]
      %v3430 = vld [vmem:[#allocation3 + $0xb0] sm:$0xff]
      %v3431 = vld [vmem:[#allocation3 + $0xb8] sm:$0xff]
      %v3432 = vld [vmem:[#allocation3 + $0xc0] sm:$0xff]
      %v3433 = vld [vmem:[#allocation3 + $0xc8] sm:$0xff]
      %v3434 = vld [vmem:[#allocation3 + $0xd0] sm:$0xff]
      %v3435 = vld [vmem:[#allocation3 + $0xd8] sm:$0xff]
      %v3436 = vld [vmem:[#allocation3 + $0xe0] sm:$0xff]
      %v3437 = vld [vmem:[#allocation3 + $0xe8] sm:$0xff]
      %v3438 = vld [vmem:[#allocation3 + $0xf0] sm:$0xff]
      %v3439 = vld [vmem:[#allocation3 + $0xf8] sm:$0xff]
      %v3440 = vld [vmem:[#allocation3 + $0x100] sm:$0xff]
      %v3441 = vld [vmem:[#allocation3 + $0x108] sm:$0xff]
      %v3442 = vld [vmem:[#allocation3 + $0x110] sm:$0xff]
      %v3443 = vld [vmem:[#allocation3 + $0x118] sm:$0xff]
      %v3444 = vld [vmem:[#allocation3 + $0x120] sm:$0xff]
      %v3445 = vld [vmem:[#allocation3 + $0x128] sm:$0xff]
      %v3446 = vld [vmem:[#allocation3 + $0x130] sm:$0xff]
      %v3447 = vld [vmem:[#allocation3 + $0x138] sm:$0xff]
      %v3448 = vld [vmem:[#allocation3 + $0x140] sm:$0xff]
      %v3449 = vld [vmem:[#allocation3 + $0x148] sm:$0xff]
      %v3450 = vld [vmem:[#allocation3 + $0x150] sm:$0xff]
      %v3451 = vld [vmem:[#allocation3 + $0x158] sm:$0xff]
      %v3452 = vld [vmem:[#allocation3 + $0x160] sm:$0xff]
      %v3453 = vld [vmem:[#allocation3 + $0x168] sm:$0xff]
      %v3454 = vld [vmem:[#allocation3 + $0x170] sm:$0xff]
      %v3455 = vld [vmem:[#allocation3 + $0x178] sm:$0xff]
      %s3456 = scalar_lea.vmem %s3, 384
      %v3457 = vld [vmem:[%s3456] sm:$0xf]
      %v3458 = vld [vmem:[%s3456 + $0x4] sm:$0xf]
      %v3459 = vld [vmem:[%s3456 + $0x8] sm:$0xf]
      %v3460 = vld [vmem:[%s3456 + $0xc] sm:$0xf]
      %v3461 = vld [vmem:[%s3456 + $0x10] sm:$0xf]
      %v3462 = vld [vmem:[%s3456 + $0x14] sm:$0xf]
      %v3463 = vld [vmem:[%s3456 + $0x18] sm:$0xf]
      %v3464 = vld [vmem:[%s3456 + $0x1c] sm:$0xf]
      %v3465 = vld [vmem:[%s3456 + $0x20] sm:$0xf]
      %v3466 = vld [vmem:[%s3456 + $0x24] sm:$0xf]
      %v3467 = vld [vmem:[%s3456 + $0x28] sm:$0xf]
      %v3468 = vld [vmem:[%s3456 + $0x2c] sm:$0xf]
      %v3469 = vld [vmem:[%s3456 + $0x30] sm:$0xf]
      %v3470 = vld [vmem:[%s3456 + $0x34] sm:$0xf]
      %v3471 = vld [vmem:[%s3456 + $0x38] sm:$0xf]
      %v3472 = vld [vmem:[%s3456 + $0x3c] sm:$0xf]
      %v3473 = vld [vmem:[%s3456 + $0x40] sm:$0xf]
      %v3474 = vld [vmem:[%s3456 + $0x44] sm:$0xf]
      %v3475 = vld [vmem:[%s3456 + $0x48] sm:$0xf]
      %v3476 = vld [vmem:[%s3456 + $0x4c] sm:$0xf]
      %v3477 = vld [vmem:[%s3456 + $0x50] sm:$0xf]
      %v3478 = vld [vmem:[%s3456 + $0x54] sm:$0xf]
      %v3479 = vld [vmem:[%s3456 + $0x58] sm:$0xf]
      %v3480 = vld [vmem:[%s3456 + $0x5c] sm:$0xf]
      %v3481 = vld [vmem:[%s3456 + $0x60] sm:$0xf]
      %v3482 = vld [vmem:[%s3456 + $0x64] sm:$0xf]
      %v3483 = vld [vmem:[%s3456 + $0x68] sm:$0xf]
      %v3484 = vld [vmem:[%s3456 + $0x6c] sm:$0xf]
      %v3485 = vld [vmem:[%s3456 + $0x70] sm:$0xf]
      %v3486 = vld [vmem:[%s3456 + $0x74] sm:$0xf]
      %v3487 = vld [vmem:[%s3456 + $0x78] sm:$0xf]
      %v3488 = vld [vmem:[%s3456 + $0x7c] sm:$0xf]
      %v3489 = vld [vmem:[%s3456 + $0x80] sm:$0xf]
      %v3490 = vld [vmem:[%s3456 + $0x84] sm:$0xf]
      %v3491 = vld [vmem:[%s3456 + $0x88] sm:$0xf]
      %v3492 = vld [vmem:[%s3456 + $0x8c] sm:$0xf]
      %v3493 = vld [vmem:[%s3456 + $0x90] sm:$0xf]
      %v3494 = vld [vmem:[%s3456 + $0x94] sm:$0xf]
      %v3495 = vld [vmem:[%s3456 + $0x98] sm:$0xf]
      %v3496 = vld [vmem:[%s3456 + $0x9c] sm:$0xf]
      %v3497 = vld [vmem:[%s3456 + $0xa0] sm:$0xf]
      %v3498 = vld [vmem:[%s3456 + $0xa4] sm:$0xf]
      %v3499 = vld [vmem:[%s3456 + $0xa8] sm:$0xf]
      %v3500 = vld [vmem:[%s3456 + $0xac] sm:$0xf]
      %v3501 = vld [vmem:[%s3456 + $0xb0] sm:$0xf]
      %v3502 = vld [vmem:[%s3456 + $0xb4] sm:$0xf]
      %v3503 = vld [vmem:[%s3456 + $0xb8] sm:$0xf]
      %v3504 = vld [vmem:[%s3456 + $0xbc] sm:$0xf]
      %v3553 = vunpack.c.l.b16 %v3457
      %v3554 = vunpack.c.l.b16 %v3458
      %v3555 = vunpack.c.l.b16 %v3459
      %v3556 = vunpack.c.l.b16 %v3460
      %v3557 = vunpack.c.l.b16 %v3461
      %v3558 = vunpack.c.l.b16 %v3462
      %v3559 = vunpack.c.l.b16 %v3463
      %v3560 = vunpack.c.l.b16 %v3464
      %v3561 = vunpack.c.l.b16 %v3465
      %v3562 = vunpack.c.l.b16 %v3466
      %v3563 = vunpack.c.l.b16 %v3467
      %v3564 = vunpack.c.l.b16 %v3468
      %v3565 = vunpack.c.l.b16 %v3469
      %v3566 = vunpack.c.l.b16 %v3470
      %v3567 = vunpack.c.l.b16 %v3471
      %v3568 = vunpack.c.l.b16 %v3472
      %v3569 = vunpack.c.l.b16 %v3473
      %v3570 = vunpack.c.l.b16 %v3474
      %v3571 = vunpack.c.l.b16 %v3475
      %v3572 = vunpack.c.l.b16 %v3476
      %v3573 = vunpack.c.l.b16 %v3477
      %v3574 = vunpack.c.l.b16 %v3478
      %v3575 = vunpack.c.l.b16 %v3479
      %v3576 = vunpack.c.l.b16 %v3480
      %v3577 = vunpack.c.l.b16 %v3481
      %v3578 = vunpack.c.l.b16 %v3482
      %v3579 = vunpack.c.l.b16 %v3483
      %v3580 = vunpack.c.l.b16 %v3484
      %v3581 = vunpack.c.l.b16 %v3485
      %v3582 = vunpack.c.l.b16 %v3486
      %v3583 = vunpack.c.l.b16 %v3487
      %v3584 = vunpack.c.l.b16 %v3488
      %v3585 = vunpack.c.l.b16 %v3489
      %v3586 = vunpack.c.l.b16 %v3490
      %v3587 = vunpack.c.l.b16 %v3491
      %v3588 = vunpack.c.l.b16 %v3492
      %v3589 = vunpack.c.l.b16 %v3493
      %v3590 = vunpack.c.l.b16 %v3494
      %v3591 = vunpack.c.l.b16 %v3495
      %v3592 = vunpack.c.l.b16 %v3496
      %v3593 = vunpack.c.l.b16 %v3497
      %v3594 = vunpack.c.l.b16 %v3498
      %v3595 = vunpack.c.l.b16 %v3499
      %v3596 = vunpack.c.l.b16 %v3500
      %v3597 = vunpack.c.l.b16 %v3501
      %v3598 = vunpack.c.l.b16 %v3502
      %v3599 = vunpack.c.l.b16 %v3503
      %v3600 = vunpack.c.l.b16 %v3504
      %v3601 = vpack.c.b16 %v3554, %v3553
      %v3602 = vpack.c.b16 %v3556, %v3555
      %v3603 = vpack.c.b16 %v3558, %v3557
      %v3604 = vpack.c.b16 %v3560, %v3559
      %v3605 = vpack.c.b16 %v3562, %v3561
      %v3606 = vpack.c.b16 %v3564, %v3563
      %v3607 = vpack.c.b16 %v3566, %v3565
      %v3608 = vpack.c.b16 %v3568, %v3567
      %v3609 = vpack.c.b16 %v3570, %v3569
      %v3610 = vpack.c.b16 %v3572, %v3571
      %v3611 = vpack.c.b16 %v3574, %v3573
      %v3612 = vpack.c.b16 %v3576, %v3575
      %v3613 = vpack.c.b16 %v3578, %v3577
      %v3614 = vpack.c.b16 %v3580, %v3579
      %v3615 = vpack.c.b16 %v3582, %v3581
      %v3616 = vpack.c.b16 %v3584, %v3583
      %v3617 = vpack.c.b16 %v3586, %v3585
      %v3618 = vpack.c.b16 %v3588, %v3587
      %v3619 = vpack.c.b16 %v3590, %v3589
      %v3620 = vpack.c.b16 %v3592, %v3591
      %v3621 = vpack.c.b16 %v3594, %v3593
      %v3622 = vpack.c.b16 %v3596, %v3595
      %v3623 = vpack.c.b16 %v3598, %v3597
      %v3624 = vpack.c.b16 %v3600, %v3599
      %3649 = vmatprep.subr.bf16.mxu0 0
      %3650 = vmatpush1.bf16.msra.mxu0 %v3601
      %3651 = vmatprep.subr.bf16.mxu0 0
      %3652 = vmatpush1.bf16.msra.mxu0 %v3602
      %3653 = vmatprep.subr.bf16.mxu0 0
      %3654 = vmatpush1.bf16.msra.mxu0 %v3603
      %3655 = vmatprep.subr.bf16.mxu0 0
      %3656 = vmatpush1.bf16.msra.mxu0 %v3604
      %3657 = vmatprep.subr.bf16.mxu0 0
      %3658 = vmatpush1.bf16.msra.mxu0 %v3605
      %3659 = vmatprep.subr.bf16.mxu0 0
      %3660 = vmatpush1.bf16.msra.mxu0 %v3606
      %3661 = vmatprep.subr.bf16.mxu0 0
      %3662 = vmatpush1.bf16.msra.mxu0 %v3607
      %3663 = vmatprep.subr.bf16.mxu0 0
      %3664 = vmatpush1.bf16.msra.mxu0 %v3608
      %3665 = vmatprep.subr.bf16.mxu0 0
      %3666 = vmatpush1.bf16.msra.mxu0 %v3609
      %3667 = vmatprep.subr.bf16.mxu0 0
      %3668 = vmatpush1.bf16.msra.mxu0 %v3610
      %3669 = vmatprep.subr.bf16.mxu0 0
      %3670 = vmatpush1.bf16.msra.mxu0 %v3611
      %3671 = vmatprep.subr.bf16.mxu0 0
      %3672 = vmatpush1.bf16.msra.mxu0 %v3612
      %3673 = vmatprep.subr.bf16.mxu0 0
      %3674 = vmatpush1.bf16.msra.mxu0 %v3613
      %3675 = vmatprep.subr.bf16.mxu0 0
      %3676 = vmatpush1.bf16.msra.mxu0 %v3614
      %3677 = vmatprep.subr.bf16.mxu0 0
      %3678 = vmatpush1.bf16.msra.mxu0 %v3615
      %3679 = vmatprep.subr.bf16.mxu0 0
      %3680 = vmatpush1.bf16.msra.mxu0 %v3616
      %3681 = vmatprep.mubr.bf16.mxu0 %v3409
      %3682 = vmatmul.mubr.bf16.gmra.mrb[0].mxu0 %v3408
      %v3683 = vpop.f32.mrb[0].mxu0
      %v3684 = vadd.f32 0.0, %v3683
      %v3685 = vpop.f32.mrb[0].mxu0
      %v3686 = vpop.f32.mrb[0].mxu0
      %v3687 = vadd.f32 0.0, %v3686
      %v3688 = vpop.f32.mrb[0].mxu0
      %3689 = vmatprep.mubr.bf16.mxu0 %v3412
      %3690 = vmatmul.mubr.bf16.gmra.mrb[0].mxu0 %v3411
      %v3691 = vpop.f32.mrb[0].mxu0
      %v3692 = vadd.f32 0.0, %v3691
      %v3693 = vpop.f32.mrb[0].mxu0
      %v3694 = vpop.f32.mrb[0].mxu0
      %v3695 = vadd.f32 0.0, %v3694
      %v3696 = vpop.f32.mrb[0].mxu0
      %3697 = vmatprep.mubr.bf16.mxu0 %v3415
      %3698 = vmatmul.mubr.bf16.gmra.mrb[0].mxu0 %v3414
      %v3699 = vpop.f32.mrb[0].mxu0
      %v3700 = vadd.f32 0.0, %v3699
      %v3701 = vpop.f32.mrb[0].mxu0
      %v3702 = vpop.f32.mrb[0].mxu0
      %v3703 = vadd.f32 0.0, %v3702
      %v3704 = vpop.f32.mrb[0].mxu0
      %3705 = vmatprep.mubr.bf16.mxu0 %v3418
      %3706 = vmatmul.mubr.bf16.gmra.mrb[0].mxu0 %v3417
      %v3707 = vpop.f32.mrb[0].mxu0
      %v3708 = vadd.f32 0.0, %v3707
      %v3709 = vpop.f32.mrb[0].mxu0
      %v3710 = vpop.f32.mrb[0].mxu0
      %v3711 = vadd.f32 0.0, %v3710
      %v3712 = vpop.f32.mrb[0].mxu0
      %3713 = vmatprep.mubr.bf16.mxu0 %v3421
      %3714 = vmatmul.mubr.bf16.gmra.mrb[0].mxu0 %v3420
      %v3715 = vpop.f32.mrb[0].mxu0
      %v3716 = vadd.f32 0.0, %v3715
      %v3717 = vpop.f32.mrb[0].mxu0
      %v3718 = vpop.f32.mrb[0].mxu0
      %v3719 = vadd.f32 0.0, %v3718
      %v3720 = vpop.f32.mrb[0].mxu0
      %3721 = vmatprep.mubr.bf16.mxu0 %v3424
      %3722 = vmatmul.mubr.bf16.gmra.mrb[0].mxu0 %v3423
      %v3723 = vpop.f32.mrb[0].mxu0
      %v3724 = vadd.f32 0.0, %v3723
      %v3725 = vpop.f32.mrb[0].mxu0
      %v3726 = vpop.f32.mrb[0].mxu0
      %v3727 = vadd.f32 0.0, %v3726
      %v3728 = vpop.f32.mrb[0].mxu0
      %3729 = vmatprep.mubr.bf16.mxu0 %v3427
      %3730 = vmatmul.mubr.bf16.gmra.mrb[0].mxu0 %v3426
      %v3731 = vpop.f32.mrb[0].mxu0
      %v3732 = vadd.f32 0.0, %v3731
      %v3733 = vpop.f32.mrb[0].mxu0
      %v3734 = vpop.f32.mrb[0].mxu0
      %v3735 = vadd.f32 0.0, %v3734
      %v3736 = vpop.f32.mrb[0].mxu0
      %3737 = vmatprep.mubr.bf16.mxu0 %v3430
      %3738 = vmatmul.mubr.bf16.gmra.mrb[0].mxu0 %v3429
      %v3739 = vpop.f32.mrb[0].mxu0
      %v3740 = vadd.f32 0.0, %v3739
      %v3741 = vpop.f32.mrb[0].mxu0
      %v3742 = vpop.f32.mrb[0].mxu0
      %v3743 = vadd.f32 0.0, %v3742
      %v3744 = vpop.f32.mrb[0].mxu0
      %3745 = vmatprep.mubr.bf16.mxu0 %v3433
      %3746 = vmatmul.mubr.bf16.gmra.mrb[0].mxu0 %v3432
      %v3747 = vpop.f32.mrb[0].mxu0
      %v3748 = vadd.f32 0.0, %v3747
      %v3749 = vpop.f32.mrb[0].mxu0
      %v3750 = vpop.f32.mrb[0].mxu0
      %v3751 = vadd.f32 0.0, %v3750
      %v3752 = vpop.f32.mrb[0].mxu0
      %3753 = vmatprep.mubr.bf16.mxu0 %v3436
      %3754 = vmatmul.mubr.bf16.gmra.mrb[0].mxu0 %v3435
      %v3755 = vpop.f32.mrb[0].mxu0
      %v3756 = vadd.f32 0.0, %v3755
      %v3757 = vpop.f32.mrb[0].mxu0
      %v3758 = vpop.f32.mrb[0].mxu0
      %v3759 = vadd.f32 0.0, %v3758
      %v3760 = vpop.f32.mrb[0].mxu0
      %3761 = vmatprep.mubr.bf16.mxu0 %v3439
      %3762 = vmatmul.mubr.bf16.gmra.mrb[0].mxu0 %v3438
      %v3763 = vpop.f32.mrb[0].mxu0
      %v3764 = vadd.f32 0.0, %v3763
      %v3765 = vpop.f32.mrb[0].mxu0
      %v3766 = vpop.f32.mrb[0].mxu0
      %v3767 = vadd.f32 0.0, %v3766
      %v3768 = vpop.f32.mrb[0].mxu0
      %3769 = vmatprep.mubr.bf16.mxu0 %v3442
      %3770 = vmatmul.mubr.bf16.gmra.mrb[0].mxu0 %v3441
      %v3771 = vpop.f32.mrb[0].mxu0
      %v3772 = vadd.f32 0.0, %v3771
      %v3773 = vpop.f32.mrb[0].mxu0
      %v3774 = vpop.f32.mrb[0].mxu0
      %v3775 = vadd.f32 0.0, %v3774
      %v3776 = vpop.f32.mrb[0].mxu0
      %3777 = vmatprep.mubr.bf16.mxu0 %v3445
      %3778 = vmatmul.mubr.bf16.gmra.mrb[0].mxu0 %v3444
      %v3779 = vpop.f32.mrb[0].mxu0
      %v3780 = vadd.f32 0.0, %v3779
      %v3781 = vpop.f32.mrb[0].mxu0
      %v3782 = vpop.f32.mrb[0].mxu0
      %v3783 = vadd.f32 0.0, %v3782
      %v3784 = vpop.f32.mrb[0].mxu0
      %3785 = vmatprep.mubr.bf16.mxu0 %v3448
      %3786 = vmatmul.mubr.bf16.gmra.mrb[0].mxu0 %v3447
      %v3787 = vpop.f32.mrb[0].mxu0
      %v3788 = vadd.f32 0.0, %v3787
      %v3789 = vpop.f32.mrb[0].mxu0
      %v3790 = vpop.f32.mrb[0].mxu0
      %v3791 = vadd.f32 0.0, %v3790
      %v3792 = vpop.f32.mrb[0].mxu0
      %3793 = vmatprep.mubr.bf16.mxu0 %v3451
      %3794 = vmatmul.mubr.bf16.gmra.mrb[0].mxu0 %v3450
      %v3795 = vpop.f32.mrb[0].mxu0
      %v3796 = vadd.f32 0.0, %v3795
      %v3797 = vpop.f32.mrb[0].mxu0
      %v3798 = vpop.f32.mrb[0].mxu0
      %v3799 = vadd.f32 0.0, %v3798
      %v3800 = vpop.f32.mrb[0].mxu0
      %3801 = vmatprep.mubr.bf16.mxu0 %v3454
      %3802 = vmatmul.mubr.bf16.gmra.mrb[0].mxu0 %v3453
      %v3803 = vpop.f32.mrb[0].mxu0
      %v3804 = vadd.f32 0.0, %v3803
      %v3805 = vpop.f32.mrb[0].mxu0
      %v3806 = vpop.f32.mrb[0].mxu0
      %v3807 = vadd.f32 0.0, %v3806
      %v3808 = vpop.f32.mrb[0].mxu0
      %3809 = vdwg.mxu0
      %3810 = vmatprep.subr.bf16.mxu0 0
      %3811 = vmatpush1.bf16.msra.mxu0 %v3617
      %3812 = vmatprep.subr.bf16.mxu0 0
      %3813 = vmatpush1.bf16.msra.mxu0 %v3618
      %3814 = vmatprep.subr.bf16.mxu0 0
      %3815 = vmatpush1.bf16.msra.mxu0 %v3619
      %3816 = vmatprep.subr.bf16.mxu0 0
      %3817 = vmatpush1.bf16.msra.mxu0 %v3620
      %3818 = vmatprep.subr.bf16.mxu0 0
      %3819 = vmatpush1.bf16.msra.mxu0 %v3621
      %3820 = vmatprep.subr.bf16.mxu0 0
      %3821 = vmatpush1.bf16.msra.mxu0 %v3622
      %3822 = vmatprep.subr.bf16.mxu0 0
      %3823 = vmatpush1.bf16.msra.mxu0 %v3623
      %3824 = vmatprep.subr.bf16.mxu0 0
      %3825 = vmatpush1.bf16.msra.mxu0 %v3624
      %3826 = vmatprep.subr.bf16.mxu0 0
      %3827 = vmatpush1.bf16.msra.mxu0 0
      %3828 = vmatprep.subr.bf16.mxu0 0
      %3829 = vmatpush1.bf16.msra.mxu0 0
      %3830 = vmatprep.subr.bf16.mxu0 0
      %3831 = vmatpush1.bf16.msra.mxu0 0
      %3832 = vmatprep.subr.bf16.mxu0 0
      %3833 = vmatpush1.bf16.msra.mxu0 0
      %3834 = vmatprep.subr.bf16.mxu0 0
      %3835 = vmatpush1.bf16.msra.mxu0 0
      %3836 = vmatprep.subr.bf16.mxu0 0
      %3837 = vmatpush1.bf16.msra.mxu0 0
      %3838 = vmatprep.subr.bf16.mxu0 0
      %3839 = vmatpush1.bf16.msra.mxu0 0
      %3840 = vmatprep.subr.bf16.mxu0 0
      %3841 = vmatpush1.bf16.msra.mxu0 0
      %3842 = vmatprep.mubr.bf16.mxu0 0
      %3843 = vmatmul.mubr.bf16.gmra.mrb[0].mxu0 %v3410
      %v3844 = vpop.f32.mrb[0].mxu0
      %v3845 = vadd.f32 %v3684, %v3844
      %v3846 = vpop.f32.mrb[0].mxu0
      %v3847 = vpop.f32.mrb[0].mxu0
      %v3848 = vadd.f32 %v3687, %v3847
      %v3849 = vpop.f32.mrb[0].mxu0
      %3850 = vmatprep.mubr.bf16.mxu0 0
      %3851 = vmatmul.mubr.bf16.gmra.mrb[0].mxu0 %v3413
      %v3852 = vpop.f32.mrb[0].mxu0
      %v3853 = vadd.f32 %v3692, %v3852
      %v3854 = vpop.f32.mrb[0].mxu0
      %v3855 = vpop.f32.mrb[0].mxu0
      %v3856 = vadd.f32 %v3695, %v3855
      %v3857 = vpop.f32.mrb[0].mxu0
      %3858 = vmatprep.mubr.bf16.mxu0 0
      %3859 = vmatmul.mubr.bf16.gmra.mrb[0].mxu0 %v3416
      %v3860 = vpop.f32.mrb[0].mxu0
      %v3861 = vadd.f32 %v3700, %v3860
      %v3862 = vpop.f32.mrb[0].mxu0
      %v3863 = vpop.f32.mrb[0].mxu0
      %v3864 = vadd.f32 %v3703, %v3863
      %v3865 = vpop.f32.mrb[0].mxu0
      %3866 = vmatprep.mubr.bf16.mxu0 0
      %3867 = vmatmul.mubr.bf16.gmra.mrb[0].mxu0 %v3419
      %v3868 = vpop.f32.mrb[0].mxu0
      %v3869 = vadd.f32 %v3708, %v3868
      %v3870 = vpop.f32.mrb[0].mxu0
      %v3871 = vpop.f32.mrb[0].mxu0
      %v3872 = vadd.f32 %v3711, %v3871
      %v3873 = vpop.f32.mrb[0].mxu0
      %3874 = vmatprep.mubr.bf16.mxu0 0
      %3875 = vmatmul.mubr.bf16.gmra.mrb[0].mxu0 %v3422
      %v3876 = vpop.f32.mrb[0].mxu0
      %v3877 = vadd.f32 %v3716, %v3876
      %v3878 = vpop.f32.mrb[0].mxu0
      %v3879 = vpop.f32.mrb[0].mxu0
      %v3880 = vadd.f32 %v3719, %v3879
      %v3881 = vpop.f32.mrb[0].mxu0
      %3882 = vmatprep.mubr.bf16.mxu0 0
      %3883 = vmatmul.mubr.bf16.gmra.mrb[0].mxu0 %v3425
      %v3884 = vpop.f32.mrb[0].mxu0
      %v3885 = vadd.f32 %v3724, %v3884
      %v3886 = vpop.f32.mrb[0].mxu0
      %v3887 = vpop.f32.mrb[0].mxu0
      %v3888 = vadd.f32 %v3727, %v3887
      %v3889 = vpop.f32.mrb[0].mxu0
      %3890 = vmatprep.mubr.bf16.mxu0 0
      %3891 = vmatmul.mubr.bf16.gmra.mrb[0].mxu0 %v3428
      %v3892 = vpop.f32.mrb[0].mxu0
      %v3893 = vadd.f32 %v3732, %v3892
      %v3894 = vpop.f32.mrb[0].mxu0
      %v3895 = vpop.f32.mrb[0].mxu0
      %v3896 = vadd.f32 %v3735, %v3895
      %v3897 = vpop.f32.mrb[0].mxu0
      %3898 = vmatprep.mubr.bf16.mxu0 0
      %3899 = vmatmul.mubr.bf16.gmra.mrb[0].mxu0 %v3431
      %v3900 = vpop.f32.mrb[0].mxu0
      %v3901 = vadd.f32 %v3740, %v3900
      %v3902 = vpop.f32.mrb[0].mxu0
      %v3903 = vpop.f32.mrb[0].mxu0
      %v3904 = vadd.f32 %v3743, %v3903
      %v3905 = vpop.f32.mrb[0].mxu0
      %3906 = vmatprep.mubr.bf16.mxu0 0
      %3907 = vmatmul.mubr.bf16.gmra.mrb[0].mxu0 %v3434
      %v3908 = vpop.f32.mrb[0].mxu0
      %v3909 = vadd.f32 %v3748, %v3908
      %v3910 = vpop.f32.mrb[0].mxu0
      %v3911 = vpop.f32.mrb[0].mxu0
      %v3912 = vadd.f32 %v3751, %v3911
      %v3913 = vpop.f32.mrb[0].mxu0
      %3914 = vmatprep.mubr.bf16.mxu0 0
      %3915 = vmatmul.mubr.bf16.gmra.mrb[0].mxu0 %v3437
      %v3916 = vpop.f32.mrb[0].mxu0
      %v3917 = vadd.f32 %v3756, %v3916
      %v3918 = vpop.f32.mrb[0].mxu0
      %v3919 = vpop.f32.mrb[0].mxu0
      %v3920 = vadd.f32 %v3759, %v3919
      %v3921 = vpop.f32.mrb[0].mxu0
      %3922 = vmatprep.mubr.bf16.mxu0 0
      %3923 = vmatmul.mubr.bf16.gmra.mrb[0].mxu0 %v3440
      %v3924 = vpop.f32.mrb[0].mxu0
      %v3925 = vadd.f32 %v3764, %v3924
      %v3926 = vpop.f32.mrb[0].mxu0
      %v3927 = vpop.f32.mrb[0].mxu0
      %v3928 = vadd.f32 %v3767, %v3927
      %v3929 = vpop.f32.mrb[0].mxu0
      %3930 = vmatprep.mubr.bf16.mxu0 0
      %3931 = vmatmul.mubr.bf16.gmra.mrb[0].mxu0 %v3443
      %v3932 = vpop.f32.mrb[0].mxu0
      %v3933 = vadd.f32 %v3772, %v3932
      %v3934 = vpop.f32.mrb[0].mxu0
      %v3935 = vpop.f32.mrb[0].mxu0
      %v3936 = vadd.f32 %v3775, %v3935
      %v3937 = vpop.f32.mrb[0].mxu0
      %3938 = vmatprep.mubr.bf16.mxu0 0
      %3939 = vmatmul.mubr.bf16.gmra.mrb[0].mxu0 %v3446
      %v3940 = vpop.f32.mrb[0].mxu0
      %v3941 = vadd.f32 %v3780, %v3940
      %v3942 = vpop.f32.mrb[0].mxu0
      %v3943 = vpop.f32.mrb[0].mxu0
      %v3944 = vadd.f32 %v3783, %v3943
      %v3945 = vpop.f32.mrb[0].mxu0
      %3946 = vmatprep.mubr.bf16.mxu0 0
      %3947 = vmatmul.mubr.bf16.gmra.mrb[0].mxu0 %v3449
      %v3948 = vpop.f32.mrb[0].mxu0
      %v3949 = vadd.f32 %v3788, %v3948
      %v3950 = vpop.f32.mrb[0].mxu0
      %v3951 = vpop.f32.mrb[0].mxu0
      %v3952 = vadd.f32 %v3791, %v3951
      %v3953 = vpop.f32.mrb[0].mxu0
      %3954 = vmatprep.mubr.bf16.mxu0 0
      %3955 = vmatmul.mubr.bf16.gmra.mrb[0].mxu0 %v3452
      %v3956 = vpop.f32.mrb[0].mxu0
      %v3957 = vadd.f32 %v3796, %v3956
      %v3958 = vpop.f32.mrb[0].mxu0
      %v3959 = vpop.f32.mrb[0].mxu0
      %v3960 = vadd.f32 %v3799, %v3959
      %v3961 = vpop.f32.mrb[0].mxu0
      %3962 = vmatprep.mubr.bf16.mxu0 0
      %3963 = vmatmul.mubr.bf16.gmra.mrb[0].mxu0 %v3455
      %v3964 = vpop.f32.mrb[0].mxu0
      %v3965 = vadd.f32 %v3804, %v3964
      %v3966 = vpop.f32.mrb[0].mxu0
      %v3967 = vpop.f32.mrb[0].mxu0
      %v3968 = vadd.f32 %v3807, %v3967
      %v3969 = vpop.f32.mrb[0].mxu0
      %3970 = vdwg.mxu0
      %v3971 = vld [vmem:[#allocation4] sm:$0xff]
      %v3972 = vld [vmem:[#allocation4 + $0x8] sm:$0xff]
      %v3973 = vld [vmem:[#allocation4 + $0x10] sm:$0xff]
      %v3974 = vld [vmem:[#allocation4 + $0x18] sm:$0xff]
      %v3975 = vld [vmem:[#allocation4 + $0x20] sm:$0xff]
      %v3976 = vld [vmem:[#allocation4 + $0x28] sm:$0xff]
      %v3977 = vld [vmem:[#allocation4 + $0x30] sm:$0xff]
      %v3978 = vld [vmem:[#allocation4 + $0x38] sm:$0xff]
      %v3979 = vld [vmem:[#allocation4 + $0x40] sm:$0xff]
      %v3980 = vld [vmem:[#allocation4 + $0x48] sm:$0xff]
      %v3981 = vld [vmem:[#allocation4 + $0x50] sm:$0xff]
      %v3982 = vld [vmem:[#allocation4 + $0x58] sm:$0xff]
      %v3983 = vld [vmem:[#allocation4 + $0x60] sm:$0xff]
      %v3984 = vld [vmem:[#allocation4 + $0x68] sm:$0xff]
      %v3985 = vld [vmem:[#allocation4 + $0x70] sm:$0xff]
      %v3986 = vld [vmem:[#allocation4 + $0x78] sm:$0xff]
      %v3987 = vld [vmem:[#allocation4 + $0x80] sm:$0xff]
      %v3988 = vld [vmem:[#allocation4 + $0x88] sm:$0xff]
      %v3989 = vld [vmem:[#allocation4 + $0x90] sm:$0xff]
      %v3990 = vld [vmem:[#allocation4 + $0x98] sm:$0xff]
      %v3991 = vld [vmem:[#allocation4 + $0xa0] sm:$0xff]
      %v3992 = vld [vmem:[#allocation4 + $0xa8] sm:$0xff]
      %v3993 = vld [vmem:[#allocation4 + $0xb0] sm:$0xff]
      %v3994 = vld [vmem:[#allocation4 + $0xb8] sm:$0xff]
      %v3995 = vld [vmem:[#allocation4 + $0xc0] sm:$0xff]
      %v3996 = vld [vmem:[#allocation4 + $0xc8] sm:$0xff]
      %v3997 = vld [vmem:[#allocation4 + $0xd0] sm:$0xff]
      %v3998 = vld [vmem:[#allocation4 + $0xd8] sm:$0xff]
      %v3999 = vld [vmem:[#allocation4 + $0xe0] sm:$0xff]
      %v4000 = vld [vmem:[#allocation4 + $0xe8] sm:$0xff]
      %v4001 = vld [vmem:[#allocation4 + $0xf0] sm:$0xff]
      %v4002 = vld [vmem:[#allocation4 + $0xf8] sm:$0xff]
      %v4003 = vadd.f32 %v3971, %v3845
      %v4004 = vadd.f32 %v3972, %v3848
      %v4005 = vadd.f32 %v3973, %v3853
      %v4006 = vadd.f32 %v3974, %v3856
      %v4007 = vadd.f32 %v3975, %v3861
      %v4008 = vadd.f32 %v3976, %v3864
      %v4009 = vadd.f32 %v3977, %v3869
      %v4010 = vadd.f32 %v3978, %v3872
      %v4011 = vadd.f32 %v3979, %v3877
      %v4012 = vadd.f32 %v3980, %v3880
      %v4013 = vadd.f32 %v3981, %v3885
      %v4014 = vadd.f32 %v3982, %v3888
      %v4015 = vadd.f32 %v3983, %v3893
      %v4016 = vadd.f32 %v3984, %v3896
      %v4017 = vadd.f32 %v3985, %v3901
      %v4018 = vadd.f32 %v3986, %v3904
      %v4019 = vadd.f32 %v3987, %v3909
      %v4020 = vadd.f32 %v3988, %v3912
      %v4021 = vadd.f32 %v3989, %v3917
      %v4022 = vadd.f32 %v3990, %v3920
      %v4023 = vadd.f32 %v3991, %v3925
      %v4024 = vadd.f32 %v3992, %v3928
      %v4025 = vadd.f32 %v3993, %v3933
      %v4026 = vadd.f32 %v3994, %v3936
      %v4027 = vadd.f32 %v3995, %v3941
      %v4028 = vadd.f32 %v3996, %v3944
      %v4029 = vadd.f32 %v3997, %v3949
      %v4030 = vadd.f32 %v3998, %v3952
      %v4031 = vadd.f32 %v3999, %v3957
      %v4032 = vadd.f32 %v4000, %v3960
      %v4033 = vadd.f32 %v4001, %v3965
      %v4034 = vadd.f32 %v4002, %v3968
      %4035 = vst [vmem:[#allocation4] sm:$0xff] %v4003
      %4036 = vst [vmem:[#allocation4 + $0x8] sm:$0xff] %v4004
      %4037 = vst [vmem:[#allocation4 + $0x10] sm:$0xff] %v4005
      %4038 = vst [vmem:[#allocation4 + $0x18] sm:$0xff] %v4006
      %4039 = vst [vmem:[#allocation4 + $0x20] sm:$0xff] %v4007
      %4040 = vst [vmem:[#allocation4 + $0x28] sm:$0xff] %v4008
      %4041 = vst [vmem:[#allocation4 + $0x30] sm:$0xff] %v4009
      %4042 = vst [vmem:[#allocation4 + $0x38] sm:$0xff] %v4010
      %4043 = vst [vmem:[#allocation4 + $0x40] sm:$0xff] %v4011
      %4044 = vst [vmem:[#allocation4 + $0x48] sm:$0xff] %v4012
      %4045 = vst [vmem:[#allocation4 + $0x50] sm:$0xff] %v4013
      %4046 = vst [vmem:[#allocation4 + $0x58] sm:$0xff] %v4014
      %4047 = vst [vmem:[#allocation4 + $0x60] sm:$0xff] %v4015
      %4048 = vst [vmem:[#allocation4 + $0x68] sm:$0xff] %v4016
      %4049 = vst [vmem:[#allocation4 + $0x70] sm:$0xff] %v4017
      %4050 = vst [vmem:[#allocation4 + $0x78] sm:$0xff] %v4018
      %4051 = vst [vmem:[#allocation4 + $0x80] sm:$0xff] %v4019
      %4052 = vst [vmem:[#allocation4 + $0x88] sm:$0xff] %v4020
      %4053 = vst [vmem:[#allocation4 + $0x90] sm:$0xff] %v4021
      %4054 = vst [vmem:[#allocation4 + $0x98] sm:$0xff] %v4022
      %4055 = vst [vmem:[#allocation4 + $0xa0] sm:$0xff] %v4023
      %4056 = vst [vmem:[#allocation4 + $0xa8] sm:$0xff] %v4024
      %4057 = vst [vmem:[#allocation4 + $0xb0] sm:$0xff] %v4025
      %4058 = vst [vmem:[#allocation4 + $0xb8] sm:$0xff] %v4026
      %4059 = vst [vmem:[#allocation4 + $0xc0] sm:$0xff] %v4027
      %4060 = vst [vmem:[#allocation4 + $0xc8] sm:$0xff] %v4028
      %4061 = vst [vmem:[#allocation4 + $0xd0] sm:$0xff] %v4029
      %4062 = vst [vmem:[#allocation4 + $0xd8] sm:$0xff] %v4030
      %4063 = vst [vmem:[#allocation4 + $0xe0] sm:$0xff] %v4031
      %4064 = vst [vmem:[#allocation4 + $0xe8] sm:$0xff] %v4032
      %4065 = vst [vmem:[#allocation4 + $0xf0] sm:$0xff] %v4033
      %4066 = vst [vmem:[#allocation4 + $0xf8] sm:$0xff] %v4034
      %v4067 = vld [vmem:[#allocation4] sm:$0xff]
      %v4068 = vld [vmem:[#allocation4 + $0x8] sm:$0xff]
      %v4069 = vld [vmem:[#allocation4 + $0x10] sm:$0xff]
      %v4070 = vld [vmem:[#allocation4 + $0x18] sm:$0xff]
      %v4071 = vld [vmem:[#allocation4 + $0x20] sm:$0xff]
      %v4072 = vld [vmem:[#allocation4 + $0x28] sm:$0xff]
      %v4073 = vld [vmem:[#allocation4 + $0x30] sm:$0xff]
      %v4074 = vld [vmem:[#allocation4 + $0x38] sm:$0xff]
      %v4075 = vld [vmem:[#allocation4 + $0x40] sm:$0xff]
      %v4076 = vld [vmem:[#allocation4 + $0x48] sm:$0xff]
      %v4077 = vld [vmem:[#allocation4 + $0x50] sm:$0xff]
      %v4078 = vld [vmem:[#allocation4 + $0x58] sm:$0xff]
      %v4079 = vld [vmem:[#allocation4 + $0x60] sm:$0xff]
      %v4080 = vld [vmem:[#allocation4 + $0x68] sm:$0xff]
      %v4081 = vld [vmem:[#allocation4 + $0x70] sm:$0xff]
      %v4082 = vld [vmem:[#allocation4 + $0x78] sm:$0xff]
      %v4083 = vld [vmem:[#allocation4 + $0x80] sm:$0xff]
      %v4084 = vld [vmem:[#allocation4 + $0x88] sm:$0xff]
      %v4085 = vld [vmem:[#allocation4 + $0x90] sm:$0xff]
      %v4086 = vld [vmem:[#allocation4 + $0x98] sm:$0xff]
      %v4087 = vld [vmem:[#allocation4 + $0xa0] sm:$0xff]
      %v4088 = vld [vmem:[#allocation4 + $0xa8] sm:$0xff]
      %v4089 = vld [vmem:[#allocation4 + $0xb0] sm:$0xff]
      %v4090 = vld [vmem:[#allocation4 + $0xb8] sm:$0xff]
      %v4091 = vld [vmem:[#allocation4 + $0xc0] sm:$0xff]
      %v4092 = vld [vmem:[#allocation4 + $0xc8] sm:$0xff]
      %v4093 = vld [vmem:[#allocation4 + $0xd0] sm:$0xff]
      %v4094 = vld [vmem:[#allocation4 + $0xd8] sm:$0xff]
      %v4095 = vld [vmem:[#allocation4 + $0xe0] sm:$0xff]
      %v4096 = vld [vmem:[#allocation4 + $0xe8] sm:$0xff]
      %v4097 = vld [vmem:[#allocation4 + $0xf0] sm:$0xff]
      %v4098 = vld [vmem:[#allocation4 + $0xf8] sm:$0xff]
      %v4099 = vpack.c.bf16 %v4068, %v4067
      %v4100 = vpack.c.bf16 %v4070, %v4069
      %v4101 = vpack.c.bf16 %v4072, %v4071
      %v4102 = vpack.c.bf16 %v4074, %v4073
      %v4103 = vpack.c.bf16 %v4076, %v4075
      %v4104 = vpack.c.bf16 %v4078, %v4077
      %v4105 = vpack.c.bf16 %v4080, %v4079
      %v4106 = vpack.c.bf16 %v4082, %v4081
      %v4107 = vpack.c.bf16 %v4084, %v4083
      %v4108 = vpack.c.bf16 %v4086, %v4085
      %v4109 = vpack.c.bf16 %v4088, %v4087
      %v4110 = vpack.c.bf16 %v4090, %v4089
      %v4111 = vpack.c.bf16 %v4092, %v4091
      %v4112 = vpack.c.bf16 %v4094, %v4093
      %v4113 = vpack.c.bf16 %v4096, %v4095
      %v4114 = vpack.c.bf16 %v4098, %v4097
      %v4131 = vunpack.c.l.b16 %v4099
      %v4132 = vunpack.c.h.b16 %v4099
      %v4133 = vunpack.c.l.b16 %v4100
      %v4134 = vunpack.c.h.b16 %v4100
      %v4135 = vunpack.c.l.b16 %v4101
      %v4136 = vunpack.c.h.b16 %v4101
      %v4137 = vunpack.c.l.b16 %v4102
      %v4138 = vunpack.c.h.b16 %v4102
      %v4139 = vunpack.c.l.b16 %v4103
      %v4140 = vunpack.c.h.b16 %v4103
      %v4141 = vunpack.c.l.b16 %v4104
      %v4142 = vunpack.c.h.b16 %v4104
      %v4143 = vunpack.c.l.b16 %v4105
      %v4144 = vunpack.c.h.b16 %v4105
      %v4145 = vunpack.c.l.b16 %v4106
      %v4146 = vunpack.c.h.b16 %v4106
      %v4147 = vunpack.c.l.b16 %v4107
      %v4148 = vunpack.c.h.b16 %v4107
      %v4149 = vunpack.c.l.b16 %v4108
      %v4150 = vunpack.c.h.b16 %v4108
      %v4151 = vunpack.c.l.b16 %v4109
      %v4152 = vunpack.c.h.b16 %v4109
      %v4153 = vunpack.c.l.b16 %v4110
      %v4154 = vunpack.c.h.b16 %v4110
      %v4155 = vunpack.c.l.b16 %v4111
      %v4156 = vunpack.c.h.b16 %v4111
      %v4157 = vunpack.c.l.b16 %v4112
      %v4158 = vunpack.c.h.b16 %v4112
      %v4159 = vunpack.c.l.b16 %v4113
      %v4160 = vunpack.c.h.b16 %v4113
      %v4161 = vunpack.c.l.b16 %v4114
      %v4162 = vunpack.c.h.b16 %v4114
      %v4163 = vpack.c.b16 %v4131, %v4131
      %v4164 = vpack.c.b16 %v4132, %v4132
      %v4165 = vpack.c.b16 %v4133, %v4133
      %v4166 = vpack.c.b16 %v4134, %v4134
      %v4167 = vpack.c.b16 %v4135, %v4135
      %v4168 = vpack.c.b16 %v4136, %v4136
      %v4169 = vpack.c.b16 %v4137, %v4137
      %v4170 = vpack.c.b16 %v4138, %v4138
      %v4171 = vpack.c.b16 %v4139, %v4139
      %v4172 = vpack.c.b16 %v4140, %v4140
      %v4173 = vpack.c.b16 %v4141, %v4141
      %v4174 = vpack.c.b16 %v4142, %v4142
      %v4175 = vpack.c.b16 %v4143, %v4143
      %v4176 = vpack.c.b16 %v4144, %v4144
      %v4177 = vpack.c.b16 %v4145, %v4145
      %v4178 = vpack.c.b16 %v4146, %v4146
      %v4179 = vpack.c.b16 %v4147, %v4147
      %v4180 = vpack.c.b16 %v4148, %v4148
      %v4181 = vpack.c.b16 %v4149, %v4149
      %v4182 = vpack.c.b16 %v4150, %v4150
      %v4183 = vpack.c.b16 %v4151, %v4151
      %v4184 = vpack.c.b16 %v4152, %v4152
      %v4185 = vpack.c.b16 %v4153, %v4153
      %v4186 = vpack.c.b16 %v4154, %v4154
      %v4187 = vpack.c.b16 %v4155, %v4155
      %v4188 = vpack.c.b16 %v4156, %v4156
      %v4189 = vpack.c.b16 %v4157, %v4157
      %v4190 = vpack.c.b16 %v4158, %v4158
      %v4191 = vpack.c.b16 %v4159, %v4159
      %v4192 = vpack.c.b16 %v4160, %v4160
      %v4193 = vpack.c.b16 %v4161, %v4161
      %v4194 = vpack.c.b16 %v4162, %v4162
      %4227 = vst [vmem:[%s264] sm:$0xf] %v4163
      %4228 = vst [vmem:[%s264 + $0x4] sm:$0xf] %v4164
      %4229 = vst [vmem:[%s264 + $0x8] sm:$0xf] %v4165
      %4230 = vst [vmem:[%s264 + $0xc] sm:$0xf] %v4166
      %4231 = vst [vmem:[%s264 + $0x10] sm:$0xf] %v4167
      %4232 = vst [vmem:[%s264 + $0x14] sm:$0xf] %v4168
      %4233 = vst [vmem:[%s264 + $0x18] sm:$0xf] %v4169
      %4234 = vst [vmem:[%s264 + $0x1c] sm:$0xf] %v4170
      %4235 = vst [vmem:[%s264 + $0x20] sm:$0xf] %v4171
      %4236 = vst [vmem:[%s264 + $0x24] sm:$0xf] %v4172
      %4237 = vst [vmem:[%s264 + $0x28] sm:$0xf] %v4173
      %4238 = vst [vmem:[%s264 + $0x2c] sm:$0xf] %v4174
      %4239 = vst [vmem:[%s264 + $0x30] sm:$0xf] %v4175
      %4240 = vst [vmem:[%s264 + $0x34] sm:$0xf] %v4176
      %4241 = vst [vmem:[%s264 + $0x38] sm:$0xf] %v4177
      %4242 = vst [vmem:[%s264 + $0x3c] sm:$0xf] %v4178
      %4243 = vst [vmem:[%s264 + $0x40] sm:$0xf] %v4179
      %4244 = vst [vmem:[%s264 + $0x44] sm:$0xf] %v4180
      %4245 = vst [vmem:[%s264 + $0x48] sm:$0xf] %v4181
      %4246 = vst [vmem:[%s264 + $0x4c] sm:$0xf] %v4182
      %4247 = vst [vmem:[%s264 + $0x50] sm:$0xf] %v4183
      %4248 = vst [vmem:[%s264 + $0x54] sm:$0xf] %v4184
      %4249 = vst [vmem:[%s264 + $0x58] sm:$0xf] %v4185
      %4250 = vst [vmem:[%s264 + $0x5c] sm:$0xf] %v4186
      %4251 = vst [vmem:[%s264 + $0x60] sm:$0xf] %v4187
      %4252 = vst [vmem:[%s264 + $0x64] sm:$0xf] %v4188
      %4253 = vst [vmem:[%s264 + $0x68] sm:$0xf] %v4189
      %4254 = vst [vmem:[%s264 + $0x6c] sm:$0xf] %v4190
      %4255 = vst [vmem:[%s264 + $0x70] sm:$0xf] %v4191
      %4256 = vst [vmem:[%s264 + $0x74] sm:$0xf] %v4192
      %4257 = vst [vmem:[%s264 + $0x78] sm:$0xf] %v4193
      %4258 = vst [vmem:[%s264 + $0x7c] sm:$0xf] %v4194
      %v4259 = vadd.f32 %v4067, %v4068
      %v4260 = vadd.f32 %v4259, %v4069
      %v4261 = vadd.f32 %v4260, %v4070
      %v4262 = vadd.f32 %v4261, %v4071
      %v4263 = vadd.f32 %v4262, %v4072
      %v4264 = vadd.f32 %v4263, %v4073
      %v4265 = vadd.f32 %v4264, %v4074
      %v4266 = vadd.f32 %v4265, %v4075
      %v4267 = vadd.f32 %v4266, %v4076
      %v4268 = vadd.f32 %v4267, %v4077
      %v4269 = vadd.f32 %v4268, %v4078
      %v4270 = vadd.f32 %v4269, %v4079
      %v4271 = vadd.f32 %v4270, %v4080
      %v4272 = vadd.f32 %v4271, %v4081
      %v4273 = vadd.f32 %v4272, %v4082
      %v4274 = vadd.f32 %v4273, %v4083
      %v4275 = vadd.f32 %v4274, %v4084
      %v4276 = vadd.f32 %v4275, %v4085
      %v4277 = vadd.f32 %v4276, %v4086
      %v4278 = vadd.f32 %v4277, %v4087
      %v4279 = vadd.f32 %v4278, %v4088
      %v4280 = vadd.f32 %v4279, %v4089
      %v4281 = vadd.f32 %v4280, %v4090
      %v4282 = vadd.f32 %v4281, %v4091
      %v4283 = vadd.f32 %v4282, %v4092
      %v4284 = vadd.f32 %v4283, %v4093
      %v4285 = vadd.f32 %v4284, %v4094
      %v4286 = vadd.f32 %v4285, %v4095
      %v4287 = vadd.f32 %v4286, %v4096
      %v4288 = vadd.f32 %v4287, %v4097
      %v4289 = vadd.f32 %v4288, %v4098
      %v4290 = vrot.slane %v4289, 4
      %v4291 = vadd.f32 %v4289, %v4290
      %v4292 = vrot.slane %v4291, 2
      %v4293 = vadd.f32 %v4291, %v4292
      %v4294 = vrot.slane %v4293, 1
      %v4295 = vadd.f32 %v4293, %v4294
      %4296 = vst [vmem:[%s268] sm:$0xff] %v4295
      %v4297 = vmul.f32 %v4067, %v4067
      %v4298 = vmul.f32 %v4068, %v4068
      %v4299 = vmul.f32 %v4069, %v4069
      %v4300 = vmul.f32 %v4070, %v4070
      %v4301 = vmul.f32 %v4071, %v4071
      %v4302 = vmul.f32 %v4072, %v4072
      %v4303 = vmul.f32 %v4073, %v4073
      %v4304 = vmul.f32 %v4074, %v4074
      %v4305 = vmul.f32 %v4075, %v4075
      %v4306 = vmul.f32 %v4076, %v4076
      %v4307 = vmul.f32 %v4077, %v4077
      %v4308 = vmul.f32 %v4078, %v4078
      %v4309 = vmul.f32 %v4079, %v4079
      %v4310 = vmul.f32 %v4080, %v4080
      %v4311 = vmul.f32 %v4081, %v4081
      %v4312 = vmul.f32 %v4082, %v4082
      %v4313 = vmul.f32 %v4083, %v4083
      %v4314 = vmul.f32 %v4084, %v4084
      %v4315 = vmul.f32 %v4085, %v4085
      %v4316 = vmul.f32 %v4086, %v4086
      %v4317 = vmul.f32 %v4087, %v4087
      %v4318 = vmul.f32 %v4088, %v4088
      %v4319 = vmul.f32 %v4089, %v4089
      %v4320 = vmul.f32 %v4090, %v4090
      %v4321 = vmul.f32 %v4091, %v4091
      %v4322 = vmul.f32 %v4092, %v4092
      %v4323 = vmul.f32 %v4093, %v4093
      %v4324 = vmul.f32 %v4094, %v4094
      %v4325 = vmul.f32 %v4095, %v4095
      %v4326 = vmul.f32 %v4096, %v4096
      %v4327 = vmul.f32 %v4097, %v4097
      %v4328 = vmul.f32 %v4098, %v4098
      %v4329 = vadd.f32 %v4297, %v4298
      %v4330 = vadd.f32 %v4329, %v4299
      %v4331 = vadd.f32 %v4330, %v4300
      %v4332 = vadd.f32 %v4331, %v4301
      %v4333 = vadd.f32 %v4332, %v4302
      %v4334 = vadd.f32 %v4333, %v4303
      %v4335 = vadd.f32 %v4334, %v4304
      %v4336 = vadd.f32 %v4335, %v4305
      %v4337 = vadd.f32 %v4336, %v4306
      %v4338 = vadd.f32 %v4337, %v4307
      %v4339 = vadd.f32 %v4338, %v4308
      %v4340 = vadd.f32 %v4339, %v4309
      %v4341 = vadd.f32 %v4340, %v4310
      %v4342 = vadd.f32 %v4341, %v4311
      %v4343 = vadd.f32 %v4342, %v4312
      %v4344 = vadd.f32 %v4343, %v4313
      %v4345 = vadd.f32 %v4344, %v4314
      %v4346 = vadd.f32 %v4345, %v4315
      %v4347 = vadd.f32 %v4346, %v4316
      %v4348 = vadd.f32 %v4347, %v4317
      %v4349 = vadd.f32 %v4348, %v4318
      %v4350 = vadd.f32 %v4349, %v4319
      %v4351 = vadd.f32 %v4350, %v4320
      %v4352 = vadd.f32 %v4351, %v4321
      %v4353 = vadd.f32 %v4352, %v4322
      %v4354 = vadd.f32 %v4353, %v4323
      %v4355 = vadd.f32 %v4354, %v4324
      %v4356 = vadd.f32 %v4355, %v4325
      %v4357 = vadd.f32 %v4356, %v4326
      %v4358 = vadd.f32 %v4357, %v4327
      %v4359 = vadd.f32 %v4358, %v4328
      %v4360 = vrot.slane %v4359, 4
      %v4361 = vadd.f32 %v4359, %v4360
      %v4362 = vrot.slane %v4361, 2
      %v4363 = vadd.f32 %v4361, %v4362
      %v4364 = vrot.slane %v4363, 1
      %v4365 = vadd.f32 %v4363, %v4364
      %4366 = vst [vmem:[%s272] sm:$0xff] %v4365
      %p4367 = scmp.lt.s32.totalorder %s18, 1
      %s4368 = scalar_select %p4367, %s18, 1
      %s4369 = smul.addr %s4368, 32
      %s4370 = smul.addr %s4369, 4
      %s4371 = scalar_lea.vmem %s4, %s4370
      %p4372 = scmp.lt.s32.totalorder %s18, 1
      %s4373 = scalar_select %p4372, %s18, 1
      %s4374 = smul.addr %s4373, 8
      %s4375 = scalar_lea.vmem %s5, %s4374
      %p4376 = scmp.lt.s32.totalorder %s18, 1
      %s4377 = scalar_select %p4376, %s18, 1
      %s4378 = smul.addr %s4377, 8
      %s4379 = scalar_lea.vmem %s6, %s4378
      // Predicated region
      $region37: #{resnet_block50_forward.5} parent=35 // pred_check
        %p4380 = pneg %p125
      $region38: #{resnet_block50_forward.5} parent=35 // pred_check_branch
        %4382 = sbr.rel (%p4380) target = $region40
      $region39: #{resnet_block50_forward.5} parent=35 // pred_region
        _
      $region40: #{resnet_block50_forward.5} parent=35 // pred_fallthru
        _
      // Predicated region
      $region41: #{resnet_block50_forward.5} parent=35 // pred_check
        %p4383 = pneg %p151
      $region42: #{resnet_block50_forward.5} parent=35 // pred_check_branch
        %4385 = sbr.rel (%p4383) target = $region44
      $region43: #{resnet_block50_forward.5} parent=35 // pred_region
        _
      $region44: #{resnet_block50_forward.5} parent=35 // pred_fallthru
        _
      // Predicated region
      $region45: #{resnet_block50_forward.5} parent=35 // pred_check
        %p4386 = pneg %p177
      $region46: #{resnet_block50_forward.5} parent=35 // pred_check_branch
        %4388 = sbr.rel (%p4386) target = $region48
      $region47: #{resnet_block50_forward.5} parent=35 // pred_region
        _
      $region48: #{resnet_block50_forward.5} parent=35 // pred_fallthru
        _
    $region36: #{resnet_block50_forward.5} parent=5 // pred_fallthru
      _
    %p4389 = scmp.le.s32.totalorder 2, %s13
    // Predicated region
    $region49: #{resnet_block50_forward.5} parent=5 // pred_check
      %p4390 = pneg %p4389
    $region50: #{resnet_block50_forward.5} parent=5 // pred_check_branch
      %4392 = sbr.rel (%p4390) target = $region52
    $region51: #{resnet_block50_forward.5} parent=5 // pred_region
      %s4393 = ssub.s32 %s13, 2
      // Predicated region
      $region53: #{resnet_block50_forward.5} parent=51 // pred_check
        %p4394 = pneg %p131
      $region54: #{resnet_block50_forward.5} parent=51 // pred_check_branch
        %4396 = sbr.rel (%p4394) target = $region56
      $region55: #{resnet_block50_forward.5} parent=51 // pred_region
        %p4397 = scmp.lt.s32.totalorder %s19, 1
        %s4398 = scalar_select %p4397, %s19, 1
        %s4399 = smul.addr %s4398, 32
        %s4400 = smul.addr %s4399, 4
        %s4401 = scalar_lea.vmem %s4, %s4400
      $region56: #{resnet_block50_forward.5} parent=51 // pred_fallthru
        _
      // Predicated region
      $region57: #{resnet_block50_forward.5} parent=51 // pred_check
        %p4402 = pneg %p157
      $region58: #{resnet_block50_forward.5} parent=51 // pred_check_branch
        %4404 = sbr.rel (%p4402) target = $region60
      $region59: #{resnet_block50_forward.5} parent=51 // pred_region
        %p4405 = scmp.lt.s32.totalorder %s19, 1
        %s4406 = scalar_select %p4405, %s19, 1
        %s4407 = smul.addr %s4406, 8
        %s4408 = scalar_lea.vmem %s5, %s4407
      $region60: #{resnet_block50_forward.5} parent=51 // pred_fallthru
        _
      // Predicated region
      $region61: #{resnet_block50_forward.5} parent=51 // pred_check
        %p4409 = pneg %p183
      $region62: #{resnet_block50_forward.5} parent=51 // pred_check_branch
        %4411 = sbr.rel (%p4409) target = $region64
      $region63: #{resnet_block50_forward.5} parent=51 // pred_region
        %p4412 = scmp.lt.s32.totalorder %s19, 1
        %s4413 = scalar_select %p4412, %s19, 1
        %s4414 = smul.addr %s4413, 8
        %s4415 = scalar_lea.vmem %s6, %s4414
      $region64: #{resnet_block50_forward.5} parent=51 // pred_fallthru
        _
    $region52: #{resnet_block50_forward.5} parent=5 // pred_fallthru
      _
  $region6: #{resnet_block50_forward.5} parent=0 // loop_footer
    %s17 = sadd.s32 1, %s13
  $region7: #{resnet_block50_forward.5} parent=0 // loop_footer_branch
    %12 = sbr.rel target = $region3
  $region8: #{resnet_block50_forward.5} parent=0 // loop_exit
    _

</llo_original>
